<compile_context>
chip_gen: v6e
topology: v6e:2x2x1
jax: 0.10.0
libtpu: 0.0.40
codegen_flags: <defaults>
</compile_context>

<pallas_src>
import numpy as np

import jax
import jax.numpy as jnp
from jax.experimental import pallas as pl
from jax.experimental.pallas import tpu as pltpu

B_TILE = 8  # images per grid step (keep the number of steps even on v7x)


# ----------------------------------------------------------------------------
# Parameter preparation (outside jit): fold BN, build Toeplitz conv matrices,
# re-index the fc weights to the kernel's internal layout.
# ----------------------------------------------------------------------------
def prepare_params(p, eps=1e-5):
    f32 = np.float32
    w1 = np.asarray(p["w1"], f32)      # (16, 1, 5, 5)   [cout, cin, kh, kw]
    w2 = np.asarray(p["w2"], f32)      # (32, 16, 5, 5)
    fcw = np.asarray(p["fc_w"], f32)   # (10, 1568)
    fcb = np.asarray(p["fc_b"], f32)   # (10,)

    s1 = np.asarray(p["g1"], f32) / np.sqrt(np.asarray(p["v1"], f32) + eps)
    sh1 = s1 * np.asarray(p["b1"], f32) + np.asarray(p["be1"], f32) - s1 * np.asarray(p["m1"], f32)
    s2 = np.asarray(p["g2"], f32) / np.sqrt(np.asarray(p["v2"], f32) + eps)
    sh2 = s2 * np.asarray(p["b2"], f32) + np.asarray(p["be2"], f32) - s2 * np.asarray(p["m2"], f32)

    # T1: (140, 512) conv1 matrix for the H-im2col'd input.  Row = kh*28 + input
    # column; column = (dx, w1', cout), w1' (pooled w) padded 14->16.  W-padding
    # is handled here by skipping out-of-range columns; BN scale folded in.
    T1 = np.zeros((5, 28, 2, 16, 16), f32)
    for kh in range(5):
        for wp in range(14):
            for dx in range(2):
                w = 2 * wp + dx
                for kw in range(5):
                    j = w + kw - 2
                    if 0 <= j < 28:
                        T1[kh, j, dx, wp, :] = s1 * w1[:, 0, kh, kw]
    T1 = T1.reshape(140, 512)

    # Per-channel shift for layer 1 on the pooled lane layout (w1', cout) -> 256.
    S1 = np.zeros((16, 16), f32)
    S1[:14, :] = sh1[None, :]
    S1 = S1.reshape(1, 256)

    # T2[kh]: (256, 512): row = (w1', cin) padded; column = (dx, w2', cout),
    # w2' padded 7->8.  BN scale folded in.
    T2 = np.zeros((5, 16, 16, 2, 8, 32), f32)
    for kh in range(5):
        for wp in range(7):
            for dx in range(2):
                w = 2 * wp + dx
                for kw in range(5):
                    j = w + kw - 2
                    if 0 <= j < 14:
                        T2[kh, j, :, dx, wp, :] = (w2[:, :, kh, kw] * s2[:, None]).T
    T2 = T2.reshape(5, 256, 512)

    S2 = np.zeros((8, 32), f32)
    S2[:7, :] = sh2[None, :]
    S2 = S2.reshape(1, 256)

    # FC weights re-indexed to the kernel's p2 layout: rows t = pooled h (7),
    # lanes (w2', cout) padded to 256.  The output dim is padded 10 -> 128 so
    # the kernel's final store is lane-dense; the wrapper slices [:, :10].
    # PyTorch flatten index is c*49 + h*7 + w, which this re-gather reproduces.
    fc_r = fcw.reshape(10, 32, 7, 7)                      # [n, c, h, w]
    FC = np.zeros((7, 8, 32, 128), f32)
    FC[:, :7, :, :10] = np.transpose(fc_r, (2, 3, 1, 0))  # [h, w, c, n]
    FC = FC.reshape(7, 256, 128)
    FCB = np.zeros((1, 128), f32)
    FCB[0, :10] = fcb

    bf16 = jnp.bfloat16
    return {
        "t1": jnp.asarray(T1, bf16),
        "s1": jnp.asarray(S1, jnp.float32),
        "t2": jnp.asarray(T2, bf16),
        "s2": jnp.asarray(S2, jnp.float32),
        "fcw": jnp.asarray(FC, bf16),
        "fcb": jnp.asarray(FCB, jnp.float32),
    }


# ----------------------------------------------------------------------------
# The fused kernel: B_TILE images per grid step.  Row index inside every row
# block is (spatial index)*B_TILE + image, i.e. the image index is fastest, so
# all row slices are 8-row aligned.
# ----------------------------------------------------------------------------
def _detector_kernel(xcat_ref, t1_ref, s1_ref, t2_ref, s2_ref, fcw_ref, fcb_ref,
                     o_ref, p1e_ref, p1o_ref, acc2_ref):
    Bt = B_TILE
    t1 = t1_ref[...]                                            # (140, 512) bf16

    # Fused 2x2 maxpool + BN/bias shift + ReLU (both commute with max).
    # a, b: (rows, 512) f32 conv outputs for the two h-halves of each pool
    # window; lanes are (dx, w', c), so the w-pool is a max of the lane halves.
    def pool_shift_relu(a, b, shift):
        m = jnp.maximum(a, b)                                   # pool over h pair
        m = jnp.maximum(m[:, :256], m[:, 256:])                 # pool over w (dx)
        return jnp.maximum(m + shift, 0.0)                      # (rows, 256) f32

    # ---- layer 1: conv1 via host-side H-im2col (K = 5*28 = 140); one matmul
    # per h-phase with M = 7*B_TILE = 56 stacked rows (j, image).
    def conv1_phase(r):
        return jnp.dot(xcat_ref[r], t1,
                       preferred_element_type=jnp.float32)      # (56, 512) f32

    # phases (0,1) -> even pooled rows h1' = 2j; (2,3) -> odd rows h1' = 2j+1.
    p1e = pool_shift_relu(conv1_phase(0), conv1_phase(1), s1_ref[...])   # (56, 256)
    p1o = pool_shift_relu(conv1_phase(2), conv1_phase(3), s1_ref[...])

    # Zero-padded (one Bt-row group at each end), h-parity-split copies of p1
    # so layer 2's shifted row reads are contiguous, tile-aligned slices.
    zgrp = jnp.zeros((Bt, 256), jnp.float32)
    p1e_ref[0:Bt, :] = zgrp
    p1e_ref[8 * Bt:9 * Bt, :] = zgrp
    p1o_ref[0:Bt, :] = zgrp
    p1o_ref[8 * Bt:9 * Bt, :] = zgrp
    p1e_ref[Bt:8 * Bt, :] = p1e
    p1o_ref[Bt:8 * Bt, :] = p1o

    # ---- layer 2: per tap kh, both conv2 output-row parities are stacked into
    # one (14*Bt, 256) LHS so each T2[kh] streams through the MXU once per tile;
    # the f32 accumulator lives in VMEM scratch to bound vreg pressure.
    e_src = (p1e_ref, p1o_ref, p1e_ref, p1o_ref, p1e_ref)
    e_off = (0, 0, 1, 1, 2)
    o_src = (p1o_ref, p1e_ref, p1o_ref, p1e_ref, p1o_ref)
    o_off = (0, 1, 1, 2, 2)
    for kh in range(5):
        le = e_src[kh][e_off[kh] * Bt:(e_off[kh] + 7) * Bt, :]  # (56, 256) f32
        lo = o_src[kh][o_off[kh] * Bt:(o_off[kh] + 7) * Bt, :]
        lhs = jnp.concatenate([le, lo], axis=0).astype(jnp.bfloat16)   # (112, 256)
        part = jnp.dot(lhs, t2_ref[kh], preferred_element_type=jnp.float32)
        if kh == 0:
            acc2_ref[...] = part
        else:
            acc2_ref[...] += part

    acc2 = acc2_ref[...]                                        # (112, 512) f32
    # rows [0:56) = even conv2 rows (h2 = 2u), [56:112) = odd (h2 = 2u+1).
    p2 = pool_shift_relu(acc2[:7 * Bt], acc2[7 * Bt:], s2_ref[...])
    p2 = p2.astype(jnp.bfloat16)                                # (56, 256)

    # ---- fc: 7 accumulating (B_TILE, 256) x (256, 128) matmuls, one per
    # pooled-h row group; N is padded to 128 so the store is lane-dense.
    logits = jnp.zeros((Bt, 128), jnp.float32)
    for u in range(7):
        logits = logits + jnp.dot(p2[u * Bt:(u + 1) * Bt, :], fcw_ref[u],
                                  preferred_element_type=jnp.float32)
    o_ref[...] = logits + fcb_ref[...]


def detector_forward(x_nchw, prep):
    B = x_nchw.shape[0]
    nt = -(-B // B_TILE)                  # number of batch tiles
    Bp = nt * B_TILE

    # NCHW (B,1,28,28) -> bf16 (halves input DMA), pad batch to a tile multiple.
    x = x_nchw.reshape(B, 28, 28).astype(jnp.bfloat16)
    if Bp != B:
        x = jnp.pad(x, ((0, Bp - B), (0, 0), (0, 0)))

    # Host-side H-only im2col for conv1: for conv output row h, concatenate the
    # 5 H-padded input rows h..h+4 (28 lanes each) -> 140 lanes.  Rows are then
    # de-interleaved by h mod 4 (phase r; h = 4j + r) and grouped (j, image) with
    # the image index fastest, so in-kernel row slices are 8-aligned.
    xpad = jnp.pad(x, ((0, 0), (2, 2), (0, 0)))                       # (Bp, 32, 28)
    xcat = jnp.concatenate([xpad[:, kh:kh + 28, :] for kh in range(5)], axis=-1)
    xcat = xcat.reshape(nt, B_TILE, 7, 4, 140)                        # [t, b, j, r, 140]
    xcat = xcat.transpose(0, 3, 2, 1, 4).reshape(nt, 4, 7 * B_TILE, 140)

    out = pl.pallas_call(
        _detector_kernel,
        out_shape=jax.ShapeDtypeStruct((Bp, 128), jnp.float32),
        grid=(nt,),
        in_specs=[
            pl.BlockSpec((None, 4, 7 * B_TILE, 140), lambda i: (i, 0, 0, 0)),
            pl.BlockSpec((140, 512), lambda i: (0, 0)),
            pl.BlockSpec((1, 256), lambda i: (0, 0)),
            pl.BlockSpec((5, 256, 512), lambda i: (0, 0, 0)),
            pl.BlockSpec((1, 256), lambda i: (0, 0)),
            pl.BlockSpec((7, 256, 128), lambda i: (0, 0, 0)),
            pl.BlockSpec((1, 128), lambda i: (0, 0)),
        ],
        out_specs=pl.BlockSpec((B_TILE, 128), lambda i: (i, 0)),
        scratch_shapes=[
            pltpu.VMEM((9 * B_TILE, 256), jnp.float32),   # p1 even pooled rows (padded)
            pltpu.VMEM((9 * B_TILE, 256), jnp.float32),   # p1 odd pooled rows (padded)
            pltpu.VMEM((14 * B_TILE, 512), jnp.float32),  # conv2 accumulator
        ],
        compiler_params=pltpu.CompilerParams(dimension_semantics=("parallel",)),
    )(xcat, prep["t1"], prep["s1"], prep["t2"], prep["s2"], prep["fcw"], prep["fcb"])
    return out[:B, :10]


# ----------------------------------------------------------------------------
# Pure-JAX reference (for correctness check only)
# ----------------------------------------------------------------------------
def _ref_forward(x_nchw, p, eps=1e-5):
    hi = jax.lax.Precision.HIGHEST

    def conv_bn_relu_ref(x, w, b, g, be, m, v):
        w_hwio = jnp.transpose(w, (2, 3, 1, 0))
        y = jax.lax.conv_general_dilated(
            x, w_hwio, (1, 1), ((2, 2), (2, 2)),
            dimension_numbers=("NHWC", "HWIO", "NHWC"), precision=hi) + b
        y = g * (y - m) / jnp.sqrt(v + eps) + be
        return jnp.maximum(y, 0.0)

    def pool_ref(x):
        B, H, W, C = x.shape
        return x.reshape(B, H // 2, 2, W // 2, 2, C).max(axis=(2, 4))

    x = jnp.transpose(x_nchw, (0, 2, 3, 1))
    out = pool_ref(conv_bn_relu_ref(x, p["w1"], p["b1"], p["g1"], p["be1"], p["m1"], p["v1"]))
    out = pool_ref(conv_bn_relu_ref(out, p["w2"], p["b2"], p["g2"], p["be2"], p["m2"], p["v2"]))
    B = out.shape[0]
    flat = jnp.transpose(out, (0, 3, 1, 2)).reshape(B, -1)
    return jnp.dot(flat, p["fc_w"].T, precision=hi) + p["fc_b"]


# ----------------------------------------------------------------------------
def make_params(key):
    ks = jax.random.split(key, 12)
    f = jnp.float32
    return {
        "w1": 0.05 * jax.random.normal(ks[0], (16, 1, 5, 5), f),
        "b1": 0.05 * jax.random.normal(ks[1], (16,), f),
        "g1": 1.0 + 0.1 * jax.random.normal(ks[2], (16,), f),
        "be1": 0.1 * jax.random.normal(ks[3], (16,), f),
        "m1": 0.1 * jax.random.normal(ks[4], (16,), f),
        "v1": 0.5 + jax.random.uniform(ks[5], (16,), f),
        "w2": 0.05 * jax.random.normal(ks[6], (32, 16, 5, 5), f),
        "b2": 0.05 * jax.random.normal(ks[7], (32,), f),
        "g2": 1.0 + 0.1 * jax.random.normal(ks[8], (32,), f),
        "be2": 0.1 * jax.random.normal(ks[9], (32,), f),
        "m2": 0.1 * jax.random.normal(ks[10], (32,), f),
        "v2": 0.5 + jax.random.uniform(ks[11], (32,), f),
        "fc_w": 0.02 * jax.random.normal(jax.random.fold_in(key, 100), (10, 7 * 7 * 32), f),
        "fc_b": 0.02 * jax.random.normal(jax.random.fold_in(key, 101), (10,), f),
    }


if __name__ == "__main__":
    key = jax.random.PRNGKey(0)
    params = make_params(key)
    prep = prepare_params(params)

    B = 16  # two grid steps of B_TILE=8 (even step count for v7x megacore split)
    x = jax.random.normal(jax.random.fold_in(key, 7), (B, 1, 28, 28), jnp.float32)

    fwd = jax.jit(detector_forward)
    logits = jax.block_until_ready(fwd(x, prep))
    assert logits.shape == (B, 10) and logits.dtype == jnp.float32

    ref = _ref_forward(x, params)
    # bf16 matmul operands with f32 accumulation -> a few-milli absolute error.
    assert jnp.allclose(logits, ref, atol=3e-2, rtol=3e-2), (logits, ref)

    print("KERNEL_OK")
</pallas_src>

<mosaic_0001>
module attributes {stable_mosaic.version = 11 : i64} {
  func.func @_detector_kernel(%arg0: i32, %arg1: memref<1x4x56x140xbf16, #tpu.memory_space<vmem>>, %arg2: memref<140x512xbf16, #tpu.memory_space<vmem>>, %arg3: memref<1x256xf32, #tpu.memory_space<vmem>>, %arg4: memref<5x256x512xbf16, #tpu.memory_space<vmem>>, %arg5: memref<1x256xf32, #tpu.memory_space<vmem>>, %arg6: memref<7x256x128xbf16, #tpu.memory_space<vmem>>, %arg7: memref<1x128xf32, #tpu.memory_space<vmem>>, %arg8: memref<8x128xf32, #tpu.memory_space<vmem>>, %arg9: memref<72x256xf32, #tpu.memory_space<vmem>>, %arg10: memref<72x256xf32, #tpu.memory_space<vmem>>, %arg11: memref<112x512xf32, #tpu.memory_space<vmem>>) attributes {dimension_semantics = [#tpu.dimension_semantics<parallel>], iteration_bounds = array<i64: 2>, scalar_prefetch = 0 : i64, scratch_operands = 3 : i64, tpu.core_type = #tpu.core_type<tc>, window_params = [{transform_indices = @transform_0, window_bounds = array<i64: 1, 4, 56, 140>}, {pipeline_mode = #tpu.pipeline_mode<synchronous>, transform_indices = @transform_1, window_bounds = array<i64: 140, 512>}, {pipeline_mode = #tpu.pipeline_mode<synchronous>, transform_indices = @transform_2, window_bounds = array<i64: 1, 256>}, {pipeline_mode = #tpu.pipeline_mode<synchronous>, transform_indices = @transform_3, window_bounds = array<i64: 5, 256, 512>}, {pipeline_mode = #tpu.pipeline_mode<synchronous>, transform_indices = @transform_4, window_bounds = array<i64: 1, 256>}, {pipeline_mode = #tpu.pipeline_mode<synchronous>, transform_indices = @transform_5, window_bounds = array<i64: 7, 256, 128>}, {pipeline_mode = #tpu.pipeline_mode<synchronous>, transform_indices = @transform_6, window_bounds = array<i64: 1, 128>}, {transform_indices = @transform_7, window_bounds = array<i64: 8, 128>}]} {
    %c0 = arith.constant 0 : index
    %c0_0 = arith.constant 0 : index
    %0 = vector.load %arg2[%c0, %c0_0] : memref<140x512xbf16, #tpu.memory_space<vmem>>, vector<140x512xbf16>
    %c0_1 = arith.constant 0 : index
    %c0_2 = arith.constant 0 : index
    %c0_3 = arith.constant 0 : index
    %c0_4 = arith.constant 0 : index
    %1 = vector.load %arg1[%c0_1, %c0_2, %c0_3, %c0_4] : memref<1x4x56x140xbf16, #tpu.memory_space<vmem>>, vector<1x1x56x140xbf16>
    %2 = vector.shape_cast %1 : vector<1x1x56x140xbf16> to vector<56x140xbf16>
    %cst = arith.constant dense<0.000000e+00> : vector<56x512xf32>
    %3 = tpu.matmul %2, %0, %cst {dimension_numbers = #tpu.dot_dimension_numbers<[1], [0], [0], [1], [0, 0, 1, 1], [], []>} : vector<56x140xbf16>, vector<140x512xbf16>, vector<56x512xf32> -> vector<56x512xf32>
    %c0_5 = arith.constant 0 : index
    %c1 = arith.constant 1 : index
    %c0_6 = arith.constant 0 : index
    %c0_7 = arith.constant 0 : index
    %4 = vector.load %arg1[%c0_5, %c1, %c0_6, %c0_7] : memref<1x4x56x140xbf16, #tpu.memory_space<vmem>>, vector<1x1x56x140xbf16>
    %5 = vector.shape_cast %4 : vector<1x1x56x140xbf16> to vector<56x140xbf16>
    %cst_8 = arith.constant dense<0.000000e+00> : vector<56x512xf32>
    %6 = tpu.matmul %5, %0, %cst_8 {dimension_numbers = #tpu.dot_dimension_numbers<[1], [0], [0], [1], [0, 0, 1, 1], [], []>} : vector<56x140xbf16>, vector<140x512xbf16>, vector<56x512xf32> -> vector<56x512xf32>
    %c0_9 = arith.constant 0 : index
    %c0_10 = arith.constant 0 : index
    %7 = vector.load %arg3[%c0_9, %c0_10] : memref<1x256xf32, #tpu.memory_space<vmem>>, vector<1x256xf32>
    %8 = arith.maximumf %3, %6 : vector<56x512xf32>
    %9 = vector.extract_strided_slice %8 {offsets = [0, 0], sizes = [56, 256], strides = [1, 1]} : vector<56x512xf32> to vector<56x256xf32>
    %10 = vector.extract_strided_slice %8 {offsets = [0, 256], sizes = [56, 256], strides = [1, 1]} : vector<56x512xf32> to vector<56x256xf32>
    %11 = arith.maximumf %9, %10 : vector<56x256xf32>
    %12 = vector.broadcast %7 : vector<1x256xf32> to vector<56x256xf32>
    %13 = arith.addf %11, %12 : vector<56x256xf32>
    %cst_11 = arith.constant 0.000000e+00 : f32
    %14 = vector.broadcast %cst_11 : f32 to vector<56x256xf32>
    %15 = arith.maximumf %13, %14 : vector<56x256xf32>
    %c0_12 = arith.constant 0 : index
    %c2 = arith.constant 2 : index
    %c0_13 = arith.constant 0 : index
    %c0_14 = arith.constant 0 : index
    %16 = vector.load %arg1[%c0_12, %c2, %c0_13, %c0_14] : memref<1x4x56x140xbf16, #tpu.memory_space<vmem>>, vector<1x1x56x140xbf16>
    %17 = vector.shape_cast %16 : vector<1x1x56x140xbf16> to vector<56x140xbf16>
    %cst_15 = arith.constant dense<0.000000e+00> : vector<56x512xf32>
    %18 = tpu.matmul %17, %0, %cst_15 {dimension_numbers = #tpu.dot_dimension_numbers<[1], [0], [0], [1], [0, 0, 1, 1], [], []>} : vector<56x140xbf16>, vector<140x512xbf16>, vector<56x512xf32> -> vector<56x512xf32>
    %c0_16 = arith.constant 0 : index
    %c3 = arith.constant 3 : index
    %c0_17 = arith.constant 0 : index
    %c0_18 = arith.constant 0 : index
    %19 = vector.load %arg1[%c0_16, %c3, %c0_17, %c0_18] : memref<1x4x56x140xbf16, #tpu.memory_space<vmem>>, vector<1x1x56x140xbf16>
    %20 = vector.shape_cast %19 : vector<1x1x56x140xbf16> to vector<56x140xbf16>
    %cst_19 = arith.constant dense<0.000000e+00> : vector<56x512xf32>
    %21 = tpu.matmul %20, %0, %cst_19 {dimension_numbers = #tpu.dot_dimension_numbers<[1], [0], [0], [1], [0, 0, 1, 1], [], []>} : vector<56x140xbf16>, vector<140x512xbf16>, vector<56x512xf32> -> vector<56x512xf32>
    %c0_20 = arith.constant 0 : index
    %c0_21 = arith.constant 0 : index
    %22 = vector.load %arg3[%c0_20, %c0_21] : memref<1x256xf32, #tpu.memory_space<vmem>>, vector<1x256xf32>
    %23 = arith.maximumf %18, %21 : vector<56x512xf32>
    %24 = vector.extract_strided_slice %23 {offsets = [0, 0], sizes = [56, 256], strides = [1, 1]} : vector<56x512xf32> to vector<56x256xf32>
    %25 = vector.extract_strided_slice %23 {offsets = [0, 256], sizes = [56, 256], strides = [1, 1]} : vector<56x512xf32> to vector<56x256xf32>
    %26 = arith.maximumf %24, %25 : vector<56x256xf32>
    %27 = vector.broadcast %22 : vector<1x256xf32> to vector<56x256xf32>
    %28 = arith.addf %26, %27 : vector<56x256xf32>
    %cst_22 = arith.constant 0.000000e+00 : f32
    %29 = vector.broadcast %cst_22 : f32 to vector<56x256xf32>
    %30 = arith.maximumf %28, %29 : vector<56x256xf32>
    %cst_23 = arith.constant 0.000000e+00 : f32
    %31 = vector.broadcast %cst_23 : f32 to vector<8x256xf32>
    %c0_24 = arith.constant 0 : index
    %c0_25 = arith.constant 0 : index
    %32 = vector.load %arg9[%c0_24, %c0_25] : memref<72x256xf32, #tpu.memory_space<vmem>>, vector<8x256xf32>
    tpu.vector_store %arg9[%c0_24, %c0_25], %31 {strides = array<i32>} : memref<72x256xf32, #tpu.memory_space<vmem>>, vector<8x256xf32>,
    %c64 = arith.constant 64 : index
    %c0_26 = arith.constant 0 : index
    %33 = vector.load %arg9[%c64, %c0_26] : memref<72x256xf32, #tpu.memory_space<vmem>>, vector<8x256xf32>
    tpu.vector_store %arg9[%c64, %c0_26], %31 {strides = array<i32>} : memref<72x256xf32, #tpu.memory_space<vmem>>, vector<8x256xf32>,
    %c0_27 = arith.constant 0 : index
    %c0_28 = arith.constant 0 : index
    %34 = vector.load %arg10[%c0_27, %c0_28] : memref<72x256xf32, #tpu.memory_space<vmem>>, vector<8x256xf32>
    tpu.vector_store %arg10[%c0_27, %c0_28], %31 {strides = array<i32>} : memref<72x256xf32, #tpu.memory_space<vmem>>, vector<8x256xf32>,
    %c64_29 = arith.constant 64 : index
    %c0_30 = arith.constant 0 : index
    %35 = vector.load %arg10[%c64_29, %c0_30] : memref<72x256xf32, #tpu.memory_space<vmem>>, vector<8x256xf32>
    tpu.vector_store %arg10[%c64_29, %c0_30], %31 {strides = array<i32>} : memref<72x256xf32, #tpu.memory_space<vmem>>, vector<8x256xf32>,
    %c8 = arith.constant 8 : index
    %c0_31 = arith.constant 0 : index
    %36 = vector.load %arg9[%c8, %c0_31] : memref<72x256xf32, #tpu.memory_space<vmem>>, vector<56x256xf32>
    tpu.vector_store %arg9[%c8, %c0_31], %15 {strides = array<i32>} : memref<72x256xf32, #tpu.memory_space<vmem>>, vector<56x256xf32>,
    %c8_32 = arith.constant 8 : index
    %c0_33 = arith.constant 0 : index
    %37 = vector.load %arg10[%c8_32, %c0_33] : memref<72x256xf32, #tpu.memory_space<vmem>>, vector<56x256xf32>
    tpu.vector_store %arg10[%c8_32, %c0_33], %30 {strides = array<i32>} : memref<72x256xf32, #tpu.memory_space<vmem>>, vector<56x256xf32>,
    %c0_34 = arith.constant 0 : index
    %c0_35 = arith.constant 0 : index
    %38 = vector.load %arg9[%c0_34, %c0_35] : memref<72x256xf32, #tpu.memory_space<vmem>>, vector<56x256xf32>
    %c0_36 = arith.constant 0 : index
    %c0_37 = arith.constant 0 : index
    %39 = vector.load %arg10[%c0_36, %c0_37] : memref<72x256xf32, #tpu.memory_space<vmem>>, vector<56x256xf32>
    %40 = tpu.concatenate %38, %39 in 0 : vector<56x256xf32>, vector<56x256xf32> -> vector<112x256xf32>
    %41 = arith.truncf %40 : vector<112x256xf32> to vector<112x256xbf16>
    %c0_38 = arith.constant 0 : index
    %c0_39 = arith.constant 0 : index
    %c0_40 = arith.constant 0 : index
    %42 = vector.load %arg4[%c0_38, %c0_39, %c0_40] : memref<5x256x512xbf16, #tpu.memory_space<vmem>>, vector<1x256x512xbf16>
    %43 = vector.shape_cast %42 : vector<1x256x512xbf16> to vector<256x512xbf16>
    %cst_41 = arith.constant dense<0.000000e+00> : vector<112x512xf32>
    %44 = tpu.matmul %41, %43, %cst_41 {dimension_numbers = #tpu.dot_dimension_numbers<[1], [0], [0], [1], [0, 0, 1, 1], [], []>} : vector<112x256xbf16>, vector<256x512xbf16>, vector<112x512xf32> -> vector<112x512xf32>
    %c0_42 = arith.constant 0 : index
    %c0_43 = arith.constant 0 : index
    %45 = vector.load %arg11[%c0_42, %c0_43] : memref<112x512xf32, #tpu.memory_space<vmem>>, vector<112x512xf32>
    tpu.vector_store %arg11[%c0_42, %c0_43], %44 {strides = array<i32>} : memref<112x512xf32, #tpu.memory_space<vmem>>, vector<112x512xf32>,
    %c0_44 = arith.constant 0 : index
    %c0_45 = arith.constant 0 : index
    %46 = vector.load %arg10[%c0_44, %c0_45] : memref<72x256xf32, #tpu.memory_space<vmem>>, vector<56x256xf32>
    %c8_46 = arith.constant 8 : index
    %c0_47 = arith.constant 0 : index
    %47 = vector.load %arg9[%c8_46, %c0_47] : memref<72x256xf32, #tpu.memory_space<vmem>>, vector<56x256xf32>
    %48 = tpu.concatenate %46, %47 in 0 : vector<56x256xf32>, vector<56x256xf32> -> vector<112x256xf32>
    %49 = arith.truncf %48 : vector<112x256xf32> to vector<112x256xbf16>
    %c1_48 = arith.constant 1 : index
    %c0_49 = arith.constant 0 : index
    %c0_50 = arith.constant 0 : index
    %50 = vector.load %arg4[%c1_48, %c0_49, %c0_50] : memref<5x256x512xbf16, #tpu.memory_space<vmem>>, vector<1x256x512xbf16>
    %51 = vector.shape_cast %50 : vector<1x256x512xbf16> to vector<256x512xbf16>
    %cst_51 = arith.constant dense<0.000000e+00> : vector<112x512xf32>
    %52 = tpu.matmul %49, %51, %cst_51 {dimension_numbers = #tpu.dot_dimension_numbers<[1], [0], [0], [1], [0, 0, 1, 1], [], []>} : vector<112x256xbf16>, vector<256x512xbf16>, vector<112x512xf32> -> vector<112x512xf32>
    %c0_52 = arith.constant 0 : index
    %c0_53 = arith.constant 0 : index
    %53 = vector.load %arg11[%c0_52, %c0_53] : memref<112x512xf32, #tpu.memory_space<vmem>>, vector<112x512xf32>
    %54 = arith.addf %53, %52 : vector<112x512xf32>
    %c0_54 = arith.constant 0 : index
    %c0_55 = arith.constant 0 : index
    %55 = vector.load %arg11[%c0_54, %c0_55] : memref<112x512xf32, #tpu.memory_space<vmem>>, vector<112x512xf32>
    tpu.vector_store %arg11[%c0_54, %c0_55], %54 {strides = array<i32>} : memref<112x512xf32, #tpu.memory_space<vmem>>, vector<112x512xf32>,
    %c8_56 = arith.constant 8 : index
    %c0_57 = arith.constant 0 : index
    %56 = vector.load %arg9[%c8_56, %c0_57] : memref<72x256xf32, #tpu.memory_space<vmem>>, vector<56x256xf32>
    %c8_58 = arith.constant 8 : index
    %c0_59 = arith.constant 0 : index
    %57 = vector.load %arg10[%c8_58, %c0_59] : memref<72x256xf32, #tpu.memory_space<vmem>>, vector<56x256xf32>
    %58 = tpu.concatenate %56, %57 in 0 : vector<56x256xf32>, vector<56x256xf32> -> vector<112x256xf32>
    %59 = arith.truncf %58 : vector<112x256xf32> to vector<112x256xbf16>
    %c2_60 = arith.constant 2 : index
    %c0_61 = arith.constant 0 : index
    %c0_62 = arith.constant 0 : index
    %60 = vector.load %arg4[%c2_60, %c0_61, %c0_62] : memref<5x256x512xbf16, #tpu.memory_space<vmem>>, vector<1x256x512xbf16>
    %61 = vector.shape_cast %60 : vector<1x256x512xbf16> to vector<256x512xbf16>
    %cst_63 = arith.constant dense<0.000000e+00> : vector<112x512xf32>
    %62 = tpu.matmul %59, %61, %cst_63 {dimension_numbers = #tpu.dot_dimension_numbers<[1], [0], [0], [1], [0, 0, 1, 1], [], []>} : vector<112x256xbf16>, vector<256x512xbf16>, vector<112x512xf32> -> vector<112x512xf32>
    %c0_64 = arith.constant 0 : index
    %c0_65 = arith.constant 0 : index
    %63 = vector.load %arg11[%c0_64, %c0_65] : memref<112x512xf32, #tpu.memory_space<vmem>>, vector<112x512xf32>
    %64 = arith.addf %63, %62 : vector<112x512xf32>
    %c0_66 = arith.constant 0 : index
    %c0_67 = arith.constant 0 : index
    %65 = vector.load %arg11[%c0_66, %c0_67] : memref<112x512xf32, #tpu.memory_space<vmem>>, vector<112x512xf32>
    tpu.vector_store %arg11[%c0_66, %c0_67], %64 {strides = array<i32>} : memref<112x512xf32, #tpu.memory_space<vmem>>, vector<112x512xf32>,
    %c8_68 = arith.constant 8 : index
    %c0_69 = arith.constant 0 : index
    %66 = vector.load %arg10[%c8_68, %c0_69] : memref<72x256xf32, #tpu.memory_space<vmem>>, vector<56x256xf32>
    %c16 = arith.constant 16 : index
    %c0_70 = arith.constant 0 : index
    %67 = vector.load %arg9[%c16, %c0_70] : memref<72x256xf32, #tpu.memory_space<vmem>>, vector<56x256xf32>
    %68 = tpu.concatenate %66, %67 in 0 : vector<56x256xf32>, vector<56x256xf32> -> vector<112x256xf32>
    %69 = arith.truncf %68 : vector<112x256xf32> to vector<112x256xbf16>
    %c3_71 = arith.constant 3 : index
    %c0_72 = arith.constant 0 : index
    %c0_73 = arith.constant 0 : index
    %70 = vector.load %arg4[%c3_71, %c0_72, %c0_73] : memref<5x256x512xbf16, #tpu.memory_space<vmem>>, vector<1x256x512xbf16>
    %71 = vector.shape_cast %70 : vector<1x256x512xbf16> to vector<256x512xbf16>
    %cst_74 = arith.constant dense<0.000000e+00> : vector<112x512xf32>
    %72 = tpu.matmul %69, %71, %cst_74 {dimension_numbers = #tpu.dot_dimension_numbers<[1], [0], [0], [1], [0, 0, 1, 1], [], []>} : vector<112x256xbf16>, vector<256x512xbf16>, vector<112x512xf32> -> vector<112x512xf32>
    %c0_75 = arith.constant 0 : index
    %c0_76 = arith.constant 0 : index
    %73 = vector.load %arg11[%c0_75, %c0_76] : memref<112x512xf32, #tpu.memory_space<vmem>>, vector<112x512xf32>
    %74 = arith.addf %73, %72 : vector<112x512xf32>
    %c0_77 = arith.constant 0 : index
    %c0_78 = arith.constant 0 : index
    %75 = vector.load %arg11[%c0_77, %c0_78] : memref<112x512xf32, #tpu.memory_space<vmem>>, vector<112x512xf32>
    tpu.vector_store %arg11[%c0_77, %c0_78], %74 {strides = array<i32>} : memref<112x512xf32, #tpu.memory_space<vmem>>, vector<112x512xf32>,
    %c16_79 = arith.constant 16 : index
    %c0_80 = arith.constant 0 : index
    %76 = vector.load %arg9[%c16_79, %c0_80] : memref<72x256xf32, #tpu.memory_space<vmem>>, vector<56x256xf32>
    %c16_81 = arith.constant 16 : index
    %c0_82 = arith.constant 0 : index
    %77 = vector.load %arg10[%c16_81, %c0_82] : memref<72x256xf32, #tpu.memory_space<vmem>>, vector<56x256xf32>
    %78 = tpu.concatenate %76, %77 in 0 : vector<56x256xf32>, vector<56x256xf32> -> vector<112x256xf32>
    %79 = arith.truncf %78 : vector<112x256xf32> to vector<112x256xbf16>
    %c4 = arith.constant 4 : index
    %c0_83 = arith.constant 0 : index
    %c0_84 = arith.constant 0 : index
    %80 = vector.load %arg4[%c4, %c0_83, %c0_84] : memref<5x256x512xbf16, #tpu.memory_space<vmem>>, vector<1x256x512xbf16>
    %81 = vector.shape_cast %80 : vector<1x256x512xbf16> to vector<256x512xbf16>
    %cst_85 = arith.constant dense<0.000000e+00> : vector<112x512xf32>
    %82 = tpu.matmul %79, %81, %cst_85 {dimension_numbers = #tpu.dot_dimension_numbers<[1], [0], [0], [1], [0, 0, 1, 1], [], []>} : vector<112x256xbf16>, vector<256x512xbf16>, vector<112x512xf32> -> vector<112x512xf32>
    %c0_86 = arith.constant 0 : index
    %c0_87 = arith.constant 0 : index
    %83 = vector.load %arg11[%c0_86, %c0_87] : memref<112x512xf32, #tpu.memory_space<vmem>>, vector<112x512xf32>
    %84 = arith.addf %83, %82 : vector<112x512xf32>
    %c0_88 = arith.constant 0 : index
    %c0_89 = arith.constant 0 : index
    %85 = vector.load %arg11[%c0_88, %c0_89] : memref<112x512xf32, #tpu.memory_space<vmem>>, vector<112x512xf32>
    tpu.vector_store %arg11[%c0_88, %c0_89], %84 {strides = array<i32>} : memref<112x512xf32, #tpu.memory_space<vmem>>, vector<112x512xf32>,
    %c0_90 = arith.constant 0 : index
    %c0_91 = arith.constant 0 : index
    %86 = vector.load %arg11[%c0_90, %c0_91] : memref<112x512xf32, #tpu.memory_space<vmem>>, vector<112x512xf32>
    %87 = vector.extract_strided_slice %86 {offsets = [0, 0], sizes = [56, 512], strides = [1, 1]} : vector<112x512xf32> to vector<56x512xf32>
    %88 = vector.extract_strided_slice %86 {offsets = [56, 0], sizes = [56, 512], strides = [1, 1]} : vector<112x512xf32> to vector<56x512xf32>
    %c0_92 = arith.constant 0 : index
    %c0_93 = arith.constant 0 : index
    %89 = vector.load %arg5[%c0_92, %c0_93] : memref<1x256xf32, #tpu.memory_space<vmem>>, vector<1x256xf32>
    %90 = arith.maximumf %87, %88 : vector<56x512xf32>
    %91 = vector.extract_strided_slice %90 {offsets = [0, 0], sizes = [56, 256], strides = [1, 1]} : vector<56x512xf32> to vector<56x256xf32>
    %92 = vector.extract_strided_slice %90 {offsets = [0, 256], sizes = [56, 256], strides = [1, 1]} : vector<56x512xf32> to vector<56x256xf32>
    %93 = arith.maximumf %91, %92 : vector<56x256xf32>
    %94 = vector.broadcast %89 : vector<1x256xf32> to vector<56x256xf32>
    %95 = arith.addf %93, %94 : vector<56x256xf32>
    %cst_94 = arith.constant 0.000000e+00 : f32
    %96 = vector.broadcast %cst_94 : f32 to vector<56x256xf32>
    %97 = arith.maximumf %95, %96 : vector<56x256xf32>
    %98 = arith.truncf %97 : vector<56x256xf32> to vector<56x256xbf16>
    %cst_95 = arith.constant 0.000000e+00 : f32
    %99 = vector.broadcast %cst_95 : f32 to vector<8x128xf32>
    %100 = vector.extract_strided_slice %98 {offsets = [0, 0], sizes = [8, 256], strides = [1, 1]} : vector<56x256xbf16> to vector<8x256xbf16>
    %c0_96 = arith.constant 0 : index
    %c0_97 = arith.constant 0 : index
    %c0_98 = arith.constant 0 : index
    %101 = vector.load %arg6[%c0_96, %c0_97, %c0_98] : memref<7x256x128xbf16, #tpu.memory_space<vmem>>, vector<1x256x128xbf16>
    %102 = vector.shape_cast %101 : vector<1x256x128xbf16> to vector<256x128xbf16>
    %cst_99 = arith.constant dense<0.000000e+00> : vector<8x128xf32>
    %103 = tpu.matmul %100, %102, %cst_99 {dimension_numbers = #tpu.dot_dimension_numbers<[1], [0], [0], [1], [0, 0, 1, 1], [], []>} : vector<8x256xbf16>, vector<256x128xbf16>, vector<8x128xf32> -> vector<8x128xf32>
    %104 = arith.addf %99, %103 : vector<8x128xf32>
    %105 = vector.extract_strided_slice %98 {offsets = [8, 0], sizes = [8, 256], strides = [1, 1]} : vector<56x256xbf16> to vector<8x256xbf16>
    %c1_100 = arith.constant 1 : index
    %c0_101 = arith.constant 0 : index
    %c0_102 = arith.constant 0 : index
    %106 = vector.load %arg6[%c1_100, %c0_101, %c0_102] : memref<7x256x128xbf16, #tpu.memory_space<vmem>>, vector<1x256x128xbf16>
    %107 = vector.shape_cast %106 : vector<1x256x128xbf16> to vector<256x128xbf16>
    %cst_103 = arith.constant dense<0.000000e+00> : vector<8x128xf32>
    %108 = tpu.matmul %105, %107, %cst_103 {dimension_numbers = #tpu.dot_dimension_numbers<[1], [0], [0], [1], [0, 0, 1, 1], [], []>} : vector<8x256xbf16>, vector<256x128xbf16>, vector<8x128xf32> -> vector<8x128xf32>
    %109 = arith.addf %104, %108 : vector<8x128xf32>
    %110 = vector.extract_strided_slice %98 {offsets = [16, 0], sizes = [8, 256], strides = [1, 1]} : vector<56x256xbf16> to vector<8x256xbf16>
    %c2_104 = arith.constant 2 : index
    %c0_105 = arith.constant 0 : index
    %c0_106 = arith.constant 0 : index
    %111 = vector.load %arg6[%c2_104, %c0_105, %c0_106] : memref<7x256x128xbf16, #tpu.memory_space<vmem>>, vector<1x256x128xbf16>
    %112 = vector.shape_cast %111 : vector<1x256x128xbf16> to vector<256x128xbf16>
    %cst_107 = arith.constant dense<0.000000e+00> : vector<8x128xf32>
    %113 = tpu.matmul %110, %112, %cst_107 {dimension_numbers = #tpu.dot_dimension_numbers<[1], [0], [0], [1], [0, 0, 1, 1], [], []>} : vector<8x256xbf16>, vector<256x128xbf16>, vector<8x128xf32> -> vector<8x128xf32>
    %114 = arith.addf %109, %113 : vector<8x128xf32>
    %115 = vector.extract_strided_slice %98 {offsets = [24, 0], sizes = [8, 256], strides = [1, 1]} : vector<56x256xbf16> to vector<8x256xbf16>
    %c3_108 = arith.constant 3 : index
    %c0_109 = arith.constant 0 : index
    %c0_110 = arith.constant 0 : index
    %116 = vector.load %arg6[%c3_108, %c0_109, %c0_110] : memref<7x256x128xbf16, #tpu.memory_space<vmem>>, vector<1x256x128xbf16>
    %117 = vector.shape_cast %116 : vector<1x256x128xbf16> to vector<256x128xbf16>
    %cst_111 = arith.constant dense<0.000000e+00> : vector<8x128xf32>
    %118 = tpu.matmul %115, %117, %cst_111 {dimension_numbers = #tpu.dot_dimension_numbers<[1], [0], [0], [1], [0, 0, 1, 1], [], []>} : vector<8x256xbf16>, vector<256x128xbf16>, vector<8x128xf32> -> vector<8x128xf32>
    %119 = arith.addf %114, %118 : vector<8x128xf32>
    %120 = vector.extract_strided_slice %98 {offsets = [32, 0], sizes = [8, 256], strides = [1, 1]} : vector<56x256xbf16> to vector<8x256xbf16>
    %c4_112 = arith.constant 4 : index
    %c0_113 = arith.constant 0 : index
    %c0_114 = arith.constant 0 : index
    %121 = vector.load %arg6[%c4_112, %c0_113, %c0_114] : memref<7x256x128xbf16, #tpu.memory_space<vmem>>, vector<1x256x128xbf16>
    %122 = vector.shape_cast %121 : vector<1x256x128xbf16> to vector<256x128xbf16>
    %cst_115 = arith.constant dense<0.000000e+00> : vector<8x128xf32>
    %123 = tpu.matmul %120, %122, %cst_115 {dimension_numbers = #tpu.dot_dimension_numbers<[1], [0], [0], [1], [0, 0, 1, 1], [], []>} : vector<8x256xbf16>, vector<256x128xbf16>, vector<8x128xf32> -> vector<8x128xf32>
    %124 = arith.addf %119, %123 : vector<8x128xf32>
    %125 = vector.extract_strided_slice %98 {offsets = [40, 0], sizes = [8, 256], strides = [1, 1]} : vector<56x256xbf16> to vector<8x256xbf16>
    %c5 = arith.constant 5 : index
    %c0_116 = arith.constant 0 : index
    %c0_117 = arith.constant 0 : index
    %126 = vector.load %arg6[%c5, %c0_116, %c0_117] : memref<7x256x128xbf16, #tpu.memory_space<vmem>>, vector<1x256x128xbf16>
    %127 = vector.shape_cast %126 : vector<1x256x128xbf16> to vector<256x128xbf16>
    %cst_118 = arith.constant dense<0.000000e+00> : vector<8x128xf32>
    %128 = tpu.matmul %125, %127, %cst_118 {dimension_numbers = #tpu.dot_dimension_numbers<[1], [0], [0], [1], [0, 0, 1, 1], [], []>} : vector<8x256xbf16>, vector<256x128xbf16>, vector<8x128xf32> -> vector<8x128xf32>
    %129 = arith.addf %124, %128 : vector<8x128xf32>
    %130 = vector.extract_strided_slice %98 {offsets = [48, 0], sizes = [8, 256], strides = [1, 1]} : vector<56x256xbf16> to vector<8x256xbf16>
    %c6 = arith.constant 6 : index
    %c0_119 = arith.constant 0 : index
    %c0_120 = arith.constant 0 : index
    %131 = vector.load %arg6[%c6, %c0_119, %c0_120] : memref<7x256x128xbf16, #tpu.memory_space<vmem>>, vector<1x256x128xbf16>
    %132 = vector.shape_cast %131 : vector<1x256x128xbf16> to vector<256x128xbf16>
    %cst_121 = arith.constant dense<0.000000e+00> : vector<8x128xf32>
    %133 = tpu.matmul %130, %132, %cst_121 {dimension_numbers = #tpu.dot_dimension_numbers<[1], [0], [0], [1], [0, 0, 1, 1], [], []>} : vector<8x256xbf16>, vector<256x128xbf16>, vector<8x128xf32> -> vector<8x128xf32>
    %134 = arith.addf %129, %133 : vector<8x128xf32>
    %c0_122 = arith.constant 0 : index
    %c0_123 = arith.constant 0 : index
    %135 = vector.load %arg7[%c0_122, %c0_123] : memref<1x128xf32, #tpu.memory_space<vmem>>, vector<1x128xf32>
    %136 = vector.broadcast %135 : vector<1x128xf32> to vector<8x128xf32>
    %137 = arith.addf %134, %136 : vector<8x128xf32>
    %c0_124 = arith.constant 0 : index
    %c0_125 = arith.constant 0 : index
    %138 = vector.load %arg8[%c0_124, %c0_125] : memref<8x128xf32, #tpu.memory_space<vmem>>, vector<8x128xf32>
    tpu.vector_store %arg8[%c0_124, %c0_125], %137 {strides = array<i32>} : memref<8x128xf32, #tpu.memory_space<vmem>>, vector<8x128xf32>,
    return
  }
  func.func @transform_0(%arg0: i32) -> (i32, i32, i32, i32) {
    %c0_i32 = arith.constant 0 : i32
    %c0_i32_0 = arith.constant 0 : i32
    %c0_i32_1 = arith.constant 0 : i32
    %c0_i32_2 = arith.constant 0 : i32
    return %arg0, %c0_i32, %c0_i32_0, %c0_i32_1 : i32, i32, i32, i32
  }
  func.func @transform_1(%arg0: i32) -> (i32, i32) {
    %c0_i32 = arith.constant 0 : i32
    %c0_i32_0 = arith.constant 0 : i32
    %c0_i32_1 = arith.constant 0 : i32
    return %c0_i32, %c0_i32_0 : i32, i32
  }
  func.func @transform_2(%arg0: i32) -> (i32, i32) {
    %c0_i32 = arith.constant 0 : i32
    %c0_i32_0 = arith.constant 0 : i32
    %c0_i32_1 = arith.constant 0 : i32
    return %c0_i32, %c0_i32_0 : i32, i32
  }
  func.func @transform_3(%arg0: i32) -> (i32, i32, i32) {
    %c0_i32 = arith.constant 0 : i32
    %c0_i32_0 = arith.constant 0 : i32
    %c0_i32_1 = arith.constant 0 : i32
    %c0_i32_2 = arith.constant 0 : i32
    return %c0_i32, %c0_i32_0, %c0_i32_1 : i32, i32, i32
  }
  func.func @transform_4(%arg0: i32) -> (i32, i32) {
    %c0_i32 = arith.constant 0 : i32
    %c0_i32_0 = arith.constant 0 : i32
    %c0_i32_1 = arith.constant 0 : i32
    return %c0_i32, %c0_i32_0 : i32, i32
  }
  func.func @transform_5(%arg0: i32) -> (i32, i32, i32) {
    %c0_i32 = arith.constant 0 : i32
    %c0_i32_0 = arith.constant 0 : i32
    %c0_i32_1 = arith.constant 0 : i32
    %c0_i32_2 = arith.constant 0 : i32
    return %c0_i32, %c0_i32_0, %c0_i32_1 : i32, i32, i32
  }
  func.func @transform_6(%arg0: i32) -> (i32, i32) {
    %c0_i32 = arith.constant 0 : i32
    %c0_i32_0 = arith.constant 0 : i32
    %c0_i32_1 = arith.constant 0 : i32
    return %c0_i32, %c0_i32_0 : i32, i32
  }
  func.func @transform_7(%arg0: i32) -> (i32, i32) {
    %c0_i32 = arith.constant 0 : i32
    %c0_i32_0 = arith.constant 0 : i32
    return %arg0, %c0_i32 : i32, i32
  }
}

</mosaic_0001>

<llo_original>
// kernel: detector_forward.1
$region0: #{detector_forward.1}
  #allocation0 [shape = 'u32[]', space=smem, size = 0x4, offset = 0x4, fixed_abs, tag = 'smem constant byte address 0x4 - core index']
  #allocation1 [shape = 'u32[144,128]{1,0:T(1,128)}', space=vmem, size = 0x12000, scoped, tag = 'internal scratch']
  #allocation2 [shape = 'f32[72,256]{1,0:T(8,128)}', space=vmem, size = 0x12000, scoped, tag = 'scratch operand']
  #allocation3 [shape = 'f32[72,256]{1,0:T(8,128)}', space=vmem, size = 0x12000, scoped, tag = 'scratch operand']
  #allocation4 [shape = 'f32[112,512]{1,0:T(8,128)}', space=vmem, size = 0x38000, scoped, tag = 'scratch operand']
  %s0 = inlined_call_operand.vmem [shape: bf16[2,4,56,140], index: 0, kind: input, shape index: {}]
  %s1 = inlined_call_operand.vmem [shape: bf16[140,512], index: 1, kind: input, shape index: {}]
  %s2 = inlined_call_operand.vmem [shape: f32[1,256], index: 2, kind: input, shape index: {}]
  %s3 = inlined_call_operand.vmem [shape: bf16[5,256,512], index: 3, kind: input, shape index: {}]
  %s4 = inlined_call_operand.vmem [shape: f32[1,256], index: 4, kind: input, shape index: {}]
  %s5 = inlined_call_operand.vmem [shape: bf16[7,256,128], index: 5, kind: input, shape index: {}]
  %s6 = inlined_call_operand.vmem [shape: f32[1,128], index: 6, kind: input, shape index: {}]
  %s7 = inlined_call_operand.hbm [shape: f32[16,128], index: 7, kind: output, shape index: {}]
  %s8 = sld [smem:[#allocation0]]
  $region61: #{detector_forward.1} parent=0
    _
  %s10 = ssub.s32 1, %s8
  %s11 = scalar_select 0, %s10, %s8
  $region1: #{detector_forward.1} parent=0
    #allocation5 [shape = 'u8[8192]{0}', space=vmem, size = 0x2000, scoped, tag = 'output window, operand 0']
    #allocation6 [shape = 's32[2]{0}', space=sflag, size = 0x8, scoped, tag = 'scoped memory for detector_forward.1']
    %12 = vsyncpa [#allocation6], 0
    %s13 = scalar_lea.sflag [#allocation6], 1
    %14 = vsyncpa %s13, 0
    loop: start=0, step=1, limit=4
    $region2: #{detector_forward.1} parent=1 // loop_pre_header
      _
    $region3: #{detector_forward.1} parent=1 // loop_header
      %s16 = sphi 0, %s20
      %p17 = scmp.ge.s32.totalorder %s16, 4
      %s26 = sphi 0, %s28
      %s29 = sphi 0, %s26
      %s30 = sphi 0, %s29
      %s46 = sphi 0, %s30
      %s50 = sphi 0, %s50
      %s52 = sphi 0, %s50
      %s53 = sphi 0, %s52
      %s67 = sphi 0, %s53
      %s71 = sphi 0, %s71
      %s73 = sphi 0, %s71
      %s74 = sphi 0, %s73
      %s88 = sphi 0, %s74
      %s92 = sphi 0, %s92
      %s94 = sphi 0, %s92
      %s95 = sphi 0, %s94
      %s109 = sphi 0, %s95
      %s113 = sphi 0, %s113
      %s115 = sphi 0, %s113
      %s116 = sphi 0, %s115
      %s130 = sphi 0, %s116
      %s134 = sphi 0, %s134
      %s136 = sphi 0, %s134
      %s137 = sphi 0, %s136
      %s151 = sphi 0, %s137
      %s155 = sphi 0, %s155
      %s157 = sphi 0, %s155
      %s158 = sphi 0, %s157
      %s172 = sphi 0, %s158
      %s178 = sphi 0, %s180
      %s181 = sphi 0, %s178
      %s182 = sphi 0, %s181
      %s198 = sphi 0, %s182
    $region4: #{detector_forward.1} parent=1 // loop_header_branch
      %19 = sbr.rel (%p17) target = $region8
    $region5: #{detector_forward.1} parent=1 // loop_body
      %s21 = ssub.s32 %s16, 1
      %s22 = ssub.s32 %s16, 2
      %s23 = sadd.s32 %s16, 1
      %s24 = ssub.s32 %s16, %s23
      %p25 = scmp.eq.s32.totalorder %s24, 0
      %s27 = sadd.s32 %s26, 1
      %s28 = scalar_select %p25, %s26, %s27
      %p31 = pneg %p25
      %p32 = scmp.eq.s32.totalorder %s16, 1
      %p33 = por %p31, %p32
      %p34 = scmp.ne.s32.totalorder %s26, %s29
      %p35 = scmp.eq.s32.totalorder %s16, 0
      %p36 = por %p34, %p35
      %p37 = scmp.ne.s32.totalorder %s26, %s29
      %p38 = scmp.eq.s32.totalorder %s21, 1
      %p39 = por %p37, %p38
      %p40 = scmp.ne.s32.totalorder %s29, %s30
      %p41 = scmp.eq.s32.totalorder %s21, 0
      %p42 = por %p40, %p41
      %p43 = scmp.ne.s32.totalorder %s29, %s30
      %p44 = scmp.eq.s32.totalorder %s22, 1
      %p45 = por %p43, %p44
      %p47 = scmp.ne.s32.totalorder %s30, %s46
      %p48 = scmp.eq.s32.totalorder %s22, 0
      %p49 = por %p47, %p48
      %s51 = sadd.s32 %s50, 1
      %p54 = scmp.eq.s32.totalorder %s16, 1
      %p55 = scmp.ne.s32.totalorder %s50, %s52
      %p56 = scmp.eq.s32.totalorder %s16, 0
      %p57 = por %p55, %p56
      %p58 = scmp.ne.s32.totalorder %s50, %s52
      %p59 = scmp.eq.s32.totalorder %s21, 1
      %p60 = por %p58, %p59
      %p61 = scmp.ne.s32.totalorder %s52, %s53
      %p62 = scmp.eq.s32.totalorder %s21, 0
      %p63 = por %p61, %p62
      %p64 = scmp.ne.s32.totalorder %s52, %s53
      %p65 = scmp.eq.s32.totalorder %s22, 1
      %p66 = por %p64, %p65
      %p68 = scmp.ne.s32.totalorder %s53, %s67
      %p69 = scmp.eq.s32.totalorder %s22, 0
      %p70 = por %p68, %p69
      %s72 = sadd.s32 %s71, 1
      %p75 = scmp.eq.s32.totalorder %s16, 1
      %p76 = scmp.ne.s32.totalorder %s71, %s73
      %p77 = scmp.eq.s32.totalorder %s16, 0
      %p78 = por %p76, %p77
      %p79 = scmp.ne.s32.totalorder %s71, %s73
      %p80 = scmp.eq.s32.totalorder %s21, 1
      %p81 = por %p79, %p80
      %p82 = scmp.ne.s32.totalorder %s73, %s74
      %p83 = scmp.eq.s32.totalorder %s21, 0
      %p84 = por %p82, %p83
      %p85 = scmp.ne.s32.totalorder %s73, %s74
      %p86 = scmp.eq.s32.totalorder %s22, 1
      %p87 = por %p85, %p86
      %p89 = scmp.ne.s32.totalorder %s74, %s88
      %p90 = scmp.eq.s32.totalorder %s22, 0
      %p91 = por %p89, %p90
      %s93 = sadd.s32 %s92, 1
      %p96 = scmp.eq.s32.totalorder %s16, 1
      %p97 = scmp.ne.s32.totalorder %s92, %s94
      %p98 = scmp.eq.s32.totalorder %s16, 0
      %p99 = por %p97, %p98
      %p100 = scmp.ne.s32.totalorder %s92, %s94
      %p101 = scmp.eq.s32.totalorder %s21, 1
      %p102 = por %p100, %p101
      %p103 = scmp.ne.s32.totalorder %s94, %s95
      %p104 = scmp.eq.s32.totalorder %s21, 0
      %p105 = por %p103, %p104
      %p106 = scmp.ne.s32.totalorder %s94, %s95
      %p107 = scmp.eq.s32.totalorder %s22, 1
      %p108 = por %p106, %p107
      %p110 = scmp.ne.s32.totalorder %s95, %s109
      %p111 = scmp.eq.s32.totalorder %s22, 0
      %p112 = por %p110, %p111
      %s114 = sadd.s32 %s113, 1
      %p117 = scmp.eq.s32.totalorder %s16, 1
      %p118 = scmp.ne.s32.totalorder %s113, %s115
      %p119 = scmp.eq.s32.totalorder %s16, 0
      %p120 = por %p118, %p119
      %p121 = scmp.ne.s32.totalorder %s113, %s115
      %p122 = scmp.eq.s32.totalorder %s21, 1
      %p123 = por %p121, %p122
      %p124 = scmp.ne.s32.totalorder %s115, %s116
      %p125 = scmp.eq.s32.totalorder %s21, 0
      %p126 = por %p124, %p125
      %p127 = scmp.ne.s32.totalorder %s115, %s116
      %p128 = scmp.eq.s32.totalorder %s22, 1
      %p129 = por %p127, %p128
      %p131 = scmp.ne.s32.totalorder %s116, %s130
      %p132 = scmp.eq.s32.totalorder %s22, 0
      %p133 = por %p131, %p132
      %s135 = sadd.s32 %s134, 1
      %p138 = scmp.eq.s32.totalorder %s16, 1
      %p139 = scmp.ne.s32.totalorder %s134, %s136
      %p140 = scmp.eq.s32.totalorder %s16, 0
      %p141 = por %p139, %p140
      %p142 = scmp.ne.s32.totalorder %s134, %s136
      %p143 = scmp.eq.s32.totalorder %s21, 1
      %p144 = por %p142, %p143
      %p145 = scmp.ne.s32.totalorder %s136, %s137
      %p146 = scmp.eq.s32.totalorder %s21, 0
      %p147 = por %p145, %p146
      %p148 = scmp.ne.s32.totalorder %s136, %s137
      %p149 = scmp.eq.s32.totalorder %s22, 1
      %p150 = por %p148, %p149
      %p152 = scmp.ne.s32.totalorder %s137, %s151
      %p153 = scmp.eq.s32.totalorder %s22, 0
      %p154 = por %p152, %p153
      %s156 = sadd.s32 %s155, 1
      %p159 = scmp.eq.s32.totalorder %s16, 1
      %p160 = scmp.ne.s32.totalorder %s155, %s157
      %p161 = scmp.eq.s32.totalorder %s16, 0
      %p162 = por %p160, %p161
      %p163 = scmp.ne.s32.totalorder %s155, %s157
      %p164 = scmp.eq.s32.totalorder %s21, 1
      %p165 = por %p163, %p164
      %p166 = scmp.ne.s32.totalorder %s157, %s158
      %p167 = scmp.eq.s32.totalorder %s21, 0
      %p168 = por %p166, %p167
      %p169 = scmp.ne.s32.totalorder %s157, %s158
      %p170 = scmp.eq.s32.totalorder %s22, 1
      %p171 = por %p169, %p170
      %p173 = scmp.ne.s32.totalorder %s158, %s172
      %p174 = scmp.eq.s32.totalorder %s22, 0
      %p175 = por %p173, %p174
      %s176 = ssub.s32 %s16, %s23
      %p177 = scmp.eq.s32.totalorder %s176, 0
      %s179 = sadd.s32 %s178, 1
      %s180 = scalar_select %p177, %s178, %s179
      %p183 = pneg %p177
      %p184 = scmp.eq.s32.totalorder %s16, 1
      %p185 = por %p183, %p184
      %p186 = scmp.ne.s32.totalorder %s178, %s181
      %p187 = scmp.eq.s32.totalorder %s16, 0
      %p188 = por %p186, %p187
      %p189 = scmp.ne.s32.totalorder %s178, %s181
      %p190 = scmp.eq.s32.totalorder %s21, 1
      %p191 = por %p189, %p190
      %p192 = scmp.ne.s32.totalorder %s181, %s182
      %p193 = scmp.eq.s32.totalorder %s21, 0
      %p194 = por %p192, %p193
      %p195 = scmp.ne.s32.totalorder %s181, %s182
      %p196 = scmp.eq.s32.totalorder %s22, 1
      %p197 = por %p195, %p196
      %p199 = scmp.ne.s32.totalorder %s182, %s198
      %p200 = scmp.eq.s32.totalorder %s22, 0
      %p201 = por %p199, %p200
      %p202 = scmp.le.s32.totalorder 1, %s16
      %p203 = scmp.lt.s32.totalorder %s16, 3
      %p204 = pnand %p202, %p203
      %p205 = pneg %p204
      // Predicated region
      $region9: #{detector_forward.1} parent=5 // pred_check
        _
      $region10: #{detector_forward.1} parent=5 // pred_check_branch
        %207 = sbr.rel (%p204) target = $region12
      $region11: #{detector_forward.1} parent=5 // pred_region
        %s208 = ssub.s32 %s16, 1
        // Predicated region
        $region13: #{detector_forward.1} parent=11 // pred_check
          %p209 = pneg %p63
        $region14: #{detector_forward.1} parent=11 // pred_check_branch
          %211 = sbr.rel (%p209) target = $region16
        $region15: #{detector_forward.1} parent=11 // pred_region
          _
        $region16: #{detector_forward.1} parent=11 // pred_fallthru
          _
        // Predicated region
        $region17: #{detector_forward.1} parent=11 // pred_check
          %p212 = pneg %p84
        $region18: #{detector_forward.1} parent=11 // pred_check_branch
          %214 = sbr.rel (%p212) target = $region20
        $region19: #{detector_forward.1} parent=11 // pred_region
          _
        $region20: #{detector_forward.1} parent=11 // pred_fallthru
          _
        // Predicated region
        $region21: #{detector_forward.1} parent=11 // pred_check
          %p215 = pneg %p105
        $region22: #{detector_forward.1} parent=11 // pred_check_branch
          %217 = sbr.rel (%p215) target = $region24
        $region23: #{detector_forward.1} parent=11 // pred_region
          _
        $region24: #{detector_forward.1} parent=11 // pred_fallthru
          _
        // Predicated region
        $region25: #{detector_forward.1} parent=11 // pred_check
          %p218 = pneg %p126
        $region26: #{detector_forward.1} parent=11 // pred_check_branch
          %220 = sbr.rel (%p218) target = $region28
        $region27: #{detector_forward.1} parent=11 // pred_region
          _
        $region28: #{detector_forward.1} parent=11 // pred_fallthru
          _
        // Predicated region
        $region29: #{detector_forward.1} parent=11 // pred_check
          %p221 = pneg %p147
        $region30: #{detector_forward.1} parent=11 // pred_check_branch
          %223 = sbr.rel (%p221) target = $region32
        $region31: #{detector_forward.1} parent=11 // pred_region
          _
        $region32: #{detector_forward.1} parent=11 // pred_fallthru
          _
        // Predicated region
        $region33: #{detector_forward.1} parent=11 // pred_check
          %p224 = pneg %p168
        $region34: #{detector_forward.1} parent=11 // pred_check_branch
          %226 = sbr.rel (%p224) target = $region36
        $region35: #{detector_forward.1} parent=11 // pred_region
          _
        $region36: #{detector_forward.1} parent=11 // pred_fallthru
          _
      $region12: #{detector_forward.1} parent=5 // pred_fallthru
        _
      %p227 = scmp.lt.s32.totalorder %s16, 2
      // Predicated region
      $region37: #{detector_forward.1} parent=5 // pred_check
        %p228 = pneg %p227
      $region38: #{detector_forward.1} parent=5 // pred_check_branch
        %230 = sbr.rel (%p228) target = $region40
      $region39: #{detector_forward.1} parent=5 // pred_region
        // Predicated region
        $region41: #{detector_forward.1} parent=39 // pred_check
          %p231 = pneg %p36
        $region42: #{detector_forward.1} parent=39 // pred_check_branch
          %233 = sbr.rel (%p231) target = $region44
        $region43: #{detector_forward.1} parent=39 // pred_region
          %p234 = scmp.lt.s32.totalorder %s16, 1
          %s235 = scalar_select %p234, %s16, 1
          %s236 = smul.addr %s235, 56
          %s237 = smul.addr %s236, 4
          %s238 = scalar_lea.vmem %s0, %s237
        $region44: #{detector_forward.1} parent=39 // pred_fallthru
          _
      $region40: #{detector_forward.1} parent=5 // pred_fallthru
        _
      %p239 = scmp.le.s32.totalorder 1, %s16
      %p240 = scmp.lt.s32.totalorder %s16, 3
      %p241 = pnand %p239, %p240
      %p242 = pneg %p241
      // Predicated region
      $region45: #{detector_forward.1} parent=5 // pred_check
        _
      $region46: #{detector_forward.1} parent=5 // pred_check_branch
        %244 = sbr.rel (%p241) target = $region48
      $region47: #{detector_forward.1} parent=5 // pred_region
        %s245 = ssub.s32 %s16, 1
        %p246 = scmp.lt.s32.totalorder %s21, 1
        %s247 = scalar_select %p246, %s21, 1
        %s248 = smul.addr %s247, 56
        %s249 = smul.addr %s248, 4
        %s250 = scalar_lea.vmem %s0, %s249
        %p251 = pneg %p42
        %p252 = pneg %p39
        %p253 = pneg %p63
        %p254 = pneg %p60
        %p255 = pneg %p84
        %p256 = pneg %p81
        %p257 = pneg %p105
        %p258 = pneg %p102
        %p259 = pneg %p126
        %p260 = pneg %p123
        %p261 = pneg %p147
        %p262 = pneg %p144
        %p263 = pneg %p168
        %p264 = pneg %p165
        %p265 = pneg %p194
        %p266 = pneg %p191
        %s267 = sand.u32 %s181, 1
        %s268 = scalar_lea.sflag [#allocation6], %s267
        %s269 = sand.u32 %s181, 1
        %s270 = smul.addr %s269, 8
        %s271 = scalar_lea.vmem [#allocation5], %s270
        %p272 = scmp.lt.s32.totalorder %s21, 1
        %s273 = scalar_select %p272, %s21, 1
        %s274 = smul.addr %s273, 56
        %s275 = smul.addr %s274, 4
        %s276 = scalar_lea.vmem %s0, %s275
        %v278 = vld [vmem:[%s1] sm:$0xff]
        %v279 = vld [vmem:[%s1 + $0x8] sm:$0xff]
        %v280 = vld [vmem:[%s1 + $0x10] sm:$0xff]
        %v281 = vld [vmem:[%s1 + $0x18] sm:$0xff]
        %v282 = vld [vmem:[%s1 + $0x20] sm:$0xff]
        %v283 = vld [vmem:[%s1 + $0x28] sm:$0xff]
        %v284 = vld [vmem:[%s1 + $0x30] sm:$0xff]
        %v285 = vld [vmem:[%s1 + $0x38] sm:$0xff]
        %v286 = vld [vmem:[%s1 + $0x40] sm:$0xff]
        %v287 = vld [vmem:[%s1 + $0x48] sm:$0xff]
        %v288 = vld [vmem:[%s1 + $0x50] sm:$0xff]
        %v289 = vld [vmem:[%s1 + $0x58] sm:$0xff]
        %v290 = vld [vmem:[%s1 + $0x60] sm:$0xff]
        %v291 = vld [vmem:[%s1 + $0x68] sm:$0xff]
        %v292 = vld [vmem:[%s1 + $0x70] sm:$0xff]
        %v293 = vld [vmem:[%s1 + $0x78] sm:$0xff]
        %v294 = vld [vmem:[%s1 + $0x80] sm:$0xff]
        %v295 = vld [vmem:[%s1 + $0x88] sm:$0xff]
        %v296 = vld [vmem:[%s1 + $0x90] sm:$0xff]
        %v297 = vld [vmem:[%s1 + $0x98] sm:$0xff]
        %v298 = vld [vmem:[%s1 + $0xa0] sm:$0xff]
        %v299 = vld [vmem:[%s1 + $0xa8] sm:$0xff]
        %v300 = vld [vmem:[%s1 + $0xb0] sm:$0xff]
        %v301 = vld [vmem:[%s1 + $0xb8] sm:$0xff]
        %v302 = vld [vmem:[%s1 + $0xc0] sm:$0xff]
        %v303 = vld [vmem:[%s1 + $0xc8] sm:$0xff]
        %v304 = vld [vmem:[%s1 + $0xd0] sm:$0xff]
        %v305 = vld [vmem:[%s1 + $0xd8] sm:$0xff]
        %v306 = vld [vmem:[%s1 + $0xe0] sm:$0xff]
        %v307 = vld [vmem:[%s1 + $0xe8] sm:$0xff]
        %v308 = vld [vmem:[%s1 + $0xf0] sm:$0xff]
        %v309 = vld [vmem:[%s1 + $0xf8] sm:$0xff]
        %v310 = vld [vmem:[%s1 + $0x100] sm:$0xff]
        %v311 = vld [vmem:[%s1 + $0x108] sm:$0xff]
        %v312 = vld [vmem:[%s1 + $0x110] sm:$0x33]
        %v313 = vld [vmem:[%s1 + $0x118] sm:$0x33]
        %v314 = vld [vmem:[%s276] sm:$0xff]
        %v315 = vld [vmem:[%s276 + $0x8] sm:$0xff]
        %v316 = vld [vmem:[%s276 + $0x10] sm:$0xff]
        %v317 = vld [vmem:[%s276 + $0x18] sm:$0xff]
        %v318 = vld [vmem:[%s276 + $0x20] sm:$0xff]
        %v319 = vld [vmem:[%s276 + $0x28] sm:$0xff]
        %v320 = vld [vmem:[%s276 + $0x30] sm:$0xff]
        %v328 = vunpack.c.l.b16 %v314
        %v329 = vunpack.c.h.b16 %v314
        %v330 = vunpack.c.l.b16 %v315
        %v331 = vunpack.c.h.b16 %v315
        %v332 = vunpack.c.l.b16 %v316
        %v333 = vunpack.c.h.b16 %v316
        %v334 = vunpack.c.l.b16 %v317
        %v335 = vunpack.c.h.b16 %v317
        %v336 = vunpack.c.l.b16 %v318
        %v337 = vunpack.c.h.b16 %v318
        %v338 = vunpack.c.l.b16 %v319
        %v339 = vunpack.c.h.b16 %v319
        %v340 = vunpack.c.l.b16 %v320
        %v341 = vunpack.c.h.b16 %v320
        %v342 = vpack.c.b16 %v330, %v328
        %v343 = vpack.c.b16 %v331, %v329
        %v344 = vpack.c.b16 %v334, %v332
        %v345 = vpack.c.b16 %v335, %v333
        %v346 = vpack.c.b16 %v338, %v336
        %v347 = vpack.c.b16 %v339, %v337
        %v348 = vpack.c.b16 %v340, %v340
        %v349 = vpack.c.b16 %v341, %v341
        %v390 = vunpack.c.l.b16 %v278
        %v391 = vunpack.c.h.b16 %v278
        %v392 = vunpack.c.l.b16 %v279
        %v393 = vunpack.c.h.b16 %v279
        %v394 = vunpack.c.l.b16 %v280
        %v395 = vunpack.c.h.b16 %v280
        %v396 = vunpack.c.l.b16 %v281
        %v397 = vunpack.c.h.b16 %v281
        %v398 = vunpack.c.l.b16 %v282
        %v399 = vunpack.c.h.b16 %v282
        %v400 = vunpack.c.l.b16 %v283
        %v401 = vunpack.c.h.b16 %v283
        %v402 = vunpack.c.l.b16 %v284
        %v403 = vunpack.c.h.b16 %v284
        %v404 = vunpack.c.l.b16 %v285
        %v405 = vunpack.c.h.b16 %v285
        %v406 = vunpack.c.l.b16 %v286
        %v407 = vunpack.c.h.b16 %v286
        %v408 = vunpack.c.l.b16 %v287
        %v409 = vunpack.c.h.b16 %v287
        %v410 = vunpack.c.l.b16 %v288
        %v411 = vunpack.c.h.b16 %v288
        %v412 = vunpack.c.l.b16 %v289
        %v413 = vunpack.c.h.b16 %v289
        %v414 = vunpack.c.l.b16 %v290
        %v415 = vunpack.c.h.b16 %v290
        %v416 = vunpack.c.l.b16 %v291
        %v417 = vunpack.c.h.b16 %v291
        %v418 = vunpack.c.l.b16 %v292
        %v419 = vunpack.c.h.b16 %v292
        %v420 = vunpack.c.l.b16 %v293
        %v421 = vunpack.c.h.b16 %v293
        %v422 = vunpack.c.l.b16 %v294
        %v423 = vunpack.c.h.b16 %v294
        %v424 = vunpack.c.l.b16 %v295
        %v425 = vunpack.c.h.b16 %v295
        %v426 = vunpack.c.l.b16 %v296
        %v427 = vunpack.c.h.b16 %v296
        %v428 = vunpack.c.l.b16 %v297
        %v429 = vunpack.c.h.b16 %v297
        %v430 = vunpack.c.l.b16 %v298
        %v431 = vunpack.c.h.b16 %v298
        %v432 = vunpack.c.l.b16 %v299
        %v433 = vunpack.c.h.b16 %v299
        %v434 = vunpack.c.l.b16 %v300
        %v435 = vunpack.c.h.b16 %v300
        %v436 = vunpack.c.l.b16 %v301
        %v437 = vunpack.c.h.b16 %v301
        %v438 = vunpack.c.l.b16 %v302
        %v439 = vunpack.c.h.b16 %v302
        %v440 = vunpack.c.l.b16 %v303
        %v441 = vunpack.c.h.b16 %v303
        %v442 = vunpack.c.l.b16 %v304
        %v443 = vunpack.c.h.b16 %v304
        %v444 = vunpack.c.l.b16 %v305
        %v445 = vunpack.c.h.b16 %v305
        %v446 = vunpack.c.l.b16 %v306
        %v447 = vunpack.c.h.b16 %v306
        %v448 = vunpack.c.l.b16 %v307
        %v449 = vunpack.c.h.b16 %v307
        %v450 = vunpack.c.l.b16 %v308
        %v451 = vunpack.c.h.b16 %v308
        %v452 = vunpack.c.l.b16 %v309
        %v453 = vunpack.c.h.b16 %v309
        %v454 = vunpack.c.l.b16 %v310
        %v455 = vunpack.c.h.b16 %v310
        %v456 = vunpack.c.l.b16 %v311
        %v457 = vunpack.c.h.b16 %v311
        %v458 = vunpack.c.l.b16 %v312
        %v459 = vunpack.c.h.b16 %v312
        %v460 = vunpack.c.l.b16 %v313
        %v461 = vunpack.c.h.b16 %v313
        %v462 = vpack.c.b16 %v394, %v390
        %v463 = vpack.c.b16 %v395, %v391
        %v464 = vpack.c.b16 %v396, %v392
        %v465 = vpack.c.b16 %v397, %v393
        %v466 = vpack.c.b16 %v402, %v398
        %v467 = vpack.c.b16 %v403, %v399
        %v468 = vpack.c.b16 %v404, %v400
        %v469 = vpack.c.b16 %v405, %v401
        %v470 = vpack.c.b16 %v410, %v406
        %v471 = vpack.c.b16 %v411, %v407
        %v472 = vpack.c.b16 %v412, %v408
        %v473 = vpack.c.b16 %v413, %v409
        %v474 = vpack.c.b16 %v418, %v414
        %v475 = vpack.c.b16 %v419, %v415
        %v476 = vpack.c.b16 %v420, %v416
        %v477 = vpack.c.b16 %v421, %v417
        %v478 = vpack.c.b16 %v426, %v422
        %v479 = vpack.c.b16 %v427, %v423
        %v480 = vpack.c.b16 %v428, %v424
        %v481 = vpack.c.b16 %v429, %v425
        %v482 = vpack.c.b16 %v434, %v430
        %v483 = vpack.c.b16 %v435, %v431
        %v484 = vpack.c.b16 %v436, %v432
        %v485 = vpack.c.b16 %v437, %v433
        %v486 = vpack.c.b16 %v442, %v438
        %v487 = vpack.c.b16 %v443, %v439
        %v488 = vpack.c.b16 %v444, %v440
        %v489 = vpack.c.b16 %v445, %v441
        %v490 = vpack.c.b16 %v450, %v446
        %v491 = vpack.c.b16 %v451, %v447
        %v492 = vpack.c.b16 %v452, %v448
        %v493 = vpack.c.b16 %v453, %v449
        %v494 = vpack.c.b16 %v458, %v454
        %v495 = vpack.c.b16 %v459, %v455
        %v496 = vpack.c.b16 %v460, %v456
        %v497 = vpack.c.b16 %v461, %v457
        %vm530 = vcmask 97280
        %v532 = vsel %vm530, %v343, 0
        %v535 = vsel %vm530, %v345, 0
        %v538 = vsel %vm530, %v347, 0
        %v541 = vsel %vm530, %v349, 0
        %vm543 = vcmask 1045504
        %v545 = vsel %vm543, %v494, 0
        %v548 = vsel %vm543, %v495, 0
        %v551 = vsel %vm543, %v496, 0
        %v554 = vsel %vm543, %v497, 0
        %556 = vmatprep.subr.bf16.mxu0 %v491
        %557 = vmatpush1.bf16.msra.mxu0 %v490
        %558 = vmatprep.subr.bf16.mxu0 %v487
        %559 = vmatpush1.bf16.msra.mxu0 %v486
        %560 = vmatprep.subr.bf16.mxu0 %v483
        %561 = vmatpush1.bf16.msra.mxu0 %v482
        %562 = vmatprep.subr.bf16.mxu0 %v479
        %563 = vmatpush1.bf16.msra.mxu0 %v478
        %564 = vmatprep.subr.bf16.mxu0 %v475
        %565 = vmatpush1.bf16.msra.mxu0 %v474
        %566 = vmatprep.subr.bf16.mxu0 %v471
        %567 = vmatpush1.bf16.msra.mxu0 %v470
        %568 = vmatprep.subr.bf16.mxu0 %v467
        %569 = vmatpush1.bf16.msra.mxu0 %v466
        %570 = vmatprep.subr.bf16.mxu0 %v463
        %571 = vmatpush1.bf16.msra.mxu0 %v462
        %572 = vmatprep.subr.bf16.mxu0 0
        %573 = vmatpush2.bf16.msra.mxu0 0
        %574 = vmatprep.subr.bf16.mxu0 0
        %575 = vmatpush2.bf16.msra.mxu0 0
        %576 = vmatprep.subr.bf16.mxu0 0
        %577 = vmatpush2.bf16.msra.mxu0 0
        %578 = vmatprep.subr.bf16.mxu0 0
        %579 = vmatpush2.bf16.msra.mxu0 0
        %580 = vmatprep.subr.bf16.mxu0 0
        %581 = vmatpush2.bf16.msra.mxu0 0
        %582 = vmatprep.subr.bf16.mxu0 0
        %583 = vmatpush2.bf16.msra.mxu0 0
        %584 = vmatprep.subr.bf16.mxu0 0
        %585 = vmatpush2.bf16.msra.mxu0 0
        %586 = vmatprep.subr.bf16.mxu0 %v548
        %587 = vmatpush2.bf16.msra.mxu0 %v545
        %588 = vmatprep.mubr.bf16.mxu0 %v532
        %589 = vmatmul.mubr.bf16.gmra.mxu0 %v342
        %v590 = vpop.f32.mrf.mxu0
        %v591 = vadd.f32 0.0, %v590
        %v592 = vpop.f32.mrf.mxu0
        %v593 = vadd.f32 0.0, %v592
        %v594 = vpop.f32.mrf.mxu0
        %v595 = vadd.f32 0.0, %v594
        %v596 = vpop.f32.mrf.mxu0
        %v597 = vadd.f32 0.0, %v596
        %598 = vmatprep.mubr.bf16.mxu0 %v535
        %599 = vmatmul.mubr.bf16.gmra.mxu0 %v344
        %v600 = vpop.f32.mrf.mxu0
        %v601 = vadd.f32 0.0, %v600
        %v602 = vpop.f32.mrf.mxu0
        %v603 = vadd.f32 0.0, %v602
        %v604 = vpop.f32.mrf.mxu0
        %v605 = vadd.f32 0.0, %v604
        %v606 = vpop.f32.mrf.mxu0
        %v607 = vadd.f32 0.0, %v606
        %608 = vmatprep.mubr.bf16.mxu0 %v538
        %609 = vmatmul.mubr.bf16.gmra.mxu0 %v346
        %v610 = vpop.f32.mrf.mxu0
        %v611 = vadd.f32 0.0, %v610
        %v612 = vpop.f32.mrf.mxu0
        %v613 = vadd.f32 0.0, %v612
        %v614 = vpop.f32.mrf.mxu0
        %v615 = vadd.f32 0.0, %v614
        %v616 = vpop.f32.mrf.mxu0
        %v617 = vadd.f32 0.0, %v616
        %618 = vmatprep.mubr.bf16.mxu0 %v541
        %619 = vmatmul.mubr.bf16.gmra.mxu0 %v348
        %v620 = vpop.f32.mrf.mxu0
        %v621 = vadd.f32 0.0, %v620
        %v622 = vpop.f32.mrf.mxu0
        %v623 = vadd.f32 0.0, %v622
        %v624 = vpop.f32.mrf.mxu0
        %v625 = vpop.f32.mrf.mxu0
        %626 = vdwg.mxu0
        %627 = vmatprep.subr.bf16.mxu0 %v493
        %628 = vmatpush1.bf16.msra.mxu0 %v492
        %629 = vmatprep.subr.bf16.mxu0 %v489
        %630 = vmatpush1.bf16.msra.mxu0 %v488
        %631 = vmatprep.subr.bf16.mxu0 %v485
        %632 = vmatpush1.bf16.msra.mxu0 %v484
        %633 = vmatprep.subr.bf16.mxu0 %v481
        %634 = vmatpush1.bf16.msra.mxu0 %v480
        %635 = vmatprep.subr.bf16.mxu0 %v477
        %636 = vmatpush1.bf16.msra.mxu0 %v476
        %637 = vmatprep.subr.bf16.mxu0 %v473
        %638 = vmatpush1.bf16.msra.mxu0 %v472
        %639 = vmatprep.subr.bf16.mxu0 %v469
        %640 = vmatpush1.bf16.msra.mxu0 %v468
        %641 = vmatprep.subr.bf16.mxu0 %v465
        %642 = vmatpush1.bf16.msra.mxu0 %v464
        %643 = vmatprep.subr.bf16.mxu0 0
        %644 = vmatpush2.bf16.msra.mxu0 0
        %645 = vmatprep.subr.bf16.mxu0 0
        %646 = vmatpush2.bf16.msra.mxu0 0
        %647 = vmatprep.subr.bf16.mxu0 0
        %648 = vmatpush2.bf16.msra.mxu0 0
        %649 = vmatprep.subr.bf16.mxu0 0
        %650 = vmatpush2.bf16.msra.mxu0 0
        %651 = vmatprep.subr.bf16.mxu0 0
        %652 = vmatpush2.bf16.msra.mxu0 0
        %653 = vmatprep.subr.bf16.mxu0 0
        %654 = vmatpush2.bf16.msra.mxu0 0
        %655 = vmatprep.subr.bf16.mxu0 0
        %656 = vmatpush2.bf16.msra.mxu0 0
        %657 = vmatprep.subr.bf16.mxu0 %v554
        %658 = vmatpush2.bf16.msra.mxu0 %v551
        %659 = vmatprep.mubr.bf16.mxu0 %v532
        %660 = vmatmul.mubr.bf16.gmra.mxu0 %v342
        %v661 = vpop.f32.mrf.mxu0
        %v662 = vadd.f32 0.0, %v661
        %v663 = vpop.f32.mrf.mxu0
        %v664 = vadd.f32 0.0, %v663
        %v665 = vpop.f32.mrf.mxu0
        %v666 = vadd.f32 0.0, %v665
        %v667 = vpop.f32.mrf.mxu0
        %v668 = vadd.f32 0.0, %v667
        %669 = vmatprep.mubr.bf16.mxu0 %v535
        %670 = vmatmul.mubr.bf16.gmra.mxu0 %v344
        %v671 = vpop.f32.mrf.mxu0
        %v672 = vadd.f32 0.0, %v671
        %v673 = vpop.f32.mrf.mxu0
        %v674 = vadd.f32 0.0, %v673
        %v675 = vpop.f32.mrf.mxu0
        %v676 = vadd.f32 0.0, %v675
        %v677 = vpop.f32.mrf.mxu0
        %v678 = vadd.f32 0.0, %v677
        %679 = vmatprep.mubr.bf16.mxu0 %v538
        %680 = vmatmul.mubr.bf16.gmra.mxu0 %v346
        %v681 = vpop.f32.mrf.mxu0
        %v682 = vadd.f32 0.0, %v681
        %v683 = vpop.f32.mrf.mxu0
        %v684 = vadd.f32 0.0, %v683
        %v685 = vpop.f32.mrf.mxu0
        %v686 = vadd.f32 0.0, %v685
        %v687 = vpop.f32.mrf.mxu0
        %v688 = vadd.f32 0.0, %v687
        %689 = vmatprep.mubr.bf16.mxu0 %v541
        %690 = vmatmul.mubr.bf16.gmra.mxu0 %v348
        %v691 = vpop.f32.mrf.mxu0
        %v692 = vadd.f32 0.0, %v691
        %v693 = vpop.f32.mrf.mxu0
        %v694 = vadd.f32 0.0, %v693
        %v695 = vpop.f32.mrf.mxu0
        %v696 = vpop.f32.mrf.mxu0
        %697 = vdwg.mxu0
        %s698 = scalar_lea.vmem %s276, 56
        %v699 = vld [vmem:[%s698] sm:$0xff]
        %v700 = vld [vmem:[%s698 + $0x8] sm:$0xff]
        %v701 = vld [vmem:[%s698 + $0x10] sm:$0xff]
        %v702 = vld [vmem:[%s698 + $0x18] sm:$0xff]
        %v703 = vld [vmem:[%s698 + $0x20] sm:$0xff]
        %v704 = vld [vmem:[%s698 + $0x28] sm:$0xff]
        %v705 = vld [vmem:[%s698 + $0x30] sm:$0xff]
        %v713 = vunpack.c.l.b16 %v699
        %v714 = vunpack.c.h.b16 %v699
        %v715 = vunpack.c.l.b16 %v700
        %v716 = vunpack.c.h.b16 %v700
        %v717 = vunpack.c.l.b16 %v701
        %v718 = vunpack.c.h.b16 %v701
        %v719 = vunpack.c.l.b16 %v702
        %v720 = vunpack.c.h.b16 %v702
        %v721 = vunpack.c.l.b16 %v703
        %v722 = vunpack.c.h.b16 %v703
        %v723 = vunpack.c.l.b16 %v704
        %v724 = vunpack.c.h.b16 %v704
        %v725 = vunpack.c.l.b16 %v705
        %v726 = vunpack.c.h.b16 %v705
        %v727 = vpack.c.b16 %v715, %v713
        %v728 = vpack.c.b16 %v716, %v714
        %v729 = vpack.c.b16 %v719, %v717
        %v730 = vpack.c.b16 %v720, %v718
        %v731 = vpack.c.b16 %v723, %v721
        %v732 = vpack.c.b16 %v724, %v722
        %v733 = vpack.c.b16 %v725, %v725
        %v734 = vpack.c.b16 %v726, %v726
        %v740 = vsel %vm530, %v728, 0
        %v743 = vsel %vm530, %v730, 0
        %v746 = vsel %vm530, %v732, 0
        %v749 = vsel %vm530, %v734, 0
        %751 = vmatprep.subr.bf16.mxu0 %v491
        %752 = vmatpush1.bf16.msra.mxu0 %v490
        %753 = vmatprep.subr.bf16.mxu0 %v487
        %754 = vmatpush1.bf16.msra.mxu0 %v486
        %755 = vmatprep.subr.bf16.mxu0 %v483
        %756 = vmatpush1.bf16.msra.mxu0 %v482
        %757 = vmatprep.subr.bf16.mxu0 %v479
        %758 = vmatpush1.bf16.msra.mxu0 %v478
        %759 = vmatprep.subr.bf16.mxu0 %v475
        %760 = vmatpush1.bf16.msra.mxu0 %v474
        %761 = vmatprep.subr.bf16.mxu0 %v471
        %762 = vmatpush1.bf16.msra.mxu0 %v470
        %763 = vmatprep.subr.bf16.mxu0 %v467
        %764 = vmatpush1.bf16.msra.mxu0 %v466
        %765 = vmatprep.subr.bf16.mxu0 %v463
        %766 = vmatpush1.bf16.msra.mxu0 %v462
        %767 = vmatprep.subr.bf16.mxu0 0
        %768 = vmatpush2.bf16.msra.mxu0 0
        %769 = vmatprep.subr.bf16.mxu0 0
        %770 = vmatpush2.bf16.msra.mxu0 0
        %771 = vmatprep.subr.bf16.mxu0 0
        %772 = vmatpush2.bf16.msra.mxu0 0
        %773 = vmatprep.subr.bf16.mxu0 0
        %774 = vmatpush2.bf16.msra.mxu0 0
        %775 = vmatprep.subr.bf16.mxu0 0
        %776 = vmatpush2.bf16.msra.mxu0 0
        %777 = vmatprep.subr.bf16.mxu0 0
        %778 = vmatpush2.bf16.msra.mxu0 0
        %779 = vmatprep.subr.bf16.mxu0 0
        %780 = vmatpush2.bf16.msra.mxu0 0
        %781 = vmatprep.subr.bf16.mxu0 %v548
        %782 = vmatpush2.bf16.msra.mxu0 %v545
        %783 = vmatprep.mubr.bf16.mxu0 %v740
        %784 = vmatmul.mubr.bf16.gmra.mxu0 %v727
        %v785 = vpop.f32.mrf.mxu0
        %v786 = vadd.f32 0.0, %v785
        %v787 = vpop.f32.mrf.mxu0
        %v788 = vadd.f32 0.0, %v787
        %v789 = vpop.f32.mrf.mxu0
        %v790 = vadd.f32 0.0, %v789
        %v791 = vpop.f32.mrf.mxu0
        %v792 = vadd.f32 0.0, %v791
        %793 = vmatprep.mubr.bf16.mxu0 %v743
        %794 = vmatmul.mubr.bf16.gmra.mxu0 %v729
        %v795 = vpop.f32.mrf.mxu0
        %v796 = vadd.f32 0.0, %v795
        %v797 = vpop.f32.mrf.mxu0
        %v798 = vadd.f32 0.0, %v797
        %v799 = vpop.f32.mrf.mxu0
        %v800 = vadd.f32 0.0, %v799
        %v801 = vpop.f32.mrf.mxu0
        %v802 = vadd.f32 0.0, %v801
        %803 = vmatprep.mubr.bf16.mxu0 %v746
        %804 = vmatmul.mubr.bf16.gmra.mxu0 %v731
        %v805 = vpop.f32.mrf.mxu0
        %v806 = vadd.f32 0.0, %v805
        %v807 = vpop.f32.mrf.mxu0
        %v808 = vadd.f32 0.0, %v807
        %v809 = vpop.f32.mrf.mxu0
        %v810 = vadd.f32 0.0, %v809
        %v811 = vpop.f32.mrf.mxu0
        %v812 = vadd.f32 0.0, %v811
        %813 = vmatprep.mubr.bf16.mxu0 %v749
        %814 = vmatmul.mubr.bf16.gmra.mxu0 %v733
        %v815 = vpop.f32.mrf.mxu0
        %v816 = vadd.f32 0.0, %v815
        %v817 = vpop.f32.mrf.mxu0
        %v818 = vadd.f32 0.0, %v817
        %v819 = vpop.f32.mrf.mxu0
        %v820 = vpop.f32.mrf.mxu0
        %821 = vdwg.mxu0
        %822 = vmatprep.subr.bf16.mxu0 %v493
        %823 = vmatpush1.bf16.msra.mxu0 %v492
        %824 = vmatprep.subr.bf16.mxu0 %v489
        %825 = vmatpush1.bf16.msra.mxu0 %v488
        %826 = vmatprep.subr.bf16.mxu0 %v485
        %827 = vmatpush1.bf16.msra.mxu0 %v484
        %828 = vmatprep.subr.bf16.mxu0 %v481
        %829 = vmatpush1.bf16.msra.mxu0 %v480
        %830 = vmatprep.subr.bf16.mxu0 %v477
        %831 = vmatpush1.bf16.msra.mxu0 %v476
        %832 = vmatprep.subr.bf16.mxu0 %v473
        %833 = vmatpush1.bf16.msra.mxu0 %v472
        %834 = vmatprep.subr.bf16.mxu0 %v469
        %835 = vmatpush1.bf16.msra.mxu0 %v468
        %836 = vmatprep.subr.bf16.mxu0 %v465
        %837 = vmatpush1.bf16.msra.mxu0 %v464
        %838 = vmatprep.subr.bf16.mxu0 0
        %839 = vmatpush2.bf16.msra.mxu0 0
        %840 = vmatprep.subr.bf16.mxu0 0
        %841 = vmatpush2.bf16.msra.mxu0 0
        %842 = vmatprep.subr.bf16.mxu0 0
        %843 = vmatpush2.bf16.msra.mxu0 0
        %844 = vmatprep.subr.bf16.mxu0 0
        %845 = vmatpush2.bf16.msra.mxu0 0
        %846 = vmatprep.subr.bf16.mxu0 0
        %847 = vmatpush2.bf16.msra.mxu0 0
        %848 = vmatprep.subr.bf16.mxu0 0
        %849 = vmatpush2.bf16.msra.mxu0 0
        %850 = vmatprep.subr.bf16.mxu0 0
        %851 = vmatpush2.bf16.msra.mxu0 0
        %852 = vmatprep.subr.bf16.mxu0 %v554
        %853 = vmatpush2.bf16.msra.mxu0 %v551
        %854 = vmatprep.mubr.bf16.mxu0 %v740
        %855 = vmatmul.mubr.bf16.gmra.mxu0 %v727
        %v856 = vpop.f32.mrf.mxu0
        %v857 = vadd.f32 0.0, %v856
        %v858 = vpop.f32.mrf.mxu0
        %v859 = vadd.f32 0.0, %v858
        %v860 = vpop.f32.mrf.mxu0
        %v861 = vadd.f32 0.0, %v860
        %v862 = vpop.f32.mrf.mxu0
        %v863 = vadd.f32 0.0, %v862
        %864 = vmatprep.mubr.bf16.mxu0 %v743
        %865 = vmatmul.mubr.bf16.gmra.mxu0 %v729
        %v866 = vpop.f32.mrf.mxu0
        %v867 = vadd.f32 0.0, %v866
        %v868 = vpop.f32.mrf.mxu0
        %v869 = vadd.f32 0.0, %v868
        %v870 = vpop.f32.mrf.mxu0
        %v871 = vadd.f32 0.0, %v870
        %v872 = vpop.f32.mrf.mxu0
        %v873 = vadd.f32 0.0, %v872
        %874 = vmatprep.mubr.bf16.mxu0 %v746
        %875 = vmatmul.mubr.bf16.gmra.mxu0 %v731
        %v876 = vpop.f32.mrf.mxu0
        %v877 = vadd.f32 0.0, %v876
        %v878 = vpop.f32.mrf.mxu0
        %v879 = vadd.f32 0.0, %v878
        %v880 = vpop.f32.mrf.mxu0
        %v881 = vadd.f32 0.0, %v880
        %v882 = vpop.f32.mrf.mxu0
        %v883 = vadd.f32 0.0, %v882
        %884 = vmatprep.mubr.bf16.mxu0 %v749
        %885 = vmatmul.mubr.bf16.gmra.mxu0 %v733
        %v886 = vpop.f32.mrf.mxu0
        %v887 = vadd.f32 0.0, %v886
        %v888 = vpop.f32.mrf.mxu0
        %v889 = vadd.f32 0.0, %v888
        %v890 = vpop.f32.mrf.mxu0
        %v891 = vpop.f32.mrf.mxu0
        %892 = vdwg.mxu0
        %v893 = vld [vmem:[%s2] sm:$0x3]
        %v894 = vmax.f32 %v591, %v786
        %v895 = vmax.f32 %v593, %v788
        %v896 = vmax.f32 %v662, %v857
        %v897 = vmax.f32 %v664, %v859
        %v898 = vmax.f32 %v595, %v790
        %v899 = vmax.f32 %v597, %v792
        %v900 = vmax.f32 %v666, %v861
        %v901 = vmax.f32 %v668, %v863
        %v902 = vmax.f32 %v601, %v796
        %v903 = vmax.f32 %v603, %v798
        %v904 = vmax.f32 %v672, %v867
        %v905 = vmax.f32 %v674, %v869
        %v906 = vmax.f32 %v605, %v800
        %v907 = vmax.f32 %v607, %v802
        %v908 = vmax.f32 %v676, %v871
        %v909 = vmax.f32 %v678, %v873
        %v910 = vmax.f32 %v611, %v806
        %v911 = vmax.f32 %v613, %v808
        %v912 = vmax.f32 %v682, %v877
        %v913 = vmax.f32 %v684, %v879
        %v914 = vmax.f32 %v615, %v810
        %v915 = vmax.f32 %v617, %v812
        %v916 = vmax.f32 %v686, %v881
        %v917 = vmax.f32 %v688, %v883
        %v918 = vmax.f32 %v621, %v816
        %v919 = vmax.f32 %v623, %v818
        %v920 = vmax.f32 %v692, %v887
        %v921 = vmax.f32 %v694, %v889
        %v922 = vmax.f32 %v894, %v896
        %v923 = vmax.f32 %v895, %v897
        %v924 = vmax.f32 %v898, %v900
        %v925 = vmax.f32 %v899, %v901
        %v926 = vmax.f32 %v902, %v904
        %v927 = vmax.f32 %v903, %v905
        %v928 = vmax.f32 %v906, %v908
        %v929 = vmax.f32 %v907, %v909
        %v930 = vmax.f32 %v910, %v912
        %v931 = vmax.f32 %v911, %v913
        %v932 = vmax.f32 %v914, %v916
        %v933 = vmax.f32 %v915, %v917
        %v934 = vmax.f32 %v918, %v920
        %v935 = vmax.f32 %v919, %v921
        %v937 = vlaneseq
        %v938 = vshrl.u32 %v937, 7
        %v939 = vsub.s32 0, %v938
        %v940 = vrot.slane %v893, %v939
        %v941 = vlaneseq
        %v942 = vshrl.u32 %v941, 7
        %v943 = vsub.s32 1, %v942
        %v944 = vrot.slane %v893, %v943
        %v947 = vadd.f32 %v922, %v940
        %v948 = vadd.f32 %v923, %v944
        %v949 = vadd.f32 %v924, %v940
        %v950 = vadd.f32 %v925, %v944
        %v951 = vadd.f32 %v926, %v940
        %v952 = vadd.f32 %v927, %v944
        %v953 = vadd.f32 %v928, %v940
        %v954 = vadd.f32 %v929, %v944
        %v955 = vadd.f32 %v930, %v940
        %v956 = vadd.f32 %v931, %v944
        %v957 = vadd.f32 %v932, %v940
        %v958 = vadd.f32 %v933, %v944
        %v959 = vadd.f32 %v934, %v940
        %v960 = vadd.f32 %v935, %v944
        %v961 = vmax.f32 %v947, 0.0
        %v962 = vmax.f32 %v948, 0.0
        %v963 = vmax.f32 %v949, 0.0
        %v964 = vmax.f32 %v950, 0.0
        %v965 = vmax.f32 %v951, 0.0
        %v966 = vmax.f32 %v952, 0.0
        %v967 = vmax.f32 %v953, 0.0
        %v968 = vmax.f32 %v954, 0.0
        %v969 = vmax.f32 %v955, 0.0
        %v970 = vmax.f32 %v956, 0.0
        %v971 = vmax.f32 %v957, 0.0
        %v972 = vmax.f32 %v958, 0.0
        %v973 = vmax.f32 %v959, 0.0
        %v974 = vmax.f32 %v960, 0.0
        %s975 = scalar_lea.vmem %s276, 112
        %v976 = vld [vmem:[%s975] sm:$0xff]
        %v977 = vld [vmem:[%s975 + $0x8] sm:$0xff]
        %v978 = vld [vmem:[%s975 + $0x10] sm:$0xff]
        %v979 = vld [vmem:[%s975 + $0x18] sm:$0xff]
        %v980 = vld [vmem:[%s975 + $0x20] sm:$0xff]
        %v981 = vld [vmem:[%s975 + $0x28] sm:$0xff]
        %v982 = vld [vmem:[%s975 + $0x30] sm:$0xff]
        %v990 = vunpack.c.l.b16 %v976
        %v991 = vunpack.c.h.b16 %v976
        %v992 = vunpack.c.l.b16 %v977
        %v993 = vunpack.c.h.b16 %v977
        %v994 = vunpack.c.l.b16 %v978
        %v995 = vunpack.c.h.b16 %v978
        %v996 = vunpack.c.l.b16 %v979
        %v997 = vunpack.c.h.b16 %v979
        %v998 = vunpack.c.l.b16 %v980
        %v999 = vunpack.c.h.b16 %v980
        %v1000 = vunpack.c.l.b16 %v981
        %v1001 = vunpack.c.h.b16 %v981
        %v1002 = vunpack.c.l.b16 %v982
        %v1003 = vunpack.c.h.b16 %v982
        %v1004 = vpack.c.b16 %v992, %v990
        %v1005 = vpack.c.b16 %v993, %v991
        %v1006 = vpack.c.b16 %v996, %v994
        %v1007 = vpack.c.b16 %v997, %v995
        %v1008 = vpack.c.b16 %v1000, %v998
        %v1009 = vpack.c.b16 %v1001, %v999
        %v1010 = vpack.c.b16 %v1002, %v1002
        %v1011 = vpack.c.b16 %v1003, %v1003
        %v1017 = vsel %vm530, %v1005, 0
        %v1020 = vsel %vm530, %v1007, 0
        %v1023 = vsel %vm530, %v1009, 0
        %v1026 = vsel %vm530, %v1011, 0
        %1028 = vmatprep.subr.bf16.mxu0 %v491
        %1029 = vmatpush1.bf16.msra.mxu0 %v490
        %1030 = vmatprep.subr.bf16.mxu0 %v487
        %1031 = vmatpush1.bf16.msra.mxu0 %v486
        %1032 = vmatprep.subr.bf16.mxu0 %v483
        %1033 = vmatpush1.bf16.msra.mxu0 %v482
        %1034 = vmatprep.subr.bf16.mxu0 %v479
        %1035 = vmatpush1.bf16.msra.mxu0 %v478
        %1036 = vmatprep.subr.bf16.mxu0 %v475
        %1037 = vmatpush1.bf16.msra.mxu0 %v474
        %1038 = vmatprep.subr.bf16.mxu0 %v471
        %1039 = vmatpush1.bf16.msra.mxu0 %v470
        %1040 = vmatprep.subr.bf16.mxu0 %v467
        %1041 = vmatpush1.bf16.msra.mxu0 %v466
        %1042 = vmatprep.subr.bf16.mxu0 %v463
        %1043 = vmatpush1.bf16.msra.mxu0 %v462
        %1044 = vmatprep.subr.bf16.mxu0 0
        %1045 = vmatpush2.bf16.msra.mxu0 0
        %1046 = vmatprep.subr.bf16.mxu0 0
        %1047 = vmatpush2.bf16.msra.mxu0 0
        %1048 = vmatprep.subr.bf16.mxu0 0
        %1049 = vmatpush2.bf16.msra.mxu0 0
        %1050 = vmatprep.subr.bf16.mxu0 0
        %1051 = vmatpush2.bf16.msra.mxu0 0
        %1052 = vmatprep.subr.bf16.mxu0 0
        %1053 = vmatpush2.bf16.msra.mxu0 0
        %1054 = vmatprep.subr.bf16.mxu0 0
        %1055 = vmatpush2.bf16.msra.mxu0 0
        %1056 = vmatprep.subr.bf16.mxu0 0
        %1057 = vmatpush2.bf16.msra.mxu0 0
        %1058 = vmatprep.subr.bf16.mxu0 %v548
        %1059 = vmatpush2.bf16.msra.mxu0 %v545
        %1060 = vmatprep.mubr.bf16.mxu0 %v1017
        %1061 = vmatmul.mubr.bf16.gmra.mxu0 %v1004
        %v1062 = vpop.f32.mrf.mxu0
        %v1063 = vadd.f32 0.0, %v1062
        %v1064 = vpop.f32.mrf.mxu0
        %v1065 = vadd.f32 0.0, %v1064
        %v1066 = vpop.f32.mrf.mxu0
        %v1067 = vadd.f32 0.0, %v1066
        %v1068 = vpop.f32.mrf.mxu0
        %v1069 = vadd.f32 0.0, %v1068
        %1070 = vmatprep.mubr.bf16.mxu0 %v1020
        %1071 = vmatmul.mubr.bf16.gmra.mxu0 %v1006
        %v1072 = vpop.f32.mrf.mxu0
        %v1073 = vadd.f32 0.0, %v1072
        %v1074 = vpop.f32.mrf.mxu0
        %v1075 = vadd.f32 0.0, %v1074
        %v1076 = vpop.f32.mrf.mxu0
        %v1077 = vadd.f32 0.0, %v1076
        %v1078 = vpop.f32.mrf.mxu0
        %v1079 = vadd.f32 0.0, %v1078
        %1080 = vmatprep.mubr.bf16.mxu0 %v1023
        %1081 = vmatmul.mubr.bf16.gmra.mxu0 %v1008
        %v1082 = vpop.f32.mrf.mxu0
        %v1083 = vadd.f32 0.0, %v1082
        %v1084 = vpop.f32.mrf.mxu0
        %v1085 = vadd.f32 0.0, %v1084
        %v1086 = vpop.f32.mrf.mxu0
        %v1087 = vadd.f32 0.0, %v1086
        %v1088 = vpop.f32.mrf.mxu0
        %v1089 = vadd.f32 0.0, %v1088
        %1090 = vmatprep.mubr.bf16.mxu0 %v1026
        %1091 = vmatmul.mubr.bf16.gmra.mxu0 %v1010
        %v1092 = vpop.f32.mrf.mxu0
        %v1093 = vadd.f32 0.0, %v1092
        %v1094 = vpop.f32.mrf.mxu0
        %v1095 = vadd.f32 0.0, %v1094
        %v1096 = vpop.f32.mrf.mxu0
        %v1097 = vpop.f32.mrf.mxu0
        %1098 = vdwg.mxu0
        %1099 = vmatprep.subr.bf16.mxu0 %v493
        %1100 = vmatpush1.bf16.msra.mxu0 %v492
        %1101 = vmatprep.subr.bf16.mxu0 %v489
        %1102 = vmatpush1.bf16.msra.mxu0 %v488
        %1103 = vmatprep.subr.bf16.mxu0 %v485
        %1104 = vmatpush1.bf16.msra.mxu0 %v484
        %1105 = vmatprep.subr.bf16.mxu0 %v481
        %1106 = vmatpush1.bf16.msra.mxu0 %v480
        %1107 = vmatprep.subr.bf16.mxu0 %v477
        %1108 = vmatpush1.bf16.msra.mxu0 %v476
        %1109 = vmatprep.subr.bf16.mxu0 %v473
        %1110 = vmatpush1.bf16.msra.mxu0 %v472
        %1111 = vmatprep.subr.bf16.mxu0 %v469
        %1112 = vmatpush1.bf16.msra.mxu0 %v468
        %1113 = vmatprep.subr.bf16.mxu0 %v465
        %1114 = vmatpush1.bf16.msra.mxu0 %v464
        %1115 = vmatprep.subr.bf16.mxu0 0
        %1116 = vmatpush2.bf16.msra.mxu0 0
        %1117 = vmatprep.subr.bf16.mxu0 0
        %1118 = vmatpush2.bf16.msra.mxu0 0
        %1119 = vmatprep.subr.bf16.mxu0 0
        %1120 = vmatpush2.bf16.msra.mxu0 0
        %1121 = vmatprep.subr.bf16.mxu0 0
        %1122 = vmatpush2.bf16.msra.mxu0 0
        %1123 = vmatprep.subr.bf16.mxu0 0
        %1124 = vmatpush2.bf16.msra.mxu0 0
        %1125 = vmatprep.subr.bf16.mxu0 0
        %1126 = vmatpush2.bf16.msra.mxu0 0
        %1127 = vmatprep.subr.bf16.mxu0 0
        %1128 = vmatpush2.bf16.msra.mxu0 0
        %1129 = vmatprep.subr.bf16.mxu0 %v554
        %1130 = vmatpush2.bf16.msra.mxu0 %v551
        %1131 = vmatprep.mubr.bf16.mxu0 %v1017
        %1132 = vmatmul.mubr.bf16.gmra.mxu0 %v1004
        %v1133 = vpop.f32.mrf.mxu0
        %v1134 = vadd.f32 0.0, %v1133
        %v1135 = vpop.f32.mrf.mxu0
        %v1136 = vadd.f32 0.0, %v1135
        %v1137 = vpop.f32.mrf.mxu0
        %v1138 = vadd.f32 0.0, %v1137
        %v1139 = vpop.f32.mrf.mxu0
        %v1140 = vadd.f32 0.0, %v1139
        %1141 = vmatprep.mubr.bf16.mxu0 %v1020
        %1142 = vmatmul.mubr.bf16.gmra.mxu0 %v1006
        %v1143 = vpop.f32.mrf.mxu0
        %v1144 = vadd.f32 0.0, %v1143
        %v1145 = vpop.f32.mrf.mxu0
        %v1146 = vadd.f32 0.0, %v1145
        %v1147 = vpop.f32.mrf.mxu0
        %v1148 = vadd.f32 0.0, %v1147
        %v1149 = vpop.f32.mrf.mxu0
        %v1150 = vadd.f32 0.0, %v1149
        %1151 = vmatprep.mubr.bf16.mxu0 %v1023
        %1152 = vmatmul.mubr.bf16.gmra.mxu0 %v1008
        %v1153 = vpop.f32.mrf.mxu0
        %v1154 = vadd.f32 0.0, %v1153
        %v1155 = vpop.f32.mrf.mxu0
        %v1156 = vadd.f32 0.0, %v1155
        %v1157 = vpop.f32.mrf.mxu0
        %v1158 = vadd.f32 0.0, %v1157
        %v1159 = vpop.f32.mrf.mxu0
        %v1160 = vadd.f32 0.0, %v1159
        %1161 = vmatprep.mubr.bf16.mxu0 %v1026
        %1162 = vmatmul.mubr.bf16.gmra.mxu0 %v1010
        %v1163 = vpop.f32.mrf.mxu0
        %v1164 = vadd.f32 0.0, %v1163
        %v1165 = vpop.f32.mrf.mxu0
        %v1166 = vadd.f32 0.0, %v1165
        %v1167 = vpop.f32.mrf.mxu0
        %v1168 = vpop.f32.mrf.mxu0
        %1169 = vdwg.mxu0
        %s1170 = scalar_lea.vmem %s276, 168
        %v1171 = vld [vmem:[%s1170] sm:$0xff]
        %v1172 = vld [vmem:[%s1170 + $0x8] sm:$0xff]
        %v1173 = vld [vmem:[%s1170 + $0x10] sm:$0xff]
        %v1174 = vld [vmem:[%s1170 + $0x18] sm:$0xff]
        %v1175 = vld [vmem:[%s1170 + $0x20] sm:$0xff]
        %v1176 = vld [vmem:[%s1170 + $0x28] sm:$0xff]
        %v1177 = vld [vmem:[%s1170 + $0x30] sm:$0xff]
        %v1185 = vunpack.c.l.b16 %v1171
        %v1186 = vunpack.c.h.b16 %v1171
        %v1187 = vunpack.c.l.b16 %v1172
        %v1188 = vunpack.c.h.b16 %v1172
        %v1189 = vunpack.c.l.b16 %v1173
        %v1190 = vunpack.c.h.b16 %v1173
        %v1191 = vunpack.c.l.b16 %v1174
        %v1192 = vunpack.c.h.b16 %v1174
        %v1193 = vunpack.c.l.b16 %v1175
        %v1194 = vunpack.c.h.b16 %v1175
        %v1195 = vunpack.c.l.b16 %v1176
        %v1196 = vunpack.c.h.b16 %v1176
        %v1197 = vunpack.c.l.b16 %v1177
        %v1198 = vunpack.c.h.b16 %v1177
        %v1199 = vpack.c.b16 %v1187, %v1185
        %v1200 = vpack.c.b16 %v1188, %v1186
        %v1201 = vpack.c.b16 %v1191, %v1189
        %v1202 = vpack.c.b16 %v1192, %v1190
        %v1203 = vpack.c.b16 %v1195, %v1193
        %v1204 = vpack.c.b16 %v1196, %v1194
        %v1205 = vpack.c.b16 %v1197, %v1197
        %v1206 = vpack.c.b16 %v1198, %v1198
        %v1212 = vsel %vm530, %v1200, 0
        %v1215 = vsel %vm530, %v1202, 0
        %v1218 = vsel %vm530, %v1204, 0
        %v1221 = vsel %vm530, %v1206, 0
        %1223 = vmatprep.subr.bf16.mxu0 %v491
        %1224 = vmatpush1.bf16.msra.mxu0 %v490
        %1225 = vmatprep.subr.bf16.mxu0 %v487
        %1226 = vmatpush1.bf16.msra.mxu0 %v486
        %1227 = vmatprep.subr.bf16.mxu0 %v483
        %1228 = vmatpush1.bf16.msra.mxu0 %v482
        %1229 = vmatprep.subr.bf16.mxu0 %v479
        %1230 = vmatpush1.bf16.msra.mxu0 %v478
        %1231 = vmatprep.subr.bf16.mxu0 %v475
        %1232 = vmatpush1.bf16.msra.mxu0 %v474
        %1233 = vmatprep.subr.bf16.mxu0 %v471
        %1234 = vmatpush1.bf16.msra.mxu0 %v470
        %1235 = vmatprep.subr.bf16.mxu0 %v467
        %1236 = vmatpush1.bf16.msra.mxu0 %v466
        %1237 = vmatprep.subr.bf16.mxu0 %v463
        %1238 = vmatpush1.bf16.msra.mxu0 %v462
        %1239 = vmatprep.subr.bf16.mxu0 0
        %1240 = vmatpush2.bf16.msra.mxu0 0
        %1241 = vmatprep.subr.bf16.mxu0 0
        %1242 = vmatpush2.bf16.msra.mxu0 0
        %1243 = vmatprep.subr.bf16.mxu0 0
        %1244 = vmatpush2.bf16.msra.mxu0 0
        %1245 = vmatprep.subr.bf16.mxu0 0
        %1246 = vmatpush2.bf16.msra.mxu0 0
        %1247 = vmatprep.subr.bf16.mxu0 0
        %1248 = vmatpush2.bf16.msra.mxu0 0
        %1249 = vmatprep.subr.bf16.mxu0 0
        %1250 = vmatpush2.bf16.msra.mxu0 0
        %1251 = vmatprep.subr.bf16.mxu0 0
        %1252 = vmatpush2.bf16.msra.mxu0 0
        %1253 = vmatprep.subr.bf16.mxu0 %v548
        %1254 = vmatpush2.bf16.msra.mxu0 %v545
        %1255 = vmatprep.mubr.bf16.mxu0 %v1212
        %1256 = vmatmul.mubr.bf16.gmra.mxu0 %v1199
        %v1257 = vpop.f32.mrf.mxu0
        %v1258 = vadd.f32 0.0, %v1257
        %v1259 = vpop.f32.mrf.mxu0
        %v1260 = vadd.f32 0.0, %v1259
        %v1261 = vpop.f32.mrf.mxu0
        %v1262 = vadd.f32 0.0, %v1261
        %v1263 = vpop.f32.mrf.mxu0
        %v1264 = vadd.f32 0.0, %v1263
        %1265 = vmatprep.mubr.bf16.mxu0 %v1215
        %1266 = vmatmul.mubr.bf16.gmra.mxu0 %v1201
        %v1267 = vpop.f32.mrf.mxu0
        %v1268 = vadd.f32 0.0, %v1267
        %v1269 = vpop.f32.mrf.mxu0
        %v1270 = vadd.f32 0.0, %v1269
        %v1271 = vpop.f32.mrf.mxu0
        %v1272 = vadd.f32 0.0, %v1271
        %v1273 = vpop.f32.mrf.mxu0
        %v1274 = vadd.f32 0.0, %v1273
        %1275 = vmatprep.mubr.bf16.mxu0 %v1218
        %1276 = vmatmul.mubr.bf16.gmra.mxu0 %v1203
        %v1277 = vpop.f32.mrf.mxu0
        %v1278 = vadd.f32 0.0, %v1277
        %v1279 = vpop.f32.mrf.mxu0
        %v1280 = vadd.f32 0.0, %v1279
        %v1281 = vpop.f32.mrf.mxu0
        %v1282 = vadd.f32 0.0, %v1281
        %v1283 = vpop.f32.mrf.mxu0
        %v1284 = vadd.f32 0.0, %v1283
        %1285 = vmatprep.mubr.bf16.mxu0 %v1221
        %1286 = vmatmul.mubr.bf16.gmra.mxu0 %v1205
        %v1287 = vpop.f32.mrf.mxu0
        %v1288 = vadd.f32 0.0, %v1287
        %v1289 = vpop.f32.mrf.mxu0
        %v1290 = vadd.f32 0.0, %v1289
        %v1291 = vpop.f32.mrf.mxu0
        %v1292 = vpop.f32.mrf.mxu0
        %1293 = vdwg.mxu0
        %1294 = vmatprep.subr.bf16.mxu0 %v493
        %1295 = vmatpush1.bf16.msra.mxu0 %v492
        %1296 = vmatprep.subr.bf16.mxu0 %v489
        %1297 = vmatpush1.bf16.msra.mxu0 %v488
        %1298 = vmatprep.subr.bf16.mxu0 %v485
        %1299 = vmatpush1.bf16.msra.mxu0 %v484
        %1300 = vmatprep.subr.bf16.mxu0 %v481
        %1301 = vmatpush1.bf16.msra.mxu0 %v480
        %1302 = vmatprep.subr.bf16.mxu0 %v477
        %1303 = vmatpush1.bf16.msra.mxu0 %v476
        %1304 = vmatprep.subr.bf16.mxu0 %v473
        %1305 = vmatpush1.bf16.msra.mxu0 %v472
        %1306 = vmatprep.subr.bf16.mxu0 %v469
        %1307 = vmatpush1.bf16.msra.mxu0 %v468
        %1308 = vmatprep.subr.bf16.mxu0 %v465
        %1309 = vmatpush1.bf16.msra.mxu0 %v464
        %1310 = vmatprep.subr.bf16.mxu0 0
        %1311 = vmatpush2.bf16.msra.mxu0 0
        %1312 = vmatprep.subr.bf16.mxu0 0
        %1313 = vmatpush2.bf16.msra.mxu0 0
        %1314 = vmatprep.subr.bf16.mxu0 0
        %1315 = vmatpush2.bf16.msra.mxu0 0
        %1316 = vmatprep.subr.bf16.mxu0 0
        %1317 = vmatpush2.bf16.msra.mxu0 0
        %1318 = vmatprep.subr.bf16.mxu0 0
        %1319 = vmatpush2.bf16.msra.mxu0 0
        %1320 = vmatprep.subr.bf16.mxu0 0
        %1321 = vmatpush2.bf16.msra.mxu0 0
        %1322 = vmatprep.subr.bf16.mxu0 0
        %1323 = vmatpush2.bf16.msra.mxu0 0
        %1324 = vmatprep.subr.bf16.mxu0 %v554
        %1325 = vmatpush2.bf16.msra.mxu0 %v551
        %1326 = vmatprep.mubr.bf16.mxu0 %v1212
        %1327 = vmatmul.mubr.bf16.gmra.mxu0 %v1199
        %v1328 = vpop.f32.mrf.mxu0
        %v1329 = vadd.f32 0.0, %v1328
        %v1330 = vpop.f32.mrf.mxu0
        %v1331 = vadd.f32 0.0, %v1330
        %v1332 = vpop.f32.mrf.mxu0
        %v1333 = vadd.f32 0.0, %v1332
        %v1334 = vpop.f32.mrf.mxu0
        %v1335 = vadd.f32 0.0, %v1334
        %1336 = vmatprep.mubr.bf16.mxu0 %v1215
        %1337 = vmatmul.mubr.bf16.gmra.mxu0 %v1201
        %v1338 = vpop.f32.mrf.mxu0
        %v1339 = vadd.f32 0.0, %v1338
        %v1340 = vpop.f32.mrf.mxu0
        %v1341 = vadd.f32 0.0, %v1340
        %v1342 = vpop.f32.mrf.mxu0
        %v1343 = vadd.f32 0.0, %v1342
        %v1344 = vpop.f32.mrf.mxu0
        %v1345 = vadd.f32 0.0, %v1344
        %1346 = vmatprep.mubr.bf16.mxu0 %v1218
        %1347 = vmatmul.mubr.bf16.gmra.mxu0 %v1203
        %v1348 = vpop.f32.mrf.mxu0
        %v1349 = vadd.f32 0.0, %v1348
        %v1350 = vpop.f32.mrf.mxu0
        %v1351 = vadd.f32 0.0, %v1350
        %v1352 = vpop.f32.mrf.mxu0
        %v1353 = vadd.f32 0.0, %v1352
        %v1354 = vpop.f32.mrf.mxu0
        %v1355 = vadd.f32 0.0, %v1354
        %1356 = vmatprep.mubr.bf16.mxu0 %v1221
        %1357 = vmatmul.mubr.bf16.gmra.mxu0 %v1205
        %v1358 = vpop.f32.mrf.mxu0
        %v1359 = vadd.f32 0.0, %v1358
        %v1360 = vpop.f32.mrf.mxu0
        %v1361 = vadd.f32 0.0, %v1360
        %v1362 = vpop.f32.mrf.mxu0
        %v1363 = vpop.f32.mrf.mxu0
        %1364 = vdwg.mxu0
        %v1365 = vmax.f32 %v1063, %v1258
        %v1366 = vmax.f32 %v1065, %v1260
        %v1367 = vmax.f32 %v1134, %v1329
        %v1368 = vmax.f32 %v1136, %v1331
        %v1369 = vmax.f32 %v1067, %v1262
        %v1370 = vmax.f32 %v1069, %v1264
        %v1371 = vmax.f32 %v1138, %v1333
        %v1372 = vmax.f32 %v1140, %v1335
        %v1373 = vmax.f32 %v1073, %v1268
        %v1374 = vmax.f32 %v1075, %v1270
        %v1375 = vmax.f32 %v1144, %v1339
        %v1376 = vmax.f32 %v1146, %v1341
        %v1377 = vmax.f32 %v1077, %v1272
        %v1378 = vmax.f32 %v1079, %v1274
        %v1379 = vmax.f32 %v1148, %v1343
        %v1380 = vmax.f32 %v1150, %v1345
        %v1381 = vmax.f32 %v1083, %v1278
        %v1382 = vmax.f32 %v1085, %v1280
        %v1383 = vmax.f32 %v1154, %v1349
        %v1384 = vmax.f32 %v1156, %v1351
        %v1385 = vmax.f32 %v1087, %v1282
        %v1386 = vmax.f32 %v1089, %v1284
        %v1387 = vmax.f32 %v1158, %v1353
        %v1388 = vmax.f32 %v1160, %v1355
        %v1389 = vmax.f32 %v1093, %v1288
        %v1390 = vmax.f32 %v1095, %v1290
        %v1391 = vmax.f32 %v1164, %v1359
        %v1392 = vmax.f32 %v1166, %v1361
        %v1393 = vmax.f32 %v1365, %v1367
        %v1394 = vmax.f32 %v1366, %v1368
        %v1395 = vmax.f32 %v1369, %v1371
        %v1396 = vmax.f32 %v1370, %v1372
        %v1397 = vmax.f32 %v1373, %v1375
        %v1398 = vmax.f32 %v1374, %v1376
        %v1399 = vmax.f32 %v1377, %v1379
        %v1400 = vmax.f32 %v1378, %v1380
        %v1401 = vmax.f32 %v1381, %v1383
        %v1402 = vmax.f32 %v1382, %v1384
        %v1403 = vmax.f32 %v1385, %v1387
        %v1404 = vmax.f32 %v1386, %v1388
        %v1405 = vmax.f32 %v1389, %v1391
        %v1406 = vmax.f32 %v1390, %v1392
        %v1407 = vadd.f32 %v1393, %v940
        %v1408 = vadd.f32 %v1394, %v944
        %v1409 = vadd.f32 %v1395, %v940
        %v1410 = vadd.f32 %v1396, %v944
        %v1411 = vadd.f32 %v1397, %v940
        %v1412 = vadd.f32 %v1398, %v944
        %v1413 = vadd.f32 %v1399, %v940
        %v1414 = vadd.f32 %v1400, %v944
        %v1415 = vadd.f32 %v1401, %v940
        %v1416 = vadd.f32 %v1402, %v944
        %v1417 = vadd.f32 %v1403, %v940
        %v1418 = vadd.f32 %v1404, %v944
        %v1419 = vadd.f32 %v1405, %v940
        %v1420 = vadd.f32 %v1406, %v944
        %v1421 = vmax.f32 %v1407, 0.0
        %v1422 = vmax.f32 %v1408, 0.0
        %v1423 = vmax.f32 %v1409, 0.0
        %v1424 = vmax.f32 %v1410, 0.0
        %v1425 = vmax.f32 %v1411, 0.0
        %v1426 = vmax.f32 %v1412, 0.0
        %v1427 = vmax.f32 %v1413, 0.0
        %v1428 = vmax.f32 %v1414, 0.0
        %v1429 = vmax.f32 %v1415, 0.0
        %v1430 = vmax.f32 %v1416, 0.0
        %v1431 = vmax.f32 %v1417, 0.0
        %v1432 = vmax.f32 %v1418, 0.0
        %v1433 = vmax.f32 %v1419, 0.0
        %v1434 = vmax.f32 %v1420, 0.0
        %1435 = vst [vmem:[#allocation2] sm:$0xff] 0.0
        %1436 = vst [vmem:[#allocation2 + $0x8] sm:$0xff] 0.0
        %1437 = vst [vmem:[#allocation2 + $0x80] sm:$0xff] 0.0
        %1438 = vst [vmem:[#allocation2 + $0x88] sm:$0xff] 0.0
        %1439 = vst [vmem:[#allocation3] sm:$0xff] 0.0
        %1440 = vst [vmem:[#allocation3 + $0x8] sm:$0xff] 0.0
        %1441 = vst [vmem:[#allocation3 + $0x80] sm:$0xff] 0.0
        %1442 = vst [vmem:[#allocation3 + $0x88] sm:$0xff] 0.0
        %1443 = vst [vmem:[#allocation2 + $0x10] sm:$0xff] %v961
        %1444 = vst [vmem:[#allocation2 + $0x18] sm:$0xff] %v962
        %1445 = vst [vmem:[#allocation2 + $0x20] sm:$0xff] %v963
        %1446 = vst [vmem:[#allocation2 + $0x28] sm:$0xff] %v964
        %1447 = vst [vmem:[#allocation2 + $0x30] sm:$0xff] %v965
        %1448 = vst [vmem:[#allocation2 + $0x38] sm:$0xff] %v966
        %1449 = vst [vmem:[#allocation2 + $0x40] sm:$0xff] %v967
        %1450 = vst [vmem:[#allocation2 + $0x48] sm:$0xff] %v968
        %1451 = vst [vmem:[#allocation2 + $0x50] sm:$0xff] %v969
        %1452 = vst [vmem:[#allocation2 + $0x58] sm:$0xff] %v970
        %1453 = vst [vmem:[#allocation2 + $0x60] sm:$0xff] %v971
        %1454 = vst [vmem:[#allocation2 + $0x68] sm:$0xff] %v972
        %1455 = vst [vmem:[#allocation2 + $0x70] sm:$0xff] %v973
        %1456 = vst [vmem:[#allocation2 + $0x78] sm:$0xff] %v974
        %1457 = vst [vmem:[#allocation3 + $0x10] sm:$0xff] %v1421
        %1458 = vst [vmem:[#allocation3 + $0x18] sm:$0xff] %v1422
        %1459 = vst [vmem:[#allocation3 + $0x20] sm:$0xff] %v1423
        %1460 = vst [vmem:[#allocation3 + $0x28] sm:$0xff] %v1424
        %1461 = vst [vmem:[#allocation3 + $0x30] sm:$0xff] %v1425
        %1462 = vst [vmem:[#allocation3 + $0x38] sm:$0xff] %v1426
        %1463 = vst [vmem:[#allocation3 + $0x40] sm:$0xff] %v1427
        %1464 = vst [vmem:[#allocation3 + $0x48] sm:$0xff] %v1428
        %1465 = vst [vmem:[#allocation3 + $0x50] sm:$0xff] %v1429
        %1466 = vst [vmem:[#allocation3 + $0x58] sm:$0xff] %v1430
        %1467 = vst [vmem:[#allocation3 + $0x60] sm:$0xff] %v1431
        %1468 = vst [vmem:[#allocation3 + $0x68] sm:$0xff] %v1432
        %1469 = vst [vmem:[#allocation3 + $0x70] sm:$0xff] %v1433
        %1470 = vst [vmem:[#allocation3 + $0x78] sm:$0xff] %v1434
        %v1471 = vld [vmem:[#allocation2] sm:$0xff]
        %v1472 = vld [vmem:[#allocation2 + $0x8] sm:$0xff]
        %v1473 = vld [vmem:[#allocation2 + $0x10] sm:$0xff]
        %v1474 = vld [vmem:[#allocation2 + $0x18] sm:$0xff]
        %v1475 = vld [vmem:[#allocation2 + $0x20] sm:$0xff]
        %v1476 = vld [vmem:[#allocation2 + $0x28] sm:$0xff]
        %v1477 = vld [vmem:[#allocation2 + $0x30] sm:$0xff]
        %v1478 = vld [vmem:[#allocation2 + $0x38] sm:$0xff]
        %v1479 = vld [vmem:[#allocation2 + $0x40] sm:$0xff]
        %v1480 = vld [vmem:[#allocation2 + $0x48] sm:$0xff]
        %v1481 = vld [vmem:[#allocation2 + $0x50] sm:$0xff]
        %v1482 = vld [vmem:[#allocation2 + $0x58] sm:$0xff]
        %v1483 = vld [vmem:[#allocation2 + $0x60] sm:$0xff]
        %v1484 = vld [vmem:[#allocation2 + $0x68] sm:$0xff]
        %v1485 = vld [vmem:[#allocation3] sm:$0xff]
        %v1486 = vld [vmem:[#allocation3 + $0x8] sm:$0xff]
        %v1487 = vld [vmem:[#allocation3 + $0x10] sm:$0xff]
        %v1488 = vld [vmem:[#allocation3 + $0x18] sm:$0xff]
        %v1489 = vld [vmem:[#allocation3 + $0x20] sm:$0xff]
        %v1490 = vld [vmem:[#allocation3 + $0x28] sm:$0xff]
        %v1491 = vld [vmem:[#allocation3 + $0x30] sm:$0xff]
        %v1492 = vld [vmem:[#allocation3 + $0x38] sm:$0xff]
        %v1493 = vld [vmem:[#allocation3 + $0x40] sm:$0xff]
        %v1494 = vld [vmem:[#allocation3 + $0x48] sm:$0xff]
        %v1495 = vld [vmem:[#allocation3 + $0x50] sm:$0xff]
        %v1496 = vld [vmem:[#allocation3 + $0x58] sm:$0xff]
        %v1497 = vld [vmem:[#allocation3 + $0x60] sm:$0xff]
        %v1498 = vld [vmem:[#allocation3 + $0x68] sm:$0xff]
        %v1499 = vpack.c.bf16 %v1473, %v1471
        %v1500 = vpack.c.bf16 %v1474, %v1472
        %v1501 = vpack.c.bf16 %v1477, %v1475
        %v1502 = vpack.c.bf16 %v1478, %v1476
        %v1503 = vpack.c.bf16 %v1481, %v1479
        %v1504 = vpack.c.bf16 %v1482, %v1480
        %v1505 = vpack.c.bf16 %v1485, %v1483
        %v1506 = vpack.c.bf16 %v1486, %v1484
        %v1507 = vpack.c.bf16 %v1489, %v1487
        %v1508 = vpack.c.bf16 %v1490, %v1488
        %v1509 = vpack.c.bf16 %v1493, %v1491
        %v1510 = vpack.c.bf16 %v1494, %v1492
        %v1511 = vpack.c.bf16 %v1497, %v1495
        %v1512 = vpack.c.bf16 %v1498, %v1496
        %v1513 = vld [vmem:[%s3] sm:$0xff]
        %v1514 = vld [vmem:[%s3 + $0x8] sm:$0xff]
        %v1515 = vld [vmem:[%s3 + $0x10] sm:$0xff]
        %v1516 = vld [vmem:[%s3 + $0x18] sm:$0xff]
        %v1517 = vld [vmem:[%s3 + $0x20] sm:$0xff]
        %v1518 = vld [vmem:[%s3 + $0x28] sm:$0xff]
        %v1519 = vld [vmem:[%s3 + $0x30] sm:$0xff]
        %v1520 = vld [vmem:[%s3 + $0x38] sm:$0xff]
        %v1521 = vld [vmem:[%s3 + $0x40] sm:$0xff]
        %v1522 = vld [vmem:[%s3 + $0x48] sm:$0xff]
        %v1523 = vld [vmem:[%s3 + $0x50] sm:$0xff]
        %v1524 = vld [vmem:[%s3 + $0x58] sm:$0xff]
        %v1525 = vld [vmem:[%s3 + $0x60] sm:$0xff]
        %v1526 = vld [vmem:[%s3 + $0x68] sm:$0xff]
        %v1527 = vld [vmem:[%s3 + $0x70] sm:$0xff]
        %v1528 = vld [vmem:[%s3 + $0x78] sm:$0xff]
        %v1529 = vld [vmem:[%s3 + $0x80] sm:$0xff]
        %v1530 = vld [vmem:[%s3 + $0x88] sm:$0xff]
        %v1531 = vld [vmem:[%s3 + $0x90] sm:$0xff]
        %v1532 = vld [vmem:[%s3 + $0x98] sm:$0xff]
        %v1533 = vld [vmem:[%s3 + $0xa0] sm:$0xff]
        %v1534 = vld [vmem:[%s3 + $0xa8] sm:$0xff]
        %v1535 = vld [vmem:[%s3 + $0xb0] sm:$0xff]
        %v1536 = vld [vmem:[%s3 + $0xb8] sm:$0xff]
        %v1537 = vld [vmem:[%s3 + $0xc0] sm:$0xff]
        %v1538 = vld [vmem:[%s3 + $0xc8] sm:$0xff]
        %v1539 = vld [vmem:[%s3 + $0xd0] sm:$0xff]
        %v1540 = vld [vmem:[%s3 + $0xd8] sm:$0xff]
        %v1541 = vld [vmem:[%s3 + $0xe0] sm:$0xff]
        %v1542 = vld [vmem:[%s3 + $0xe8] sm:$0xff]
        %v1543 = vld [vmem:[%s3 + $0xf0] sm:$0xff]
        %v1544 = vld [vmem:[%s3 + $0xf8] sm:$0xff]
        %v1545 = vld [vmem:[%s3 + $0x100] sm:$0xff]
        %v1546 = vld [vmem:[%s3 + $0x108] sm:$0xff]
        %v1547 = vld [vmem:[%s3 + $0x110] sm:$0xff]
        %v1548 = vld [vmem:[%s3 + $0x118] sm:$0xff]
        %v1549 = vld [vmem:[%s3 + $0x120] sm:$0xff]
        %v1550 = vld [vmem:[%s3 + $0x128] sm:$0xff]
        %v1551 = vld [vmem:[%s3 + $0x130] sm:$0xff]
        %v1552 = vld [vmem:[%s3 + $0x138] sm:$0xff]
        %v1553 = vld [vmem:[%s3 + $0x140] sm:$0xff]
        %v1554 = vld [vmem:[%s3 + $0x148] sm:$0xff]
        %v1555 = vld [vmem:[%s3 + $0x150] sm:$0xff]
        %v1556 = vld [vmem:[%s3 + $0x158] sm:$0xff]
        %v1557 = vld [vmem:[%s3 + $0x160] sm:$0xff]
        %v1558 = vld [vmem:[%s3 + $0x168] sm:$0xff]
        %v1559 = vld [vmem:[%s3 + $0x170] sm:$0xff]
        %v1560 = vld [vmem:[%s3 + $0x178] sm:$0xff]
        %v1561 = vld [vmem:[%s3 + $0x180] sm:$0xff]
        %v1562 = vld [vmem:[%s3 + $0x188] sm:$0xff]
        %v1563 = vld [vmem:[%s3 + $0x190] sm:$0xff]
        %v1564 = vld [vmem:[%s3 + $0x198] sm:$0xff]
        %v1565 = vld [vmem:[%s3 + $0x1a0] sm:$0xff]
        %v1566 = vld [vmem:[%s3 + $0x1a8] sm:$0xff]
        %v1567 = vld [vmem:[%s3 + $0x1b0] sm:$0xff]
        %v1568 = vld [vmem:[%s3 + $0x1b8] sm:$0xff]
        %v1569 = vld [vmem:[%s3 + $0x1c0] sm:$0xff]
        %v1570 = vld [vmem:[%s3 + $0x1c8] sm:$0xff]
        %v1571 = vld [vmem:[%s3 + $0x1d0] sm:$0xff]
        %v1572 = vld [vmem:[%s3 + $0x1d8] sm:$0xff]
        %v1573 = vld [vmem:[%s3 + $0x1e0] sm:$0xff]
        %v1574 = vld [vmem:[%s3 + $0x1e8] sm:$0xff]
        %v1575 = vld [vmem:[%s3 + $0x1f0] sm:$0xff]
        %v1576 = vld [vmem:[%s3 + $0x1f8] sm:$0xff]
        %v1641 = vunpack.c.l.b16 %v1513
        %v1642 = vunpack.c.h.b16 %v1513
        %v1643 = vunpack.c.l.b16 %v1514
        %v1644 = vunpack.c.h.b16 %v1514
        %v1645 = vunpack.c.l.b16 %v1515
        %v1646 = vunpack.c.h.b16 %v1515
        %v1647 = vunpack.c.l.b16 %v1516
        %v1648 = vunpack.c.h.b16 %v1516
        %v1649 = vunpack.c.l.b16 %v1517
        %v1650 = vunpack.c.h.b16 %v1517
        %v1651 = vunpack.c.l.b16 %v1518
        %v1652 = vunpack.c.h.b16 %v1518
        %v1653 = vunpack.c.l.b16 %v1519
        %v1654 = vunpack.c.h.b16 %v1519
        %v1655 = vunpack.c.l.b16 %v1520
        %v1656 = vunpack.c.h.b16 %v1520
        %v1657 = vunpack.c.l.b16 %v1521
        %v1658 = vunpack.c.h.b16 %v1521
        %v1659 = vunpack.c.l.b16 %v1522
        %v1660 = vunpack.c.h.b16 %v1522
        %v1661 = vunpack.c.l.b16 %v1523
        %v1662 = vunpack.c.h.b16 %v1523
        %v1663 = vunpack.c.l.b16 %v1524
        %v1664 = vunpack.c.h.b16 %v1524
        %v1665 = vunpack.c.l.b16 %v1525
        %v1666 = vunpack.c.h.b16 %v1525
        %v1667 = vunpack.c.l.b16 %v1526
        %v1668 = vunpack.c.h.b16 %v1526
        %v1669 = vunpack.c.l.b16 %v1527
        %v1670 = vunpack.c.h.b16 %v1527
        %v1671 = vunpack.c.l.b16 %v1528
        %v1672 = vunpack.c.h.b16 %v1528
        %v1673 = vunpack.c.l.b16 %v1529
        %v1674 = vunpack.c.h.b16 %v1529
        %v1675 = vunpack.c.l.b16 %v1530
        %v1676 = vunpack.c.h.b16 %v1530
        %v1677 = vunpack.c.l.b16 %v1531
        %v1678 = vunpack.c.h.b16 %v1531
        %v1679 = vunpack.c.l.b16 %v1532
        %v1680 = vunpack.c.h.b16 %v1532
        %v1681 = vunpack.c.l.b16 %v1533
        %v1682 = vunpack.c.h.b16 %v1533
        %v1683 = vunpack.c.l.b16 %v1534
        %v1684 = vunpack.c.h.b16 %v1534
        %v1685 = vunpack.c.l.b16 %v1535
        %v1686 = vunpack.c.h.b16 %v1535
        %v1687 = vunpack.c.l.b16 %v1536
        %v1688 = vunpack.c.h.b16 %v1536
        %v1689 = vunpack.c.l.b16 %v1537
        %v1690 = vunpack.c.h.b16 %v1537
        %v1691 = vunpack.c.l.b16 %v1538
        %v1692 = vunpack.c.h.b16 %v1538
        %v1693 = vunpack.c.l.b16 %v1539
        %v1694 = vunpack.c.h.b16 %v1539
        %v1695 = vunpack.c.l.b16 %v1540
        %v1696 = vunpack.c.h.b16 %v1540
        %v1697 = vunpack.c.l.b16 %v1541
        %v1698 = vunpack.c.h.b16 %v1541
        %v1699 = vunpack.c.l.b16 %v1542
        %v1700 = vunpack.c.h.b16 %v1542
        %v1701 = vunpack.c.l.b16 %v1543
        %v1702 = vunpack.c.h.b16 %v1543
        %v1703 = vunpack.c.l.b16 %v1544
        %v1704 = vunpack.c.h.b16 %v1544
        %v1705 = vunpack.c.l.b16 %v1545
        %v1706 = vunpack.c.h.b16 %v1545
        %v1707 = vunpack.c.l.b16 %v1546
        %v1708 = vunpack.c.h.b16 %v1546
        %v1709 = vunpack.c.l.b16 %v1547
        %v1710 = vunpack.c.h.b16 %v1547
        %v1711 = vunpack.c.l.b16 %v1548
        %v1712 = vunpack.c.h.b16 %v1548
        %v1713 = vunpack.c.l.b16 %v1549
        %v1714 = vunpack.c.h.b16 %v1549
        %v1715 = vunpack.c.l.b16 %v1550
        %v1716 = vunpack.c.h.b16 %v1550
        %v1717 = vunpack.c.l.b16 %v1551
        %v1718 = vunpack.c.h.b16 %v1551
        %v1719 = vunpack.c.l.b16 %v1552
        %v1720 = vunpack.c.h.b16 %v1552
        %v1721 = vunpack.c.l.b16 %v1553
        %v1722 = vunpack.c.h.b16 %v1553
        %v1723 = vunpack.c.l.b16 %v1554
        %v1724 = vunpack.c.h.b16 %v1554
        %v1725 = vunpack.c.l.b16 %v1555
        %v1726 = vunpack.c.h.b16 %v1555
        %v1727 = vunpack.c.l.b16 %v1556
        %v1728 = vunpack.c.h.b16 %v1556
        %v1729 = vunpack.c.l.b16 %v1557
        %v1730 = vunpack.c.h.b16 %v1557
        %v1731 = vunpack.c.l.b16 %v1558
        %v1732 = vunpack.c.h.b16 %v1558
        %v1733 = vunpack.c.l.b16 %v1559
        %v1734 = vunpack.c.h.b16 %v1559
        %v1735 = vunpack.c.l.b16 %v1560
        %v1736 = vunpack.c.h.b16 %v1560
        %v1737 = vunpack.c.l.b16 %v1561
        %v1738 = vunpack.c.h.b16 %v1561
        %v1739 = vunpack.c.l.b16 %v1562
        %v1740 = vunpack.c.h.b16 %v1562
        %v1741 = vunpack.c.l.b16 %v1563
        %v1742 = vunpack.c.h.b16 %v1563
        %v1743 = vunpack.c.l.b16 %v1564
        %v1744 = vunpack.c.h.b16 %v1564
        %v1745 = vunpack.c.l.b16 %v1565
        %v1746 = vunpack.c.h.b16 %v1565
        %v1747 = vunpack.c.l.b16 %v1566
        %v1748 = vunpack.c.h.b16 %v1566
        %v1749 = vunpack.c.l.b16 %v1567
        %v1750 = vunpack.c.h.b16 %v1567
        %v1751 = vunpack.c.l.b16 %v1568
        %v1752 = vunpack.c.h.b16 %v1568
        %v1753 = vunpack.c.l.b16 %v1569
        %v1754 = vunpack.c.h.b16 %v1569
        %v1755 = vunpack.c.l.b16 %v1570
        %v1756 = vunpack.c.h.b16 %v1570
        %v1757 = vunpack.c.l.b16 %v1571
        %v1758 = vunpack.c.h.b16 %v1571
        %v1759 = vunpack.c.l.b16 %v1572
        %v1760 = vunpack.c.h.b16 %v1572
        %v1761 = vunpack.c.l.b16 %v1573
        %v1762 = vunpack.c.h.b16 %v1573
        %v1763 = vunpack.c.l.b16 %v1574
        %v1764 = vunpack.c.h.b16 %v1574
        %v1765 = vunpack.c.l.b16 %v1575
        %v1766 = vunpack.c.h.b16 %v1575
        %v1767 = vunpack.c.l.b16 %v1576
        %v1768 = vunpack.c.h.b16 %v1576
        %v1769 = vpack.c.b16 %v1645, %v1641
        %v1770 = vpack.c.b16 %v1646, %v1642
        %v1771 = vpack.c.b16 %v1647, %v1643
        %v1772 = vpack.c.b16 %v1648, %v1644
        %v1773 = vpack.c.b16 %v1653, %v1649
        %v1774 = vpack.c.b16 %v1654, %v1650
        %v1775 = vpack.c.b16 %v1655, %v1651
        %v1776 = vpack.c.b16 %v1656, %v1652
        %v1777 = vpack.c.b16 %v1661, %v1657
        %v1778 = vpack.c.b16 %v1662, %v1658
        %v1779 = vpack.c.b16 %v1663, %v1659
        %v1780 = vpack.c.b16 %v1664, %v1660
        %v1781 = vpack.c.b16 %v1669, %v1665
        %v1782 = vpack.c.b16 %v1670, %v1666
        %v1783 = vpack.c.b16 %v1671, %v1667
        %v1784 = vpack.c.b16 %v1672, %v1668
        %v1785 = vpack.c.b16 %v1677, %v1673
        %v1786 = vpack.c.b16 %v1678, %v1674
        %v1787 = vpack.c.b16 %v1679, %v1675
        %v1788 = vpack.c.b16 %v1680, %v1676
        %v1789 = vpack.c.b16 %v1685, %v1681
        %v1790 = vpack.c.b16 %v1686, %v1682
        %v1791 = vpack.c.b16 %v1687, %v1683
        %v1792 = vpack.c.b16 %v1688, %v1684
        %v1793 = vpack.c.b16 %v1693, %v1689
        %v1794 = vpack.c.b16 %v1694, %v1690
        %v1795 = vpack.c.b16 %v1695, %v1691
        %v1796 = vpack.c.b16 %v1696, %v1692
        %v1797 = vpack.c.b16 %v1701, %v1697
        %v1798 = vpack.c.b16 %v1702, %v1698
        %v1799 = vpack.c.b16 %v1703, %v1699
        %v1800 = vpack.c.b16 %v1704, %v1700
        %v1801 = vpack.c.b16 %v1709, %v1705
        %v1802 = vpack.c.b16 %v1710, %v1706
        %v1803 = vpack.c.b16 %v1711, %v1707
        %v1804 = vpack.c.b16 %v1712, %v1708
        %v1805 = vpack.c.b16 %v1717, %v1713
        %v1806 = vpack.c.b16 %v1718, %v1714
        %v1807 = vpack.c.b16 %v1719, %v1715
        %v1808 = vpack.c.b16 %v1720, %v1716
        %v1809 = vpack.c.b16 %v1725, %v1721
        %v1810 = vpack.c.b16 %v1726, %v1722
        %v1811 = vpack.c.b16 %v1727, %v1723
        %v1812 = vpack.c.b16 %v1728, %v1724
        %v1813 = vpack.c.b16 %v1733, %v1729
        %v1814 = vpack.c.b16 %v1734, %v1730
        %v1815 = vpack.c.b16 %v1735, %v1731
        %v1816 = vpack.c.b16 %v1736, %v1732
        %v1817 = vpack.c.b16 %v1741, %v1737
        %v1818 = vpack.c.b16 %v1742, %v1738
        %v1819 = vpack.c.b16 %v1743, %v1739
        %v1820 = vpack.c.b16 %v1744, %v1740
        %v1821 = vpack.c.b16 %v1749, %v1745
        %v1822 = vpack.c.b16 %v1750, %v1746
        %v1823 = vpack.c.b16 %v1751, %v1747
        %v1824 = vpack.c.b16 %v1752, %v1748
        %v1825 = vpack.c.b16 %v1757, %v1753
        %v1826 = vpack.c.b16 %v1758, %v1754
        %v1827 = vpack.c.b16 %v1759, %v1755
        %v1828 = vpack.c.b16 %v1760, %v1756
        %v1829 = vpack.c.b16 %v1765, %v1761
        %v1830 = vpack.c.b16 %v1766, %v1762
        %v1831 = vpack.c.b16 %v1767, %v1763
        %v1832 = vpack.c.b16 %v1768, %v1764
        %1897 = vmatprep.subr.bf16.mxu0 %v1798
        %1898 = vmatpush1.bf16.msra.mxu0 %v1797
        %1899 = vmatprep.subr.bf16.mxu0 %v1794
        %1900 = vmatpush1.bf16.msra.mxu0 %v1793
        %1901 = vmatprep.subr.bf16.mxu0 %v1790
        %1902 = vmatpush1.bf16.msra.mxu0 %v1789
        %1903 = vmatprep.subr.bf16.mxu0 %v1786
        %1904 = vmatpush1.bf16.msra.mxu0 %v1785
        %1905 = vmatprep.subr.bf16.mxu0 %v1782
        %1906 = vmatpush1.bf16.msra.mxu0 %v1781
        %1907 = vmatprep.subr.bf16.mxu0 %v1778
        %1908 = vmatpush1.bf16.msra.mxu0 %v1777
        %1909 = vmatprep.subr.bf16.mxu0 %v1774
        %1910 = vmatpush1.bf16.msra.mxu0 %v1773
        %1911 = vmatprep.subr.bf16.mxu0 %v1770
        %1912 = vmatpush1.bf16.msra.mxu0 %v1769
        %1913 = vmatprep.subr.bf16.mxu0 %v1830
        %1914 = vmatpush2.bf16.msra.mxu0 %v1829
        %1915 = vmatprep.subr.bf16.mxu0 %v1826
        %1916 = vmatpush2.bf16.msra.mxu0 %v1825
        %1917 = vmatprep.subr.bf16.mxu0 %v1822
        %1918 = vmatpush2.bf16.msra.mxu0 %v1821
        %1919 = vmatprep.subr.bf16.mxu0 %v1818
        %1920 = vmatpush2.bf16.msra.mxu0 %v1817
        %1921 = vmatprep.subr.bf16.mxu0 %v1814
        %1922 = vmatpush2.bf16.msra.mxu0 %v1813
        %1923 = vmatprep.subr.bf16.mxu0 %v1810
        %1924 = vmatpush2.bf16.msra.mxu0 %v1809
        %1925 = vmatprep.subr.bf16.mxu0 %v1806
        %1926 = vmatpush2.bf16.msra.mxu0 %v1805
        %1927 = vmatprep.subr.bf16.mxu0 %v1802
        %1928 = vmatpush2.bf16.msra.mxu0 %v1801
        %1929 = vmatprep.mubr.bf16.mxu0 %v1500
        %1930 = vmatmul.mubr.bf16.gmra.mxu0 %v1499
        %v1931 = vpop.f32.mrf.mxu0
        %v1932 = vadd.f32 0.0, %v1931
        %v1933 = vpop.f32.mrf.mxu0
        %v1934 = vadd.f32 0.0, %v1933
        %v1935 = vpop.f32.mrf.mxu0
        %v1936 = vadd.f32 0.0, %v1935
        %v1937 = vpop.f32.mrf.mxu0
        %v1938 = vadd.f32 0.0, %v1937
        %1939 = vmatprep.mubr.bf16.mxu0 %v1502
        %1940 = vmatmul.mubr.bf16.gmra.mxu0 %v1501
        %v1941 = vpop.f32.mrf.mxu0
        %v1942 = vadd.f32 0.0, %v1941
        %v1943 = vpop.f32.mrf.mxu0
        %v1944 = vadd.f32 0.0, %v1943
        %v1945 = vpop.f32.mrf.mxu0
        %v1946 = vadd.f32 0.0, %v1945
        %v1947 = vpop.f32.mrf.mxu0
        %v1948 = vadd.f32 0.0, %v1947
        %1949 = vmatprep.mubr.bf16.mxu0 %v1504
        %1950 = vmatmul.mubr.bf16.gmra.mxu0 %v1503
        %v1951 = vpop.f32.mrf.mxu0
        %v1952 = vadd.f32 0.0, %v1951
        %v1953 = vpop.f32.mrf.mxu0
        %v1954 = vadd.f32 0.0, %v1953
        %v1955 = vpop.f32.mrf.mxu0
        %v1956 = vadd.f32 0.0, %v1955
        %v1957 = vpop.f32.mrf.mxu0
        %v1958 = vadd.f32 0.0, %v1957
        %1959 = vmatprep.mubr.bf16.mxu0 %v1506
        %1960 = vmatmul.mubr.bf16.gmra.mxu0 %v1505
        %v1961 = vpop.f32.mrf.mxu0
        %v1962 = vadd.f32 0.0, %v1961
        %v1963 = vpop.f32.mrf.mxu0
        %v1964 = vadd.f32 0.0, %v1963
        %v1965 = vpop.f32.mrf.mxu0
        %v1966 = vadd.f32 0.0, %v1965
        %v1967 = vpop.f32.mrf.mxu0
        %v1968 = vadd.f32 0.0, %v1967
        %1969 = vmatprep.mubr.bf16.mxu0 %v1508
        %1970 = vmatmul.mubr.bf16.gmra.mxu0 %v1507
        %v1971 = vpop.f32.mrf.mxu0
        %v1972 = vadd.f32 0.0, %v1971
        %v1973 = vpop.f32.mrf.mxu0
        %v1974 = vadd.f32 0.0, %v1973
        %v1975 = vpop.f32.mrf.mxu0
        %v1976 = vadd.f32 0.0, %v1975
        %v1977 = vpop.f32.mrf.mxu0
        %v1978 = vadd.f32 0.0, %v1977
        %1979 = vmatprep.mubr.bf16.mxu0 %v1510
        %1980 = vmatmul.mubr.bf16.gmra.mxu0 %v1509
        %v1981 = vpop.f32.mrf.mxu0
        %v1982 = vadd.f32 0.0, %v1981
        %v1983 = vpop.f32.mrf.mxu0
        %v1984 = vadd.f32 0.0, %v1983
        %v1985 = vpop.f32.mrf.mxu0
        %v1986 = vadd.f32 0.0, %v1985
        %v1987 = vpop.f32.mrf.mxu0
        %v1988 = vadd.f32 0.0, %v1987
        %1989 = vmatprep.mubr.bf16.mxu0 %v1512
        %1990 = vmatmul.mubr.bf16.gmra.mxu0 %v1511
        %v1991 = vpop.f32.mrf.mxu0
        %v1992 = vadd.f32 0.0, %v1991
        %v1993 = vpop.f32.mrf.mxu0
        %v1994 = vadd.f32 0.0, %v1993
        %v1995 = vpop.f32.mrf.mxu0
        %v1996 = vadd.f32 0.0, %v1995
        %v1997 = vpop.f32.mrf.mxu0
        %v1998 = vadd.f32 0.0, %v1997
        %1999 = vdwg.mxu0
        %2000 = vmatprep.subr.bf16.mxu0 %v1800
        %2001 = vmatpush1.bf16.msra.mxu0 %v1799
        %2002 = vmatprep.subr.bf16.mxu0 %v1796
        %2003 = vmatpush1.bf16.msra.mxu0 %v1795
        %2004 = vmatprep.subr.bf16.mxu0 %v1792
        %2005 = vmatpush1.bf16.msra.mxu0 %v1791
        %2006 = vmatprep.subr.bf16.mxu0 %v1788
        %2007 = vmatpush1.bf16.msra.mxu0 %v1787
        %2008 = vmatprep.subr.bf16.mxu0 %v1784
        %2009 = vmatpush1.bf16.msra.mxu0 %v1783
        %2010 = vmatprep.subr.bf16.mxu0 %v1780
        %2011 = vmatpush1.bf16.msra.mxu0 %v1779
        %2012 = vmatprep.subr.bf16.mxu0 %v1776
        %2013 = vmatpush1.bf16.msra.mxu0 %v1775
        %2014 = vmatprep.subr.bf16.mxu0 %v1772
        %2015 = vmatpush1.bf16.msra.mxu0 %v1771
        %2016 = vmatprep.subr.bf16.mxu0 %v1832
        %2017 = vmatpush2.bf16.msra.mxu0 %v1831
        %2018 = vmatprep.subr.bf16.mxu0 %v1828
        %2019 = vmatpush2.bf16.msra.mxu0 %v1827
        %2020 = vmatprep.subr.bf16.mxu0 %v1824
        %2021 = vmatpush2.bf16.msra.mxu0 %v1823
        %2022 = vmatprep.subr.bf16.mxu0 %v1820
        %2023 = vmatpush2.bf16.msra.mxu0 %v1819
        %2024 = vmatprep.subr.bf16.mxu0 %v1816
        %2025 = vmatpush2.bf16.msra.mxu0 %v1815
        %2026 = vmatprep.subr.bf16.mxu0 %v1812
        %2027 = vmatpush2.bf16.msra.mxu0 %v1811
        %2028 = vmatprep.subr.bf16.mxu0 %v1808
        %2029 = vmatpush2.bf16.msra.mxu0 %v1807
        %2030 = vmatprep.subr.bf16.mxu0 %v1804
        %2031 = vmatpush2.bf16.msra.mxu0 %v1803
        %2032 = vmatprep.mubr.bf16.mxu0 %v1500
        %2033 = vmatmul.mubr.bf16.gmra.mxu0 %v1499
        %v2034 = vpop.f32.mrf.mxu0
        %v2035 = vadd.f32 0.0, %v2034
        %v2036 = vpop.f32.mrf.mxu0
        %v2037 = vadd.f32 0.0, %v2036
        %v2038 = vpop.f32.mrf.mxu0
        %v2039 = vadd.f32 0.0, %v2038
        %v2040 = vpop.f32.mrf.mxu0
        %v2041 = vadd.f32 0.0, %v2040
        %2042 = vmatprep.mubr.bf16.mxu0 %v1502
        %2043 = vmatmul.mubr.bf16.gmra.mxu0 %v1501
        %v2044 = vpop.f32.mrf.mxu0
        %v2045 = vadd.f32 0.0, %v2044
        %v2046 = vpop.f32.mrf.mxu0
        %v2047 = vadd.f32 0.0, %v2046
        %v2048 = vpop.f32.mrf.mxu0
        %v2049 = vadd.f32 0.0, %v2048
        %v2050 = vpop.f32.mrf.mxu0
        %v2051 = vadd.f32 0.0, %v2050
        %2052 = vmatprep.mubr.bf16.mxu0 %v1504
        %2053 = vmatmul.mubr.bf16.gmra.mxu0 %v1503
        %v2054 = vpop.f32.mrf.mxu0
        %v2055 = vadd.f32 0.0, %v2054
        %v2056 = vpop.f32.mrf.mxu0
        %v2057 = vadd.f32 0.0, %v2056
        %v2058 = vpop.f32.mrf.mxu0
        %v2059 = vadd.f32 0.0, %v2058
        %v2060 = vpop.f32.mrf.mxu0
        %v2061 = vadd.f32 0.0, %v2060
        %2062 = vmatprep.mubr.bf16.mxu0 %v1506
        %2063 = vmatmul.mubr.bf16.gmra.mxu0 %v1505
        %v2064 = vpop.f32.mrf.mxu0
        %v2065 = vadd.f32 0.0, %v2064
        %v2066 = vpop.f32.mrf.mxu0
        %v2067 = vadd.f32 0.0, %v2066
        %v2068 = vpop.f32.mrf.mxu0
        %v2069 = vadd.f32 0.0, %v2068
        %v2070 = vpop.f32.mrf.mxu0
        %v2071 = vadd.f32 0.0, %v2070
        %2072 = vmatprep.mubr.bf16.mxu0 %v1508
        %2073 = vmatmul.mubr.bf16.gmra.mxu0 %v1507
        %v2074 = vpop.f32.mrf.mxu0
        %v2075 = vadd.f32 0.0, %v2074
        %v2076 = vpop.f32.mrf.mxu0
        %v2077 = vadd.f32 0.0, %v2076
        %v2078 = vpop.f32.mrf.mxu0
        %v2079 = vadd.f32 0.0, %v2078
        %v2080 = vpop.f32.mrf.mxu0
        %v2081 = vadd.f32 0.0, %v2080
        %2082 = vmatprep.mubr.bf16.mxu0 %v1510
        %2083 = vmatmul.mubr.bf16.gmra.mxu0 %v1509
        %v2084 = vpop.f32.mrf.mxu0
        %v2085 = vadd.f32 0.0, %v2084
        %v2086 = vpop.f32.mrf.mxu0
        %v2087 = vadd.f32 0.0, %v2086
        %v2088 = vpop.f32.mrf.mxu0
        %v2089 = vadd.f32 0.0, %v2088
        %v2090 = vpop.f32.mrf.mxu0
        %v2091 = vadd.f32 0.0, %v2090
        %2092 = vmatprep.mubr.bf16.mxu0 %v1512
        %2093 = vmatmul.mubr.bf16.gmra.mxu0 %v1511
        %v2094 = vpop.f32.mrf.mxu0
        %v2095 = vadd.f32 0.0, %v2094
        %v2096 = vpop.f32.mrf.mxu0
        %v2097 = vadd.f32 0.0, %v2096
        %v2098 = vpop.f32.mrf.mxu0
        %v2099 = vadd.f32 0.0, %v2098
        %v2100 = vpop.f32.mrf.mxu0
        %v2101 = vadd.f32 0.0, %v2100
        %2102 = vdwg.mxu0
        %2103 = vst [vmem:[#allocation4] sm:$0xff] %v1932
        %2104 = vst [vmem:[#allocation4 + $0x8] sm:$0xff] %v1934
        %2105 = vst [vmem:[#allocation4 + $0x10] sm:$0xff] %v2035
        %2106 = vst [vmem:[#allocation4 + $0x18] sm:$0xff] %v2037
        %2107 = vst [vmem:[#allocation4 + $0x20] sm:$0xff] %v1936
        %2108 = vst [vmem:[#allocation4 + $0x28] sm:$0xff] %v1938
        %2109 = vst [vmem:[#allocation4 + $0x30] sm:$0xff] %v2039
        %2110 = vst [vmem:[#allocation4 + $0x38] sm:$0xff] %v2041
        %2111 = vst [vmem:[#allocation4 + $0x40] sm:$0xff] %v1942
        %2112 = vst [vmem:[#allocation4 + $0x48] sm:$0xff] %v1944
        %2113 = vst [vmem:[#allocation4 + $0x50] sm:$0xff] %v2045
        %2114 = vst [vmem:[#allocation4 + $0x58] sm:$0xff] %v2047
        %2115 = vst [vmem:[#allocation4 + $0x60] sm:$0xff] %v1946
        %2116 = vst [vmem:[#allocation4 + $0x68] sm:$0xff] %v1948
        %2117 = vst [vmem:[#allocation4 + $0x70] sm:$0xff] %v2049
        %2118 = vst [vmem:[#allocation4 + $0x78] sm:$0xff] %v2051
        %2119 = vst [vmem:[#allocation4 + $0x80] sm:$0xff] %v1952
        %2120 = vst [vmem:[#allocation4 + $0x88] sm:$0xff] %v1954
        %2121 = vst [vmem:[#allocation4 + $0x90] sm:$0xff] %v2055
        %2122 = vst [vmem:[#allocation4 + $0x98] sm:$0xff] %v2057
        %2123 = vst [vmem:[#allocation4 + $0xa0] sm:$0xff] %v1956
        %2124 = vst [vmem:[#allocation4 + $0xa8] sm:$0xff] %v1958
        %2125 = vst [vmem:[#allocation4 + $0xb0] sm:$0xff] %v2059
        %2126 = vst [vmem:[#allocation4 + $0xb8] sm:$0xff] %v2061
        %2127 = vst [vmem:[#allocation4 + $0xc0] sm:$0xff] %v1962
        %2128 = vst [vmem:[#allocation4 + $0xc8] sm:$0xff] %v1964
        %2129 = vst [vmem:[#allocation4 + $0xd0] sm:$0xff] %v2065
        %2130 = vst [vmem:[#allocation4 + $0xd8] sm:$0xff] %v2067
        %2131 = vst [vmem:[#allocation4 + $0xe0] sm:$0xff] %v1966
        %2132 = vst [vmem:[#allocation4 + $0xe8] sm:$0xff] %v1968
        %2133 = vst [vmem:[#allocation4 + $0xf0] sm:$0xff] %v2069
        %2134 = vst [vmem:[#allocation4 + $0xf8] sm:$0xff] %v2071
        %2135 = vst [vmem:[#allocation4 + $0x100] sm:$0xff] %v1972
        %2136 = vst [vmem:[#allocation4 + $0x108] sm:$0xff] %v1974
        %2137 = vst [vmem:[#allocation4 + $0x110] sm:$0xff] %v2075
        %2138 = vst [vmem:[#allocation4 + $0x118] sm:$0xff] %v2077
        %2139 = vst [vmem:[#allocation4 + $0x120] sm:$0xff] %v1976
        %2140 = vst [vmem:[#allocation4 + $0x128] sm:$0xff] %v1978
        %2141 = vst [vmem:[#allocation4 + $0x130] sm:$0xff] %v2079
        %2142 = vst [vmem:[#allocation4 + $0x138] sm:$0xff] %v2081
        %2143 = vst [vmem:[#allocation4 + $0x140] sm:$0xff] %v1982
        %2144 = vst [vmem:[#allocation4 + $0x148] sm:$0xff] %v1984
        %2145 = vst [vmem:[#allocation4 + $0x150] sm:$0xff] %v2085
        %2146 = vst [vmem:[#allocation4 + $0x158] sm:$0xff] %v2087
        %2147 = vst [vmem:[#allocation4 + $0x160] sm:$0xff] %v1986
        %2148 = vst [vmem:[#allocation4 + $0x168] sm:$0xff] %v1988
        %2149 = vst [vmem:[#allocation4 + $0x170] sm:$0xff] %v2089
        %2150 = vst [vmem:[#allocation4 + $0x178] sm:$0xff] %v2091
        %2151 = vst [vmem:[#allocation4 + $0x180] sm:$0xff] %v1992
        %2152 = vst [vmem:[#allocation4 + $0x188] sm:$0xff] %v1994
        %2153 = vst [vmem:[#allocation4 + $0x190] sm:$0xff] %v2095
        %2154 = vst [vmem:[#allocation4 + $0x198] sm:$0xff] %v2097
        %2155 = vst [vmem:[#allocation4 + $0x1a0] sm:$0xff] %v1996
        %2156 = vst [vmem:[#allocation4 + $0x1a8] sm:$0xff] %v1998
        %2157 = vst [vmem:[#allocation4 + $0x1b0] sm:$0xff] %v2099
        %2158 = vst [vmem:[#allocation4 + $0x1b8] sm:$0xff] %v2101
        %v2159 = vld [vmem:[#allocation3] sm:$0xff]
        %v2160 = vld [vmem:[#allocation3 + $0x8] sm:$0xff]
        %v2161 = vld [vmem:[#allocation3 + $0x10] sm:$0xff]
        %v2162 = vld [vmem:[#allocation3 + $0x18] sm:$0xff]
        %v2163 = vld [vmem:[#allocation3 + $0x20] sm:$0xff]
        %v2164 = vld [vmem:[#allocation3 + $0x28] sm:$0xff]
        %v2165 = vld [vmem:[#allocation3 + $0x30] sm:$0xff]
        %v2166 = vld [vmem:[#allocation3 + $0x38] sm:$0xff]
        %v2167 = vld [vmem:[#allocation3 + $0x40] sm:$0xff]
        %v2168 = vld [vmem:[#allocation3 + $0x48] sm:$0xff]
        %v2169 = vld [vmem:[#allocation3 + $0x50] sm:$0xff]
        %v2170 = vld [vmem:[#allocation3 + $0x58] sm:$0xff]
        %v2171 = vld [vmem:[#allocation3 + $0x60] sm:$0xff]
        %v2172 = vld [vmem:[#allocation3 + $0x68] sm:$0xff]
        %v2173 = vld [vmem:[#allocation2 + $0x10] sm:$0xff]
        %v2174 = vld [vmem:[#allocation2 + $0x18] sm:$0xff]
        %v2175 = vld [vmem:[#allocation2 + $0x20] sm:$0xff]
        %v2176 = vld [vmem:[#allocation2 + $0x28] sm:$0xff]
        %v2177 = vld [vmem:[#allocation2 + $0x30] sm:$0xff]
        %v2178 = vld [vmem:[#allocation2 + $0x38] sm:$0xff]
        %v2179 = vld [vmem:[#allocation2 + $0x40] sm:$0xff]
        %v2180 = vld [vmem:[#allocation2 + $0x48] sm:$0xff]
        %v2181 = vld [vmem:[#allocation2 + $0x50] sm:$0xff]
        %v2182 = vld [vmem:[#allocation2 + $0x58] sm:$0xff]
        %v2183 = vld [vmem:[#allocation2 + $0x60] sm:$0xff]
        %v2184 = vld [vmem:[#allocation2 + $0x68] sm:$0xff]
        %v2185 = vld [vmem:[#allocation2 + $0x70] sm:$0xff]
        %v2186 = vld [vmem:[#allocation2 + $0x78] sm:$0xff]
        %v2187 = vpack.c.bf16 %v2161, %v2159
        %v2188 = vpack.c.bf16 %v2162, %v2160
        %v2189 = vpack.c.bf16 %v2165, %v2163
        %v2190 = vpack.c.bf16 %v2166, %v2164
        %v2191 = vpack.c.bf16 %v2169, %v2167
        %v2192 = vpack.c.bf16 %v2170, %v2168
        %v2193 = vpack.c.bf16 %v2173, %v2171
        %v2194 = vpack.c.bf16 %v2174, %v2172
        %v2195 = vpack.c.bf16 %v2177, %v2175
        %v2196 = vpack.c.bf16 %v2178, %v2176
        %v2197 = vpack.c.bf16 %v2181, %v2179
        %v2198 = vpack.c.bf16 %v2182, %v2180
        %v2199 = vpack.c.bf16 %v2185, %v2183
        %v2200 = vpack.c.bf16 %v2186, %v2184
        %s2201 = scalar_lea.vmem %s3, 512
        %v2202 = vld [vmem:[%s2201] sm:$0xff]
        %v2203 = vld [vmem:[%s2201 + $0x8] sm:$0xff]
        %v2204 = vld [vmem:[%s2201 + $0x10] sm:$0xff]
        %v2205 = vld [vmem:[%s2201 + $0x18] sm:$0xff]
        %v2206 = vld [vmem:[%s2201 + $0x20] sm:$0xff]
        %v2207 = vld [vmem:[%s2201 + $0x28] sm:$0xff]
        %v2208 = vld [vmem:[%s2201 + $0x30] sm:$0xff]
        %v2209 = vld [vmem:[%s2201 + $0x38] sm:$0xff]
        %v2210 = vld [vmem:[%s2201 + $0x40] sm:$0xff]
        %v2211 = vld [vmem:[%s2201 + $0x48] sm:$0xff]
        %v2212 = vld [vmem:[%s2201 + $0x50] sm:$0xff]
        %v2213 = vld [vmem:[%s2201 + $0x58] sm:$0xff]
        %v2214 = vld [vmem:[%s2201 + $0x60] sm:$0xff]
        %v2215 = vld [vmem:[%s2201 + $0x68] sm:$0xff]
        %v2216 = vld [vmem:[%s2201 + $0x70] sm:$0xff]
        %v2217 = vld [vmem:[%s2201 + $0x78] sm:$0xff]
        %v2218 = vld [vmem:[%s2201 + $0x80] sm:$0xff]
        %v2219 = vld [vmem:[%s2201 + $0x88] sm:$0xff]
        %v2220 = vld [vmem:[%s2201 + $0x90] sm:$0xff]
        %v2221 = vld [vmem:[%s2201 + $0x98] sm:$0xff]
        %v2222 = vld [vmem:[%s2201 + $0xa0] sm:$0xff]
        %v2223 = vld [vmem:[%s2201 + $0xa8] sm:$0xff]
        %v2224 = vld [vmem:[%s2201 + $0xb0] sm:$0xff]
        %v2225 = vld [vmem:[%s2201 + $0xb8] sm:$0xff]
        %v2226 = vld [vmem:[%s2201 + $0xc0] sm:$0xff]
        %v2227 = vld [vmem:[%s2201 + $0xc8] sm:$0xff]
        %v2228 = vld [vmem:[%s2201 + $0xd0] sm:$0xff]
        %v2229 = vld [vmem:[%s2201 + $0xd8] sm:$0xff]
        %v2230 = vld [vmem:[%s2201 + $0xe0] sm:$0xff]
        %v2231 = vld [vmem:[%s2201 + $0xe8] sm:$0xff]
        %v2232 = vld [vmem:[%s2201 + $0xf0] sm:$0xff]
        %v2233 = vld [vmem:[%s2201 + $0xf8] sm:$0xff]
        %v2234 = vld [vmem:[%s2201 + $0x100] sm:$0xff]
        %v2235 = vld [vmem:[%s2201 + $0x108] sm:$0xff]
        %v2236 = vld [vmem:[%s2201 + $0x110] sm:$0xff]
        %v2237 = vld [vmem:[%s2201 + $0x118] sm:$0xff]
        %v2238 = vld [vmem:[%s2201 + $0x120] sm:$0xff]
        %v2239 = vld [vmem:[%s2201 + $0x128] sm:$0xff]
        %v2240 = vld [vmem:[%s2201 + $0x130] sm:$0xff]
        %v2241 = vld [vmem:[%s2201 + $0x138] sm:$0xff]
        %v2242 = vld [vmem:[%s2201 + $0x140] sm:$0xff]
        %v2243 = vld [vmem:[%s2201 + $0x148] sm:$0xff]
        %v2244 = vld [vmem:[%s2201 + $0x150] sm:$0xff]
        %v2245 = vld [vmem:[%s2201 + $0x158] sm:$0xff]
        %v2246 = vld [vmem:[%s2201 + $0x160] sm:$0xff]
        %v2247 = vld [vmem:[%s2201 + $0x168] sm:$0xff]
        %v2248 = vld [vmem:[%s2201 + $0x170] sm:$0xff]
        %v2249 = vld [vmem:[%s2201 + $0x178] sm:$0xff]
        %v2250 = vld [vmem:[%s2201 + $0x180] sm:$0xff]
        %v2251 = vld [vmem:[%s2201 + $0x188] sm:$0xff]
        %v2252 = vld [vmem:[%s2201 + $0x190] sm:$0xff]
        %v2253 = vld [vmem:[%s2201 + $0x198] sm:$0xff]
        %v2254 = vld [vmem:[%s2201 + $0x1a0] sm:$0xff]
        %v2255 = vld [vmem:[%s2201 + $0x1a8] sm:$0xff]
        %v2256 = vld [vmem:[%s2201 + $0x1b0] sm:$0xff]
        %v2257 = vld [vmem:[%s2201 + $0x1b8] sm:$0xff]
        %v2258 = vld [vmem:[%s2201 + $0x1c0] sm:$0xff]
        %v2259 = vld [vmem:[%s2201 + $0x1c8] sm:$0xff]
        %v2260 = vld [vmem:[%s2201 + $0x1d0] sm:$0xff]
        %v2261 = vld [vmem:[%s2201 + $0x1d8] sm:$0xff]
        %v2262 = vld [vmem:[%s2201 + $0x1e0] sm:$0xff]
        %v2263 = vld [vmem:[%s2201 + $0x1e8] sm:$0xff]
        %v2264 = vld [vmem:[%s2201 + $0x1f0] sm:$0xff]
        %v2265 = vld [vmem:[%s2201 + $0x1f8] sm:$0xff]
        %v2330 = vunpack.c.l.b16 %v2202
        %v2331 = vunpack.c.h.b16 %v2202
        %v2332 = vunpack.c.l.b16 %v2203
        %v2333 = vunpack.c.h.b16 %v2203
        %v2334 = vunpack.c.l.b16 %v2204
        %v2335 = vunpack.c.h.b16 %v2204
        %v2336 = vunpack.c.l.b16 %v2205
        %v2337 = vunpack.c.h.b16 %v2205
        %v2338 = vunpack.c.l.b16 %v2206
        %v2339 = vunpack.c.h.b16 %v2206
        %v2340 = vunpack.c.l.b16 %v2207
        %v2341 = vunpack.c.h.b16 %v2207
        %v2342 = vunpack.c.l.b16 %v2208
        %v2343 = vunpack.c.h.b16 %v2208
        %v2344 = vunpack.c.l.b16 %v2209
        %v2345 = vunpack.c.h.b16 %v2209
        %v2346 = vunpack.c.l.b16 %v2210
        %v2347 = vunpack.c.h.b16 %v2210
        %v2348 = vunpack.c.l.b16 %v2211
        %v2349 = vunpack.c.h.b16 %v2211
        %v2350 = vunpack.c.l.b16 %v2212
        %v2351 = vunpack.c.h.b16 %v2212
        %v2352 = vunpack.c.l.b16 %v2213
        %v2353 = vunpack.c.h.b16 %v2213
        %v2354 = vunpack.c.l.b16 %v2214
        %v2355 = vunpack.c.h.b16 %v2214
        %v2356 = vunpack.c.l.b16 %v2215
        %v2357 = vunpack.c.h.b16 %v2215
        %v2358 = vunpack.c.l.b16 %v2216
        %v2359 = vunpack.c.h.b16 %v2216
        %v2360 = vunpack.c.l.b16 %v2217
        %v2361 = vunpack.c.h.b16 %v2217
        %v2362 = vunpack.c.l.b16 %v2218
        %v2363 = vunpack.c.h.b16 %v2218
        %v2364 = vunpack.c.l.b16 %v2219
        %v2365 = vunpack.c.h.b16 %v2219
        %v2366 = vunpack.c.l.b16 %v2220
        %v2367 = vunpack.c.h.b16 %v2220
        %v2368 = vunpack.c.l.b16 %v2221
        %v2369 = vunpack.c.h.b16 %v2221
        %v2370 = vunpack.c.l.b16 %v2222
        %v2371 = vunpack.c.h.b16 %v2222
        %v2372 = vunpack.c.l.b16 %v2223
        %v2373 = vunpack.c.h.b16 %v2223
        %v2374 = vunpack.c.l.b16 %v2224
        %v2375 = vunpack.c.h.b16 %v2224
        %v2376 = vunpack.c.l.b16 %v2225
        %v2377 = vunpack.c.h.b16 %v2225
        %v2378 = vunpack.c.l.b16 %v2226
        %v2379 = vunpack.c.h.b16 %v2226
        %v2380 = vunpack.c.l.b16 %v2227
        %v2381 = vunpack.c.h.b16 %v2227
        %v2382 = vunpack.c.l.b16 %v2228
        %v2383 = vunpack.c.h.b16 %v2228
        %v2384 = vunpack.c.l.b16 %v2229
        %v2385 = vunpack.c.h.b16 %v2229
        %v2386 = vunpack.c.l.b16 %v2230
        %v2387 = vunpack.c.h.b16 %v2230
        %v2388 = vunpack.c.l.b16 %v2231
        %v2389 = vunpack.c.h.b16 %v2231
        %v2390 = vunpack.c.l.b16 %v2232
        %v2391 = vunpack.c.h.b16 %v2232
        %v2392 = vunpack.c.l.b16 %v2233
        %v2393 = vunpack.c.h.b16 %v2233
        %v2394 = vunpack.c.l.b16 %v2234
        %v2395 = vunpack.c.h.b16 %v2234
        %v2396 = vunpack.c.l.b16 %v2235
        %v2397 = vunpack.c.h.b16 %v2235
        %v2398 = vunpack.c.l.b16 %v2236
        %v2399 = vunpack.c.h.b16 %v2236
        %v2400 = vunpack.c.l.b16 %v2237
        %v2401 = vunpack.c.h.b16 %v2237
        %v2402 = vunpack.c.l.b16 %v2238
        %v2403 = vunpack.c.h.b16 %v2238
        %v2404 = vunpack.c.l.b16 %v2239
        %v2405 = vunpack.c.h.b16 %v2239
        %v2406 = vunpack.c.l.b16 %v2240
        %v2407 = vunpack.c.h.b16 %v2240
        %v2408 = vunpack.c.l.b16 %v2241
        %v2409 = vunpack.c.h.b16 %v2241
        %v2410 = vunpack.c.l.b16 %v2242
        %v2411 = vunpack.c.h.b16 %v2242
        %v2412 = vunpack.c.l.b16 %v2243
        %v2413 = vunpack.c.h.b16 %v2243
        %v2414 = vunpack.c.l.b16 %v2244
        %v2415 = vunpack.c.h.b16 %v2244
        %v2416 = vunpack.c.l.b16 %v2245
        %v2417 = vunpack.c.h.b16 %v2245
        %v2418 = vunpack.c.l.b16 %v2246
        %v2419 = vunpack.c.h.b16 %v2246
        %v2420 = vunpack.c.l.b16 %v2247
        %v2421 = vunpack.c.h.b16 %v2247
        %v2422 = vunpack.c.l.b16 %v2248
        %v2423 = vunpack.c.h.b16 %v2248
        %v2424 = vunpack.c.l.b16 %v2249
        %v2425 = vunpack.c.h.b16 %v2249
        %v2426 = vunpack.c.l.b16 %v2250
        %v2427 = vunpack.c.h.b16 %v2250
        %v2428 = vunpack.c.l.b16 %v2251
        %v2429 = vunpack.c.h.b16 %v2251
        %v2430 = vunpack.c.l.b16 %v2252
        %v2431 = vunpack.c.h.b16 %v2252
        %v2432 = vunpack.c.l.b16 %v2253
        %v2433 = vunpack.c.h.b16 %v2253
        %v2434 = vunpack.c.l.b16 %v2254
        %v2435 = vunpack.c.h.b16 %v2254
        %v2436 = vunpack.c.l.b16 %v2255
        %v2437 = vunpack.c.h.b16 %v2255
        %v2438 = vunpack.c.l.b16 %v2256
        %v2439 = vunpack.c.h.b16 %v2256
        %v2440 = vunpack.c.l.b16 %v2257
        %v2441 = vunpack.c.h.b16 %v2257
        %v2442 = vunpack.c.l.b16 %v2258
        %v2443 = vunpack.c.h.b16 %v2258
        %v2444 = vunpack.c.l.b16 %v2259
        %v2445 = vunpack.c.h.b16 %v2259
        %v2446 = vunpack.c.l.b16 %v2260
        %v2447 = vunpack.c.h.b16 %v2260
        %v2448 = vunpack.c.l.b16 %v2261
        %v2449 = vunpack.c.h.b16 %v2261
        %v2450 = vunpack.c.l.b16 %v2262
        %v2451 = vunpack.c.h.b16 %v2262
        %v2452 = vunpack.c.l.b16 %v2263
        %v2453 = vunpack.c.h.b16 %v2263
        %v2454 = vunpack.c.l.b16 %v2264
        %v2455 = vunpack.c.h.b16 %v2264
        %v2456 = vunpack.c.l.b16 %v2265
        %v2457 = vunpack.c.h.b16 %v2265
        %v2458 = vpack.c.b16 %v2334, %v2330
        %v2459 = vpack.c.b16 %v2335, %v2331
        %v2460 = vpack.c.b16 %v2336, %v2332
        %v2461 = vpack.c.b16 %v2337, %v2333
        %v2462 = vpack.c.b16 %v2342, %v2338
        %v2463 = vpack.c.b16 %v2343, %v2339
        %v2464 = vpack.c.b16 %v2344, %v2340
        %v2465 = vpack.c.b16 %v2345, %v2341
        %v2466 = vpack.c.b16 %v2350, %v2346
        %v2467 = vpack.c.b16 %v2351, %v2347
        %v2468 = vpack.c.b16 %v2352, %v2348
        %v2469 = vpack.c.b16 %v2353, %v2349
        %v2470 = vpack.c.b16 %v2358, %v2354
        %v2471 = vpack.c.b16 %v2359, %v2355
        %v2472 = vpack.c.b16 %v2360, %v2356
        %v2473 = vpack.c.b16 %v2361, %v2357
        %v2474 = vpack.c.b16 %v2366, %v2362
        %v2475 = vpack.c.b16 %v2367, %v2363
        %v2476 = vpack.c.b16 %v2368, %v2364
        %v2477 = vpack.c.b16 %v2369, %v2365
        %v2478 = vpack.c.b16 %v2374, %v2370
        %v2479 = vpack.c.b16 %v2375, %v2371
        %v2480 = vpack.c.b16 %v2376, %v2372
        %v2481 = vpack.c.b16 %v2377, %v2373
        %v2482 = vpack.c.b16 %v2382, %v2378
        %v2483 = vpack.c.b16 %v2383, %v2379
        %v2484 = vpack.c.b16 %v2384, %v2380
        %v2485 = vpack.c.b16 %v2385, %v2381
        %v2486 = vpack.c.b16 %v2390, %v2386
        %v2487 = vpack.c.b16 %v2391, %v2387
        %v2488 = vpack.c.b16 %v2392, %v2388
        %v2489 = vpack.c.b16 %v2393, %v2389
        %v2490 = vpack.c.b16 %v2398, %v2394
        %v2491 = vpack.c.b16 %v2399, %v2395
        %v2492 = vpack.c.b16 %v2400, %v2396
        %v2493 = vpack.c.b16 %v2401, %v2397
        %v2494 = vpack.c.b16 %v2406, %v2402
        %v2495 = vpack.c.b16 %v2407, %v2403
        %v2496 = vpack.c.b16 %v2408, %v2404
        %v2497 = vpack.c.b16 %v2409, %v2405
        %v2498 = vpack.c.b16 %v2414, %v2410
        %v2499 = vpack.c.b16 %v2415, %v2411
        %v2500 = vpack.c.b16 %v2416, %v2412
        %v2501 = vpack.c.b16 %v2417, %v2413
        %v2502 = vpack.c.b16 %v2422, %v2418
        %v2503 = vpack.c.b16 %v2423, %v2419
        %v2504 = vpack.c.b16 %v2424, %v2420
        %v2505 = vpack.c.b16 %v2425, %v2421
        %v2506 = vpack.c.b16 %v2430, %v2426
        %v2507 = vpack.c.b16 %v2431, %v2427
        %v2508 = vpack.c.b16 %v2432, %v2428
        %v2509 = vpack.c.b16 %v2433, %v2429
        %v2510 = vpack.c.b16 %v2438, %v2434
        %v2511 = vpack.c.b16 %v2439, %v2435
        %v2512 = vpack.c.b16 %v2440, %v2436
        %v2513 = vpack.c.b16 %v2441, %v2437
        %v2514 = vpack.c.b16 %v2446, %v2442
        %v2515 = vpack.c.b16 %v2447, %v2443
        %v2516 = vpack.c.b16 %v2448, %v2444
        %v2517 = vpack.c.b16 %v2449, %v2445
        %v2518 = vpack.c.b16 %v2454, %v2450
        %v2519 = vpack.c.b16 %v2455, %v2451
        %v2520 = vpack.c.b16 %v2456, %v2452
        %v2521 = vpack.c.b16 %v2457, %v2453
        %2586 = vmatprep.subr.bf16.mxu0 %v2487
        %2587 = vmatpush1.bf16.msra.mxu0 %v2486
        %2588 = vmatprep.subr.bf16.mxu0 %v2483
        %2589 = vmatpush1.bf16.msra.mxu0 %v2482
        %2590 = vmatprep.subr.bf16.mxu0 %v2479
        %2591 = vmatpush1.bf16.msra.mxu0 %v2478
        %2592 = vmatprep.subr.bf16.mxu0 %v2475
        %2593 = vmatpush1.bf16.msra.mxu0 %v2474
        %2594 = vmatprep.subr.bf16.mxu0 %v2471
        %2595 = vmatpush1.bf16.msra.mxu0 %v2470
        %2596 = vmatprep.subr.bf16.mxu0 %v2467
        %2597 = vmatpush1.bf16.msra.mxu0 %v2466
        %2598 = vmatprep.subr.bf16.mxu0 %v2463
        %2599 = vmatpush1.bf16.msra.mxu0 %v2462
        %2600 = vmatprep.subr.bf16.mxu0 %v2459
        %2601 = vmatpush1.bf16.msra.mxu0 %v2458
        %2602 = vmatprep.subr.bf16.mxu0 %v2519
        %2603 = vmatpush2.bf16.msra.mxu0 %v2518
        %2604 = vmatprep.subr.bf16.mxu0 %v2515
        %2605 = vmatpush2.bf16.msra.mxu0 %v2514
        %2606 = vmatprep.subr.bf16.mxu0 %v2511
        %2607 = vmatpush2.bf16.msra.mxu0 %v2510
        %2608 = vmatprep.subr.bf16.mxu0 %v2507
        %2609 = vmatpush2.bf16.msra.mxu0 %v2506
        %2610 = vmatprep.subr.bf16.mxu0 %v2503
        %2611 = vmatpush2.bf16.msra.mxu0 %v2502
        %2612 = vmatprep.subr.bf16.mxu0 %v2499
        %2613 = vmatpush2.bf16.msra.mxu0 %v2498
        %2614 = vmatprep.subr.bf16.mxu0 %v2495
        %2615 = vmatpush2.bf16.msra.mxu0 %v2494
        %2616 = vmatprep.subr.bf16.mxu0 %v2491
        %2617 = vmatpush2.bf16.msra.mxu0 %v2490
        %2618 = vmatprep.mubr.bf16.mxu0 %v2188
        %2619 = vmatmul.mubr.bf16.gmra.mxu0 %v2187
        %v2620 = vpop.f32.mrf.mxu0
        %v2621 = vadd.f32 0.0, %v2620
        %v2622 = vpop.f32.mrf.mxu0
        %v2623 = vadd.f32 0.0, %v2622
        %v2624 = vpop.f32.mrf.mxu0
        %v2625 = vadd.f32 0.0, %v2624
        %v2626 = vpop.f32.mrf.mxu0
        %v2627 = vadd.f32 0.0, %v2626
        %2628 = vmatprep.mubr.bf16.mxu0 %v2190
        %2629 = vmatmul.mubr.bf16.gmra.mxu0 %v2189
        %v2630 = vpop.f32.mrf.mxu0
        %v2631 = vadd.f32 0.0, %v2630
        %v2632 = vpop.f32.mrf.mxu0
        %v2633 = vadd.f32 0.0, %v2632
        %v2634 = vpop.f32.mrf.mxu0
        %v2635 = vadd.f32 0.0, %v2634
        %v2636 = vpop.f32.mrf.mxu0
        %v2637 = vadd.f32 0.0, %v2636
        %2638 = vmatprep.mubr.bf16.mxu0 %v2192
        %2639 = vmatmul.mubr.bf16.gmra.mxu0 %v2191
        %v2640 = vpop.f32.mrf.mxu0
        %v2641 = vadd.f32 0.0, %v2640
        %v2642 = vpop.f32.mrf.mxu0
        %v2643 = vadd.f32 0.0, %v2642
        %v2644 = vpop.f32.mrf.mxu0
        %v2645 = vadd.f32 0.0, %v2644
        %v2646 = vpop.f32.mrf.mxu0
        %v2647 = vadd.f32 0.0, %v2646
        %2648 = vmatprep.mubr.bf16.mxu0 %v2194
        %2649 = vmatmul.mubr.bf16.gmra.mxu0 %v2193
        %v2650 = vpop.f32.mrf.mxu0
        %v2651 = vadd.f32 0.0, %v2650
        %v2652 = vpop.f32.mrf.mxu0
        %v2653 = vadd.f32 0.0, %v2652
        %v2654 = vpop.f32.mrf.mxu0
        %v2655 = vadd.f32 0.0, %v2654
        %v2656 = vpop.f32.mrf.mxu0
        %v2657 = vadd.f32 0.0, %v2656
        %2658 = vmatprep.mubr.bf16.mxu0 %v2196
        %2659 = vmatmul.mubr.bf16.gmra.mxu0 %v2195
        %v2660 = vpop.f32.mrf.mxu0
        %v2661 = vadd.f32 0.0, %v2660
        %v2662 = vpop.f32.mrf.mxu0
        %v2663 = vadd.f32 0.0, %v2662
        %v2664 = vpop.f32.mrf.mxu0
        %v2665 = vadd.f32 0.0, %v2664
        %v2666 = vpop.f32.mrf.mxu0
        %v2667 = vadd.f32 0.0, %v2666
        %2668 = vmatprep.mubr.bf16.mxu0 %v2198
        %2669 = vmatmul.mubr.bf16.gmra.mxu0 %v2197
        %v2670 = vpop.f32.mrf.mxu0
        %v2671 = vadd.f32 0.0, %v2670
        %v2672 = vpop.f32.mrf.mxu0
        %v2673 = vadd.f32 0.0, %v2672
        %v2674 = vpop.f32.mrf.mxu0
        %v2675 = vadd.f32 0.0, %v2674
        %v2676 = vpop.f32.mrf.mxu0
        %v2677 = vadd.f32 0.0, %v2676
        %2678 = vmatprep.mubr.bf16.mxu0 %v2200
        %2679 = vmatmul.mubr.bf16.gmra.mxu0 %v2199
        %v2680 = vpop.f32.mrf.mxu0
        %v2681 = vadd.f32 0.0, %v2680
        %v2682 = vpop.f32.mrf.mxu0
        %v2683 = vadd.f32 0.0, %v2682
        %v2684 = vpop.f32.mrf.mxu0
        %v2685 = vadd.f32 0.0, %v2684
        %v2686 = vpop.f32.mrf.mxu0
        %v2687 = vadd.f32 0.0, %v2686
        %2688 = vdwg.mxu0
        %2689 = vmatprep.subr.bf16.mxu0 %v2489
        %2690 = vmatpush1.bf16.msra.mxu0 %v2488
        %2691 = vmatprep.subr.bf16.mxu0 %v2485
        %2692 = vmatpush1.bf16.msra.mxu0 %v2484
        %2693 = vmatprep.subr.bf16.mxu0 %v2481
        %2694 = vmatpush1.bf16.msra.mxu0 %v2480
        %2695 = vmatprep.subr.bf16.mxu0 %v2477
        %2696 = vmatpush1.bf16.msra.mxu0 %v2476
        %2697 = vmatprep.subr.bf16.mxu0 %v2473
        %2698 = vmatpush1.bf16.msra.mxu0 %v2472
        %2699 = vmatprep.subr.bf16.mxu0 %v2469
        %2700 = vmatpush1.bf16.msra.mxu0 %v2468
        %2701 = vmatprep.subr.bf16.mxu0 %v2465
        %2702 = vmatpush1.bf16.msra.mxu0 %v2464
        %2703 = vmatprep.subr.bf16.mxu0 %v2461
        %2704 = vmatpush1.bf16.msra.mxu0 %v2460
        %2705 = vmatprep.subr.bf16.mxu0 %v2521
        %2706 = vmatpush2.bf16.msra.mxu0 %v2520
        %2707 = vmatprep.subr.bf16.mxu0 %v2517
        %2708 = vmatpush2.bf16.msra.mxu0 %v2516
        %2709 = vmatprep.subr.bf16.mxu0 %v2513
        %2710 = vmatpush2.bf16.msra.mxu0 %v2512
        %2711 = vmatprep.subr.bf16.mxu0 %v2509
        %2712 = vmatpush2.bf16.msra.mxu0 %v2508
        %2713 = vmatprep.subr.bf16.mxu0 %v2505
        %2714 = vmatpush2.bf16.msra.mxu0 %v2504
        %2715 = vmatprep.subr.bf16.mxu0 %v2501
        %2716 = vmatpush2.bf16.msra.mxu0 %v2500
        %2717 = vmatprep.subr.bf16.mxu0 %v2497
        %2718 = vmatpush2.bf16.msra.mxu0 %v2496
        %2719 = vmatprep.subr.bf16.mxu0 %v2493
        %2720 = vmatpush2.bf16.msra.mxu0 %v2492
        %2721 = vmatprep.mubr.bf16.mxu0 %v2188
        %2722 = vmatmul.mubr.bf16.gmra.mxu0 %v2187
        %v2723 = vpop.f32.mrf.mxu0
        %v2724 = vadd.f32 0.0, %v2723
        %v2725 = vpop.f32.mrf.mxu0
        %v2726 = vadd.f32 0.0, %v2725
        %v2727 = vpop.f32.mrf.mxu0
        %v2728 = vadd.f32 0.0, %v2727
        %v2729 = vpop.f32.mrf.mxu0
        %v2730 = vadd.f32 0.0, %v2729
        %2731 = vmatprep.mubr.bf16.mxu0 %v2190
        %2732 = vmatmul.mubr.bf16.gmra.mxu0 %v2189
        %v2733 = vpop.f32.mrf.mxu0
        %v2734 = vadd.f32 0.0, %v2733
        %v2735 = vpop.f32.mrf.mxu0
        %v2736 = vadd.f32 0.0, %v2735
        %v2737 = vpop.f32.mrf.mxu0
        %v2738 = vadd.f32 0.0, %v2737
        %v2739 = vpop.f32.mrf.mxu0
        %v2740 = vadd.f32 0.0, %v2739
        %2741 = vmatprep.mubr.bf16.mxu0 %v2192
        %2742 = vmatmul.mubr.bf16.gmra.mxu0 %v2191
        %v2743 = vpop.f32.mrf.mxu0
        %v2744 = vadd.f32 0.0, %v2743
        %v2745 = vpop.f32.mrf.mxu0
        %v2746 = vadd.f32 0.0, %v2745
        %v2747 = vpop.f32.mrf.mxu0
        %v2748 = vadd.f32 0.0, %v2747
        %v2749 = vpop.f32.mrf.mxu0
        %v2750 = vadd.f32 0.0, %v2749
        %2751 = vmatprep.mubr.bf16.mxu0 %v2194
        %2752 = vmatmul.mubr.bf16.gmra.mxu0 %v2193
        %v2753 = vpop.f32.mrf.mxu0
        %v2754 = vadd.f32 0.0, %v2753
        %v2755 = vpop.f32.mrf.mxu0
        %v2756 = vadd.f32 0.0, %v2755
        %v2757 = vpop.f32.mrf.mxu0
        %v2758 = vadd.f32 0.0, %v2757
        %v2759 = vpop.f32.mrf.mxu0
        %v2760 = vadd.f32 0.0, %v2759
        %2761 = vmatprep.mubr.bf16.mxu0 %v2196
        %2762 = vmatmul.mubr.bf16.gmra.mxu0 %v2195
        %v2763 = vpop.f32.mrf.mxu0
        %v2764 = vadd.f32 0.0, %v2763
        %v2765 = vpop.f32.mrf.mxu0
        %v2766 = vadd.f32 0.0, %v2765
        %v2767 = vpop.f32.mrf.mxu0
        %v2768 = vadd.f32 0.0, %v2767
        %v2769 = vpop.f32.mrf.mxu0
        %v2770 = vadd.f32 0.0, %v2769
        %2771 = vmatprep.mubr.bf16.mxu0 %v2198
        %2772 = vmatmul.mubr.bf16.gmra.mxu0 %v2197
        %v2773 = vpop.f32.mrf.mxu0
        %v2774 = vadd.f32 0.0, %v2773
        %v2775 = vpop.f32.mrf.mxu0
        %v2776 = vadd.f32 0.0, %v2775
        %v2777 = vpop.f32.mrf.mxu0
        %v2778 = vadd.f32 0.0, %v2777
        %v2779 = vpop.f32.mrf.mxu0
        %v2780 = vadd.f32 0.0, %v2779
        %2781 = vmatprep.mubr.bf16.mxu0 %v2200
        %2782 = vmatmul.mubr.bf16.gmra.mxu0 %v2199
        %v2783 = vpop.f32.mrf.mxu0
        %v2784 = vadd.f32 0.0, %v2783
        %v2785 = vpop.f32.mrf.mxu0
        %v2786 = vadd.f32 0.0, %v2785
        %v2787 = vpop.f32.mrf.mxu0
        %v2788 = vadd.f32 0.0, %v2787
        %v2789 = vpop.f32.mrf.mxu0
        %v2790 = vadd.f32 0.0, %v2789
        %2791 = vdwg.mxu0
        %v2792 = vld [vmem:[#allocation4] sm:$0xff]
        %v2793 = vld [vmem:[#allocation4 + $0x8] sm:$0xff]
        %v2794 = vld [vmem:[#allocation4 + $0x10] sm:$0xff]
        %v2795 = vld [vmem:[#allocation4 + $0x18] sm:$0xff]
        %v2796 = vld [vmem:[#allocation4 + $0x20] sm:$0xff]
        %v2797 = vld [vmem:[#allocation4 + $0x28] sm:$0xff]
        %v2798 = vld [vmem:[#allocation4 + $0x30] sm:$0xff]
        %v2799 = vld [vmem:[#allocation4 + $0x38] sm:$0xff]
        %v2800 = vld [vmem:[#allocation4 + $0x40] sm:$0xff]
        %v2801 = vld [vmem:[#allocation4 + $0x48] sm:$0xff]
        %v2802 = vld [vmem:[#allocation4 + $0x50] sm:$0xff]
        %v2803 = vld [vmem:[#allocation4 + $0x58] sm:$0xff]
        %v2804 = vld [vmem:[#allocation4 + $0x60] sm:$0xff]
        %v2805 = vld [vmem:[#allocation4 + $0x68] sm:$0xff]
        %v2806 = vld [vmem:[#allocation4 + $0x70] sm:$0xff]
        %v2807 = vld [vmem:[#allocation4 + $0x78] sm:$0xff]
        %v2808 = vld [vmem:[#allocation4 + $0x80] sm:$0xff]
        %v2809 = vld [vmem:[#allocation4 + $0x88] sm:$0xff]
        %v2810 = vld [vmem:[#allocation4 + $0x90] sm:$0xff]
        %v2811 = vld [vmem:[#allocation4 + $0x98] sm:$0xff]
        %v2812 = vld [vmem:[#allocation4 + $0xa0] sm:$0xff]
        %v2813 = vld [vmem:[#allocation4 + $0xa8] sm:$0xff]
        %v2814 = vld [vmem:[#allocation4 + $0xb0] sm:$0xff]
        %v2815 = vld [vmem:[#allocation4 + $0xb8] sm:$0xff]
        %v2816 = vld [vmem:[#allocation4 + $0xc0] sm:$0xff]
        %v2817 = vld [vmem:[#allocation4 + $0xc8] sm:$0xff]
        %v2818 = vld [vmem:[#allocation4 + $0xd0] sm:$0xff]
        %v2819 = vld [vmem:[#allocation4 + $0xd8] sm:$0xff]
        %v2820 = vld [vmem:[#allocation4 + $0xe0] sm:$0xff]
        %v2821 = vld [vmem:[#allocation4 + $0xe8] sm:$0xff]
        %v2822 = vld [vmem:[#allocation4 + $0xf0] sm:$0xff]
        %v2823 = vld [vmem:[#allocation4 + $0xf8] sm:$0xff]
        %v2824 = vld [vmem:[#allocation4 + $0x100] sm:$0xff]
        %v2825 = vld [vmem:[#allocation4 + $0x108] sm:$0xff]
        %v2826 = vld [vmem:[#allocation4 + $0x110] sm:$0xff]
        %v2827 = vld [vmem:[#allocation4 + $0x118] sm:$0xff]
        %v2828 = vld [vmem:[#allocation4 + $0x120] sm:$0xff]
        %v2829 = vld [vmem:[#allocation4 + $0x128] sm:$0xff]
        %v2830 = vld [vmem:[#allocation4 + $0x130] sm:$0xff]
        %v2831 = vld [vmem:[#allocation4 + $0x138] sm:$0xff]
        %v2832 = vld [vmem:[#allocation4 + $0x140] sm:$0xff]
        %v2833 = vld [vmem:[#allocation4 + $0x148] sm:$0xff]
        %v2834 = vld [vmem:[#allocation4 + $0x150] sm:$0xff]
        %v2835 = vld [vmem:[#allocation4 + $0x158] sm:$0xff]
        %v2836 = vld [vmem:[#allocation4 + $0x160] sm:$0xff]
        %v2837 = vld [vmem:[#allocation4 + $0x168] sm:$0xff]
        %v2838 = vld [vmem:[#allocation4 + $0x170] sm:$0xff]
        %v2839 = vld [vmem:[#allocation4 + $0x178] sm:$0xff]
        %v2840 = vld [vmem:[#allocation4 + $0x180] sm:$0xff]
        %v2841 = vld [vmem:[#allocation4 + $0x188] sm:$0xff]
        %v2842 = vld [vmem:[#allocation4 + $0x190] sm:$0xff]
        %v2843 = vld [vmem:[#allocation4 + $0x198] sm:$0xff]
        %v2844 = vld [vmem:[#allocation4 + $0x1a0] sm:$0xff]
        %v2845 = vld [vmem:[#allocation4 + $0x1a8] sm:$0xff]
        %v2846 = vld [vmem:[#allocation4 + $0x1b0] sm:$0xff]
        %v2847 = vld [vmem:[#allocation4 + $0x1b8] sm:$0xff]
        %v2848 = vadd.f32 %v2792, %v2621
        %v2849 = vadd.f32 %v2793, %v2623
        %v2850 = vadd.f32 %v2794, %v2724
        %v2851 = vadd.f32 %v2795, %v2726
        %v2852 = vadd.f32 %v2796, %v2625
        %v2853 = vadd.f32 %v2797, %v2627
        %v2854 = vadd.f32 %v2798, %v2728
        %v2855 = vadd.f32 %v2799, %v2730
        %v2856 = vadd.f32 %v2800, %v2631
        %v2857 = vadd.f32 %v2801, %v2633
        %v2858 = vadd.f32 %v2802, %v2734
        %v2859 = vadd.f32 %v2803, %v2736
        %v2860 = vadd.f32 %v2804, %v2635
        %v2861 = vadd.f32 %v2805, %v2637
        %v2862 = vadd.f32 %v2806, %v2738
        %v2863 = vadd.f32 %v2807, %v2740
        %v2864 = vadd.f32 %v2808, %v2641
        %v2865 = vadd.f32 %v2809, %v2643
        %v2866 = vadd.f32 %v2810, %v2744
        %v2867 = vadd.f32 %v2811, %v2746
        %v2868 = vadd.f32 %v2812, %v2645
        %v2869 = vadd.f32 %v2813, %v2647
        %v2870 = vadd.f32 %v2814, %v2748
        %v2871 = vadd.f32 %v2815, %v2750
        %v2872 = vadd.f32 %v2816, %v2651
        %v2873 = vadd.f32 %v2817, %v2653
        %v2874 = vadd.f32 %v2818, %v2754
        %v2875 = vadd.f32 %v2819, %v2756
        %v2876 = vadd.f32 %v2820, %v2655
        %v2877 = vadd.f32 %v2821, %v2657
        %v2878 = vadd.f32 %v2822, %v2758
        %v2879 = vadd.f32 %v2823, %v2760
        %v2880 = vadd.f32 %v2824, %v2661
        %v2881 = vadd.f32 %v2825, %v2663
        %v2882 = vadd.f32 %v2826, %v2764
        %v2883 = vadd.f32 %v2827, %v2766
        %v2884 = vadd.f32 %v2828, %v2665
        %v2885 = vadd.f32 %v2829, %v2667
        %v2886 = vadd.f32 %v2830, %v2768
        %v2887 = vadd.f32 %v2831, %v2770
        %v2888 = vadd.f32 %v2832, %v2671
        %v2889 = vadd.f32 %v2833, %v2673
        %v2890 = vadd.f32 %v2834, %v2774
        %v2891 = vadd.f32 %v2835, %v2776
        %v2892 = vadd.f32 %v2836, %v2675
        %v2893 = vadd.f32 %v2837, %v2677
        %v2894 = vadd.f32 %v2838, %v2778
        %v2895 = vadd.f32 %v2839, %v2780
        %v2896 = vadd.f32 %v2840, %v2681
        %v2897 = vadd.f32 %v2841, %v2683
        %v2898 = vadd.f32 %v2842, %v2784
        %v2899 = vadd.f32 %v2843, %v2786
        %v2900 = vadd.f32 %v2844, %v2685
        %v2901 = vadd.f32 %v2845, %v2687
        %v2902 = vadd.f32 %v2846, %v2788
        %v2903 = vadd.f32 %v2847, %v2790
        %2904 = vst [vmem:[#allocation4] sm:$0xff] %v2848
        %2905 = vst [vmem:[#allocation4 + $0x8] sm:$0xff] %v2849
        %2906 = vst [vmem:[#allocation4 + $0x10] sm:$0xff] %v2850
        %2907 = vst [vmem:[#allocation4 + $0x18] sm:$0xff] %v2851
        %2908 = vst [vmem:[#allocation4 + $0x20] sm:$0xff] %v2852
        %2909 = vst [vmem:[#allocation4 + $0x28] sm:$0xff] %v2853
        %2910 = vst [vmem:[#allocation4 + $0x30] sm:$0xff] %v2854
        %2911 = vst [vmem:[#allocation4 + $0x38] sm:$0xff] %v2855
        %2912 = vst [vmem:[#allocation4 + $0x40] sm:$0xff] %v2856
        %2913 = vst [vmem:[#allocation4 + $0x48] sm:$0xff] %v2857
        %2914 = vst [vmem:[#allocation4 + $0x50] sm:$0xff] %v2858
        %2915 = vst [vmem:[#allocation4 + $0x58] sm:$0xff] %v2859
        %2916 = vst [vmem:[#allocation4 + $0x60] sm:$0xff] %v2860
        %2917 = vst [vmem:[#allocation4 + $0x68] sm:$0xff] %v2861
        %2918 = vst [vmem:[#allocation4 + $0x70] sm:$0xff] %v2862
        %2919 = vst [vmem:[#allocation4 + $0x78] sm:$0xff] %v2863
        %2920 = vst [vmem:[#allocation4 + $0x80] sm:$0xff] %v2864
        %2921 = vst [vmem:[#allocation4 + $0x88] sm:$0xff] %v2865
        %2922 = vst [vmem:[#allocation4 + $0x90] sm:$0xff] %v2866
        %2923 = vst [vmem:[#allocation4 + $0x98] sm:$0xff] %v2867
        %2924 = vst [vmem:[#allocation4 + $0xa0] sm:$0xff] %v2868
        %2925 = vst [vmem:[#allocation4 + $0xa8] sm:$0xff] %v2869
        %2926 = vst [vmem:[#allocation4 + $0xb0] sm:$0xff] %v2870
        %2927 = vst [vmem:[#allocation4 + $0xb8] sm:$0xff] %v2871
        %2928 = vst [vmem:[#allocation4 + $0xc0] sm:$0xff] %v2872
        %2929 = vst [vmem:[#allocation4 + $0xc8] sm:$0xff] %v2873
        %2930 = vst [vmem:[#allocation4 + $0xd0] sm:$0xff] %v2874
        %2931 = vst [vmem:[#allocation4 + $0xd8] sm:$0xff] %v2875
        %2932 = vst [vmem:[#allocation4 + $0xe0] sm:$0xff] %v2876
        %2933 = vst [vmem:[#allocation4 + $0xe8] sm:$0xff] %v2877
        %2934 = vst [vmem:[#allocation4 + $0xf0] sm:$0xff] %v2878
        %2935 = vst [vmem:[#allocation4 + $0xf8] sm:$0xff] %v2879
        %2936 = vst [vmem:[#allocation4 + $0x100] sm:$0xff] %v2880
        %2937 = vst [vmem:[#allocation4 + $0x108] sm:$0xff] %v2881
        %2938 = vst [vmem:[#allocation4 + $0x110] sm:$0xff] %v2882
        %2939 = vst [vmem:[#allocation4 + $0x118] sm:$0xff] %v2883
        %2940 = vst [vmem:[#allocation4 + $0x120] sm:$0xff] %v2884
        %2941 = vst [vmem:[#allocation4 + $0x128] sm:$0xff] %v2885
        %2942 = vst [vmem:[#allocation4 + $0x130] sm:$0xff] %v2886
        %2943 = vst [vmem:[#allocation4 + $0x138] sm:$0xff] %v2887
        %2944 = vst [vmem:[#allocation4 + $0x140] sm:$0xff] %v2888
        %2945 = vst [vmem:[#allocation4 + $0x148] sm:$0xff] %v2889
        %2946 = vst [vmem:[#allocation4 + $0x150] sm:$0xff] %v2890
        %2947 = vst [vmem:[#allocation4 + $0x158] sm:$0xff] %v2891
        %2948 = vst [vmem:[#allocation4 + $0x160] sm:$0xff] %v2892
        %2949 = vst [vmem:[#allocation4 + $0x168] sm:$0xff] %v2893
        %2950 = vst [vmem:[#allocation4 + $0x170] sm:$0xff] %v2894
        %2951 = vst [vmem:[#allocation4 + $0x178] sm:$0xff] %v2895
        %2952 = vst [vmem:[#allocation4 + $0x180] sm:$0xff] %v2896
        %2953 = vst [vmem:[#allocation4 + $0x188] sm:$0xff] %v2897
        %2954 = vst [vmem:[#allocation4 + $0x190] sm:$0xff] %v2898
        %2955 = vst [vmem:[#allocation4 + $0x198] sm:$0xff] %v2899
        %2956 = vst [vmem:[#allocation4 + $0x1a0] sm:$0xff] %v2900
        %2957 = vst [vmem:[#allocation4 + $0x1a8] sm:$0xff] %v2901
        %2958 = vst [vmem:[#allocation4 + $0x1b0] sm:$0xff] %v2902
        %2959 = vst [vmem:[#allocation4 + $0x1b8] sm:$0xff] %v2903
        %v2960 = vld [vmem:[#allocation2 + $0x10] sm:$0xff]
        %v2961 = vld [vmem:[#allocation2 + $0x18] sm:$0xff]
        %v2962 = vld [vmem:[#allocation2 + $0x20] sm:$0xff]
        %v2963 = vld [vmem:[#allocation2 + $0x28] sm:$0xff]
        %v2964 = vld [vmem:[#allocation2 + $0x30] sm:$0xff]
        %v2965 = vld [vmem:[#allocation2 + $0x38] sm:$0xff]
        %v2966 = vld [vmem:[#allocation2 + $0x40] sm:$0xff]
        %v2967 = vld [vmem:[#allocation2 + $0x48] sm:$0xff]
        %v2968 = vld [vmem:[#allocation2 + $0x50] sm:$0xff]
        %v2969 = vld [vmem:[#allocation2 + $0x58] sm:$0xff]
        %v2970 = vld [vmem:[#allocation2 + $0x60] sm:$0xff]
        %v2971 = vld [vmem:[#allocation2 + $0x68] sm:$0xff]
        %v2972 = vld [vmem:[#allocation2 + $0x70] sm:$0xff]
        %v2973 = vld [vmem:[#allocation2 + $0x78] sm:$0xff]
        %v2974 = vld [vmem:[#allocation3 + $0x10] sm:$0xff]
        %v2975 = vld [vmem:[#allocation3 + $0x18] sm:$0xff]
        %v2976 = vld [vmem:[#allocation3 + $0x20] sm:$0xff]
        %v2977 = vld [vmem:[#allocation3 + $0x28] sm:$0xff]
        %v2978 = vld [vmem:[#allocation3 + $0x30] sm:$0xff]
        %v2979 = vld [vmem:[#allocation3 + $0x38] sm:$0xff]
        %v2980 = vld [vmem:[#allocation3 + $0x40] sm:$0xff]
        %v2981 = vld [vmem:[#allocation3 + $0x48] sm:$0xff]
        %v2982 = vld [vmem:[#allocation3 + $0x50] sm:$0xff]
        %v2983 = vld [vmem:[#allocation3 + $0x58] sm:$0xff]
        %v2984 = vld [vmem:[#allocation3 + $0x60] sm:$0xff]
        %v2985 = vld [vmem:[#allocation3 + $0x68] sm:$0xff]
        %v2986 = vld [vmem:[#allocation3 + $0x70] sm:$0xff]
        %v2987 = vld [vmem:[#allocation3 + $0x78] sm:$0xff]
        %v2988 = vpack.c.bf16 %v2962, %v2960
        %v2989 = vpack.c.bf16 %v2963, %v2961
        %v2990 = vpack.c.bf16 %v2966, %v2964
        %v2991 = vpack.c.bf16 %v2967, %v2965
        %v2992 = vpack.c.bf16 %v2970, %v2968
        %v2993 = vpack.c.bf16 %v2971, %v2969
        %v2994 = vpack.c.bf16 %v2974, %v2972
        %v2995 = vpack.c.bf16 %v2975, %v2973
        %v2996 = vpack.c.bf16 %v2978, %v2976
        %v2997 = vpack.c.bf16 %v2979, %v2977
        %v2998 = vpack.c.bf16 %v2982, %v2980
        %v2999 = vpack.c.bf16 %v2983, %v2981
        %v3000 = vpack.c.bf16 %v2986, %v2984
        %v3001 = vpack.c.bf16 %v2987, %v2985
        %s3002 = scalar_lea.vmem %s3, 1024
        %v3003 = vld [vmem:[%s3002] sm:$0xff]
        %v3004 = vld [vmem:[%s3002 + $0x8] sm:$0xff]
        %v3005 = vld [vmem:[%s3002 + $0x10] sm:$0xff]
        %v3006 = vld [vmem:[%s3002 + $0x18] sm:$0xff]
        %v3007 = vld [vmem:[%s3002 + $0x20] sm:$0xff]
        %v3008 = vld [vmem:[%s3002 + $0x28] sm:$0xff]
        %v3009 = vld [vmem:[%s3002 + $0x30] sm:$0xff]
        %v3010 = vld [vmem:[%s3002 + $0x38] sm:$0xff]
        %v3011 = vld [vmem:[%s3002 + $0x40] sm:$0xff]
        %v3012 = vld [vmem:[%s3002 + $0x48] sm:$0xff]
        %v3013 = vld [vmem:[%s3002 + $0x50] sm:$0xff]
        %v3014 = vld [vmem:[%s3002 + $0x58] sm:$0xff]
        %v3015 = vld [vmem:[%s3002 + $0x60] sm:$0xff]
        %v3016 = vld [vmem:[%s3002 + $0x68] sm:$0xff]
        %v3017 = vld [vmem:[%s3002 + $0x70] sm:$0xff]
        %v3018 = vld [vmem:[%s3002 + $0x78] sm:$0xff]
        %v3019 = vld [vmem:[%s3002 + $0x80] sm:$0xff]
        %v3020 = vld [vmem:[%s3002 + $0x88] sm:$0xff]
        %v3021 = vld [vmem:[%s3002 + $0x90] sm:$0xff]
        %v3022 = vld [vmem:[%s3002 + $0x98] sm:$0xff]
        %v3023 = vld [vmem:[%s3002 + $0xa0] sm:$0xff]
        %v3024 = vld [vmem:[%s3002 + $0xa8] sm:$0xff]
        %v3025 = vld [vmem:[%s3002 + $0xb0] sm:$0xff]
        %v3026 = vld [vmem:[%s3002 + $0xb8] sm:$0xff]
        %v3027 = vld [vmem:[%s3002 + $0xc0] sm:$0xff]
        %v3028 = vld [vmem:[%s3002 + $0xc8] sm:$0xff]
        %v3029 = vld [vmem:[%s3002 + $0xd0] sm:$0xff]
        %v3030 = vld [vmem:[%s3002 + $0xd8] sm:$0xff]
        %v3031 = vld [vmem:[%s3002 + $0xe0] sm:$0xff]
        %v3032 = vld [vmem:[%s3002 + $0xe8] sm:$0xff]
        %v3033 = vld [vmem:[%s3002 + $0xf0] sm:$0xff]
        %v3034 = vld [vmem:[%s3002 + $0xf8] sm:$0xff]
        %v3035 = vld [vmem:[%s3002 + $0x100] sm:$0xff]
        %v3036 = vld [vmem:[%s3002 + $0x108] sm:$0xff]
        %v3037 = vld [vmem:[%s3002 + $0x110] sm:$0xff]
        %v3038 = vld [vmem:[%s3002 + $0x118] sm:$0xff]
        %v3039 = vld [vmem:[%s3002 + $0x120] sm:$0xff]
        %v3040 = vld [vmem:[%s3002 + $0x128] sm:$0xff]
        %v3041 = vld [vmem:[%s3002 + $0x130] sm:$0xff]
        %v3042 = vld [vmem:[%s3002 + $0x138] sm:$0xff]
        %v3043 = vld [vmem:[%s3002 + $0x140] sm:$0xff]
        %v3044 = vld [vmem:[%s3002 + $0x148] sm:$0xff]
        %v3045 = vld [vmem:[%s3002 + $0x150] sm:$0xff]
        %v3046 = vld [vmem:[%s3002 + $0x158] sm:$0xff]
        %v3047 = vld [vmem:[%s3002 + $0x160] sm:$0xff]
        %v3048 = vld [vmem:[%s3002 + $0x168] sm:$0xff]
        %v3049 = vld [vmem:[%s3002 + $0x170] sm:$0xff]
        %v3050 = vld [vmem:[%s3002 + $0x178] sm:$0xff]
        %v3051 = vld [vmem:[%s3002 + $0x180] sm:$0xff]
        %v3052 = vld [vmem:[%s3002 + $0x188] sm:$0xff]
        %v3053 = vld [vmem:[%s3002 + $0x190] sm:$0xff]
        %v3054 = vld [vmem:[%s3002 + $0x198] sm:$0xff]
        %v3055 = vld [vmem:[%s3002 + $0x1a0] sm:$0xff]
        %v3056 = vld [vmem:[%s3002 + $0x1a8] sm:$0xff]
        %v3057 = vld [vmem:[%s3002 + $0x1b0] sm:$0xff]
        %v3058 = vld [vmem:[%s3002 + $0x1b8] sm:$0xff]
        %v3059 = vld [vmem:[%s3002 + $0x1c0] sm:$0xff]
        %v3060 = vld [vmem:[%s3002 + $0x1c8] sm:$0xff]
        %v3061 = vld [vmem:[%s3002 + $0x1d0] sm:$0xff]
        %v3062 = vld [vmem:[%s3002 + $0x1d8] sm:$0xff]
        %v3063 = vld [vmem:[%s3002 + $0x1e0] sm:$0xff]
        %v3064 = vld [vmem:[%s3002 + $0x1e8] sm:$0xff]
        %v3065 = vld [vmem:[%s3002 + $0x1f0] sm:$0xff]
        %v3066 = vld [vmem:[%s3002 + $0x1f8] sm:$0xff]
        %v3131 = vunpack.c.l.b16 %v3003
        %v3132 = vunpack.c.h.b16 %v3003
        %v3133 = vunpack.c.l.b16 %v3004
        %v3134 = vunpack.c.h.b16 %v3004
        %v3135 = vunpack.c.l.b16 %v3005
        %v3136 = vunpack.c.h.b16 %v3005
        %v3137 = vunpack.c.l.b16 %v3006
        %v3138 = vunpack.c.h.b16 %v3006
        %v3139 = vunpack.c.l.b16 %v3007
        %v3140 = vunpack.c.h.b16 %v3007
        %v3141 = vunpack.c.l.b16 %v3008
        %v3142 = vunpack.c.h.b16 %v3008
        %v3143 = vunpack.c.l.b16 %v3009
        %v3144 = vunpack.c.h.b16 %v3009
        %v3145 = vunpack.c.l.b16 %v3010
        %v3146 = vunpack.c.h.b16 %v3010
        %v3147 = vunpack.c.l.b16 %v3011
        %v3148 = vunpack.c.h.b16 %v3011
        %v3149 = vunpack.c.l.b16 %v3012
        %v3150 = vunpack.c.h.b16 %v3012
        %v3151 = vunpack.c.l.b16 %v3013
        %v3152 = vunpack.c.h.b16 %v3013
        %v3153 = vunpack.c.l.b16 %v3014
        %v3154 = vunpack.c.h.b16 %v3014
        %v3155 = vunpack.c.l.b16 %v3015
        %v3156 = vunpack.c.h.b16 %v3015
        %v3157 = vunpack.c.l.b16 %v3016
        %v3158 = vunpack.c.h.b16 %v3016
        %v3159 = vunpack.c.l.b16 %v3017
        %v3160 = vunpack.c.h.b16 %v3017
        %v3161 = vunpack.c.l.b16 %v3018
        %v3162 = vunpack.c.h.b16 %v3018
        %v3163 = vunpack.c.l.b16 %v3019
        %v3164 = vunpack.c.h.b16 %v3019
        %v3165 = vunpack.c.l.b16 %v3020
        %v3166 = vunpack.c.h.b16 %v3020
        %v3167 = vunpack.c.l.b16 %v3021
        %v3168 = vunpack.c.h.b16 %v3021
        %v3169 = vunpack.c.l.b16 %v3022
        %v3170 = vunpack.c.h.b16 %v3022
        %v3171 = vunpack.c.l.b16 %v3023
        %v3172 = vunpack.c.h.b16 %v3023
        %v3173 = vunpack.c.l.b16 %v3024
        %v3174 = vunpack.c.h.b16 %v3024
        %v3175 = vunpack.c.l.b16 %v3025
        %v3176 = vunpack.c.h.b16 %v3025
        %v3177 = vunpack.c.l.b16 %v3026
        %v3178 = vunpack.c.h.b16 %v3026
        %v3179 = vunpack.c.l.b16 %v3027
        %v3180 = vunpack.c.h.b16 %v3027
        %v3181 = vunpack.c.l.b16 %v3028
        %v3182 = vunpack.c.h.b16 %v3028
        %v3183 = vunpack.c.l.b16 %v3029
        %v3184 = vunpack.c.h.b16 %v3029
        %v3185 = vunpack.c.l.b16 %v3030
        %v3186 = vunpack.c.h.b16 %v3030
        %v3187 = vunpack.c.l.b16 %v3031
        %v3188 = vunpack.c.h.b16 %v3031
        %v3189 = vunpack.c.l.b16 %v3032
        %v3190 = vunpack.c.h.b16 %v3032
        %v3191 = vunpack.c.l.b16 %v3033
        %v3192 = vunpack.c.h.b16 %v3033
        %v3193 = vunpack.c.l.b16 %v3034
        %v3194 = vunpack.c.h.b16 %v3034
        %v3195 = vunpack.c.l.b16 %v3035
        %v3196 = vunpack.c.h.b16 %v3035
        %v3197 = vunpack.c.l.b16 %v3036
        %v3198 = vunpack.c.h.b16 %v3036
        %v3199 = vunpack.c.l.b16 %v3037
        %v3200 = vunpack.c.h.b16 %v3037
        %v3201 = vunpack.c.l.b16 %v3038
        %v3202 = vunpack.c.h.b16 %v3038
        %v3203 = vunpack.c.l.b16 %v3039
        %v3204 = vunpack.c.h.b16 %v3039
        %v3205 = vunpack.c.l.b16 %v3040
        %v3206 = vunpack.c.h.b16 %v3040
        %v3207 = vunpack.c.l.b16 %v3041
        %v3208 = vunpack.c.h.b16 %v3041
        %v3209 = vunpack.c.l.b16 %v3042
        %v3210 = vunpack.c.h.b16 %v3042
        %v3211 = vunpack.c.l.b16 %v3043
        %v3212 = vunpack.c.h.b16 %v3043
        %v3213 = vunpack.c.l.b16 %v3044
        %v3214 = vunpack.c.h.b16 %v3044
        %v3215 = vunpack.c.l.b16 %v3045
        %v3216 = vunpack.c.h.b16 %v3045
        %v3217 = vunpack.c.l.b16 %v3046
        %v3218 = vunpack.c.h.b16 %v3046
        %v3219 = vunpack.c.l.b16 %v3047
        %v3220 = vunpack.c.h.b16 %v3047
        %v3221 = vunpack.c.l.b16 %v3048
        %v3222 = vunpack.c.h.b16 %v3048
        %v3223 = vunpack.c.l.b16 %v3049
        %v3224 = vunpack.c.h.b16 %v3049
        %v3225 = vunpack.c.l.b16 %v3050
        %v3226 = vunpack.c.h.b16 %v3050
        %v3227 = vunpack.c.l.b16 %v3051
        %v3228 = vunpack.c.h.b16 %v3051
        %v3229 = vunpack.c.l.b16 %v3052
        %v3230 = vunpack.c.h.b16 %v3052
        %v3231 = vunpack.c.l.b16 %v3053
        %v3232 = vunpack.c.h.b16 %v3053
        %v3233 = vunpack.c.l.b16 %v3054
        %v3234 = vunpack.c.h.b16 %v3054
        %v3235 = vunpack.c.l.b16 %v3055
        %v3236 = vunpack.c.h.b16 %v3055
        %v3237 = vunpack.c.l.b16 %v3056
        %v3238 = vunpack.c.h.b16 %v3056
        %v3239 = vunpack.c.l.b16 %v3057
        %v3240 = vunpack.c.h.b16 %v3057
        %v3241 = vunpack.c.l.b16 %v3058
        %v3242 = vunpack.c.h.b16 %v3058
        %v3243 = vunpack.c.l.b16 %v3059
        %v3244 = vunpack.c.h.b16 %v3059
        %v3245 = vunpack.c.l.b16 %v3060
        %v3246 = vunpack.c.h.b16 %v3060
        %v3247 = vunpack.c.l.b16 %v3061
        %v3248 = vunpack.c.h.b16 %v3061
        %v3249 = vunpack.c.l.b16 %v3062
        %v3250 = vunpack.c.h.b16 %v3062
        %v3251 = vunpack.c.l.b16 %v3063
        %v3252 = vunpack.c.h.b16 %v3063
        %v3253 = vunpack.c.l.b16 %v3064
        %v3254 = vunpack.c.h.b16 %v3064
        %v3255 = vunpack.c.l.b16 %v3065
        %v3256 = vunpack.c.h.b16 %v3065
        %v3257 = vunpack.c.l.b16 %v3066
        %v3258 = vunpack.c.h.b16 %v3066
        %v3259 = vpack.c.b16 %v3135, %v3131
        %v3260 = vpack.c.b16 %v3136, %v3132
        %v3261 = vpack.c.b16 %v3137, %v3133
        %v3262 = vpack.c.b16 %v3138, %v3134
        %v3263 = vpack.c.b16 %v3143, %v3139
        %v3264 = vpack.c.b16 %v3144, %v3140
        %v3265 = vpack.c.b16 %v3145, %v3141
        %v3266 = vpack.c.b16 %v3146, %v3142
        %v3267 = vpack.c.b16 %v3151, %v3147
        %v3268 = vpack.c.b16 %v3152, %v3148
        %v3269 = vpack.c.b16 %v3153, %v3149
        %v3270 = vpack.c.b16 %v3154, %v3150
        %v3271 = vpack.c.b16 %v3159, %v3155
        %v3272 = vpack.c.b16 %v3160, %v3156
        %v3273 = vpack.c.b16 %v3161, %v3157
        %v3274 = vpack.c.b16 %v3162, %v3158
        %v3275 = vpack.c.b16 %v3167, %v3163
        %v3276 = vpack.c.b16 %v3168, %v3164
        %v3277 = vpack.c.b16 %v3169, %v3165
        %v3278 = vpack.c.b16 %v3170, %v3166
        %v3279 = vpack.c.b16 %v3175, %v3171
        %v3280 = vpack.c.b16 %v3176, %v3172
        %v3281 = vpack.c.b16 %v3177, %v3173
        %v3282 = vpack.c.b16 %v3178, %v3174
        %v3283 = vpack.c.b16 %v3183, %v3179
        %v3284 = vpack.c.b16 %v3184, %v3180
        %v3285 = vpack.c.b16 %v3185, %v3181
        %v3286 = vpack.c.b16 %v3186, %v3182
        %v3287 = vpack.c.b16 %v3191, %v3187
        %v3288 = vpack.c.b16 %v3192, %v3188
        %v3289 = vpack.c.b16 %v3193, %v3189
        %v3290 = vpack.c.b16 %v3194, %v3190
        %v3291 = vpack.c.b16 %v3199, %v3195
        %v3292 = vpack.c.b16 %v3200, %v3196
        %v3293 = vpack.c.b16 %v3201, %v3197
        %v3294 = vpack.c.b16 %v3202, %v3198
        %v3295 = vpack.c.b16 %v3207, %v3203
        %v3296 = vpack.c.b16 %v3208, %v3204
        %v3297 = vpack.c.b16 %v3209, %v3205
        %v3298 = vpack.c.b16 %v3210, %v3206
        %v3299 = vpack.c.b16 %v3215, %v3211
        %v3300 = vpack.c.b16 %v3216, %v3212
        %v3301 = vpack.c.b16 %v3217, %v3213
        %v3302 = vpack.c.b16 %v3218, %v3214
        %v3303 = vpack.c.b16 %v3223, %v3219
        %v3304 = vpack.c.b16 %v3224, %v3220
        %v3305 = vpack.c.b16 %v3225, %v3221
        %v3306 = vpack.c.b16 %v3226, %v3222
        %v3307 = vpack.c.b16 %v3231, %v3227
        %v3308 = vpack.c.b16 %v3232, %v3228
        %v3309 = vpack.c.b16 %v3233, %v3229
        %v3310 = vpack.c.b16 %v3234, %v3230
        %v3311 = vpack.c.b16 %v3239, %v3235
        %v3312 = vpack.c.b16 %v3240, %v3236
        %v3313 = vpack.c.b16 %v3241, %v3237
        %v3314 = vpack.c.b16 %v3242, %v3238
        %v3315 = vpack.c.b16 %v3247, %v3243
        %v3316 = vpack.c.b16 %v3248, %v3244
        %v3317 = vpack.c.b16 %v3249, %v3245
        %v3318 = vpack.c.b16 %v3250, %v3246
        %v3319 = vpack.c.b16 %v3255, %v3251
        %v3320 = vpack.c.b16 %v3256, %v3252
        %v3321 = vpack.c.b16 %v3257, %v3253
        %v3322 = vpack.c.b16 %v3258, %v3254
        %3387 = vmatprep.subr.bf16.mxu0 %v3288
        %3388 = vmatpush1.bf16.msra.mxu0 %v3287
        %3389 = vmatprep.subr.bf16.mxu0 %v3284
        %3390 = vmatpush1.bf16.msra.mxu0 %v3283
        %3391 = vmatprep.subr.bf16.mxu0 %v3280
        %3392 = vmatpush1.bf16.msra.mxu0 %v3279
        %3393 = vmatprep.subr.bf16.mxu0 %v3276
        %3394 = vmatpush1.bf16.msra.mxu0 %v3275
        %3395 = vmatprep.subr.bf16.mxu0 %v3272
        %3396 = vmatpush1.bf16.msra.mxu0 %v3271
        %3397 = vmatprep.subr.bf16.mxu0 %v3268
        %3398 = vmatpush1.bf16.msra.mxu0 %v3267
        %3399 = vmatprep.subr.bf16.mxu0 %v3264
        %3400 = vmatpush1.bf16.msra.mxu0 %v3263
        %3401 = vmatprep.subr.bf16.mxu0 %v3260
        %3402 = vmatpush1.bf16.msra.mxu0 %v3259
        %3403 = vmatprep.subr.bf16.mxu0 %v3320
        %3404 = vmatpush2.bf16.msra.mxu0 %v3319
        %3405 = vmatprep.subr.bf16.mxu0 %v3316
        %3406 = vmatpush2.bf16.msra.mxu0 %v3315
        %3407 = vmatprep.subr.bf16.mxu0 %v3312
        %3408 = vmatpush2.bf16.msra.mxu0 %v3311
        %3409 = vmatprep.subr.bf16.mxu0 %v3308
        %3410 = vmatpush2.bf16.msra.mxu0 %v3307
        %3411 = vmatprep.subr.bf16.mxu0 %v3304
        %3412 = vmatpush2.bf16.msra.mxu0 %v3303
        %3413 = vmatprep.subr.bf16.mxu0 %v3300
        %3414 = vmatpush2.bf16.msra.mxu0 %v3299
        %3415 = vmatprep.subr.bf16.mxu0 %v3296
        %3416 = vmatpush2.bf16.msra.mxu0 %v3295
        %3417 = vmatprep.subr.bf16.mxu0 %v3292
        %3418 = vmatpush2.bf16.msra.mxu0 %v3291
        %3419 = vmatprep.mubr.bf16.mxu0 %v2989
        %3420 = vmatmul.mubr.bf16.gmra.mxu0 %v2988
        %v3421 = vpop.f32.mrf.mxu0
        %v3422 = vadd.f32 0.0, %v3421
        %v3423 = vpop.f32.mrf.mxu0
        %v3424 = vadd.f32 0.0, %v3423
        %v3425 = vpop.f32.mrf.mxu0
        %v3426 = vadd.f32 0.0, %v3425
        %v3427 = vpop.f32.mrf.mxu0
        %v3428 = vadd.f32 0.0, %v3427
        %3429 = vmatprep.mubr.bf16.mxu0 %v2991
        %3430 = vmatmul.mubr.bf16.gmra.mxu0 %v2990
        %v3431 = vpop.f32.mrf.mxu0
        %v3432 = vadd.f32 0.0, %v3431
        %v3433 = vpop.f32.mrf.mxu0
        %v3434 = vadd.f32 0.0, %v3433
        %v3435 = vpop.f32.mrf.mxu0
        %v3436 = vadd.f32 0.0, %v3435
        %v3437 = vpop.f32.mrf.mxu0
        %v3438 = vadd.f32 0.0, %v3437
        %3439 = vmatprep.mubr.bf16.mxu0 %v2993
        %3440 = vmatmul.mubr.bf16.gmra.mxu0 %v2992
        %v3441 = vpop.f32.mrf.mxu0
        %v3442 = vadd.f32 0.0, %v3441
        %v3443 = vpop.f32.mrf.mxu0
        %v3444 = vadd.f32 0.0, %v3443
        %v3445 = vpop.f32.mrf.mxu0
        %v3446 = vadd.f32 0.0, %v3445
        %v3447 = vpop.f32.mrf.mxu0
        %v3448 = vadd.f32 0.0, %v3447
        %3449 = vmatprep.mubr.bf16.mxu0 %v2995
        %3450 = vmatmul.mubr.bf16.gmra.mxu0 %v2994
        %v3451 = vpop.f32.mrf.mxu0
        %v3452 = vadd.f32 0.0, %v3451
        %v3453 = vpop.f32.mrf.mxu0
        %v3454 = vadd.f32 0.0, %v3453
        %v3455 = vpop.f32.mrf.mxu0
        %v3456 = vadd.f32 0.0, %v3455
        %v3457 = vpop.f32.mrf.mxu0
        %v3458 = vadd.f32 0.0, %v3457
        %3459 = vmatprep.mubr.bf16.mxu0 %v2997
        %3460 = vmatmul.mubr.bf16.gmra.mxu0 %v2996
        %v3461 = vpop.f32.mrf.mxu0
        %v3462 = vadd.f32 0.0, %v3461
        %v3463 = vpop.f32.mrf.mxu0
        %v3464 = vadd.f32 0.0, %v3463
        %v3465 = vpop.f32.mrf.mxu0
        %v3466 = vadd.f32 0.0, %v3465
        %v3467 = vpop.f32.mrf.mxu0
        %v3468 = vadd.f32 0.0, %v3467
        %3469 = vmatprep.mubr.bf16.mxu0 %v2999
        %3470 = vmatmul.mubr.bf16.gmra.mxu0 %v2998
        %v3471 = vpop.f32.mrf.mxu0
        %v3472 = vadd.f32 0.0, %v3471
        %v3473 = vpop.f32.mrf.mxu0
        %v3474 = vadd.f32 0.0, %v3473
        %v3475 = vpop.f32.mrf.mxu0
        %v3476 = vadd.f32 0.0, %v3475
        %v3477 = vpop.f32.mrf.mxu0
        %v3478 = vadd.f32 0.0, %v3477
        %3479 = vmatprep.mubr.bf16.mxu0 %v3001
        %3480 = vmatmul.mubr.bf16.gmra.mxu0 %v3000
        %v3481 = vpop.f32.mrf.mxu0
        %v3482 = vadd.f32 0.0, %v3481
        %v3483 = vpop.f32.mrf.mxu0
        %v3484 = vadd.f32 0.0, %v3483
        %v3485 = vpop.f32.mrf.mxu0
        %v3486 = vadd.f32 0.0, %v3485
        %v3487 = vpop.f32.mrf.mxu0
        %v3488 = vadd.f32 0.0, %v3487
        %3489 = vdwg.mxu0
        %3490 = vmatprep.subr.bf16.mxu0 %v3290
        %3491 = vmatpush1.bf16.msra.mxu0 %v3289
        %3492 = vmatprep.subr.bf16.mxu0 %v3286
        %3493 = vmatpush1.bf16.msra.mxu0 %v3285
        %3494 = vmatprep.subr.bf16.mxu0 %v3282
        %3495 = vmatpush1.bf16.msra.mxu0 %v3281
        %3496 = vmatprep.subr.bf16.mxu0 %v3278
        %3497 = vmatpush1.bf16.msra.mxu0 %v3277
        %3498 = vmatprep.subr.bf16.mxu0 %v3274
        %3499 = vmatpush1.bf16.msra.mxu0 %v3273
        %3500 = vmatprep.subr.bf16.mxu0 %v3270
        %3501 = vmatpush1.bf16.msra.mxu0 %v3269
        %3502 = vmatprep.subr.bf16.mxu0 %v3266
        %3503 = vmatpush1.bf16.msra.mxu0 %v3265
        %3504 = vmatprep.subr.bf16.mxu0 %v3262
        %3505 = vmatpush1.bf16.msra.mxu0 %v3261
        %3506 = vmatprep.subr.bf16.mxu0 %v3322
        %3507 = vmatpush2.bf16.msra.mxu0 %v3321
        %3508 = vmatprep.subr.bf16.mxu0 %v3318
        %3509 = vmatpush2.bf16.msra.mxu0 %v3317
        %3510 = vmatprep.subr.bf16.mxu0 %v3314
        %3511 = vmatpush2.bf16.msra.mxu0 %v3313
        %3512 = vmatprep.subr.bf16.mxu0 %v3310
        %3513 = vmatpush2.bf16.msra.mxu0 %v3309
        %3514 = vmatprep.subr.bf16.mxu0 %v3306
        %3515 = vmatpush2.bf16.msra.mxu0 %v3305
        %3516 = vmatprep.subr.bf16.mxu0 %v3302
        %3517 = vmatpush2.bf16.msra.mxu0 %v3301
        %3518 = vmatprep.subr.bf16.mxu0 %v3298
        %3519 = vmatpush2.bf16.msra.mxu0 %v3297
        %3520 = vmatprep.subr.bf16.mxu0 %v3294
        %3521 = vmatpush2.bf16.msra.mxu0 %v3293
        %3522 = vmatprep.mubr.bf16.mxu0 %v2989
        %3523 = vmatmul.mubr.bf16.gmra.mxu0 %v2988
        %v3524 = vpop.f32.mrf.mxu0
        %v3525 = vadd.f32 0.0, %v3524
        %v3526 = vpop.f32.mrf.mxu0
        %v3527 = vadd.f32 0.0, %v3526
        %v3528 = vpop.f32.mrf.mxu0
        %v3529 = vadd.f32 0.0, %v3528
        %v3530 = vpop.f32.mrf.mxu0
        %v3531 = vadd.f32 0.0, %v3530
        %3532 = vmatprep.mubr.bf16.mxu0 %v2991
        %3533 = vmatmul.mubr.bf16.gmra.mxu0 %v2990
        %v3534 = vpop.f32.mrf.mxu0
        %v3535 = vadd.f32 0.0, %v3534
        %v3536 = vpop.f32.mrf.mxu0
        %v3537 = vadd.f32 0.0, %v3536
        %v3538 = vpop.f32.mrf.mxu0
        %v3539 = vadd.f32 0.0, %v3538
        %v3540 = vpop.f32.mrf.mxu0
        %v3541 = vadd.f32 0.0, %v3540
        %3542 = vmatprep.mubr.bf16.mxu0 %v2993
        %3543 = vmatmul.mubr.bf16.gmra.mxu0 %v2992
        %v3544 = vpop.f32.mrf.mxu0
        %v3545 = vadd.f32 0.0, %v3544
        %v3546 = vpop.f32.mrf.mxu0
        %v3547 = vadd.f32 0.0, %v3546
        %v3548 = vpop.f32.mrf.mxu0
        %v3549 = vadd.f32 0.0, %v3548
        %v3550 = vpop.f32.mrf.mxu0
        %v3551 = vadd.f32 0.0, %v3550
        %3552 = vmatprep.mubr.bf16.mxu0 %v2995
        %3553 = vmatmul.mubr.bf16.gmra.mxu0 %v2994
        %v3554 = vpop.f32.mrf.mxu0
        %v3555 = vadd.f32 0.0, %v3554
        %v3556 = vpop.f32.mrf.mxu0
        %v3557 = vadd.f32 0.0, %v3556
        %v3558 = vpop.f32.mrf.mxu0
        %v3559 = vadd.f32 0.0, %v3558
        %v3560 = vpop.f32.mrf.mxu0
        %v3561 = vadd.f32 0.0, %v3560
        %3562 = vmatprep.mubr.bf16.mxu0 %v2997
        %3563 = vmatmul.mubr.bf16.gmra.mxu0 %v2996
        %v3564 = vpop.f32.mrf.mxu0
        %v3565 = vadd.f32 0.0, %v3564
        %v3566 = vpop.f32.mrf.mxu0
        %v3567 = vadd.f32 0.0, %v3566
        %v3568 = vpop.f32.mrf.mxu0
        %v3569 = vadd.f32 0.0, %v3568
        %v3570 = vpop.f32.mrf.mxu0
        %v3571 = vadd.f32 0.0, %v3570
        %3572 = vmatprep.mubr.bf16.mxu0 %v2999
        %3573 = vmatmul.mubr.bf16.gmra.mxu0 %v2998
        %v3574 = vpop.f32.mrf.mxu0
        %v3575 = vadd.f32 0.0, %v3574
        %v3576 = vpop.f32.mrf.mxu0
        %v3577 = vadd.f32 0.0, %v3576
        %v3578 = vpop.f32.mrf.mxu0
        %v3579 = vadd.f32 0.0, %v3578
        %v3580 = vpop.f32.mrf.mxu0
        %v3581 = vadd.f32 0.0, %v3580
        %3582 = vmatprep.mubr.bf16.mxu0 %v3001
        %3583 = vmatmul.mubr.bf16.gmra.mxu0 %v3000
        %v3584 = vpop.f32.mrf.mxu0
        %v3585 = vadd.f32 0.0, %v3584
        %v3586 = vpop.f32.mrf.mxu0
        %v3587 = vadd.f32 0.0, %v3586
        %v3588 = vpop.f32.mrf.mxu0
        %v3589 = vadd.f32 0.0, %v3588
        %v3590 = vpop.f32.mrf.mxu0
        %v3591 = vadd.f32 0.0, %v3590
        %3592 = vdwg.mxu0
        %v3593 = vld [vmem:[#allocation4] sm:$0xff]
        %v3594 = vld [vmem:[#allocation4 + $0x8] sm:$0xff]
        %v3595 = vld [vmem:[#allocation4 + $0x10] sm:$0xff]
        %v3596 = vld [vmem:[#allocation4 + $0x18] sm:$0xff]
        %v3597 = vld [vmem:[#allocation4 + $0x20] sm:$0xff]
        %v3598 = vld [vmem:[#allocation4 + $0x28] sm:$0xff]
        %v3599 = vld [vmem:[#allocation4 + $0x30] sm:$0xff]
        %v3600 = vld [vmem:[#allocation4 + $0x38] sm:$0xff]
        %v3601 = vld [vmem:[#allocation4 + $0x40] sm:$0xff]
        %v3602 = vld [vmem:[#allocation4 + $0x48] sm:$0xff]
        %v3603 = vld [vmem:[#allocation4 + $0x50] sm:$0xff]
        %v3604 = vld [vmem:[#allocation4 + $0x58] sm:$0xff]
        %v3605 = vld [vmem:[#allocation4 + $0x60] sm:$0xff]
        %v3606 = vld [vmem:[#allocation4 + $0x68] sm:$0xff]
        %v3607 = vld [vmem:[#allocation4 + $0x70] sm:$0xff]
        %v3608 = vld [vmem:[#allocation4 + $0x78] sm:$0xff]
        %v3609 = vld [vmem:[#allocation4 + $0x80] sm:$0xff]
        %v3610 = vld [vmem:[#allocation4 + $0x88] sm:$0xff]
        %v3611 = vld [vmem:[#allocation4 + $0x90] sm:$0xff]
        %v3612 = vld [vmem:[#allocation4 + $0x98] sm:$0xff]
        %v3613 = vld [vmem:[#allocation4 + $0xa0] sm:$0xff]
        %v3614 = vld [vmem:[#allocation4 + $0xa8] sm:$0xff]
        %v3615 = vld [vmem:[#allocation4 + $0xb0] sm:$0xff]
        %v3616 = vld [vmem:[#allocation4 + $0xb8] sm:$0xff]
        %v3617 = vld [vmem:[#allocation4 + $0xc0] sm:$0xff]
        %v3618 = vld [vmem:[#allocation4 + $0xc8] sm:$0xff]
        %v3619 = vld [vmem:[#allocation4 + $0xd0] sm:$0xff]
        %v3620 = vld [vmem:[#allocation4 + $0xd8] sm:$0xff]
        %v3621 = vld [vmem:[#allocation4 + $0xe0] sm:$0xff]
        %v3622 = vld [vmem:[#allocation4 + $0xe8] sm:$0xff]
        %v3623 = vld [vmem:[#allocation4 + $0xf0] sm:$0xff]
        %v3624 = vld [vmem:[#allocation4 + $0xf8] sm:$0xff]
        %v3625 = vld [vmem:[#allocation4 + $0x100] sm:$0xff]
        %v3626 = vld [vmem:[#allocation4 + $0x108] sm:$0xff]
        %v3627 = vld [vmem:[#allocation4 + $0x110] sm:$0xff]
        %v3628 = vld [vmem:[#allocation4 + $0x118] sm:$0xff]
        %v3629 = vld [vmem:[#allocation4 + $0x120] sm:$0xff]
        %v3630 = vld [vmem:[#allocation4 + $0x128] sm:$0xff]
        %v3631 = vld [vmem:[#allocation4 + $0x130] sm:$0xff]
        %v3632 = vld [vmem:[#allocation4 + $0x138] sm:$0xff]
        %v3633 = vld [vmem:[#allocation4 + $0x140] sm:$0xff]
        %v3634 = vld [vmem:[#allocation4 + $0x148] sm:$0xff]
        %v3635 = vld [vmem:[#allocation4 + $0x150] sm:$0xff]
        %v3636 = vld [vmem:[#allocation4 + $0x158] sm:$0xff]
        %v3637 = vld [vmem:[#allocation4 + $0x160] sm:$0xff]
        %v3638 = vld [vmem:[#allocation4 + $0x168] sm:$0xff]
        %v3639 = vld [vmem:[#allocation4 + $0x170] sm:$0xff]
        %v3640 = vld [vmem:[#allocation4 + $0x178] sm:$0xff]
        %v3641 = vld [vmem:[#allocation4 + $0x180] sm:$0xff]
        %v3642 = vld [vmem:[#allocation4 + $0x188] sm:$0xff]
        %v3643 = vld [vmem:[#allocation4 + $0x190] sm:$0xff]
        %v3644 = vld [vmem:[#allocation4 + $0x198] sm:$0xff]
        %v3645 = vld [vmem:[#allocation4 + $0x1a0] sm:$0xff]
        %v3646 = vld [vmem:[#allocation4 + $0x1a8] sm:$0xff]
        %v3647 = vld [vmem:[#allocation4 + $0x1b0] sm:$0xff]
        %v3648 = vld [vmem:[#allocation4 + $0x1b8] sm:$0xff]
        %v3649 = vadd.f32 %v3593, %v3422
        %v3650 = vadd.f32 %v3594, %v3424
        %v3651 = vadd.f32 %v3595, %v3525
        %v3652 = vadd.f32 %v3596, %v3527
        %v3653 = vadd.f32 %v3597, %v3426
        %v3654 = vadd.f32 %v3598, %v3428
        %v3655 = vadd.f32 %v3599, %v3529
        %v3656 = vadd.f32 %v3600, %v3531
        %v3657 = vadd.f32 %v3601, %v3432
        %v3658 = vadd.f32 %v3602, %v3434
        %v3659 = vadd.f32 %v3603, %v3535
        %v3660 = vadd.f32 %v3604, %v3537
        %v3661 = vadd.f32 %v3605, %v3436
        %v3662 = vadd.f32 %v3606, %v3438
        %v3663 = vadd.f32 %v3607, %v3539
        %v3664 = vadd.f32 %v3608, %v3541
        %v3665 = vadd.f32 %v3609, %v3442
        %v3666 = vadd.f32 %v3610, %v3444
        %v3667 = vadd.f32 %v3611, %v3545
        %v3668 = vadd.f32 %v3612, %v3547
        %v3669 = vadd.f32 %v3613, %v3446
        %v3670 = vadd.f32 %v3614, %v3448
        %v3671 = vadd.f32 %v3615, %v3549
        %v3672 = vadd.f32 %v3616, %v3551
        %v3673 = vadd.f32 %v3617, %v3452
        %v3674 = vadd.f32 %v3618, %v3454
        %v3675 = vadd.f32 %v3619, %v3555
        %v3676 = vadd.f32 %v3620, %v3557
        %v3677 = vadd.f32 %v3621, %v3456
        %v3678 = vadd.f32 %v3622, %v3458
        %v3679 = vadd.f32 %v3623, %v3559
        %v3680 = vadd.f32 %v3624, %v3561
        %v3681 = vadd.f32 %v3625, %v3462
        %v3682 = vadd.f32 %v3626, %v3464
        %v3683 = vadd.f32 %v3627, %v3565
        %v3684 = vadd.f32 %v3628, %v3567
        %v3685 = vadd.f32 %v3629, %v3466
        %v3686 = vadd.f32 %v3630, %v3468
        %v3687 = vadd.f32 %v3631, %v3569
        %v3688 = vadd.f32 %v3632, %v3571
        %v3689 = vadd.f32 %v3633, %v3472
        %v3690 = vadd.f32 %v3634, %v3474
        %v3691 = vadd.f32 %v3635, %v3575
        %v3692 = vadd.f32 %v3636, %v3577
        %v3693 = vadd.f32 %v3637, %v3476
        %v3694 = vadd.f32 %v3638, %v3478
        %v3695 = vadd.f32 %v3639, %v3579
        %v3696 = vadd.f32 %v3640, %v3581
        %v3697 = vadd.f32 %v3641, %v3482
        %v3698 = vadd.f32 %v3642, %v3484
        %v3699 = vadd.f32 %v3643, %v3585
        %v3700 = vadd.f32 %v3644, %v3587
        %v3701 = vadd.f32 %v3645, %v3486
        %v3702 = vadd.f32 %v3646, %v3488
        %v3703 = vadd.f32 %v3647, %v3589
        %v3704 = vadd.f32 %v3648, %v3591
        %3705 = vst [vmem:[#allocation4] sm:$0xff] %v3649
        %3706 = vst [vmem:[#allocation4 + $0x8] sm:$0xff] %v3650
        %3707 = vst [vmem:[#allocation4 + $0x10] sm:$0xff] %v3651
        %3708 = vst [vmem:[#allocation4 + $0x18] sm:$0xff] %v3652
        %3709 = vst [vmem:[#allocation4 + $0x20] sm:$0xff] %v3653
        %3710 = vst [vmem:[#allocation4 + $0x28] sm:$0xff] %v3654
        %3711 = vst [vmem:[#allocation4 + $0x30] sm:$0xff] %v3655
        %3712 = vst [vmem:[#allocation4 + $0x38] sm:$0xff] %v3656
        %3713 = vst [vmem:[#allocation4 + $0x40] sm:$0xff] %v3657
        %3714 = vst [vmem:[#allocation4 + $0x48] sm:$0xff] %v3658
        %3715 = vst [vmem:[#allocation4 + $0x50] sm:$0xff] %v3659
        %3716 = vst [vmem:[#allocation4 + $0x58] sm:$0xff] %v3660
        %3717 = vst [vmem:[#allocation4 + $0x60] sm:$0xff] %v3661
        %3718 = vst [vmem:[#allocation4 + $0x68] sm:$0xff] %v3662
        %3719 = vst [vmem:[#allocation4 + $0x70] sm:$0xff] %v3663
        %3720 = vst [vmem:[#allocation4 + $0x78] sm:$0xff] %v3664
        %3721 = vst [vmem:[#allocation4 + $0x80] sm:$0xff] %v3665
        %3722 = vst [vmem:[#allocation4 + $0x88] sm:$0xff] %v3666
        %3723 = vst [vmem:[#allocation4 + $0x90] sm:$0xff] %v3667
        %3724 = vst [vmem:[#allocation4 + $0x98] sm:$0xff] %v3668
        %3725 = vst [vmem:[#allocation4 + $0xa0] sm:$0xff] %v3669
        %3726 = vst [vmem:[#allocation4 + $0xa8] sm:$0xff] %v3670
        %3727 = vst [vmem:[#allocation4 + $0xb0] sm:$0xff] %v3671
        %3728 = vst [vmem:[#allocation4 + $0xb8] sm:$0xff] %v3672
        %3729 = vst [vmem:[#allocation4 + $0xc0] sm:$0xff] %v3673
        %3730 = vst [vmem:[#allocation4 + $0xc8] sm:$0xff] %v3674
        %3731 = vst [vmem:[#allocation4 + $0xd0] sm:$0xff] %v3675
        %3732 = vst [vmem:[#allocation4 + $0xd8] sm:$0xff] %v3676
        %3733 = vst [vmem:[#allocation4 + $0xe0] sm:$0xff] %v3677
        %3734 = vst [vmem:[#allocation4 + $0xe8] sm:$0xff] %v3678
        %3735 = vst [vmem:[#allocation4 + $0xf0] sm:$0xff] %v3679
        %3736 = vst [vmem:[#allocation4 + $0xf8] sm:$0xff] %v3680
        %3737 = vst [vmem:[#allocation4 + $0x100] sm:$0xff] %v3681
        %3738 = vst [vmem:[#allocation4 + $0x108] sm:$0xff] %v3682
        %3739 = vst [vmem:[#allocation4 + $0x110] sm:$0xff] %v3683
        %3740 = vst [vmem:[#allocation4 + $0x118] sm:$0xff] %v3684
        %3741 = vst [vmem:[#allocation4 + $0x120] sm:$0xff] %v3685
        %3742 = vst [vmem:[#allocation4 + $0x128] sm:$0xff] %v3686
        %3743 = vst [vmem:[#allocation4 + $0x130] sm:$0xff] %v3687
        %3744 = vst [vmem:[#allocation4 + $0x138] sm:$0xff] %v3688
        %3745 = vst [vmem:[#allocation4 + $0x140] sm:$0xff] %v3689
        %3746 = vst [vmem:[#allocation4 + $0x148] sm:$0xff] %v3690
        %3747 = vst [vmem:[#allocation4 + $0x150] sm:$0xff] %v3691
        %3748 = vst [vmem:[#allocation4 + $0x158] sm:$0xff] %v3692
        %3749 = vst [vmem:[#allocation4 + $0x160] sm:$0xff] %v3693
        %3750 = vst [vmem:[#allocation4 + $0x168] sm:$0xff] %v3694
        %3751 = vst [vmem:[#allocation4 + $0x170] sm:$0xff] %v3695
        %3752 = vst [vmem:[#allocation4 + $0x178] sm:$0xff] %v3696
        %3753 = vst [vmem:[#allocation4 + $0x180] sm:$0xff] %v3697
        %3754 = vst [vmem:[#allocation4 + $0x188] sm:$0xff] %v3698
        %3755 = vst [vmem:[#allocation4 + $0x190] sm:$0xff] %v3699
        %3756 = vst [vmem:[#allocation4 + $0x198] sm:$0xff] %v3700
        %3757 = vst [vmem:[#allocation4 + $0x1a0] sm:$0xff] %v3701
        %3758 = vst [vmem:[#allocation4 + $0x1a8] sm:$0xff] %v3702
        %3759 = vst [vmem:[#allocation4 + $0x1b0] sm:$0xff] %v3703
        %3760 = vst [vmem:[#allocation4 + $0x1b8] sm:$0xff] %v3704
        %v3761 = vld [vmem:[#allocation3 + $0x10] sm:$0xff]
        %v3762 = vld [vmem:[#allocation3 + $0x18] sm:$0xff]
        %v3763 = vld [vmem:[#allocation3 + $0x20] sm:$0xff]
        %v3764 = vld [vmem:[#allocation3 + $0x28] sm:$0xff]
        %v3765 = vld [vmem:[#allocation3 + $0x30] sm:$0xff]
        %v3766 = vld [vmem:[#allocation3 + $0x38] sm:$0xff]
        %v3767 = vld [vmem:[#allocation3 + $0x40] sm:$0xff]
        %v3768 = vld [vmem:[#allocation3 + $0x48] sm:$0xff]
        %v3769 = vld [vmem:[#allocation3 + $0x50] sm:$0xff]
        %v3770 = vld [vmem:[#allocation3 + $0x58] sm:$0xff]
        %v3771 = vld [vmem:[#allocation3 + $0x60] sm:$0xff]
        %v3772 = vld [vmem:[#allocation3 + $0x68] sm:$0xff]
        %v3773 = vld [vmem:[#allocation3 + $0x70] sm:$0xff]
        %v3774 = vld [vmem:[#allocation3 + $0x78] sm:$0xff]
        %v3775 = vld [vmem:[#allocation2 + $0x20] sm:$0xff]
        %v3776 = vld [vmem:[#allocation2 + $0x28] sm:$0xff]
        %v3777 = vld [vmem:[#allocation2 + $0x30] sm:$0xff]
        %v3778 = vld [vmem:[#allocation2 + $0x38] sm:$0xff]
        %v3779 = vld [vmem:[#allocation2 + $0x40] sm:$0xff]
        %v3780 = vld [vmem:[#allocation2 + $0x48] sm:$0xff]
        %v3781 = vld [vmem:[#allocation2 + $0x50] sm:$0xff]
        %v3782 = vld [vmem:[#allocation2 + $0x58] sm:$0xff]
        %v3783 = vld [vmem:[#allocation2 + $0x60] sm:$0xff]
        %v3784 = vld [vmem:[#allocation2 + $0x68] sm:$0xff]
        %v3785 = vld [vmem:[#allocation2 + $0x70] sm:$0xff]
        %v3786 = vld [vmem:[#allocation2 + $0x78] sm:$0xff]
        %v3787 = vld [vmem:[#allocation2 + $0x80] sm:$0xff]
        %v3788 = vld [vmem:[#allocation2 + $0x88] sm:$0xff]
        %v3789 = vpack.c.bf16 %v3763, %v3761
        %v3790 = vpack.c.bf16 %v3764, %v3762
        %v3791 = vpack.c.bf16 %v3767, %v3765
        %v3792 = vpack.c.bf16 %v3768, %v3766
        %v3793 = vpack.c.bf16 %v3771, %v3769
        %v3794 = vpack.c.bf16 %v3772, %v3770
        %v3795 = vpack.c.bf16 %v3775, %v3773
        %v3796 = vpack.c.bf16 %v3776, %v3774
        %v3797 = vpack.c.bf16 %v3779, %v3777
        %v3798 = vpack.c.bf16 %v3780, %v3778
        %v3799 = vpack.c.bf16 %v3783, %v3781
        %v3800 = vpack.c.bf16 %v3784, %v3782
        %v3801 = vpack.c.bf16 %v3787, %v3785
        %v3802 = vpack.c.bf16 %v3788, %v3786
        %s3803 = scalar_lea.vmem %s3, 1536
        %v3804 = vld [vmem:[%s3803] sm:$0xff]
        %v3805 = vld [vmem:[%s3803 + $0x8] sm:$0xff]
        %v3806 = vld [vmem:[%s3803 + $0x10] sm:$0xff]
        %v3807 = vld [vmem:[%s3803 + $0x18] sm:$0xff]
        %v3808 = vld [vmem:[%s3803 + $0x20] sm:$0xff]
        %v3809 = vld [vmem:[%s3803 + $0x28] sm:$0xff]
        %v3810 = vld [vmem:[%s3803 + $0x30] sm:$0xff]
        %v3811 = vld [vmem:[%s3803 + $0x38] sm:$0xff]
        %v3812 = vld [vmem:[%s3803 + $0x40] sm:$0xff]
        %v3813 = vld [vmem:[%s3803 + $0x48] sm:$0xff]
        %v3814 = vld [vmem:[%s3803 + $0x50] sm:$0xff]
        %v3815 = vld [vmem:[%s3803 + $0x58] sm:$0xff]
        %v3816 = vld [vmem:[%s3803 + $0x60] sm:$0xff]
        %v3817 = vld [vmem:[%s3803 + $0x68] sm:$0xff]
        %v3818 = vld [vmem:[%s3803 + $0x70] sm:$0xff]
        %v3819 = vld [vmem:[%s3803 + $0x78] sm:$0xff]
        %v3820 = vld [vmem:[%s3803 + $0x80] sm:$0xff]
        %v3821 = vld [vmem:[%s3803 + $0x88] sm:$0xff]
        %v3822 = vld [vmem:[%s3803 + $0x90] sm:$0xff]
        %v3823 = vld [vmem:[%s3803 + $0x98] sm:$0xff]
        %v3824 = vld [vmem:[%s3803 + $0xa0] sm:$0xff]
        %v3825 = vld [vmem:[%s3803 + $0xa8] sm:$0xff]
        %v3826 = vld [vmem:[%s3803 + $0xb0] sm:$0xff]
        %v3827 = vld [vmem:[%s3803 + $0xb8] sm:$0xff]
        %v3828 = vld [vmem:[%s3803 + $0xc0] sm:$0xff]
        %v3829 = vld [vmem:[%s3803 + $0xc8] sm:$0xff]
        %v3830 = vld [vmem:[%s3803 + $0xd0] sm:$0xff]
        %v3831 = vld [vmem:[%s3803 + $0xd8] sm:$0xff]
        %v3832 = vld [vmem:[%s3803 + $0xe0] sm:$0xff]
        %v3833 = vld [vmem:[%s3803 + $0xe8] sm:$0xff]
        %v3834 = vld [vmem:[%s3803 + $0xf0] sm:$0xff]
        %v3835 = vld [vmem:[%s3803 + $0xf8] sm:$0xff]
        %v3836 = vld [vmem:[%s3803 + $0x100] sm:$0xff]
        %v3837 = vld [vmem:[%s3803 + $0x108] sm:$0xff]
        %v3838 = vld [vmem:[%s3803 + $0x110] sm:$0xff]
        %v3839 = vld [vmem:[%s3803 + $0x118] sm:$0xff]
        %v3840 = vld [vmem:[%s3803 + $0x120] sm:$0xff]
        %v3841 = vld [vmem:[%s3803 + $0x128] sm:$0xff]
        %v3842 = vld [vmem:[%s3803 + $0x130] sm:$0xff]
        %v3843 = vld [vmem:[%s3803 + $0x138] sm:$0xff]
        %v3844 = vld [vmem:[%s3803 + $0x140] sm:$0xff]
        %v3845 = vld [vmem:[%s3803 + $0x148] sm:$0xff]
        %v3846 = vld [vmem:[%s3803 + $0x150] sm:$0xff]
        %v3847 = vld [vmem:[%s3803 + $0x158] sm:$0xff]
        %v3848 = vld [vmem:[%s3803 + $0x160] sm:$0xff]
        %v3849 = vld [vmem:[%s3803 + $0x168] sm:$0xff]
        %v3850 = vld [vmem:[%s3803 + $0x170] sm:$0xff]
        %v3851 = vld [vmem:[%s3803 + $0x178] sm:$0xff]
        %v3852 = vld [vmem:[%s3803 + $0x180] sm:$0xff]
        %v3853 = vld [vmem:[%s3803 + $0x188] sm:$0xff]
        %v3854 = vld [vmem:[%s3803 + $0x190] sm:$0xff]
        %v3855 = vld [vmem:[%s3803 + $0x198] sm:$0xff]
        %v3856 = vld [vmem:[%s3803 + $0x1a0] sm:$0xff]
        %v3857 = vld [vmem:[%s3803 + $0x1a8] sm:$0xff]
        %v3858 = vld [vmem:[%s3803 + $0x1b0] sm:$0xff]
        %v3859 = vld [vmem:[%s3803 + $0x1b8] sm:$0xff]
        %v3860 = vld [vmem:[%s3803 + $0x1c0] sm:$0xff]
        %v3861 = vld [vmem:[%s3803 + $0x1c8] sm:$0xff]
        %v3862 = vld [vmem:[%s3803 + $0x1d0] sm:$0xff]
        %v3863 = vld [vmem:[%s3803 + $0x1d8] sm:$0xff]
        %v3864 = vld [vmem:[%s3803 + $0x1e0] sm:$0xff]
        %v3865 = vld [vmem:[%s3803 + $0x1e8] sm:$0xff]
        %v3866 = vld [vmem:[%s3803 + $0x1f0] sm:$0xff]
        %v3867 = vld [vmem:[%s3803 + $0x1f8] sm:$0xff]
        %v3932 = vunpack.c.l.b16 %v3804
        %v3933 = vunpack.c.h.b16 %v3804
        %v3934 = vunpack.c.l.b16 %v3805
        %v3935 = vunpack.c.h.b16 %v3805
        %v3936 = vunpack.c.l.b16 %v3806
        %v3937 = vunpack.c.h.b16 %v3806
        %v3938 = vunpack.c.l.b16 %v3807
        %v3939 = vunpack.c.h.b16 %v3807
        %v3940 = vunpack.c.l.b16 %v3808
        %v3941 = vunpack.c.h.b16 %v3808
        %v3942 = vunpack.c.l.b16 %v3809
        %v3943 = vunpack.c.h.b16 %v3809
        %v3944 = vunpack.c.l.b16 %v3810
        %v3945 = vunpack.c.h.b16 %v3810
        %v3946 = vunpack.c.l.b16 %v3811
        %v3947 = vunpack.c.h.b16 %v3811
        %v3948 = vunpack.c.l.b16 %v3812
        %v3949 = vunpack.c.h.b16 %v3812
        %v3950 = vunpack.c.l.b16 %v3813
        %v3951 = vunpack.c.h.b16 %v3813
        %v3952 = vunpack.c.l.b16 %v3814
        %v3953 = vunpack.c.h.b16 %v3814
        %v3954 = vunpack.c.l.b16 %v3815
        %v3955 = vunpack.c.h.b16 %v3815
        %v3956 = vunpack.c.l.b16 %v3816
        %v3957 = vunpack.c.h.b16 %v3816
        %v3958 = vunpack.c.l.b16 %v3817
        %v3959 = vunpack.c.h.b16 %v3817
        %v3960 = vunpack.c.l.b16 %v3818
        %v3961 = vunpack.c.h.b16 %v3818
        %v3962 = vunpack.c.l.b16 %v3819
        %v3963 = vunpack.c.h.b16 %v3819
        %v3964 = vunpack.c.l.b16 %v3820
        %v3965 = vunpack.c.h.b16 %v3820
        %v3966 = vunpack.c.l.b16 %v3821
        %v3967 = vunpack.c.h.b16 %v3821
        %v3968 = vunpack.c.l.b16 %v3822
        %v3969 = vunpack.c.h.b16 %v3822
        %v3970 = vunpack.c.l.b16 %v3823
        %v3971 = vunpack.c.h.b16 %v3823
        %v3972 = vunpack.c.l.b16 %v3824
        %v3973 = vunpack.c.h.b16 %v3824
        %v3974 = vunpack.c.l.b16 %v3825
        %v3975 = vunpack.c.h.b16 %v3825
        %v3976 = vunpack.c.l.b16 %v3826
        %v3977 = vunpack.c.h.b16 %v3826
        %v3978 = vunpack.c.l.b16 %v3827
        %v3979 = vunpack.c.h.b16 %v3827
        %v3980 = vunpack.c.l.b16 %v3828
        %v3981 = vunpack.c.h.b16 %v3828
        %v3982 = vunpack.c.l.b16 %v3829
        %v3983 = vunpack.c.h.b16 %v3829
        %v3984 = vunpack.c.l.b16 %v3830
        %v3985 = vunpack.c.h.b16 %v3830
        %v3986 = vunpack.c.l.b16 %v3831
        %v3987 = vunpack.c.h.b16 %v3831
        %v3988 = vunpack.c.l.b16 %v3832
        %v3989 = vunpack.c.h.b16 %v3832
        %v3990 = vunpack.c.l.b16 %v3833
        %v3991 = vunpack.c.h.b16 %v3833
        %v3992 = vunpack.c.l.b16 %v3834
        %v3993 = vunpack.c.h.b16 %v3834
        %v3994 = vunpack.c.l.b16 %v3835
        %v3995 = vunpack.c.h.b16 %v3835
        %v3996 = vunpack.c.l.b16 %v3836
        %v3997 = vunpack.c.h.b16 %v3836
        %v3998 = vunpack.c.l.b16 %v3837
        %v3999 = vunpack.c.h.b16 %v3837
        %v4000 = vunpack.c.l.b16 %v3838
        %v4001 = vunpack.c.h.b16 %v3838
        %v4002 = vunpack.c.l.b16 %v3839
        %v4003 = vunpack.c.h.b16 %v3839
        %v4004 = vunpack.c.l.b16 %v3840
        %v4005 = vunpack.c.h.b16 %v3840
        %v4006 = vunpack.c.l.b16 %v3841
        %v4007 = vunpack.c.h.b16 %v3841
        %v4008 = vunpack.c.l.b16 %v3842
        %v4009 = vunpack.c.h.b16 %v3842
        %v4010 = vunpack.c.l.b16 %v3843
        %v4011 = vunpack.c.h.b16 %v3843
        %v4012 = vunpack.c.l.b16 %v3844
        %v4013 = vunpack.c.h.b16 %v3844
        %v4014 = vunpack.c.l.b16 %v3845
        %v4015 = vunpack.c.h.b16 %v3845
        %v4016 = vunpack.c.l.b16 %v3846
        %v4017 = vunpack.c.h.b16 %v3846
        %v4018 = vunpack.c.l.b16 %v3847
        %v4019 = vunpack.c.h.b16 %v3847
        %v4020 = vunpack.c.l.b16 %v3848
        %v4021 = vunpack.c.h.b16 %v3848
        %v4022 = vunpack.c.l.b16 %v3849
        %v4023 = vunpack.c.h.b16 %v3849
        %v4024 = vunpack.c.l.b16 %v3850
        %v4025 = vunpack.c.h.b16 %v3850
        %v4026 = vunpack.c.l.b16 %v3851
        %v4027 = vunpack.c.h.b16 %v3851
        %v4028 = vunpack.c.l.b16 %v3852
        %v4029 = vunpack.c.h.b16 %v3852
        %v4030 = vunpack.c.l.b16 %v3853
        %v4031 = vunpack.c.h.b16 %v3853
        %v4032 = vunpack.c.l.b16 %v3854
        %v4033 = vunpack.c.h.b16 %v3854
        %v4034 = vunpack.c.l.b16 %v3855
        %v4035 = vunpack.c.h.b16 %v3855
        %v4036 = vunpack.c.l.b16 %v3856
        %v4037 = vunpack.c.h.b16 %v3856
        %v4038 = vunpack.c.l.b16 %v3857
        %v4039 = vunpack.c.h.b16 %v3857
        %v4040 = vunpack.c.l.b16 %v3858
        %v4041 = vunpack.c.h.b16 %v3858
        %v4042 = vunpack.c.l.b16 %v3859
        %v4043 = vunpack.c.h.b16 %v3859
        %v4044 = vunpack.c.l.b16 %v3860
        %v4045 = vunpack.c.h.b16 %v3860
        %v4046 = vunpack.c.l.b16 %v3861
        %v4047 = vunpack.c.h.b16 %v3861
        %v4048 = vunpack.c.l.b16 %v3862
        %v4049 = vunpack.c.h.b16 %v3862
        %v4050 = vunpack.c.l.b16 %v3863
        %v4051 = vunpack.c.h.b16 %v3863
        %v4052 = vunpack.c.l.b16 %v3864
        %v4053 = vunpack.c.h.b16 %v3864
        %v4054 = vunpack.c.l.b16 %v3865
        %v4055 = vunpack.c.h.b16 %v3865
        %v4056 = vunpack.c.l.b16 %v3866
        %v4057 = vunpack.c.h.b16 %v3866
        %v4058 = vunpack.c.l.b16 %v3867
        %v4059 = vunpack.c.h.b16 %v3867
        %v4060 = vpack.c.b16 %v3936, %v3932
        %v4061 = vpack.c.b16 %v3937, %v3933
        %v4062 = vpack.c.b16 %v3938, %v3934
        %v4063 = vpack.c.b16 %v3939, %v3935
        %v4064 = vpack.c.b16 %v3944, %v3940
        %v4065 = vpack.c.b16 %v3945, %v3941
        %v4066 = vpack.c.b16 %v3946, %v3942
        %v4067 = vpack.c.b16 %v3947, %v3943
        %v4068 = vpack.c.b16 %v3952, %v3948
        %v4069 = vpack.c.b16 %v3953, %v3949
        %v4070 = vpack.c.b16 %v3954, %v3950
        %v4071 = vpack.c.b16 %v3955, %v3951
        %v4072 = vpack.c.b16 %v3960, %v3956
        %v4073 = vpack.c.b16 %v3961, %v3957
        %v4074 = vpack.c.b16 %v3962, %v3958
        %v4075 = vpack.c.b16 %v3963, %v3959
        %v4076 = vpack.c.b16 %v3968, %v3964
        %v4077 = vpack.c.b16 %v3969, %v3965
        %v4078 = vpack.c.b16 %v3970, %v3966
        %v4079 = vpack.c.b16 %v3971, %v3967
        %v4080 = vpack.c.b16 %v3976, %v3972
        %v4081 = vpack.c.b16 %v3977, %v3973
        %v4082 = vpack.c.b16 %v3978, %v3974
        %v4083 = vpack.c.b16 %v3979, %v3975
        %v4084 = vpack.c.b16 %v3984, %v3980
        %v4085 = vpack.c.b16 %v3985, %v3981
        %v4086 = vpack.c.b16 %v3986, %v3982
        %v4087 = vpack.c.b16 %v3987, %v3983
        %v4088 = vpack.c.b16 %v3992, %v3988
        %v4089 = vpack.c.b16 %v3993, %v3989
        %v4090 = vpack.c.b16 %v3994, %v3990
        %v4091 = vpack.c.b16 %v3995, %v3991
        %v4092 = vpack.c.b16 %v4000, %v3996
        %v4093 = vpack.c.b16 %v4001, %v3997
        %v4094 = vpack.c.b16 %v4002, %v3998
        %v4095 = vpack.c.b16 %v4003, %v3999
        %v4096 = vpack.c.b16 %v4008, %v4004
        %v4097 = vpack.c.b16 %v4009, %v4005
        %v4098 = vpack.c.b16 %v4010, %v4006
        %v4099 = vpack.c.b16 %v4011, %v4007
        %v4100 = vpack.c.b16 %v4016, %v4012
        %v4101 = vpack.c.b16 %v4017, %v4013
        %v4102 = vpack.c.b16 %v4018, %v4014
        %v4103 = vpack.c.b16 %v4019, %v4015
        %v4104 = vpack.c.b16 %v4024, %v4020
        %v4105 = vpack.c.b16 %v4025, %v4021
        %v4106 = vpack.c.b16 %v4026, %v4022
        %v4107 = vpack.c.b16 %v4027, %v4023
        %v4108 = vpack.c.b16 %v4032, %v4028
        %v4109 = vpack.c.b16 %v4033, %v4029
        %v4110 = vpack.c.b16 %v4034, %v4030
        %v4111 = vpack.c.b16 %v4035, %v4031
        %v4112 = vpack.c.b16 %v4040, %v4036
        %v4113 = vpack.c.b16 %v4041, %v4037
        %v4114 = vpack.c.b16 %v4042, %v4038
        %v4115 = vpack.c.b16 %v4043, %v4039
        %v4116 = vpack.c.b16 %v4048, %v4044
        %v4117 = vpack.c.b16 %v4049, %v4045
        %v4118 = vpack.c.b16 %v4050, %v4046
        %v4119 = vpack.c.b16 %v4051, %v4047
        %v4120 = vpack.c.b16 %v4056, %v4052
        %v4121 = vpack.c.b16 %v4057, %v4053
        %v4122 = vpack.c.b16 %v4058, %v4054
        %v4123 = vpack.c.b16 %v4059, %v4055
        %4188 = vmatprep.subr.bf16.mxu0 %v4089
        %4189 = vmatpush1.bf16.msra.mxu0 %v4088
        %4190 = vmatprep.subr.bf16.mxu0 %v4085
        %4191 = vmatpush1.bf16.msra.mxu0 %v4084
        %4192 = vmatprep.subr.bf16.mxu0 %v4081
        %4193 = vmatpush1.bf16.msra.mxu0 %v4080
        %4194 = vmatprep.subr.bf16.mxu0 %v4077
        %4195 = vmatpush1.bf16.msra.mxu0 %v4076
        %4196 = vmatprep.subr.bf16.mxu0 %v4073
        %4197 = vmatpush1.bf16.msra.mxu0 %v4072
        %4198 = vmatprep.subr.bf16.mxu0 %v4069
        %4199 = vmatpush1.bf16.msra.mxu0 %v4068
        %4200 = vmatprep.subr.bf16.mxu0 %v4065
        %4201 = vmatpush1.bf16.msra.mxu0 %v4064
        %4202 = vmatprep.subr.bf16.mxu0 %v4061
        %4203 = vmatpush1.bf16.msra.mxu0 %v4060
        %4204 = vmatprep.subr.bf16.mxu0 %v4121
        %4205 = vmatpush2.bf16.msra.mxu0 %v4120
        %4206 = vmatprep.subr.bf16.mxu0 %v4117
        %4207 = vmatpush2.bf16.msra.mxu0 %v4116
        %4208 = vmatprep.subr.bf16.mxu0 %v4113
        %4209 = vmatpush2.bf16.msra.mxu0 %v4112
        %4210 = vmatprep.subr.bf16.mxu0 %v4109
        %4211 = vmatpush2.bf16.msra.mxu0 %v4108
        %4212 = vmatprep.subr.bf16.mxu0 %v4105
        %4213 = vmatpush2.bf16.msra.mxu0 %v4104
        %4214 = vmatprep.subr.bf16.mxu0 %v4101
        %4215 = vmatpush2.bf16.msra.mxu0 %v4100
        %4216 = vmatprep.subr.bf16.mxu0 %v4097
        %4217 = vmatpush2.bf16.msra.mxu0 %v4096
        %4218 = vmatprep.subr.bf16.mxu0 %v4093
        %4219 = vmatpush2.bf16.msra.mxu0 %v4092
        %4220 = vmatprep.mubr.bf16.mxu0 %v3790
        %4221 = vmatmul.mubr.bf16.gmra.mxu0 %v3789
        %v4222 = vpop.f32.mrf.mxu0
        %v4223 = vadd.f32 0.0, %v4222
        %v4224 = vpop.f32.mrf.mxu0
        %v4225 = vadd.f32 0.0, %v4224
        %v4226 = vpop.f32.mrf.mxu0
        %v4227 = vadd.f32 0.0, %v4226
        %v4228 = vpop.f32.mrf.mxu0
        %v4229 = vadd.f32 0.0, %v4228
        %4230 = vmatprep.mubr.bf16.mxu0 %v3792
        %4231 = vmatmul.mubr.bf16.gmra.mxu0 %v3791
        %v4232 = vpop.f32.mrf.mxu0
        %v4233 = vadd.f32 0.0, %v4232
        %v4234 = vpop.f32.mrf.mxu0
        %v4235 = vadd.f32 0.0, %v4234
        %v4236 = vpop.f32.mrf.mxu0
        %v4237 = vadd.f32 0.0, %v4236
        %v4238 = vpop.f32.mrf.mxu0
        %v4239 = vadd.f32 0.0, %v4238
        %4240 = vmatprep.mubr.bf16.mxu0 %v3794
        %4241 = vmatmul.mubr.bf16.gmra.mxu0 %v3793
        %v4242 = vpop.f32.mrf.mxu0
        %v4243 = vadd.f32 0.0, %v4242
        %v4244 = vpop.f32.mrf.mxu0
        %v4245 = vadd.f32 0.0, %v4244
        %v4246 = vpop.f32.mrf.mxu0
        %v4247 = vadd.f32 0.0, %v4246
        %v4248 = vpop.f32.mrf.mxu0
        %v4249 = vadd.f32 0.0, %v4248
        %4250 = vmatprep.mubr.bf16.mxu0 %v3796
        %4251 = vmatmul.mubr.bf16.gmra.mxu0 %v3795
        %v4252 = vpop.f32.mrf.mxu0
        %v4253 = vadd.f32 0.0, %v4252
        %v4254 = vpop.f32.mrf.mxu0
        %v4255 = vadd.f32 0.0, %v4254
        %v4256 = vpop.f32.mrf.mxu0
        %v4257 = vadd.f32 0.0, %v4256
        %v4258 = vpop.f32.mrf.mxu0
        %v4259 = vadd.f32 0.0, %v4258
        %4260 = vmatprep.mubr.bf16.mxu0 %v3798
        %4261 = vmatmul.mubr.bf16.gmra.mxu0 %v3797
        %v4262 = vpop.f32.mrf.mxu0
        %v4263 = vadd.f32 0.0, %v4262
        %v4264 = vpop.f32.mrf.mxu0
        %v4265 = vadd.f32 0.0, %v4264
        %v4266 = vpop.f32.mrf.mxu0
        %v4267 = vadd.f32 0.0, %v4266
        %v4268 = vpop.f32.mrf.mxu0
        %v4269 = vadd.f32 0.0, %v4268
        %4270 = vmatprep.mubr.bf16.mxu0 %v3800
        %4271 = vmatmul.mubr.bf16.gmra.mxu0 %v3799
        %v4272 = vpop.f32.mrf.mxu0
        %v4273 = vadd.f32 0.0, %v4272
        %v4274 = vpop.f32.mrf.mxu0
        %v4275 = vadd.f32 0.0, %v4274
        %v4276 = vpop.f32.mrf.mxu0
        %v4277 = vadd.f32 0.0, %v4276
        %v4278 = vpop.f32.mrf.mxu0
        %v4279 = vadd.f32 0.0, %v4278
        %4280 = vmatprep.mubr.bf16.mxu0 %v3802
        %4281 = vmatmul.mubr.bf16.gmra.mxu0 %v3801
        %v4282 = vpop.f32.mrf.mxu0
        %v4283 = vadd.f32 0.0, %v4282
        %v4284 = vpop.f32.mrf.mxu0
        %v4285 = vadd.f32 0.0, %v4284
        %v4286 = vpop.f32.mrf.mxu0
        %v4287 = vadd.f32 0.0, %v4286
        %v4288 = vpop.f32.mrf.mxu0
        %v4289 = vadd.f32 0.0, %v4288
        %4290 = vdwg.mxu0
        %4291 = vmatprep.subr.bf16.mxu0 %v4091
        %4292 = vmatpush1.bf16.msra.mxu0 %v4090
        %4293 = vmatprep.subr.bf16.mxu0 %v4087
        %4294 = vmatpush1.bf16.msra.mxu0 %v4086
        %4295 = vmatprep.subr.bf16.mxu0 %v4083
        %4296 = vmatpush1.bf16.msra.mxu0 %v4082
        %4297 = vmatprep.subr.bf16.mxu0 %v4079
        %4298 = vmatpush1.bf16.msra.mxu0 %v4078
        %4299 = vmatprep.subr.bf16.mxu0 %v4075
        %4300 = vmatpush1.bf16.msra.mxu0 %v4074
        %4301 = vmatprep.subr.bf16.mxu0 %v4071
        %4302 = vmatpush1.bf16.msra.mxu0 %v4070
        %4303 = vmatprep.subr.bf16.mxu0 %v4067
        %4304 = vmatpush1.bf16.msra.mxu0 %v4066
        %4305 = vmatprep.subr.bf16.mxu0 %v4063
        %4306 = vmatpush1.bf16.msra.mxu0 %v4062
        %4307 = vmatprep.subr.bf16.mxu0 %v4123
        %4308 = vmatpush2.bf16.msra.mxu0 %v4122
        %4309 = vmatprep.subr.bf16.mxu0 %v4119
        %4310 = vmatpush2.bf16.msra.mxu0 %v4118
        %4311 = vmatprep.subr.bf16.mxu0 %v4115
        %4312 = vmatpush2.bf16.msra.mxu0 %v4114
        %4313 = vmatprep.subr.bf16.mxu0 %v4111
        %4314 = vmatpush2.bf16.msra.mxu0 %v4110
        %4315 = vmatprep.subr.bf16.mxu0 %v4107
        %4316 = vmatpush2.bf16.msra.mxu0 %v4106
        %4317 = vmatprep.subr.bf16.mxu0 %v4103
        %4318 = vmatpush2.bf16.msra.mxu0 %v4102
        %4319 = vmatprep.subr.bf16.mxu0 %v4099
        %4320 = vmatpush2.bf16.msra.mxu0 %v4098
        %4321 = vmatprep.subr.bf16.mxu0 %v4095
        %4322 = vmatpush2.bf16.msra.mxu0 %v4094
        %4323 = vmatprep.mubr.bf16.mxu0 %v3790
        %4324 = vmatmul.mubr.bf16.gmra.mxu0 %v3789
        %v4325 = vpop.f32.mrf.mxu0
        %v4326 = vadd.f32 0.0, %v4325
        %v4327 = vpop.f32.mrf.mxu0
        %v4328 = vadd.f32 0.0, %v4327
        %v4329 = vpop.f32.mrf.mxu0
        %v4330 = vadd.f32 0.0, %v4329
        %v4331 = vpop.f32.mrf.mxu0
        %v4332 = vadd.f32 0.0, %v4331
        %4333 = vmatprep.mubr.bf16.mxu0 %v3792
        %4334 = vmatmul.mubr.bf16.gmra.mxu0 %v3791
        %v4335 = vpop.f32.mrf.mxu0
        %v4336 = vadd.f32 0.0, %v4335
        %v4337 = vpop.f32.mrf.mxu0
        %v4338 = vadd.f32 0.0, %v4337
        %v4339 = vpop.f32.mrf.mxu0
        %v4340 = vadd.f32 0.0, %v4339
        %v4341 = vpop.f32.mrf.mxu0
        %v4342 = vadd.f32 0.0, %v4341
        %4343 = vmatprep.mubr.bf16.mxu0 %v3794
        %4344 = vmatmul.mubr.bf16.gmra.mxu0 %v3793
        %v4345 = vpop.f32.mrf.mxu0
        %v4346 = vadd.f32 0.0, %v4345
        %v4347 = vpop.f32.mrf.mxu0
        %v4348 = vadd.f32 0.0, %v4347
        %v4349 = vpop.f32.mrf.mxu0
        %v4350 = vadd.f32 0.0, %v4349
        %v4351 = vpop.f32.mrf.mxu0
        %v4352 = vadd.f32 0.0, %v4351
        %4353 = vmatprep.mubr.bf16.mxu0 %v3796
        %4354 = vmatmul.mubr.bf16.gmra.mxu0 %v3795
        %v4355 = vpop.f32.mrf.mxu0
        %v4356 = vadd.f32 0.0, %v4355
        %v4357 = vpop.f32.mrf.mxu0
        %v4358 = vadd.f32 0.0, %v4357
        %v4359 = vpop.f32.mrf.mxu0
        %v4360 = vadd.f32 0.0, %v4359
        %v4361 = vpop.f32.mrf.mxu0
        %v4362 = vadd.f32 0.0, %v4361
        %4363 = vmatprep.mubr.bf16.mxu0 %v3798
        %4364 = vmatmul.mubr.bf16.gmra.mxu0 %v3797
        %v4365 = vpop.f32.mrf.mxu0
        %v4366 = vadd.f32 0.0, %v4365
        %v4367 = vpop.f32.mrf.mxu0
        %v4368 = vadd.f32 0.0, %v4367
        %v4369 = vpop.f32.mrf.mxu0
        %v4370 = vadd.f32 0.0, %v4369
        %v4371 = vpop.f32.mrf.mxu0
        %v4372 = vadd.f32 0.0, %v4371
        %4373 = vmatprep.mubr.bf16.mxu0 %v3800
        %4374 = vmatmul.mubr.bf16.gmra.mxu0 %v3799
        %v4375 = vpop.f32.mrf.mxu0
        %v4376 = vadd.f32 0.0, %v4375
        %v4377 = vpop.f32.mrf.mxu0
        %v4378 = vadd.f32 0.0, %v4377
        %v4379 = vpop.f32.mrf.mxu0
        %v4380 = vadd.f32 0.0, %v4379
        %v4381 = vpop.f32.mrf.mxu0
        %v4382 = vadd.f32 0.0, %v4381
        %4383 = vmatprep.mubr.bf16.mxu0 %v3802
        %4384 = vmatmul.mubr.bf16.gmra.mxu0 %v3801
        %v4385 = vpop.f32.mrf.mxu0
        %v4386 = vadd.f32 0.0, %v4385
        %v4387 = vpop.f32.mrf.mxu0
        %v4388 = vadd.f32 0.0, %v4387
        %v4389 = vpop.f32.mrf.mxu0
        %v4390 = vadd.f32 0.0, %v4389
        %v4391 = vpop.f32.mrf.mxu0
        %v4392 = vadd.f32 0.0, %v4391
        %4393 = vdwg.mxu0
        %v4394 = vld [vmem:[#allocation4] sm:$0xff]
        %v4395 = vld [vmem:[#allocation4 + $0x8] sm:$0xff]
        %v4396 = vld [vmem:[#allocation4 + $0x10] sm:$0xff]
        %v4397 = vld [vmem:[#allocation4 + $0x18] sm:$0xff]
        %v4398 = vld [vmem:[#allocation4 + $0x20] sm:$0xff]
        %v4399 = vld [vmem:[#allocation4 + $0x28] sm:$0xff]
        %v4400 = vld [vmem:[#allocation4 + $0x30] sm:$0xff]
        %v4401 = vld [vmem:[#allocation4 + $0x38] sm:$0xff]
        %v4402 = vld [vmem:[#allocation4 + $0x40] sm:$0xff]
        %v4403 = vld [vmem:[#allocation4 + $0x48] sm:$0xff]
        %v4404 = vld [vmem:[#allocation4 + $0x50] sm:$0xff]
        %v4405 = vld [vmem:[#allocation4 + $0x58] sm:$0xff]
        %v4406 = vld [vmem:[#allocation4 + $0x60] sm:$0xff]
        %v4407 = vld [vmem:[#allocation4 + $0x68] sm:$0xff]
        %v4408 = vld [vmem:[#allocation4 + $0x70] sm:$0xff]
        %v4409 = vld [vmem:[#allocation4 + $0x78] sm:$0xff]
        %v4410 = vld [vmem:[#allocation4 + $0x80] sm:$0xff]
        %v4411 = vld [vmem:[#allocation4 + $0x88] sm:$0xff]
        %v4412 = vld [vmem:[#allocation4 + $0x90] sm:$0xff]
        %v4413 = vld [vmem:[#allocation4 + $0x98] sm:$0xff]
        %v4414 = vld [vmem:[#allocation4 + $0xa0] sm:$0xff]
        %v4415 = vld [vmem:[#allocation4 + $0xa8] sm:$0xff]
        %v4416 = vld [vmem:[#allocation4 + $0xb0] sm:$0xff]
        %v4417 = vld [vmem:[#allocation4 + $0xb8] sm:$0xff]
        %v4418 = vld [vmem:[#allocation4 + $0xc0] sm:$0xff]
        %v4419 = vld [vmem:[#allocation4 + $0xc8] sm:$0xff]
        %v4420 = vld [vmem:[#allocation4 + $0xd0] sm:$0xff]
        %v4421 = vld [vmem:[#allocation4 + $0xd8] sm:$0xff]
        %v4422 = vld [vmem:[#allocation4 + $0xe0] sm:$0xff]
        %v4423 = vld [vmem:[#allocation4 + $0xe8] sm:$0xff]
        %v4424 = vld [vmem:[#allocation4 + $0xf0] sm:$0xff]
        %v4425 = vld [vmem:[#allocation4 + $0xf8] sm:$0xff]
        %v4426 = vld [vmem:[#allocation4 + $0x100] sm:$0xff]
        %v4427 = vld [vmem:[#allocation4 + $0x108] sm:$0xff]
        %v4428 = vld [vmem:[#allocation4 + $0x110] sm:$0xff]
        %v4429 = vld [vmem:[#allocation4 + $0x118] sm:$0xff]
        %v4430 = vld [vmem:[#allocation4 + $0x120] sm:$0xff]
        %v4431 = vld [vmem:[#allocation4 + $0x128] sm:$0xff]
        %v4432 = vld [vmem:[#allocation4 + $0x130] sm:$0xff]
        %v4433 = vld [vmem:[#allocation4 + $0x138] sm:$0xff]
        %v4434 = vld [vmem:[#allocation4 + $0x140] sm:$0xff]
        %v4435 = vld [vmem:[#allocation4 + $0x148] sm:$0xff]
        %v4436 = vld [vmem:[#allocation4 + $0x150] sm:$0xff]
        %v4437 = vld [vmem:[#allocation4 + $0x158] sm:$0xff]
        %v4438 = vld [vmem:[#allocation4 + $0x160] sm:$0xff]
        %v4439 = vld [vmem:[#allocation4 + $0x168] sm:$0xff]
        %v4440 = vld [vmem:[#allocation4 + $0x170] sm:$0xff]
        %v4441 = vld [vmem:[#allocation4 + $0x178] sm:$0xff]
        %v4442 = vld [vmem:[#allocation4 + $0x180] sm:$0xff]
        %v4443 = vld [vmem:[#allocation4 + $0x188] sm:$0xff]
        %v4444 = vld [vmem:[#allocation4 + $0x190] sm:$0xff]
        %v4445 = vld [vmem:[#allocation4 + $0x198] sm:$0xff]
        %v4446 = vld [vmem:[#allocation4 + $0x1a0] sm:$0xff]
        %v4447 = vld [vmem:[#allocation4 + $0x1a8] sm:$0xff]
        %v4448 = vld [vmem:[#allocation4 + $0x1b0] sm:$0xff]
        %v4449 = vld [vmem:[#allocation4 + $0x1b8] sm:$0xff]
        %v4450 = vadd.f32 %v4394, %v4223
        %v4451 = vadd.f32 %v4395, %v4225
        %v4452 = vadd.f32 %v4396, %v4326
        %v4453 = vadd.f32 %v4397, %v4328
        %v4454 = vadd.f32 %v4398, %v4227
        %v4455 = vadd.f32 %v4399, %v4229
        %v4456 = vadd.f32 %v4400, %v4330
        %v4457 = vadd.f32 %v4401, %v4332
        %v4458 = vadd.f32 %v4402, %v4233
        %v4459 = vadd.f32 %v4403, %v4235
        %v4460 = vadd.f32 %v4404, %v4336
        %v4461 = vadd.f32 %v4405, %v4338
        %v4462 = vadd.f32 %v4406, %v4237
        %v4463 = vadd.f32 %v4407, %v4239
        %v4464 = vadd.f32 %v4408, %v4340
        %v4465 = vadd.f32 %v4409, %v4342
        %v4466 = vadd.f32 %v4410, %v4243
        %v4467 = vadd.f32 %v4411, %v4245
        %v4468 = vadd.f32 %v4412, %v4346
        %v4469 = vadd.f32 %v4413, %v4348
        %v4470 = vadd.f32 %v4414, %v4247
        %v4471 = vadd.f32 %v4415, %v4249
        %v4472 = vadd.f32 %v4416, %v4350
        %v4473 = vadd.f32 %v4417, %v4352
        %v4474 = vadd.f32 %v4418, %v4253
        %v4475 = vadd.f32 %v4419, %v4255
        %v4476 = vadd.f32 %v4420, %v4356
        %v4477 = vadd.f32 %v4421, %v4358
        %v4478 = vadd.f32 %v4422, %v4257
        %v4479 = vadd.f32 %v4423, %v4259
        %v4480 = vadd.f32 %v4424, %v4360
        %v4481 = vadd.f32 %v4425, %v4362
        %v4482 = vadd.f32 %v4426, %v4263
        %v4483 = vadd.f32 %v4427, %v4265
        %v4484 = vadd.f32 %v4428, %v4366
        %v4485 = vadd.f32 %v4429, %v4368
        %v4486 = vadd.f32 %v4430, %v4267
        %v4487 = vadd.f32 %v4431, %v4269
        %v4488 = vadd.f32 %v4432, %v4370
        %v4489 = vadd.f32 %v4433, %v4372
        %v4490 = vadd.f32 %v4434, %v4273
        %v4491 = vadd.f32 %v4435, %v4275
        %v4492 = vadd.f32 %v4436, %v4376
        %v4493 = vadd.f32 %v4437, %v4378
        %v4494 = vadd.f32 %v4438, %v4277
        %v4495 = vadd.f32 %v4439, %v4279
        %v4496 = vadd.f32 %v4440, %v4380
        %v4497 = vadd.f32 %v4441, %v4382
        %v4498 = vadd.f32 %v4442, %v4283
        %v4499 = vadd.f32 %v4443, %v4285
        %v4500 = vadd.f32 %v4444, %v4386
        %v4501 = vadd.f32 %v4445, %v4388
        %v4502 = vadd.f32 %v4446, %v4287
        %v4503 = vadd.f32 %v4447, %v4289
        %v4504 = vadd.f32 %v4448, %v4390
        %v4505 = vadd.f32 %v4449, %v4392
        %4506 = vst [vmem:[#allocation4] sm:$0xff] %v4450
        %4507 = vst [vmem:[#allocation4 + $0x8] sm:$0xff] %v4451
        %4508 = vst [vmem:[#allocation4 + $0x10] sm:$0xff] %v4452
        %4509 = vst [vmem:[#allocation4 + $0x18] sm:$0xff] %v4453
        %4510 = vst [vmem:[#allocation4 + $0x20] sm:$0xff] %v4454
        %4511 = vst [vmem:[#allocation4 + $0x28] sm:$0xff] %v4455
        %4512 = vst [vmem:[#allocation4 + $0x30] sm:$0xff] %v4456
        %4513 = vst [vmem:[#allocation4 + $0x38] sm:$0xff] %v4457
        %4514 = vst [vmem:[#allocation4 + $0x40] sm:$0xff] %v4458
        %4515 = vst [vmem:[#allocation4 + $0x48] sm:$0xff] %v4459
        %4516 = vst [vmem:[#allocation4 + $0x50] sm:$0xff] %v4460
        %4517 = vst [vmem:[#allocation4 + $0x58] sm:$0xff] %v4461
        %4518 = vst [vmem:[#allocation4 + $0x60] sm:$0xff] %v4462
        %4519 = vst [vmem:[#allocation4 + $0x68] sm:$0xff] %v4463
        %4520 = vst [vmem:[#allocation4 + $0x70] sm:$0xff] %v4464
        %4521 = vst [vmem:[#allocation4 + $0x78] sm:$0xff] %v4465
        %4522 = vst [vmem:[#allocation4 + $0x80] sm:$0xff] %v4466
        %4523 = vst [vmem:[#allocation4 + $0x88] sm:$0xff] %v4467
        %4524 = vst [vmem:[#allocation4 + $0x90] sm:$0xff] %v4468
        %4525 = vst [vmem:[#allocation4 + $0x98] sm:$0xff] %v4469
        %4526 = vst [vmem:[#allocation4 + $0xa0] sm:$0xff] %v4470
        %4527 = vst [vmem:[#allocation4 + $0xa8] sm:$0xff] %v4471
        %4528 = vst [vmem:[#allocation4 + $0xb0] sm:$0xff] %v4472
        %4529 = vst [vmem:[#allocation4 + $0xb8] sm:$0xff] %v4473
        %4530 = vst [vmem:[#allocation4 + $0xc0] sm:$0xff] %v4474
        %4531 = vst [vmem:[#allocation4 + $0xc8] sm:$0xff] %v4475
        %4532 = vst [vmem:[#allocation4 + $0xd0] sm:$0xff] %v4476
        %4533 = vst [vmem:[#allocation4 + $0xd8] sm:$0xff] %v4477
        %4534 = vst [vmem:[#allocation4 + $0xe0] sm:$0xff] %v4478
        %4535 = vst [vmem:[#allocation4 + $0xe8] sm:$0xff] %v4479
        %4536 = vst [vmem:[#allocation4 + $0xf0] sm:$0xff] %v4480
        %4537 = vst [vmem:[#allocation4 + $0xf8] sm:$0xff] %v4481
        %4538 = vst [vmem:[#allocation4 + $0x100] sm:$0xff] %v4482
        %4539 = vst [vmem:[#allocation4 + $0x108] sm:$0xff] %v4483
        %4540 = vst [vmem:[#allocation4 + $0x110] sm:$0xff] %v4484
        %4541 = vst [vmem:[#allocation4 + $0x118] sm:$0xff] %v4485
        %4542 = vst [vmem:[#allocation4 + $0x120] sm:$0xff] %v4486
        %4543 = vst [vmem:[#allocation4 + $0x128] sm:$0xff] %v4487
        %4544 = vst [vmem:[#allocation4 + $0x130] sm:$0xff] %v4488
        %4545 = vst [vmem:[#allocation4 + $0x138] sm:$0xff] %v4489
        %4546 = vst [vmem:[#allocation4 + $0x140] sm:$0xff] %v4490
        %4547 = vst [vmem:[#allocation4 + $0x148] sm:$0xff] %v4491
        %4548 = vst [vmem:[#allocation4 + $0x150] sm:$0xff] %v4492
        %4549 = vst [vmem:[#allocation4 + $0x158] sm:$0xff] %v4493
        %4550 = vst [vmem:[#allocation4 + $0x160] sm:$0xff] %v4494
        %4551 = vst [vmem:[#allocation4 + $0x168] sm:$0xff] %v4495
        %4552 = vst [vmem:[#allocation4 + $0x170] sm:$0xff] %v4496
        %4553 = vst [vmem:[#allocation4 + $0x178] sm:$0xff] %v4497
        %4554 = vst [vmem:[#allocation4 + $0x180] sm:$0xff] %v4498
        %4555 = vst [vmem:[#allocation4 + $0x188] sm:$0xff] %v4499
        %4556 = vst [vmem:[#allocation4 + $0x190] sm:$0xff] %v4500
        %4557 = vst [vmem:[#allocation4 + $0x198] sm:$0xff] %v4501
        %4558 = vst [vmem:[#allocation4 + $0x1a0] sm:$0xff] %v4502
        %4559 = vst [vmem:[#allocation4 + $0x1a8] sm:$0xff] %v4503
        %4560 = vst [vmem:[#allocation4 + $0x1b0] sm:$0xff] %v4504
        %4561 = vst [vmem:[#allocation4 + $0x1b8] sm:$0xff] %v4505
        %v4562 = vld [vmem:[#allocation2 + $0x20] sm:$0xff]
        %v4563 = vld [vmem:[#allocation2 + $0x28] sm:$0xff]
        %v4564 = vld [vmem:[#allocation2 + $0x30] sm:$0xff]
        %v4565 = vld [vmem:[#allocation2 + $0x38] sm:$0xff]
        %v4566 = vld [vmem:[#allocation2 + $0x40] sm:$0xff]
        %v4567 = vld [vmem:[#allocation2 + $0x48] sm:$0xff]
        %v4568 = vld [vmem:[#allocation2 + $0x50] sm:$0xff]
        %v4569 = vld [vmem:[#allocation2 + $0x58] sm:$0xff]
        %v4570 = vld [vmem:[#allocation2 + $0x60] sm:$0xff]
        %v4571 = vld [vmem:[#allocation2 + $0x68] sm:$0xff]
        %v4572 = vld [vmem:[#allocation2 + $0x70] sm:$0xff]
        %v4573 = vld [vmem:[#allocation2 + $0x78] sm:$0xff]
        %v4574 = vld [vmem:[#allocation2 + $0x80] sm:$0xff]
        %v4575 = vld [vmem:[#allocation2 + $0x88] sm:$0xff]
        %v4576 = vld [vmem:[#allocation3 + $0x20] sm:$0xff]
        %v4577 = vld [vmem:[#allocation3 + $0x28] sm:$0xff]
        %v4578 = vld [vmem:[#allocation3 + $0x30] sm:$0xff]
        %v4579 = vld [vmem:[#allocation3 + $0x38] sm:$0xff]
        %v4580 = vld [vmem:[#allocation3 + $0x40] sm:$0xff]
        %v4581 = vld [vmem:[#allocation3 + $0x48] sm:$0xff]
        %v4582 = vld [vmem:[#allocation3 + $0x50] sm:$0xff]
        %v4583 = vld [vmem:[#allocation3 + $0x58] sm:$0xff]
        %v4584 = vld [vmem:[#allocation3 + $0x60] sm:$0xff]
        %v4585 = vld [vmem:[#allocation3 + $0x68] sm:$0xff]
        %v4586 = vld [vmem:[#allocation3 + $0x70] sm:$0xff]
        %v4587 = vld [vmem:[#allocation3 + $0x78] sm:$0xff]
        %v4588 = vld [vmem:[#allocation3 + $0x80] sm:$0xff]
        %v4589 = vld [vmem:[#allocation3 + $0x88] sm:$0xff]
        %v4590 = vpack.c.bf16 %v4564, %v4562
        %v4591 = vpack.c.bf16 %v4565, %v4563
        %v4592 = vpack.c.bf16 %v4568, %v4566
        %v4593 = vpack.c.bf16 %v4569, %v4567
        %v4594 = vpack.c.bf16 %v4572, %v4570
        %v4595 = vpack.c.bf16 %v4573, %v4571
        %v4596 = vpack.c.bf16 %v4576, %v4574
        %v4597 = vpack.c.bf16 %v4577, %v4575
        %v4598 = vpack.c.bf16 %v4580, %v4578
        %v4599 = vpack.c.bf16 %v4581, %v4579
        %v4600 = vpack.c.bf16 %v4584, %v4582
        %v4601 = vpack.c.bf16 %v4585, %v4583
        %v4602 = vpack.c.bf16 %v4588, %v4586
        %v4603 = vpack.c.bf16 %v4589, %v4587
        %s4604 = scalar_lea.vmem %s3, 2048
        %v4605 = vld [vmem:[%s4604] sm:$0xff]
        %v4606 = vld [vmem:[%s4604 + $0x8] sm:$0xff]
        %v4607 = vld [vmem:[%s4604 + $0x10] sm:$0xff]
        %v4608 = vld [vmem:[%s4604 + $0x18] sm:$0xff]
        %v4609 = vld [vmem:[%s4604 + $0x20] sm:$0xff]
        %v4610 = vld [vmem:[%s4604 + $0x28] sm:$0xff]
        %v4611 = vld [vmem:[%s4604 + $0x30] sm:$0xff]
        %v4612 = vld [vmem:[%s4604 + $0x38] sm:$0xff]
        %v4613 = vld [vmem:[%s4604 + $0x40] sm:$0xff]
        %v4614 = vld [vmem:[%s4604 + $0x48] sm:$0xff]
        %v4615 = vld [vmem:[%s4604 + $0x50] sm:$0xff]
        %v4616 = vld [vmem:[%s4604 + $0x58] sm:$0xff]
        %v4617 = vld [vmem:[%s4604 + $0x60] sm:$0xff]
        %v4618 = vld [vmem:[%s4604 + $0x68] sm:$0xff]
        %v4619 = vld [vmem:[%s4604 + $0x70] sm:$0xff]
        %v4620 = vld [vmem:[%s4604 + $0x78] sm:$0xff]
        %v4621 = vld [vmem:[%s4604 + $0x80] sm:$0xff]
        %v4622 = vld [vmem:[%s4604 + $0x88] sm:$0xff]
        %v4623 = vld [vmem:[%s4604 + $0x90] sm:$0xff]
        %v4624 = vld [vmem:[%s4604 + $0x98] sm:$0xff]
        %v4625 = vld [vmem:[%s4604 + $0xa0] sm:$0xff]
        %v4626 = vld [vmem:[%s4604 + $0xa8] sm:$0xff]
        %v4627 = vld [vmem:[%s4604 + $0xb0] sm:$0xff]
        %v4628 = vld [vmem:[%s4604 + $0xb8] sm:$0xff]
        %v4629 = vld [vmem:[%s4604 + $0xc0] sm:$0xff]
        %v4630 = vld [vmem:[%s4604 + $0xc8] sm:$0xff]
        %v4631 = vld [vmem:[%s4604 + $0xd0] sm:$0xff]
        %v4632 = vld [vmem:[%s4604 + $0xd8] sm:$0xff]
        %v4633 = vld [vmem:[%s4604 + $0xe0] sm:$0xff]
        %v4634 = vld [vmem:[%s4604 + $0xe8] sm:$0xff]
        %v4635 = vld [vmem:[%s4604 + $0xf0] sm:$0xff]
        %v4636 = vld [vmem:[%s4604 + $0xf8] sm:$0xff]
        %v4637 = vld [vmem:[%s4604 + $0x100] sm:$0xff]
        %v4638 = vld [vmem:[%s4604 + $0x108] sm:$0xff]
        %v4639 = vld [vmem:[%s4604 + $0x110] sm:$0xff]
        %v4640 = vld [vmem:[%s4604 + $0x118] sm:$0xff]
        %v4641 = vld [vmem:[%s4604 + $0x120] sm:$0xff]
        %v4642 = vld [vmem:[%s4604 + $0x128] sm:$0xff]
        %v4643 = vld [vmem:[%s4604 + $0x130] sm:$0xff]
        %v4644 = vld [vmem:[%s4604 + $0x138] sm:$0xff]
        %v4645 = vld [vmem:[%s4604 + $0x140] sm:$0xff]
        %v4646 = vld [vmem:[%s4604 + $0x148] sm:$0xff]
        %v4647 = vld [vmem:[%s4604 + $0x150] sm:$0xff]
        %v4648 = vld [vmem:[%s4604 + $0x158] sm:$0xff]
        %v4649 = vld [vmem:[%s4604 + $0x160] sm:$0xff]
        %v4650 = vld [vmem:[%s4604 + $0x168] sm:$0xff]
        %v4651 = vld [vmem:[%s4604 + $0x170] sm:$0xff]
        %v4652 = vld [vmem:[%s4604 + $0x178] sm:$0xff]
        %v4653 = vld [vmem:[%s4604 + $0x180] sm:$0xff]
        %v4654 = vld [vmem:[%s4604 + $0x188] sm:$0xff]
        %v4655 = vld [vmem:[%s4604 + $0x190] sm:$0xff]
        %v4656 = vld [vmem:[%s4604 + $0x198] sm:$0xff]
        %v4657 = vld [vmem:[%s4604 + $0x1a0] sm:$0xff]
        %v4658 = vld [vmem:[%s4604 + $0x1a8] sm:$0xff]
        %v4659 = vld [vmem:[%s4604 + $0x1b0] sm:$0xff]
        %v4660 = vld [vmem:[%s4604 + $0x1b8] sm:$0xff]
        %v4661 = vld [vmem:[%s4604 + $0x1c0] sm:$0xff]
        %v4662 = vld [vmem:[%s4604 + $0x1c8] sm:$0xff]
        %v4663 = vld [vmem:[%s4604 + $0x1d0] sm:$0xff]
        %v4664 = vld [vmem:[%s4604 + $0x1d8] sm:$0xff]
        %v4665 = vld [vmem:[%s4604 + $0x1e0] sm:$0xff]
        %v4666 = vld [vmem:[%s4604 + $0x1e8] sm:$0xff]
        %v4667 = vld [vmem:[%s4604 + $0x1f0] sm:$0xff]
        %v4668 = vld [vmem:[%s4604 + $0x1f8] sm:$0xff]
        %v4733 = vunpack.c.l.b16 %v4605
        %v4734 = vunpack.c.h.b16 %v4605
        %v4735 = vunpack.c.l.b16 %v4606
        %v4736 = vunpack.c.h.b16 %v4606
        %v4737 = vunpack.c.l.b16 %v4607
        %v4738 = vunpack.c.h.b16 %v4607
        %v4739 = vunpack.c.l.b16 %v4608
        %v4740 = vunpack.c.h.b16 %v4608
        %v4741 = vunpack.c.l.b16 %v4609
        %v4742 = vunpack.c.h.b16 %v4609
        %v4743 = vunpack.c.l.b16 %v4610
        %v4744 = vunpack.c.h.b16 %v4610
        %v4745 = vunpack.c.l.b16 %v4611
        %v4746 = vunpack.c.h.b16 %v4611
        %v4747 = vunpack.c.l.b16 %v4612
        %v4748 = vunpack.c.h.b16 %v4612
        %v4749 = vunpack.c.l.b16 %v4613
        %v4750 = vunpack.c.h.b16 %v4613
        %v4751 = vunpack.c.l.b16 %v4614
        %v4752 = vunpack.c.h.b16 %v4614
        %v4753 = vunpack.c.l.b16 %v4615
        %v4754 = vunpack.c.h.b16 %v4615
        %v4755 = vunpack.c.l.b16 %v4616
        %v4756 = vunpack.c.h.b16 %v4616
        %v4757 = vunpack.c.l.b16 %v4617
        %v4758 = vunpack.c.h.b16 %v4617
        %v4759 = vunpack.c.l.b16 %v4618
        %v4760 = vunpack.c.h.b16 %v4618
        %v4761 = vunpack.c.l.b16 %v4619
        %v4762 = vunpack.c.h.b16 %v4619
        %v4763 = vunpack.c.l.b16 %v4620
        %v4764 = vunpack.c.h.b16 %v4620
        %v4765 = vunpack.c.l.b16 %v4621
        %v4766 = vunpack.c.h.b16 %v4621
        %v4767 = vunpack.c.l.b16 %v4622
        %v4768 = vunpack.c.h.b16 %v4622
        %v4769 = vunpack.c.l.b16 %v4623
        %v4770 = vunpack.c.h.b16 %v4623
        %v4771 = vunpack.c.l.b16 %v4624
        %v4772 = vunpack.c.h.b16 %v4624
        %v4773 = vunpack.c.l.b16 %v4625
        %v4774 = vunpack.c.h.b16 %v4625
        %v4775 = vunpack.c.l.b16 %v4626
        %v4776 = vunpack.c.h.b16 %v4626
        %v4777 = vunpack.c.l.b16 %v4627
        %v4778 = vunpack.c.h.b16 %v4627
        %v4779 = vunpack.c.l.b16 %v4628
        %v4780 = vunpack.c.h.b16 %v4628
        %v4781 = vunpack.c.l.b16 %v4629
        %v4782 = vunpack.c.h.b16 %v4629
        %v4783 = vunpack.c.l.b16 %v4630
        %v4784 = vunpack.c.h.b16 %v4630
        %v4785 = vunpack.c.l.b16 %v4631
        %v4786 = vunpack.c.h.b16 %v4631
        %v4787 = vunpack.c.l.b16 %v4632
        %v4788 = vunpack.c.h.b16 %v4632
        %v4789 = vunpack.c.l.b16 %v4633
        %v4790 = vunpack.c.h.b16 %v4633
        %v4791 = vunpack.c.l.b16 %v4634
        %v4792 = vunpack.c.h.b16 %v4634
        %v4793 = vunpack.c.l.b16 %v4635
        %v4794 = vunpack.c.h.b16 %v4635
        %v4795 = vunpack.c.l.b16 %v4636
        %v4796 = vunpack.c.h.b16 %v4636
        %v4797 = vunpack.c.l.b16 %v4637
        %v4798 = vunpack.c.h.b16 %v4637
        %v4799 = vunpack.c.l.b16 %v4638
        %v4800 = vunpack.c.h.b16 %v4638
        %v4801 = vunpack.c.l.b16 %v4639
        %v4802 = vunpack.c.h.b16 %v4639
        %v4803 = vunpack.c.l.b16 %v4640
        %v4804 = vunpack.c.h.b16 %v4640
        %v4805 = vunpack.c.l.b16 %v4641
        %v4806 = vunpack.c.h.b16 %v4641
        %v4807 = vunpack.c.l.b16 %v4642
        %v4808 = vunpack.c.h.b16 %v4642
        %v4809 = vunpack.c.l.b16 %v4643
        %v4810 = vunpack.c.h.b16 %v4643
        %v4811 = vunpack.c.l.b16 %v4644
        %v4812 = vunpack.c.h.b16 %v4644
        %v4813 = vunpack.c.l.b16 %v4645
        %v4814 = vunpack.c.h.b16 %v4645
        %v4815 = vunpack.c.l.b16 %v4646
        %v4816 = vunpack.c.h.b16 %v4646
        %v4817 = vunpack.c.l.b16 %v4647
        %v4818 = vunpack.c.h.b16 %v4647
        %v4819 = vunpack.c.l.b16 %v4648
        %v4820 = vunpack.c.h.b16 %v4648
        %v4821 = vunpack.c.l.b16 %v4649
        %v4822 = vunpack.c.h.b16 %v4649
        %v4823 = vunpack.c.l.b16 %v4650
        %v4824 = vunpack.c.h.b16 %v4650
        %v4825 = vunpack.c.l.b16 %v4651
        %v4826 = vunpack.c.h.b16 %v4651
        %v4827 = vunpack.c.l.b16 %v4652
        %v4828 = vunpack.c.h.b16 %v4652
        %v4829 = vunpack.c.l.b16 %v4653
        %v4830 = vunpack.c.h.b16 %v4653
        %v4831 = vunpack.c.l.b16 %v4654
        %v4832 = vunpack.c.h.b16 %v4654
        %v4833 = vunpack.c.l.b16 %v4655
        %v4834 = vunpack.c.h.b16 %v4655
        %v4835 = vunpack.c.l.b16 %v4656
        %v4836 = vunpack.c.h.b16 %v4656
        %v4837 = vunpack.c.l.b16 %v4657
        %v4838 = vunpack.c.h.b16 %v4657
        %v4839 = vunpack.c.l.b16 %v4658
        %v4840 = vunpack.c.h.b16 %v4658
        %v4841 = vunpack.c.l.b16 %v4659
        %v4842 = vunpack.c.h.b16 %v4659
        %v4843 = vunpack.c.l.b16 %v4660
        %v4844 = vunpack.c.h.b16 %v4660
        %v4845 = vunpack.c.l.b16 %v4661
        %v4846 = vunpack.c.h.b16 %v4661
        %v4847 = vunpack.c.l.b16 %v4662
        %v4848 = vunpack.c.h.b16 %v4662
        %v4849 = vunpack.c.l.b16 %v4663
        %v4850 = vunpack.c.h.b16 %v4663
        %v4851 = vunpack.c.l.b16 %v4664
        %v4852 = vunpack.c.h.b16 %v4664
        %v4853 = vunpack.c.l.b16 %v4665
        %v4854 = vunpack.c.h.b16 %v4665
        %v4855 = vunpack.c.l.b16 %v4666
        %v4856 = vunpack.c.h.b16 %v4666
        %v4857 = vunpack.c.l.b16 %v4667
        %v4858 = vunpack.c.h.b16 %v4667
        %v4859 = vunpack.c.l.b16 %v4668
        %v4860 = vunpack.c.h.b16 %v4668
        %v4861 = vpack.c.b16 %v4737, %v4733
        %v4862 = vpack.c.b16 %v4738, %v4734
        %v4863 = vpack.c.b16 %v4739, %v4735
        %v4864 = vpack.c.b16 %v4740, %v4736
        %v4865 = vpack.c.b16 %v4745, %v4741
        %v4866 = vpack.c.b16 %v4746, %v4742
        %v4867 = vpack.c.b16 %v4747, %v4743
        %v4868 = vpack.c.b16 %v4748, %v4744
        %v4869 = vpack.c.b16 %v4753, %v4749
        %v4870 = vpack.c.b16 %v4754, %v4750
        %v4871 = vpack.c.b16 %v4755, %v4751
        %v4872 = vpack.c.b16 %v4756, %v4752
        %v4873 = vpack.c.b16 %v4761, %v4757
        %v4874 = vpack.c.b16 %v4762, %v4758
        %v4875 = vpack.c.b16 %v4763, %v4759
        %v4876 = vpack.c.b16 %v4764, %v4760
        %v4877 = vpack.c.b16 %v4769, %v4765
        %v4878 = vpack.c.b16 %v4770, %v4766
        %v4879 = vpack.c.b16 %v4771, %v4767
        %v4880 = vpack.c.b16 %v4772, %v4768
        %v4881 = vpack.c.b16 %v4777, %v4773
        %v4882 = vpack.c.b16 %v4778, %v4774
        %v4883 = vpack.c.b16 %v4779, %v4775
        %v4884 = vpack.c.b16 %v4780, %v4776
        %v4885 = vpack.c.b16 %v4785, %v4781
        %v4886 = vpack.c.b16 %v4786, %v4782
        %v4887 = vpack.c.b16 %v4787, %v4783
        %v4888 = vpack.c.b16 %v4788, %v4784
        %v4889 = vpack.c.b16 %v4793, %v4789
        %v4890 = vpack.c.b16 %v4794, %v4790
        %v4891 = vpack.c.b16 %v4795, %v4791
        %v4892 = vpack.c.b16 %v4796, %v4792
        %v4893 = vpack.c.b16 %v4801, %v4797
        %v4894 = vpack.c.b16 %v4802, %v4798
        %v4895 = vpack.c.b16 %v4803, %v4799
        %v4896 = vpack.c.b16 %v4804, %v4800
        %v4897 = vpack.c.b16 %v4809, %v4805
        %v4898 = vpack.c.b16 %v4810, %v4806
        %v4899 = vpack.c.b16 %v4811, %v4807
        %v4900 = vpack.c.b16 %v4812, %v4808
        %v4901 = vpack.c.b16 %v4817, %v4813
        %v4902 = vpack.c.b16 %v4818, %v4814
        %v4903 = vpack.c.b16 %v4819, %v4815
        %v4904 = vpack.c.b16 %v4820, %v4816
        %v4905 = vpack.c.b16 %v4825, %v4821
        %v4906 = vpack.c.b16 %v4826, %v4822
        %v4907 = vpack.c.b16 %v4827, %v4823
        %v4908 = vpack.c.b16 %v4828, %v4824
        %v4909 = vpack.c.b16 %v4833, %v4829
        %v4910 = vpack.c.b16 %v4834, %v4830
        %v4911 = vpack.c.b16 %v4835, %v4831
        %v4912 = vpack.c.b16 %v4836, %v4832
        %v4913 = vpack.c.b16 %v4841, %v4837
        %v4914 = vpack.c.b16 %v4842, %v4838
        %v4915 = vpack.c.b16 %v4843, %v4839
        %v4916 = vpack.c.b16 %v4844, %v4840
        %v4917 = vpack.c.b16 %v4849, %v4845
        %v4918 = vpack.c.b16 %v4850, %v4846
        %v4919 = vpack.c.b16 %v4851, %v4847
        %v4920 = vpack.c.b16 %v4852, %v4848
        %v4921 = vpack.c.b16 %v4857, %v4853
        %v4922 = vpack.c.b16 %v4858, %v4854
        %v4923 = vpack.c.b16 %v4859, %v4855
        %v4924 = vpack.c.b16 %v4860, %v4856
        %4989 = vmatprep.subr.bf16.mxu0 %v4890
        %4990 = vmatpush1.bf16.msra.mxu0 %v4889
        %4991 = vmatprep.subr.bf16.mxu0 %v4886
        %4992 = vmatpush1.bf16.msra.mxu0 %v4885
        %4993 = vmatprep.subr.bf16.mxu0 %v4882
        %4994 = vmatpush1.bf16.msra.mxu0 %v4881
        %4995 = vmatprep.subr.bf16.mxu0 %v4878
        %4996 = vmatpush1.bf16.msra.mxu0 %v4877
        %4997 = vmatprep.subr.bf16.mxu0 %v4874
        %4998 = vmatpush1.bf16.msra.mxu0 %v4873
        %4999 = vmatprep.subr.bf16.mxu0 %v4870
        %5000 = vmatpush1.bf16.msra.mxu0 %v4869
        %5001 = vmatprep.subr.bf16.mxu0 %v4866
        %5002 = vmatpush1.bf16.msra.mxu0 %v4865
        %5003 = vmatprep.subr.bf16.mxu0 %v4862
        %5004 = vmatpush1.bf16.msra.mxu0 %v4861
        %5005 = vmatprep.subr.bf16.mxu0 %v4922
        %5006 = vmatpush2.bf16.msra.mxu0 %v4921
        %5007 = vmatprep.subr.bf16.mxu0 %v4918
        %5008 = vmatpush2.bf16.msra.mxu0 %v4917
        %5009 = vmatprep.subr.bf16.mxu0 %v4914
        %5010 = vmatpush2.bf16.msra.mxu0 %v4913
        %5011 = vmatprep.subr.bf16.mxu0 %v4910
        %5012 = vmatpush2.bf16.msra.mxu0 %v4909
        %5013 = vmatprep.subr.bf16.mxu0 %v4906
        %5014 = vmatpush2.bf16.msra.mxu0 %v4905
        %5015 = vmatprep.subr.bf16.mxu0 %v4902
        %5016 = vmatpush2.bf16.msra.mxu0 %v4901
        %5017 = vmatprep.subr.bf16.mxu0 %v4898
        %5018 = vmatpush2.bf16.msra.mxu0 %v4897
        %5019 = vmatprep.subr.bf16.mxu0 %v4894
        %5020 = vmatpush2.bf16.msra.mxu0 %v4893
        %5021 = vmatprep.mubr.bf16.mxu0 %v4591
        %5022 = vmatmul.mubr.bf16.gmra.mxu0 %v4590
        %v5023 = vpop.f32.mrf.mxu0
        %v5024 = vadd.f32 0.0, %v5023
        %v5025 = vpop.f32.mrf.mxu0
        %v5026 = vadd.f32 0.0, %v5025
        %v5027 = vpop.f32.mrf.mxu0
        %v5028 = vadd.f32 0.0, %v5027
        %v5029 = vpop.f32.mrf.mxu0
        %v5030 = vadd.f32 0.0, %v5029
        %5031 = vmatprep.mubr.bf16.mxu0 %v4593
        %5032 = vmatmul.mubr.bf16.gmra.mxu0 %v4592
        %v5033 = vpop.f32.mrf.mxu0
        %v5034 = vadd.f32 0.0, %v5033
        %v5035 = vpop.f32.mrf.mxu0
        %v5036 = vadd.f32 0.0, %v5035
        %v5037 = vpop.f32.mrf.mxu0
        %v5038 = vadd.f32 0.0, %v5037
        %v5039 = vpop.f32.mrf.mxu0
        %v5040 = vadd.f32 0.0, %v5039
        %5041 = vmatprep.mubr.bf16.mxu0 %v4595
        %5042 = vmatmul.mubr.bf16.gmra.mxu0 %v4594
        %v5043 = vpop.f32.mrf.mxu0
        %v5044 = vadd.f32 0.0, %v5043
        %v5045 = vpop.f32.mrf.mxu0
        %v5046 = vadd.f32 0.0, %v5045
        %v5047 = vpop.f32.mrf.mxu0
        %v5048 = vadd.f32 0.0, %v5047
        %v5049 = vpop.f32.mrf.mxu0
        %v5050 = vadd.f32 0.0, %v5049
        %5051 = vmatprep.mubr.bf16.mxu0 %v4597
        %5052 = vmatmul.mubr.bf16.gmra.mxu0 %v4596
        %v5053 = vpop.f32.mrf.mxu0
        %v5054 = vadd.f32 0.0, %v5053
        %v5055 = vpop.f32.mrf.mxu0
        %v5056 = vadd.f32 0.0, %v5055
        %v5057 = vpop.f32.mrf.mxu0
        %v5058 = vadd.f32 0.0, %v5057
        %v5059 = vpop.f32.mrf.mxu0
        %v5060 = vadd.f32 0.0, %v5059
        %5061 = vmatprep.mubr.bf16.mxu0 %v4599
        %5062 = vmatmul.mubr.bf16.gmra.mxu0 %v4598
        %v5063 = vpop.f32.mrf.mxu0
        %v5064 = vadd.f32 0.0, %v5063
        %v5065 = vpop.f32.mrf.mxu0
        %v5066 = vadd.f32 0.0, %v5065
        %v5067 = vpop.f32.mrf.mxu0
        %v5068 = vadd.f32 0.0, %v5067
        %v5069 = vpop.f32.mrf.mxu0
        %v5070 = vadd.f32 0.0, %v5069
        %5071 = vmatprep.mubr.bf16.mxu0 %v4601
        %5072 = vmatmul.mubr.bf16.gmra.mxu0 %v4600
        %v5073 = vpop.f32.mrf.mxu0
        %v5074 = vadd.f32 0.0, %v5073
        %v5075 = vpop.f32.mrf.mxu0
        %v5076 = vadd.f32 0.0, %v5075
        %v5077 = vpop.f32.mrf.mxu0
        %v5078 = vadd.f32 0.0, %v5077
        %v5079 = vpop.f32.mrf.mxu0
        %v5080 = vadd.f32 0.0, %v5079
        %5081 = vmatprep.mubr.bf16.mxu0 %v4603
        %5082 = vmatmul.mubr.bf16.gmra.mxu0 %v4602
        %v5083 = vpop.f32.mrf.mxu0
        %v5084 = vadd.f32 0.0, %v5083
        %v5085 = vpop.f32.mrf.mxu0
        %v5086 = vadd.f32 0.0, %v5085
        %v5087 = vpop.f32.mrf.mxu0
        %v5088 = vadd.f32 0.0, %v5087
        %v5089 = vpop.f32.mrf.mxu0
        %v5090 = vadd.f32 0.0, %v5089
        %5091 = vdwg.mxu0
        %5092 = vmatprep.subr.bf16.mxu0 %v4892
        %5093 = vmatpush1.bf16.msra.mxu0 %v4891
        %5094 = vmatprep.subr.bf16.mxu0 %v4888
        %5095 = vmatpush1.bf16.msra.mxu0 %v4887
        %5096 = vmatprep.subr.bf16.mxu0 %v4884
        %5097 = vmatpush1.bf16.msra.mxu0 %v4883
        %5098 = vmatprep.subr.bf16.mxu0 %v4880
        %5099 = vmatpush1.bf16.msra.mxu0 %v4879
        %5100 = vmatprep.subr.bf16.mxu0 %v4876
        %5101 = vmatpush1.bf16.msra.mxu0 %v4875
        %5102 = vmatprep.subr.bf16.mxu0 %v4872
        %5103 = vmatpush1.bf16.msra.mxu0 %v4871
        %5104 = vmatprep.subr.bf16.mxu0 %v4868
        %5105 = vmatpush1.bf16.msra.mxu0 %v4867
        %5106 = vmatprep.subr.bf16.mxu0 %v4864
        %5107 = vmatpush1.bf16.msra.mxu0 %v4863
        %5108 = vmatprep.subr.bf16.mxu0 %v4924
        %5109 = vmatpush2.bf16.msra.mxu0 %v4923
        %5110 = vmatprep.subr.bf16.mxu0 %v4920
        %5111 = vmatpush2.bf16.msra.mxu0 %v4919
        %5112 = vmatprep.subr.bf16.mxu0 %v4916
        %5113 = vmatpush2.bf16.msra.mxu0 %v4915
        %5114 = vmatprep.subr.bf16.mxu0 %v4912
        %5115 = vmatpush2.bf16.msra.mxu0 %v4911
        %5116 = vmatprep.subr.bf16.mxu0 %v4908
        %5117 = vmatpush2.bf16.msra.mxu0 %v4907
        %5118 = vmatprep.subr.bf16.mxu0 %v4904
        %5119 = vmatpush2.bf16.msra.mxu0 %v4903
        %5120 = vmatprep.subr.bf16.mxu0 %v4900
        %5121 = vmatpush2.bf16.msra.mxu0 %v4899
        %5122 = vmatprep.subr.bf16.mxu0 %v4896
        %5123 = vmatpush2.bf16.msra.mxu0 %v4895
        %5124 = vmatprep.mubr.bf16.mxu0 %v4591
        %5125 = vmatmul.mubr.bf16.gmra.mxu0 %v4590
        %v5126 = vpop.f32.mrf.mxu0
        %v5127 = vadd.f32 0.0, %v5126
        %v5128 = vpop.f32.mrf.mxu0
        %v5129 = vadd.f32 0.0, %v5128
        %v5130 = vpop.f32.mrf.mxu0
        %v5131 = vadd.f32 0.0, %v5130
        %v5132 = vpop.f32.mrf.mxu0
        %v5133 = vadd.f32 0.0, %v5132
        %5134 = vmatprep.mubr.bf16.mxu0 %v4593
        %5135 = vmatmul.mubr.bf16.gmra.mxu0 %v4592
        %v5136 = vpop.f32.mrf.mxu0
        %v5137 = vadd.f32 0.0, %v5136
        %v5138 = vpop.f32.mrf.mxu0
        %v5139 = vadd.f32 0.0, %v5138
        %v5140 = vpop.f32.mrf.mxu0
        %v5141 = vadd.f32 0.0, %v5140
        %v5142 = vpop.f32.mrf.mxu0
        %v5143 = vadd.f32 0.0, %v5142
        %5144 = vmatprep.mubr.bf16.mxu0 %v4595
        %5145 = vmatmul.mubr.bf16.gmra.mxu0 %v4594
        %v5146 = vpop.f32.mrf.mxu0
        %v5147 = vadd.f32 0.0, %v5146
        %v5148 = vpop.f32.mrf.mxu0
        %v5149 = vadd.f32 0.0, %v5148
        %v5150 = vpop.f32.mrf.mxu0
        %v5151 = vadd.f32 0.0, %v5150
        %v5152 = vpop.f32.mrf.mxu0
        %v5153 = vadd.f32 0.0, %v5152
        %5154 = vmatprep.mubr.bf16.mxu0 %v4597
        %5155 = vmatmul.mubr.bf16.gmra.mxu0 %v4596
        %v5156 = vpop.f32.mrf.mxu0
        %v5157 = vadd.f32 0.0, %v5156
        %v5158 = vpop.f32.mrf.mxu0
        %v5159 = vadd.f32 0.0, %v5158
        %v5160 = vpop.f32.mrf.mxu0
        %v5161 = vadd.f32 0.0, %v5160
        %v5162 = vpop.f32.mrf.mxu0
        %v5163 = vadd.f32 0.0, %v5162
        %5164 = vmatprep.mubr.bf16.mxu0 %v4599
        %5165 = vmatmul.mubr.bf16.gmra.mxu0 %v4598
        %v5166 = vpop.f32.mrf.mxu0
        %v5167 = vadd.f32 0.0, %v5166
        %v5168 = vpop.f32.mrf.mxu0
        %v5169 = vadd.f32 0.0, %v5168
        %v5170 = vpop.f32.mrf.mxu0
        %v5171 = vadd.f32 0.0, %v5170
        %v5172 = vpop.f32.mrf.mxu0
        %v5173 = vadd.f32 0.0, %v5172
        %5174 = vmatprep.mubr.bf16.mxu0 %v4601
        %5175 = vmatmul.mubr.bf16.gmra.mxu0 %v4600
        %v5176 = vpop.f32.mrf.mxu0
        %v5177 = vadd.f32 0.0, %v5176
        %v5178 = vpop.f32.mrf.mxu0
        %v5179 = vadd.f32 0.0, %v5178
        %v5180 = vpop.f32.mrf.mxu0
        %v5181 = vadd.f32 0.0, %v5180
        %v5182 = vpop.f32.mrf.mxu0
        %v5183 = vadd.f32 0.0, %v5182
        %5184 = vmatprep.mubr.bf16.mxu0 %v4603
        %5185 = vmatmul.mubr.bf16.gmra.mxu0 %v4602
        %v5186 = vpop.f32.mrf.mxu0
        %v5187 = vadd.f32 0.0, %v5186
        %v5188 = vpop.f32.mrf.mxu0
        %v5189 = vadd.f32 0.0, %v5188
        %v5190 = vpop.f32.mrf.mxu0
        %v5191 = vadd.f32 0.0, %v5190
        %v5192 = vpop.f32.mrf.mxu0
        %v5193 = vadd.f32 0.0, %v5192
        %5194 = vdwg.mxu0
        %v5195 = vld [vmem:[#allocation4] sm:$0xff]
        %v5196 = vld [vmem:[#allocation4 + $0x8] sm:$0xff]
        %v5197 = vld [vmem:[#allocation4 + $0x10] sm:$0xff]
        %v5198 = vld [vmem:[#allocation4 + $0x18] sm:$0xff]
        %v5199 = vld [vmem:[#allocation4 + $0x20] sm:$0xff]
        %v5200 = vld [vmem:[#allocation4 + $0x28] sm:$0xff]
        %v5201 = vld [vmem:[#allocation4 + $0x30] sm:$0xff]
        %v5202 = vld [vmem:[#allocation4 + $0x38] sm:$0xff]
        %v5203 = vld [vmem:[#allocation4 + $0x40] sm:$0xff]
        %v5204 = vld [vmem:[#allocation4 + $0x48] sm:$0xff]
        %v5205 = vld [vmem:[#allocation4 + $0x50] sm:$0xff]
        %v5206 = vld [vmem:[#allocation4 + $0x58] sm:$0xff]
        %v5207 = vld [vmem:[#allocation4 + $0x60] sm:$0xff]
        %v5208 = vld [vmem:[#allocation4 + $0x68] sm:$0xff]
        %v5209 = vld [vmem:[#allocation4 + $0x70] sm:$0xff]
        %v5210 = vld [vmem:[#allocation4 + $0x78] sm:$0xff]
        %v5211 = vld [vmem:[#allocation4 + $0x80] sm:$0xff]
        %v5212 = vld [vmem:[#allocation4 + $0x88] sm:$0xff]
        %v5213 = vld [vmem:[#allocation4 + $0x90] sm:$0xff]
        %v5214 = vld [vmem:[#allocation4 + $0x98] sm:$0xff]
        %v5215 = vld [vmem:[#allocation4 + $0xa0] sm:$0xff]
        %v5216 = vld [vmem:[#allocation4 + $0xa8] sm:$0xff]
        %v5217 = vld [vmem:[#allocation4 + $0xb0] sm:$0xff]
        %v5218 = vld [vmem:[#allocation4 + $0xb8] sm:$0xff]
        %v5219 = vld [vmem:[#allocation4 + $0xc0] sm:$0xff]
        %v5220 = vld [vmem:[#allocation4 + $0xc8] sm:$0xff]
        %v5221 = vld [vmem:[#allocation4 + $0xd0] sm:$0xff]
        %v5222 = vld [vmem:[#allocation4 + $0xd8] sm:$0xff]
        %v5223 = vld [vmem:[#allocation4 + $0xe0] sm:$0xff]
        %v5224 = vld [vmem:[#allocation4 + $0xe8] sm:$0xff]
        %v5225 = vld [vmem:[#allocation4 + $0xf0] sm:$0xff]
        %v5226 = vld [vmem:[#allocation4 + $0xf8] sm:$0xff]
        %v5227 = vld [vmem:[#allocation4 + $0x100] sm:$0xff]
        %v5228 = vld [vmem:[#allocation4 + $0x108] sm:$0xff]
        %v5229 = vld [vmem:[#allocation4 + $0x110] sm:$0xff]
        %v5230 = vld [vmem:[#allocation4 + $0x118] sm:$0xff]
        %v5231 = vld [vmem:[#allocation4 + $0x120] sm:$0xff]
        %v5232 = vld [vmem:[#allocation4 + $0x128] sm:$0xff]
        %v5233 = vld [vmem:[#allocation4 + $0x130] sm:$0xff]
        %v5234 = vld [vmem:[#allocation4 + $0x138] sm:$0xff]
        %v5235 = vld [vmem:[#allocation4 + $0x140] sm:$0xff]
        %v5236 = vld [vmem:[#allocation4 + $0x148] sm:$0xff]
        %v5237 = vld [vmem:[#allocation4 + $0x150] sm:$0xff]
        %v5238 = vld [vmem:[#allocation4 + $0x158] sm:$0xff]
        %v5239 = vld [vmem:[#allocation4 + $0x160] sm:$0xff]
        %v5240 = vld [vmem:[#allocation4 + $0x168] sm:$0xff]
        %v5241 = vld [vmem:[#allocation4 + $0x170] sm:$0xff]
        %v5242 = vld [vmem:[#allocation4 + $0x178] sm:$0xff]
        %v5243 = vld [vmem:[#allocation4 + $0x180] sm:$0xff]
        %v5244 = vld [vmem:[#allocation4 + $0x188] sm:$0xff]
        %v5245 = vld [vmem:[#allocation4 + $0x190] sm:$0xff]
        %v5246 = vld [vmem:[#allocation4 + $0x198] sm:$0xff]
        %v5247 = vld [vmem:[#allocation4 + $0x1a0] sm:$0xff]
        %v5248 = vld [vmem:[#allocation4 + $0x1a8] sm:$0xff]
        %v5249 = vld [vmem:[#allocation4 + $0x1b0] sm:$0xff]
        %v5250 = vld [vmem:[#allocation4 + $0x1b8] sm:$0xff]
        %v5251 = vadd.f32 %v5195, %v5024
        %v5252 = vadd.f32 %v5196, %v5026
        %v5253 = vadd.f32 %v5197, %v5127
        %v5254 = vadd.f32 %v5198, %v5129
        %v5255 = vadd.f32 %v5199, %v5028
        %v5256 = vadd.f32 %v5200, %v5030
        %v5257 = vadd.f32 %v5201, %v5131
        %v5258 = vadd.f32 %v5202, %v5133
        %v5259 = vadd.f32 %v5203, %v5034
        %v5260 = vadd.f32 %v5204, %v5036
        %v5261 = vadd.f32 %v5205, %v5137
        %v5262 = vadd.f32 %v5206, %v5139
        %v5263 = vadd.f32 %v5207, %v5038
        %v5264 = vadd.f32 %v5208, %v5040
        %v5265 = vadd.f32 %v5209, %v5141
        %v5266 = vadd.f32 %v5210, %v5143
        %v5267 = vadd.f32 %v5211, %v5044
        %v5268 = vadd.f32 %v5212, %v5046
        %v5269 = vadd.f32 %v5213, %v5147
        %v5270 = vadd.f32 %v5214, %v5149
        %v5271 = vadd.f32 %v5215, %v5048
        %v5272 = vadd.f32 %v5216, %v5050
        %v5273 = vadd.f32 %v5217, %v5151
        %v5274 = vadd.f32 %v5218, %v5153
        %v5275 = vadd.f32 %v5219, %v5054
        %v5276 = vadd.f32 %v5220, %v5056
        %v5277 = vadd.f32 %v5221, %v5157
        %v5278 = vadd.f32 %v5222, %v5159
        %v5279 = vadd.f32 %v5223, %v5058
        %v5280 = vadd.f32 %v5224, %v5060
        %v5281 = vadd.f32 %v5225, %v5161
        %v5282 = vadd.f32 %v5226, %v5163
        %v5283 = vadd.f32 %v5227, %v5064
        %v5284 = vadd.f32 %v5228, %v5066
        %v5285 = vadd.f32 %v5229, %v5167
        %v5286 = vadd.f32 %v5230, %v5169
        %v5287 = vadd.f32 %v5231, %v5068
        %v5288 = vadd.f32 %v5232, %v5070
        %v5289 = vadd.f32 %v5233, %v5171
        %v5290 = vadd.f32 %v5234, %v5173
        %v5291 = vadd.f32 %v5235, %v5074
        %v5292 = vadd.f32 %v5236, %v5076
        %v5293 = vadd.f32 %v5237, %v5177
        %v5294 = vadd.f32 %v5238, %v5179
        %v5295 = vadd.f32 %v5239, %v5078
        %v5296 = vadd.f32 %v5240, %v5080
        %v5297 = vadd.f32 %v5241, %v5181
        %v5298 = vadd.f32 %v5242, %v5183
        %v5299 = vadd.f32 %v5243, %v5084
        %v5300 = vadd.f32 %v5244, %v5086
        %v5301 = vadd.f32 %v5245, %v5187
        %v5302 = vadd.f32 %v5246, %v5189
        %v5303 = vadd.f32 %v5247, %v5088
        %v5304 = vadd.f32 %v5248, %v5090
        %v5305 = vadd.f32 %v5249, %v5191
        %v5306 = vadd.f32 %v5250, %v5193
        %5307 = vst [vmem:[#allocation4] sm:$0xff] %v5251
        %5308 = vst [vmem:[#allocation4 + $0x8] sm:$0xff] %v5252
        %5309 = vst [vmem:[#allocation4 + $0x10] sm:$0xff] %v5253
        %5310 = vst [vmem:[#allocation4 + $0x18] sm:$0xff] %v5254
        %5311 = vst [vmem:[#allocation4 + $0x20] sm:$0xff] %v5255
        %5312 = vst [vmem:[#allocation4 + $0x28] sm:$0xff] %v5256
        %5313 = vst [vmem:[#allocation4 + $0x30] sm:$0xff] %v5257
        %5314 = vst [vmem:[#allocation4 + $0x38] sm:$0xff] %v5258
        %5315 = vst [vmem:[#allocation4 + $0x40] sm:$0xff] %v5259
        %5316 = vst [vmem:[#allocation4 + $0x48] sm:$0xff] %v5260
        %5317 = vst [vmem:[#allocation4 + $0x50] sm:$0xff] %v5261
        %5318 = vst [vmem:[#allocation4 + $0x58] sm:$0xff] %v5262
        %5319 = vst [vmem:[#allocation4 + $0x60] sm:$0xff] %v5263
        %5320 = vst [vmem:[#allocation4 + $0x68] sm:$0xff] %v5264
        %5321 = vst [vmem:[#allocation4 + $0x70] sm:$0xff] %v5265
        %5322 = vst [vmem:[#allocation4 + $0x78] sm:$0xff] %v5266
        %5323 = vst [vmem:[#allocation4 + $0x80] sm:$0xff] %v5267
        %5324 = vst [vmem:[#allocation4 + $0x88] sm:$0xff] %v5268
        %5325 = vst [vmem:[#allocation4 + $0x90] sm:$0xff] %v5269
        %5326 = vst [vmem:[#allocation4 + $0x98] sm:$0xff] %v5270
        %5327 = vst [vmem:[#allocation4 + $0xa0] sm:$0xff] %v5271
        %5328 = vst [vmem:[#allocation4 + $0xa8] sm:$0xff] %v5272
        %5329 = vst [vmem:[#allocation4 + $0xb0] sm:$0xff] %v5273
        %5330 = vst [vmem:[#allocation4 + $0xb8] sm:$0xff] %v5274
        %5331 = vst [vmem:[#allocation4 + $0xc0] sm:$0xff] %v5275
        %5332 = vst [vmem:[#allocation4 + $0xc8] sm:$0xff] %v5276
        %5333 = vst [vmem:[#allocation4 + $0xd0] sm:$0xff] %v5277
        %5334 = vst [vmem:[#allocation4 + $0xd8] sm:$0xff] %v5278
        %5335 = vst [vmem:[#allocation4 + $0xe0] sm:$0xff] %v5279
        %5336 = vst [vmem:[#allocation4 + $0xe8] sm:$0xff] %v5280
        %5337 = vst [vmem:[#allocation4 + $0xf0] sm:$0xff] %v5281
        %5338 = vst [vmem:[#allocation4 + $0xf8] sm:$0xff] %v5282
        %5339 = vst [vmem:[#allocation4 + $0x100] sm:$0xff] %v5283
        %5340 = vst [vmem:[#allocation4 + $0x108] sm:$0xff] %v5284
        %5341 = vst [vmem:[#allocation4 + $0x110] sm:$0xff] %v5285
        %5342 = vst [vmem:[#allocation4 + $0x118] sm:$0xff] %v5286
        %5343 = vst [vmem:[#allocation4 + $0x120] sm:$0xff] %v5287
        %5344 = vst [vmem:[#allocation4 + $0x128] sm:$0xff] %v5288
        %5345 = vst [vmem:[#allocation4 + $0x130] sm:$0xff] %v5289
        %5346 = vst [vmem:[#allocation4 + $0x138] sm:$0xff] %v5290
        %5347 = vst [vmem:[#allocation4 + $0x140] sm:$0xff] %v5291
        %5348 = vst [vmem:[#allocation4 + $0x148] sm:$0xff] %v5292
        %5349 = vst [vmem:[#allocation4 + $0x150] sm:$0xff] %v5293
        %5350 = vst [vmem:[#allocation4 + $0x158] sm:$0xff] %v5294
        %5351 = vst [vmem:[#allocation4 + $0x160] sm:$0xff] %v5295
        %5352 = vst [vmem:[#allocation4 + $0x168] sm:$0xff] %v5296
        %5353 = vst [vmem:[#allocation4 + $0x170] sm:$0xff] %v5297
        %5354 = vst [vmem:[#allocation4 + $0x178] sm:$0xff] %v5298
        %5355 = vst [vmem:[#allocation4 + $0x180] sm:$0xff] %v5299
        %5356 = vst [vmem:[#allocation4 + $0x188] sm:$0xff] %v5300
        %5357 = vst [vmem:[#allocation4 + $0x190] sm:$0xff] %v5301
        %5358 = vst [vmem:[#allocation4 + $0x198] sm:$0xff] %v5302
        %5359 = vst [vmem:[#allocation4 + $0x1a0] sm:$0xff] %v5303
        %5360 = vst [vmem:[#allocation4 + $0x1a8] sm:$0xff] %v5304
        %5361 = vst [vmem:[#allocation4 + $0x1b0] sm:$0xff] %v5305
        %5362 = vst [vmem:[#allocation4 + $0x1b8] sm:$0xff] %v5306
        %v5363 = vld [vmem:[#allocation4] sm:$0xff]
        %v5364 = vld [vmem:[#allocation4 + $0x8] sm:$0xff]
        %v5365 = vld [vmem:[#allocation4 + $0x10] sm:$0xff]
        %v5366 = vld [vmem:[#allocation4 + $0x18] sm:$0xff]
        %v5367 = vld [vmem:[#allocation4 + $0x20] sm:$0xff]
        %v5368 = vld [vmem:[#allocation4 + $0x28] sm:$0xff]
        %v5369 = vld [vmem:[#allocation4 + $0x30] sm:$0xff]
        %v5370 = vld [vmem:[#allocation4 + $0x38] sm:$0xff]
        %v5371 = vld [vmem:[#allocation4 + $0x40] sm:$0xff]
        %v5372 = vld [vmem:[#allocation4 + $0x48] sm:$0xff]
        %v5373 = vld [vmem:[#allocation4 + $0x50] sm:$0xff]
        %v5374 = vld [vmem:[#allocation4 + $0x58] sm:$0xff]
        %v5375 = vld [vmem:[#allocation4 + $0x60] sm:$0xff]
        %v5376 = vld [vmem:[#allocation4 + $0x68] sm:$0xff]
        %v5377 = vld [vmem:[#allocation4 + $0x70] sm:$0xff]
        %v5378 = vld [vmem:[#allocation4 + $0x78] sm:$0xff]
        %v5379 = vld [vmem:[#allocation4 + $0x80] sm:$0xff]
        %v5380 = vld [vmem:[#allocation4 + $0x88] sm:$0xff]
        %v5381 = vld [vmem:[#allocation4 + $0x90] sm:$0xff]
        %v5382 = vld [vmem:[#allocation4 + $0x98] sm:$0xff]
        %v5383 = vld [vmem:[#allocation4 + $0xa0] sm:$0xff]
        %v5384 = vld [vmem:[#allocation4 + $0xa8] sm:$0xff]
        %v5385 = vld [vmem:[#allocation4 + $0xb0] sm:$0xff]
        %v5386 = vld [vmem:[#allocation4 + $0xb8] sm:$0xff]
        %v5387 = vld [vmem:[#allocation4 + $0xc0] sm:$0xff]
        %v5388 = vld [vmem:[#allocation4 + $0xc8] sm:$0xff]
        %v5389 = vld [vmem:[#allocation4 + $0xd0] sm:$0xff]
        %v5390 = vld [vmem:[#allocation4 + $0xd8] sm:$0xff]
        %v5391 = vld [vmem:[#allocation4 + $0xe0] sm:$0xff]
        %v5392 = vld [vmem:[#allocation4 + $0xe8] sm:$0xff]
        %v5393 = vld [vmem:[#allocation4 + $0xf0] sm:$0xff]
        %v5394 = vld [vmem:[#allocation4 + $0xf8] sm:$0xff]
        %v5395 = vld [vmem:[#allocation4 + $0x100] sm:$0xff]
        %v5396 = vld [vmem:[#allocation4 + $0x108] sm:$0xff]
        %v5397 = vld [vmem:[#allocation4 + $0x110] sm:$0xff]
        %v5398 = vld [vmem:[#allocation4 + $0x118] sm:$0xff]
        %v5399 = vld [vmem:[#allocation4 + $0x120] sm:$0xff]
        %v5400 = vld [vmem:[#allocation4 + $0x128] sm:$0xff]
        %v5401 = vld [vmem:[#allocation4 + $0x130] sm:$0xff]
        %v5402 = vld [vmem:[#allocation4 + $0x138] sm:$0xff]
        %v5403 = vld [vmem:[#allocation4 + $0x140] sm:$0xff]
        %v5404 = vld [vmem:[#allocation4 + $0x148] sm:$0xff]
        %v5405 = vld [vmem:[#allocation4 + $0x150] sm:$0xff]
        %v5406 = vld [vmem:[#allocation4 + $0x158] sm:$0xff]
        %v5407 = vld [vmem:[#allocation4 + $0x160] sm:$0xff]
        %v5408 = vld [vmem:[#allocation4 + $0x168] sm:$0xff]
        %v5409 = vld [vmem:[#allocation4 + $0x170] sm:$0xff]
        %v5410 = vld [vmem:[#allocation4 + $0x178] sm:$0xff]
        %v5411 = vld [vmem:[#allocation4 + $0x180] sm:$0xff]
        %v5412 = vld [vmem:[#allocation4 + $0x188] sm:$0xff]
        %v5413 = vld [vmem:[#allocation4 + $0x190] sm:$0xff]
        %v5414 = vld [vmem:[#allocation4 + $0x198] sm:$0xff]
        %v5415 = vld [vmem:[#allocation4 + $0x1a0] sm:$0xff]
        %v5416 = vld [vmem:[#allocation4 + $0x1a8] sm:$0xff]
        %v5417 = vld [vmem:[#allocation4 + $0x1b0] sm:$0xff]
        %v5418 = vld [vmem:[#allocation4 + $0x1b8] sm:$0xff]
        %v5419 = vld [vmem:[%s4] sm:$0x3]
        %v5420 = vmax.f32 %v5363, %v5391
        %v5421 = vmax.f32 %v5364, %v5392
        %v5422 = vmax.f32 %v5365, %v5393
        %v5423 = vmax.f32 %v5366, %v5394
        %v5424 = vmax.f32 %v5367, %v5395
        %v5425 = vmax.f32 %v5368, %v5396
        %v5426 = vmax.f32 %v5369, %v5397
        %v5427 = vmax.f32 %v5370, %v5398
        %v5428 = vmax.f32 %v5371, %v5399
        %v5429 = vmax.f32 %v5372, %v5400
        %v5430 = vmax.f32 %v5373, %v5401
        %v5431 = vmax.f32 %v5374, %v5402
        %v5432 = vmax.f32 %v5375, %v5403
        %v5433 = vmax.f32 %v5376, %v5404
        %v5434 = vmax.f32 %v5377, %v5405
        %v5435 = vmax.f32 %v5378, %v5406
        %v5436 = vmax.f32 %v5379, %v5407
        %v5437 = vmax.f32 %v5380, %v5408
        %v5438 = vmax.f32 %v5381, %v5409
        %v5439 = vmax.f32 %v5382, %v5410
        %v5440 = vmax.f32 %v5383, %v5411
        %v5441 = vmax.f32 %v5384, %v5412
        %v5442 = vmax.f32 %v5385, %v5413
        %v5443 = vmax.f32 %v5386, %v5414
        %v5444 = vmax.f32 %v5387, %v5415
        %v5445 = vmax.f32 %v5388, %v5416
        %v5446 = vmax.f32 %v5389, %v5417
        %v5447 = vmax.f32 %v5390, %v5418
        %v5448 = vmax.f32 %v5420, %v5422
        %v5449 = vmax.f32 %v5421, %v5423
        %v5450 = vmax.f32 %v5424, %v5426
        %v5451 = vmax.f32 %v5425, %v5427
        %v5452 = vmax.f32 %v5428, %v5430
        %v5453 = vmax.f32 %v5429, %v5431
        %v5454 = vmax.f32 %v5432, %v5434
        %v5455 = vmax.f32 %v5433, %v5435
        %v5456 = vmax.f32 %v5436, %v5438
        %v5457 = vmax.f32 %v5437, %v5439
        %v5458 = vmax.f32 %v5440, %v5442
        %v5459 = vmax.f32 %v5441, %v5443
        %v5460 = vmax.f32 %v5444, %v5446
        %v5461 = vmax.f32 %v5445, %v5447
        %v5463 = vlaneseq
        %v5464 = vshrl.u32 %v5463, 7
        %v5465 = vsub.s32 0, %v5464
        %v5466 = vrot.slane %v5419, %v5465
        %v5467 = vlaneseq
        %v5468 = vshrl.u32 %v5467, 7
        %v5469 = vsub.s32 1, %v5468
        %v5470 = vrot.slane %v5419, %v5469
        %v5473 = vadd.f32 %v5448, %v5466
        %v5474 = vadd.f32 %v5449, %v5470
        %v5475 = vadd.f32 %v5450, %v5466
        %v5476 = vadd.f32 %v5451, %v5470
        %v5477 = vadd.f32 %v5452, %v5466
        %v5478 = vadd.f32 %v5453, %v5470
        %v5479 = vadd.f32 %v5454, %v5466
        %v5480 = vadd.f32 %v5455, %v5470
        %v5481 = vadd.f32 %v5456, %v5466
        %v5482 = vadd.f32 %v5457, %v5470
        %v5483 = vadd.f32 %v5458, %v5466
        %v5484 = vadd.f32 %v5459, %v5470
        %v5485 = vadd.f32 %v5460, %v5466
        %v5486 = vadd.f32 %v5461, %v5470
        %v5487 = vmax.f32 %v5473, 0.0
        %v5488 = vmax.f32 %v5474, 0.0
        %v5489 = vmax.f32 %v5475, 0.0
        %v5490 = vmax.f32 %v5476, 0.0
        %v5491 = vmax.f32 %v5477, 0.0
        %v5492 = vmax.f32 %v5478, 0.0
        %v5493 = vmax.f32 %v5479, 0.0
        %v5494 = vmax.f32 %v5480, 0.0
        %v5495 = vmax.f32 %v5481, 0.0
        %v5496 = vmax.f32 %v5482, 0.0
        %v5497 = vmax.f32 %v5483, 0.0
        %v5498 = vmax.f32 %v5484, 0.0
        %v5499 = vmax.f32 %v5485, 0.0
        %v5500 = vmax.f32 %v5486, 0.0
        %v5501 = vpack.c.bf16 %v5489, %v5487
        %v5502 = vpack.c.bf16 %v5490, %v5488
        %v5503 = vpack.c.bf16 %v5493, %v5491
        %v5504 = vpack.c.bf16 %v5494, %v5492
        %v5505 = vpack.c.bf16 %v5497, %v5495
        %v5506 = vpack.c.bf16 %v5498, %v5496
        %v5507 = vpack.c.bf16 %v5499, %v5499
        %v5508 = vpack.c.bf16 %v5500, %v5500
        %v5509 = vld [vmem:[%s5] sm:$0xf]
        %v5510 = vld [vmem:[%s5 + $0x4] sm:$0xf]
        %v5511 = vld [vmem:[%s5 + $0x8] sm:$0xf]
        %v5512 = vld [vmem:[%s5 + $0xc] sm:$0xf]
        %v5513 = vld [vmem:[%s5 + $0x10] sm:$0xf]
        %v5514 = vld [vmem:[%s5 + $0x14] sm:$0xf]
        %v5515 = vld [vmem:[%s5 + $0x18] sm:$0xf]
        %v5516 = vld [vmem:[%s5 + $0x1c] sm:$0xf]
        %v5517 = vld [vmem:[%s5 + $0x20] sm:$0xf]
        %v5518 = vld [vmem:[%s5 + $0x24] sm:$0xf]
        %v5519 = vld [vmem:[%s5 + $0x28] sm:$0xf]
        %v5520 = vld [vmem:[%s5 + $0x2c] sm:$0xf]
        %v5521 = vld [vmem:[%s5 + $0x30] sm:$0xf]
        %v5522 = vld [vmem:[%s5 + $0x34] sm:$0xf]
        %v5523 = vld [vmem:[%s5 + $0x38] sm:$0xf]
        %v5524 = vld [vmem:[%s5 + $0x3c] sm:$0xf]
        %v5525 = vld [vmem:[%s5 + $0x40] sm:$0xf]
        %v5526 = vld [vmem:[%s5 + $0x44] sm:$0xf]
        %v5527 = vld [vmem:[%s5 + $0x48] sm:$0xf]
        %v5528 = vld [vmem:[%s5 + $0x4c] sm:$0xf]
        %v5529 = vld [vmem:[%s5 + $0x50] sm:$0xf]
        %v5530 = vld [vmem:[%s5 + $0x54] sm:$0xf]
        %v5531 = vld [vmem:[%s5 + $0x58] sm:$0xf]
        %v5532 = vld [vmem:[%s5 + $0x5c] sm:$0xf]
        %v5533 = vld [vmem:[%s5 + $0x60] sm:$0xf]
        %v5534 = vld [vmem:[%s5 + $0x64] sm:$0xf]
        %v5535 = vld [vmem:[%s5 + $0x68] sm:$0xf]
        %v5536 = vld [vmem:[%s5 + $0x6c] sm:$0xf]
        %v5537 = vld [vmem:[%s5 + $0x70] sm:$0xf]
        %v5538 = vld [vmem:[%s5 + $0x74] sm:$0xf]
        %v5539 = vld [vmem:[%s5 + $0x78] sm:$0xf]
        %v5540 = vld [vmem:[%s5 + $0x7c] sm:$0xf]
        %s5541 = scalar_lea.vmem %s5, 128
        %v5542 = vld [vmem:[%s5541] sm:$0xf]
        %v5543 = vld [vmem:[%s5541 + $0x4] sm:$0xf]
        %v5544 = vld [vmem:[%s5541 + $0x8] sm:$0xf]
        %v5545 = vld [vmem:[%s5541 + $0xc] sm:$0xf]
        %v5546 = vld [vmem:[%s5541 + $0x10] sm:$0xf]
        %v5547 = vld [vmem:[%s5541 + $0x14] sm:$0xf]
        %v5548 = vld [vmem:[%s5541 + $0x18] sm:$0xf]
        %v5549 = vld [vmem:[%s5541 + $0x1c] sm:$0xf]
        %v5550 = vld [vmem:[%s5541 + $0x20] sm:$0xf]
        %v5551 = vld [vmem:[%s5541 + $0x24] sm:$0xf]
        %v5552 = vld [vmem:[%s5541 + $0x28] sm:$0xf]
        %v5553 = vld [vmem:[%s5541 + $0x2c] sm:$0xf]
        %v5554 = vld [vmem:[%s5541 + $0x30] sm:$0xf]
        %v5555 = vld [vmem:[%s5541 + $0x34] sm:$0xf]
        %v5556 = vld [vmem:[%s5541 + $0x38] sm:$0xf]
        %v5557 = vld [vmem:[%s5541 + $0x3c] sm:$0xf]
        %v5558 = vld [vmem:[%s5541 + $0x40] sm:$0xf]
        %v5559 = vld [vmem:[%s5541 + $0x44] sm:$0xf]
        %v5560 = vld [vmem:[%s5541 + $0x48] sm:$0xf]
        %v5561 = vld [vmem:[%s5541 + $0x4c] sm:$0xf]
        %v5562 = vld [vmem:[%s5541 + $0x50] sm:$0xf]
        %v5563 = vld [vmem:[%s5541 + $0x54] sm:$0xf]
        %v5564 = vld [vmem:[%s5541 + $0x58] sm:$0xf]
        %v5565 = vld [vmem:[%s5541 + $0x5c] sm:$0xf]
        %v5566 = vld [vmem:[%s5541 + $0x60] sm:$0xf]
        %v5567 = vld [vmem:[%s5541 + $0x64] sm:$0xf]
        %v5568 = vld [vmem:[%s5541 + $0x68] sm:$0xf]
        %v5569 = vld [vmem:[%s5541 + $0x6c] sm:$0xf]
        %v5570 = vld [vmem:[%s5541 + $0x70] sm:$0xf]
        %v5571 = vld [vmem:[%s5541 + $0x74] sm:$0xf]
        %v5572 = vld [vmem:[%s5541 + $0x78] sm:$0xf]
        %v5573 = vld [vmem:[%s5541 + $0x7c] sm:$0xf]
        %v5576 = vrot.slane %v5501, 4
        %v5577 = vrot.slane %v5502, 4
        %v5612 = vunpack.c.l.b16 %v5542
        %v5613 = vunpack.c.l.b16 %v5543
        %v5614 = vunpack.c.l.b16 %v5544
        %v5615 = vunpack.c.l.b16 %v5545
        %v5616 = vunpack.c.l.b16 %v5546
        %v5617 = vunpack.c.l.b16 %v5547
        %v5618 = vunpack.c.l.b16 %v5548
        %v5619 = vunpack.c.l.b16 %v5549
        %v5620 = vunpack.c.l.b16 %v5550
        %v5621 = vunpack.c.l.b16 %v5551
        %v5622 = vunpack.c.l.b16 %v5552
        %v5623 = vunpack.c.l.b16 %v5553
        %v5624 = vunpack.c.l.b16 %v5554
        %v5625 = vunpack.c.l.b16 %v5555
        %v5626 = vunpack.c.l.b16 %v5556
        %v5627 = vunpack.c.l.b16 %v5557
        %v5628 = vunpack.c.l.b16 %v5558
        %v5629 = vunpack.c.l.b16 %v5559
        %v5630 = vunpack.c.l.b16 %v5560
        %v5631 = vunpack.c.l.b16 %v5561
        %v5632 = vunpack.c.l.b16 %v5562
        %v5633 = vunpack.c.l.b16 %v5563
        %v5634 = vunpack.c.l.b16 %v5564
        %v5635 = vunpack.c.l.b16 %v5565
        %v5636 = vunpack.c.l.b16 %v5566
        %v5637 = vunpack.c.l.b16 %v5567
        %v5638 = vunpack.c.l.b16 %v5568
        %v5639 = vunpack.c.l.b16 %v5569
        %v5640 = vunpack.c.l.b16 %v5570
        %v5641 = vunpack.c.l.b16 %v5571
        %v5642 = vunpack.c.l.b16 %v5572
        %v5643 = vunpack.c.l.b16 %v5573
        %v5644 = vpack.c.b16 %v5613, %v5612
        %v5645 = vpack.c.b16 %v5615, %v5614
        %v5646 = vpack.c.b16 %v5617, %v5616
        %v5647 = vpack.c.b16 %v5619, %v5618
        %v5648 = vpack.c.b16 %v5621, %v5620
        %v5649 = vpack.c.b16 %v5623, %v5622
        %v5650 = vpack.c.b16 %v5625, %v5624
        %v5651 = vpack.c.b16 %v5627, %v5626
        %v5652 = vpack.c.b16 %v5629, %v5628
        %v5653 = vpack.c.b16 %v5631, %v5630
        %v5654 = vpack.c.b16 %v5633, %v5632
        %v5655 = vpack.c.b16 %v5635, %v5634
        %v5656 = vpack.c.b16 %v5637, %v5636
        %v5657 = vpack.c.b16 %v5639, %v5638
        %v5658 = vpack.c.b16 %v5641, %v5640
        %v5659 = vpack.c.b16 %v5643, %v5642
        %5676 = vmatprep.subr.bf16.mxu0 0
        %5677 = vmatpush1.bf16.msra.mxu0 %v5651
        %5678 = vmatprep.subr.bf16.mxu0 0
        %5679 = vmatpush1.bf16.msra.mxu0 %v5650
        %5680 = vmatprep.subr.bf16.mxu0 0
        %5681 = vmatpush1.bf16.msra.mxu0 %v5649
        %5682 = vmatprep.subr.bf16.mxu0 0
        %5683 = vmatpush1.bf16.msra.mxu0 %v5648
        %5684 = vmatprep.subr.bf16.mxu0 0
        %5685 = vmatpush1.bf16.msra.mxu0 %v5647
        %5686 = vmatprep.subr.bf16.mxu0 0
        %5687 = vmatpush1.bf16.msra.mxu0 %v5646
        %5688 = vmatprep.subr.bf16.mxu0 0
        %5689 = vmatpush1.bf16.msra.mxu0 %v5645
        %5690 = vmatprep.subr.bf16.mxu0 0
        %5691 = vmatpush1.bf16.msra.mxu0 %v5644
        %5692 = vmatprep.subr.bf16.mxu0 0
        %5693 = vmatpush2.bf16.msra.mxu0 %v5659
        %5694 = vmatprep.subr.bf16.mxu0 0
        %5695 = vmatpush2.bf16.msra.mxu0 %v5658
        %5696 = vmatprep.subr.bf16.mxu0 0
        %5697 = vmatpush2.bf16.msra.mxu0 %v5657
        %5698 = vmatprep.subr.bf16.mxu0 0
        %5699 = vmatpush2.bf16.msra.mxu0 %v5656
        %5700 = vmatprep.subr.bf16.mxu0 0
        %5701 = vmatpush2.bf16.msra.mxu0 %v5655
        %5702 = vmatprep.subr.bf16.mxu0 0
        %5703 = vmatpush2.bf16.msra.mxu0 %v5654
        %5704 = vmatprep.subr.bf16.mxu0 0
        %5705 = vmatpush2.bf16.msra.mxu0 %v5653
        %5706 = vmatprep.subr.bf16.mxu0 0
        %5707 = vmatpush2.bf16.msra.mxu0 %v5652
        %5708 = vmatprep.mubr.bf16.mxu0 %v5577
        %5709 = vmatmul.mubr.bf16.gmra.mxu0 %v5576
        %v5710 = vpop.f32.mrf.mxu0
        %v5711 = vadd.f32 0.0, %v5710
        %v5712 = vpop.f32.mrf.mxu0
        %v5713 = vpop.f32.mrf.mxu0
        %v5714 = vpop.f32.mrf.mxu0
        %5715 = vdwg.mxu0
        %v5748 = vunpack.c.l.b16 %v5509
        %v5749 = vunpack.c.l.b16 %v5510
        %v5750 = vunpack.c.l.b16 %v5511
        %v5751 = vunpack.c.l.b16 %v5512
        %v5752 = vunpack.c.l.b16 %v5513
        %v5753 = vunpack.c.l.b16 %v5514
        %v5754 = vunpack.c.l.b16 %v5515
        %v5755 = vunpack.c.l.b16 %v5516
        %v5756 = vunpack.c.l.b16 %v5517
        %v5757 = vunpack.c.l.b16 %v5518
        %v5758 = vunpack.c.l.b16 %v5519
        %v5759 = vunpack.c.l.b16 %v5520
        %v5760 = vunpack.c.l.b16 %v5521
        %v5761 = vunpack.c.l.b16 %v5522
        %v5762 = vunpack.c.l.b16 %v5523
        %v5763 = vunpack.c.l.b16 %v5524
        %v5764 = vunpack.c.l.b16 %v5525
        %v5765 = vunpack.c.l.b16 %v5526
        %v5766 = vunpack.c.l.b16 %v5527
        %v5767 = vunpack.c.l.b16 %v5528
        %v5768 = vunpack.c.l.b16 %v5529
        %v5769 = vunpack.c.l.b16 %v5530
        %v5770 = vunpack.c.l.b16 %v5531
        %v5771 = vunpack.c.l.b16 %v5532
        %v5772 = vunpack.c.l.b16 %v5533
        %v5773 = vunpack.c.l.b16 %v5534
        %v5774 = vunpack.c.l.b16 %v5535
        %v5775 = vunpack.c.l.b16 %v5536
        %v5776 = vunpack.c.l.b16 %v5537
        %v5777 = vunpack.c.l.b16 %v5538
        %v5778 = vunpack.c.l.b16 %v5539
        %v5779 = vunpack.c.l.b16 %v5540
        %v5780 = vpack.c.b16 %v5749, %v5748
        %v5781 = vpack.c.b16 %v5751, %v5750
        %v5782 = vpack.c.b16 %v5753, %v5752
        %v5783 = vpack.c.b16 %v5755, %v5754
        %v5784 = vpack.c.b16 %v5757, %v5756
        %v5785 = vpack.c.b16 %v5759, %v5758
        %v5786 = vpack.c.b16 %v5761, %v5760
        %v5787 = vpack.c.b16 %v5763, %v5762
        %v5788 = vpack.c.b16 %v5765, %v5764
        %v5789 = vpack.c.b16 %v5767, %v5766
        %v5790 = vpack.c.b16 %v5769, %v5768
        %v5791 = vpack.c.b16 %v5771, %v5770
        %v5792 = vpack.c.b16 %v5773, %v5772
        %v5793 = vpack.c.b16 %v5775, %v5774
        %v5794 = vpack.c.b16 %v5777, %v5776
        %v5795 = vpack.c.b16 %v5779, %v5778
        %5812 = vmatprep.subr.bf16.mxu0 0
        %5813 = vmatpush1.bf16.msra.mxu0 %v5787
        %5814 = vmatprep.subr.bf16.mxu0 0
        %5815 = vmatpush1.bf16.msra.mxu0 %v5786
        %5816 = vmatprep.subr.bf16.mxu0 0
        %5817 = vmatpush1.bf16.msra.mxu0 %v5785
        %5818 = vmatprep.subr.bf16.mxu0 0
        %5819 = vmatpush1.bf16.msra.mxu0 %v5784
        %5820 = vmatprep.subr.bf16.mxu0 0
        %5821 = vmatpush1.bf16.msra.mxu0 %v5783
        %5822 = vmatprep.subr.bf16.mxu0 0
        %5823 = vmatpush1.bf16.msra.mxu0 %v5782
        %5824 = vmatprep.subr.bf16.mxu0 0
        %5825 = vmatpush1.bf16.msra.mxu0 %v5781
        %5826 = vmatprep.subr.bf16.mxu0 0
        %5827 = vmatpush1.bf16.msra.mxu0 %v5780
        %5828 = vmatprep.subr.bf16.mxu0 0
        %5829 = vmatpush2.bf16.msra.mxu0 %v5795
        %5830 = vmatprep.subr.bf16.mxu0 0
        %5831 = vmatpush2.bf16.msra.mxu0 %v5794
        %5832 = vmatprep.subr.bf16.mxu0 0
        %5833 = vmatpush2.bf16.msra.mxu0 %v5793
        %5834 = vmatprep.subr.bf16.mxu0 0
        %5835 = vmatpush2.bf16.msra.mxu0 %v5792
        %5836 = vmatprep.subr.bf16.mxu0 0
        %5837 = vmatpush2.bf16.msra.mxu0 %v5791
        %5838 = vmatprep.subr.bf16.mxu0 0
        %5839 = vmatpush2.bf16.msra.mxu0 %v5790
        %5840 = vmatprep.subr.bf16.mxu0 0
        %5841 = vmatpush2.bf16.msra.mxu0 %v5789
        %5842 = vmatprep.subr.bf16.mxu0 0
        %5843 = vmatpush2.bf16.msra.mxu0 %v5788
        %5844 = vmatprep.mubr.bf16.mxu0 %v5502
        %5845 = vmatmul.mubr.bf16.gmra.mxu0 %v5501
        %v5846 = vpop.f32.mrf.mxu0
        %v5847 = vadd.f32 %v5711, %v5846
        %v5848 = vpop.f32.mrf.mxu0
        %v5849 = vpop.f32.mrf.mxu0
        %v5850 = vpop.f32.mrf.mxu0
        %5851 = vdwg.mxu0
        %s5852 = scalar_lea.vmem %s5, 256
        %v5853 = vld [vmem:[%s5852] sm:$0xf]
        %v5854 = vld [vmem:[%s5852 + $0x4] sm:$0xf]
        %v5855 = vld [vmem:[%s5852 + $0x8] sm:$0xf]
        %v5856 = vld [vmem:[%s5852 + $0xc] sm:$0xf]
        %v5857 = vld [vmem:[%s5852 + $0x10] sm:$0xf]
        %v5858 = vld [vmem:[%s5852 + $0x14] sm:$0xf]
        %v5859 = vld [vmem:[%s5852 + $0x18] sm:$0xf]
        %v5860 = vld [vmem:[%s5852 + $0x1c] sm:$0xf]
        %v5861 = vld [vmem:[%s5852 + $0x20] sm:$0xf]
        %v5862 = vld [vmem:[%s5852 + $0x24] sm:$0xf]
        %v5863 = vld [vmem:[%s5852 + $0x28] sm:$0xf]
        %v5864 = vld [vmem:[%s5852 + $0x2c] sm:$0xf]
        %v5865 = vld [vmem:[%s5852 + $0x30] sm:$0xf]
        %v5866 = vld [vmem:[%s5852 + $0x34] sm:$0xf]
        %v5867 = vld [vmem:[%s5852 + $0x38] sm:$0xf]
        %v5868 = vld [vmem:[%s5852 + $0x3c] sm:$0xf]
        %v5869 = vld [vmem:[%s5852 + $0x40] sm:$0xf]
        %v5870 = vld [vmem:[%s5852 + $0x44] sm:$0xf]
        %v5871 = vld [vmem:[%s5852 + $0x48] sm:$0xf]
        %v5872 = vld [vmem:[%s5852 + $0x4c] sm:$0xf]
        %v5873 = vld [vmem:[%s5852 + $0x50] sm:$0xf]
        %v5874 = vld [vmem:[%s5852 + $0x54] sm:$0xf]
        %v5875 = vld [vmem:[%s5852 + $0x58] sm:$0xf]
        %v5876 = vld [vmem:[%s5852 + $0x5c] sm:$0xf]
        %v5877 = vld [vmem:[%s5852 + $0x60] sm:$0xf]
        %v5878 = vld [vmem:[%s5852 + $0x64] sm:$0xf]
        %v5879 = vld [vmem:[%s5852 + $0x68] sm:$0xf]
        %v5880 = vld [vmem:[%s5852 + $0x6c] sm:$0xf]
        %v5881 = vld [vmem:[%s5852 + $0x70] sm:$0xf]
        %v5882 = vld [vmem:[%s5852 + $0x74] sm:$0xf]
        %v5883 = vld [vmem:[%s5852 + $0x78] sm:$0xf]
        %v5884 = vld [vmem:[%s5852 + $0x7c] sm:$0xf]
        %v5917 = vunpack.c.l.b16 %v5853
        %v5918 = vunpack.c.l.b16 %v5854
        %v5919 = vunpack.c.l.b16 %v5855
        %v5920 = vunpack.c.l.b16 %v5856
        %v5921 = vunpack.c.l.b16 %v5857
        %v5922 = vunpack.c.l.b16 %v5858
        %v5923 = vunpack.c.l.b16 %v5859
        %v5924 = vunpack.c.l.b16 %v5860
        %v5925 = vunpack.c.l.b16 %v5861
        %v5926 = vunpack.c.l.b16 %v5862
        %v5927 = vunpack.c.l.b16 %v5863
        %v5928 = vunpack.c.l.b16 %v5864
        %v5929 = vunpack.c.l.b16 %v5865
        %v5930 = vunpack.c.l.b16 %v5866
        %v5931 = vunpack.c.l.b16 %v5867
        %v5932 = vunpack.c.l.b16 %v5868
        %v5933 = vunpack.c.l.b16 %v5869
        %v5934 = vunpack.c.l.b16 %v5870
        %v5935 = vunpack.c.l.b16 %v5871
        %v5936 = vunpack.c.l.b16 %v5872
        %v5937 = vunpack.c.l.b16 %v5873
        %v5938 = vunpack.c.l.b16 %v5874
        %v5939 = vunpack.c.l.b16 %v5875
        %v5940 = vunpack.c.l.b16 %v5876
        %v5941 = vunpack.c.l.b16 %v5877
        %v5942 = vunpack.c.l.b16 %v5878
        %v5943 = vunpack.c.l.b16 %v5879
        %v5944 = vunpack.c.l.b16 %v5880
        %v5945 = vunpack.c.l.b16 %v5881
        %v5946 = vunpack.c.l.b16 %v5882
        %v5947 = vunpack.c.l.b16 %v5883
        %v5948 = vunpack.c.l.b16 %v5884
        %v5949 = vpack.c.b16 %v5918, %v5917
        %v5950 = vpack.c.b16 %v5920, %v5919
        %v5951 = vpack.c.b16 %v5922, %v5921
        %v5952 = vpack.c.b16 %v5924, %v5923
        %v5953 = vpack.c.b16 %v5926, %v5925
        %v5954 = vpack.c.b16 %v5928, %v5927
        %v5955 = vpack.c.b16 %v5930, %v5929
        %v5956 = vpack.c.b16 %v5932, %v5931
        %v5957 = vpack.c.b16 %v5934, %v5933
        %v5958 = vpack.c.b16 %v5936, %v5935
        %v5959 = vpack.c.b16 %v5938, %v5937
        %v5960 = vpack.c.b16 %v5940, %v5939
        %v5961 = vpack.c.b16 %v5942, %v5941
        %v5962 = vpack.c.b16 %v5944, %v5943
        %v5963 = vpack.c.b16 %v5946, %v5945
        %v5964 = vpack.c.b16 %v5948, %v5947
        %5981 = vmatprep.subr.bf16.mxu0 0
        %5982 = vmatpush1.bf16.msra.mxu0 %v5956
        %5983 = vmatprep.subr.bf16.mxu0 0
        %5984 = vmatpush1.bf16.msra.mxu0 %v5955
        %5985 = vmatprep.subr.bf16.mxu0 0
        %5986 = vmatpush1.bf16.msra.mxu0 %v5954
        %5987 = vmatprep.subr.bf16.mxu0 0
        %5988 = vmatpush1.bf16.msra.mxu0 %v5953
        %5989 = vmatprep.subr.bf16.mxu0 0
        %5990 = vmatpush1.bf16.msra.mxu0 %v5952
        %5991 = vmatprep.subr.bf16.mxu0 0
        %5992 = vmatpush1.bf16.msra.mxu0 %v5951
        %5993 = vmatprep.subr.bf16.mxu0 0
        %5994 = vmatpush1.bf16.msra.mxu0 %v5950
        %5995 = vmatprep.subr.bf16.mxu0 0
        %5996 = vmatpush1.bf16.msra.mxu0 %v5949
        %5997 = vmatprep.subr.bf16.mxu0 0
        %5998 = vmatpush2.bf16.msra.mxu0 %v5964
        %5999 = vmatprep.subr.bf16.mxu0 0
        %6000 = vmatpush2.bf16.msra.mxu0 %v5963
        %6001 = vmatprep.subr.bf16.mxu0 0
        %6002 = vmatpush2.bf16.msra.mxu0 %v5962
        %6003 = vmatprep.subr.bf16.mxu0 0
        %6004 = vmatpush2.bf16.msra.mxu0 %v5961
        %6005 = vmatprep.subr.bf16.mxu0 0
        %6006 = vmatpush2.bf16.msra.mxu0 %v5960
        %6007 = vmatprep.subr.bf16.mxu0 0
        %6008 = vmatpush2.bf16.msra.mxu0 %v5959
        %6009 = vmatprep.subr.bf16.mxu0 0
        %6010 = vmatpush2.bf16.msra.mxu0 %v5958
        %6011 = vmatprep.subr.bf16.mxu0 0
        %6012 = vmatpush2.bf16.msra.mxu0 %v5957
        %6013 = vmatprep.mubr.bf16.mxu0 %v5504
        %6014 = vmatmul.mubr.bf16.gmra.mxu0 %v5503
        %v6015 = vpop.f32.mrf.mxu0
        %v6016 = vadd.f32 0.0, %v6015
        %v6017 = vpop.f32.mrf.mxu0
        %v6018 = vpop.f32.mrf.mxu0
        %v6019 = vpop.f32.mrf.mxu0
        %6020 = vdwg.mxu0
        %v6021 = vadd.f32 %v5847, %v6016
        %s6022 = scalar_lea.vmem %s5, 384
        %v6023 = vld [vmem:[%s6022] sm:$0xf]
        %v6024 = vld [vmem:[%s6022 + $0x4] sm:$0xf]
        %v6025 = vld [vmem:[%s6022 + $0x8] sm:$0xf]
        %v6026 = vld [vmem:[%s6022 + $0xc] sm:$0xf]
        %v6027 = vld [vmem:[%s6022 + $0x10] sm:$0xf]
        %v6028 = vld [vmem:[%s6022 + $0x14] sm:$0xf]
        %v6029 = vld [vmem:[%s6022 + $0x18] sm:$0xf]
        %v6030 = vld [vmem:[%s6022 + $0x1c] sm:$0xf]
        %v6031 = vld [vmem:[%s6022 + $0x20] sm:$0xf]
        %v6032 = vld [vmem:[%s6022 + $0x24] sm:$0xf]
        %v6033 = vld [vmem:[%s6022 + $0x28] sm:$0xf]
        %v6034 = vld [vmem:[%s6022 + $0x2c] sm:$0xf]
        %v6035 = vld [vmem:[%s6022 + $0x30] sm:$0xf]
        %v6036 = vld [vmem:[%s6022 + $0x34] sm:$0xf]
        %v6037 = vld [vmem:[%s6022 + $0x38] sm:$0xf]
        %v6038 = vld [vmem:[%s6022 + $0x3c] sm:$0xf]
        %v6039 = vld [vmem:[%s6022 + $0x40] sm:$0xf]
        %v6040 = vld [vmem:[%s6022 + $0x44] sm:$0xf]
        %v6041 = vld [vmem:[%s6022 + $0x48] sm:$0xf]
        %v6042 = vld [vmem:[%s6022 + $0x4c] sm:$0xf]
        %v6043 = vld [vmem:[%s6022 + $0x50] sm:$0xf]
        %v6044 = vld [vmem:[%s6022 + $0x54] sm:$0xf]
        %v6045 = vld [vmem:[%s6022 + $0x58] sm:$0xf]
        %v6046 = vld [vmem:[%s6022 + $0x5c] sm:$0xf]
        %v6047 = vld [vmem:[%s6022 + $0x60] sm:$0xf]
        %v6048 = vld [vmem:[%s6022 + $0x64] sm:$0xf]
        %v6049 = vld [vmem:[%s6022 + $0x68] sm:$0xf]
        %v6050 = vld [vmem:[%s6022 + $0x6c] sm:$0xf]
        %v6051 = vld [vmem:[%s6022 + $0x70] sm:$0xf]
        %v6052 = vld [vmem:[%s6022 + $0x74] sm:$0xf]
        %v6053 = vld [vmem:[%s6022 + $0x78] sm:$0xf]
        %v6054 = vld [vmem:[%s6022 + $0x7c] sm:$0xf]
        %v6057 = vrot.slane %v5503, 4
        %v6058 = vrot.slane %v5504, 4
        %v6093 = vunpack.c.l.b16 %v6023
        %v6094 = vunpack.c.l.b16 %v6024
        %v6095 = vunpack.c.l.b16 %v6025
        %v6096 = vunpack.c.l.b16 %v6026
        %v6097 = vunpack.c.l.b16 %v6027
        %v6098 = vunpack.c.l.b16 %v6028
        %v6099 = vunpack.c.l.b16 %v6029
        %v6100 = vunpack.c.l.b16 %v6030
        %v6101 = vunpack.c.l.b16 %v6031
        %v6102 = vunpack.c.l.b16 %v6032
        %v6103 = vunpack.c.l.b16 %v6033
        %v6104 = vunpack.c.l.b16 %v6034
        %v6105 = vunpack.c.l.b16 %v6035
        %v6106 = vunpack.c.l.b16 %v6036
        %v6107 = vunpack.c.l.b16 %v6037
        %v6108 = vunpack.c.l.b16 %v6038
        %v6109 = vunpack.c.l.b16 %v6039
        %v6110 = vunpack.c.l.b16 %v6040
        %v6111 = vunpack.c.l.b16 %v6041
        %v6112 = vunpack.c.l.b16 %v6042
        %v6113 = vunpack.c.l.b16 %v6043
        %v6114 = vunpack.c.l.b16 %v6044
        %v6115 = vunpack.c.l.b16 %v6045
        %v6116 = vunpack.c.l.b16 %v6046
        %v6117 = vunpack.c.l.b16 %v6047
        %v6118 = vunpack.c.l.b16 %v6048
        %v6119 = vunpack.c.l.b16 %v6049
        %v6120 = vunpack.c.l.b16 %v6050
        %v6121 = vunpack.c.l.b16 %v6051
        %v6122 = vunpack.c.l.b16 %v6052
        %v6123 = vunpack.c.l.b16 %v6053
        %v6124 = vunpack.c.l.b16 %v6054
        %v6125 = vpack.c.b16 %v6094, %v6093
        %v6126 = vpack.c.b16 %v6096, %v6095
        %v6127 = vpack.c.b16 %v6098, %v6097
        %v6128 = vpack.c.b16 %v6100, %v6099
        %v6129 = vpack.c.b16 %v6102, %v6101
        %v6130 = vpack.c.b16 %v6104, %v6103
        %v6131 = vpack.c.b16 %v6106, %v6105
        %v6132 = vpack.c.b16 %v6108, %v6107
        %v6133 = vpack.c.b16 %v6110, %v6109
        %v6134 = vpack.c.b16 %v6112, %v6111
        %v6135 = vpack.c.b16 %v6114, %v6113
        %v6136 = vpack.c.b16 %v6116, %v6115
        %v6137 = vpack.c.b16 %v6118, %v6117
        %v6138 = vpack.c.b16 %v6120, %v6119
        %v6139 = vpack.c.b16 %v6122, %v6121
        %v6140 = vpack.c.b16 %v6124, %v6123
        %6157 = vmatprep.subr.bf16.mxu0 0
        %6158 = vmatpush1.bf16.msra.mxu0 %v6132
        %6159 = vmatprep.subr.bf16.mxu0 0
        %6160 = vmatpush1.bf16.msra.mxu0 %v6131
        %6161 = vmatprep.subr.bf16.mxu0 0
        %6162 = vmatpush1.bf16.msra.mxu0 %v6130
        %6163 = vmatprep.subr.bf16.mxu0 0
        %6164 = vmatpush1.bf16.msra.mxu0 %v6129
        %6165 = vmatprep.subr.bf16.mxu0 0
        %6166 = vmatpush1.bf16.msra.mxu0 %v6128
        %6167 = vmatprep.subr.bf16.mxu0 0
        %6168 = vmatpush1.bf16.msra.mxu0 %v6127
        %6169 = vmatprep.subr.bf16.mxu0 0
        %6170 = vmatpush1.bf16.msra.mxu0 %v6126
        %6171 = vmatprep.subr.bf16.mxu0 0
        %6172 = vmatpush1.bf16.msra.mxu0 %v6125
        %6173 = vmatprep.subr.bf16.mxu0 0
        %6174 = vmatpush2.bf16.msra.mxu0 %v6140
        %6175 = vmatprep.subr.bf16.mxu0 0
        %6176 = vmatpush2.bf16.msra.mxu0 %v6139
        %6177 = vmatprep.subr.bf16.mxu0 0
        %6178 = vmatpush2.bf16.msra.mxu0 %v6138
        %6179 = vmatprep.subr.bf16.mxu0 0
        %6180 = vmatpush2.bf16.msra.mxu0 %v6137
        %6181 = vmatprep.subr.bf16.mxu0 0
        %6182 = vmatpush2.bf16.msra.mxu0 %v6136
        %6183 = vmatprep.subr.bf16.mxu0 0
        %6184 = vmatpush2.bf16.msra.mxu0 %v6135
        %6185 = vmatprep.subr.bf16.mxu0 0
        %6186 = vmatpush2.bf16.msra.mxu0 %v6134
        %6187 = vmatprep.subr.bf16.mxu0 0
        %6188 = vmatpush2.bf16.msra.mxu0 %v6133
        %6189 = vmatprep.mubr.bf16.mxu0 %v6058
        %6190 = vmatmul.mubr.bf16.gmra.mxu0 %v6057
        %v6191 = vpop.f32.mrf.mxu0
        %v6192 = vadd.f32 0.0, %v6191
        %v6193 = vpop.f32.mrf.mxu0
        %v6194 = vpop.f32.mrf.mxu0
        %v6195 = vpop.f32.mrf.mxu0
        %6196 = vdwg.mxu0
        %v6197 = vadd.f32 %v6021, %v6192
        %s6198 = scalar_lea.vmem %s5, 512
        %v6199 = vld [vmem:[%s6198] sm:$0xf]
        %v6200 = vld [vmem:[%s6198 + $0x4] sm:$0xf]
        %v6201 = vld [vmem:[%s6198 + $0x8] sm:$0xf]
        %v6202 = vld [vmem:[%s6198 + $0xc] sm:$0xf]
        %v6203 = vld [vmem:[%s6198 + $0x10] sm:$0xf]
        %v6204 = vld [vmem:[%s6198 + $0x14] sm:$0xf]
        %v6205 = vld [vmem:[%s6198 + $0x18] sm:$0xf]
        %v6206 = vld [vmem:[%s6198 + $0x1c] sm:$0xf]
        %v6207 = vld [vmem:[%s6198 + $0x20] sm:$0xf]
        %v6208 = vld [vmem:[%s6198 + $0x24] sm:$0xf]
        %v6209 = vld [vmem:[%s6198 + $0x28] sm:$0xf]
        %v6210 = vld [vmem:[%s6198 + $0x2c] sm:$0xf]
        %v6211 = vld [vmem:[%s6198 + $0x30] sm:$0xf]
        %v6212 = vld [vmem:[%s6198 + $0x34] sm:$0xf]
        %v6213 = vld [vmem:[%s6198 + $0x38] sm:$0xf]
        %v6214 = vld [vmem:[%s6198 + $0x3c] sm:$0xf]
        %v6215 = vld [vmem:[%s6198 + $0x40] sm:$0xf]
        %v6216 = vld [vmem:[%s6198 + $0x44] sm:$0xf]
        %v6217 = vld [vmem:[%s6198 + $0x48] sm:$0xf]
        %v6218 = vld [vmem:[%s6198 + $0x4c] sm:$0xf]
        %v6219 = vld [vmem:[%s6198 + $0x50] sm:$0xf]
        %v6220 = vld [vmem:[%s6198 + $0x54] sm:$0xf]
        %v6221 = vld [vmem:[%s6198 + $0x58] sm:$0xf]
        %v6222 = vld [vmem:[%s6198 + $0x5c] sm:$0xf]
        %v6223 = vld [vmem:[%s6198 + $0x60] sm:$0xf]
        %v6224 = vld [vmem:[%s6198 + $0x64] sm:$0xf]
        %v6225 = vld [vmem:[%s6198 + $0x68] sm:$0xf]
        %v6226 = vld [vmem:[%s6198 + $0x6c] sm:$0xf]
        %v6227 = vld [vmem:[%s6198 + $0x70] sm:$0xf]
        %v6228 = vld [vmem:[%s6198 + $0x74] sm:$0xf]
        %v6229 = vld [vmem:[%s6198 + $0x78] sm:$0xf]
        %v6230 = vld [vmem:[%s6198 + $0x7c] sm:$0xf]
        %v6263 = vunpack.c.l.b16 %v6199
        %v6264 = vunpack.c.l.b16 %v6200
        %v6265 = vunpack.c.l.b16 %v6201
        %v6266 = vunpack.c.l.b16 %v6202
        %v6267 = vunpack.c.l.b16 %v6203
        %v6268 = vunpack.c.l.b16 %v6204
        %v6269 = vunpack.c.l.b16 %v6205
        %v6270 = vunpack.c.l.b16 %v6206
        %v6271 = vunpack.c.l.b16 %v6207
        %v6272 = vunpack.c.l.b16 %v6208
        %v6273 = vunpack.c.l.b16 %v6209
        %v6274 = vunpack.c.l.b16 %v6210
        %v6275 = vunpack.c.l.b16 %v6211
        %v6276 = vunpack.c.l.b16 %v6212
        %v6277 = vunpack.c.l.b16 %v6213
        %v6278 = vunpack.c.l.b16 %v6214
        %v6279 = vunpack.c.l.b16 %v6215
        %v6280 = vunpack.c.l.b16 %v6216
        %v6281 = vunpack.c.l.b16 %v6217
        %v6282 = vunpack.c.l.b16 %v6218
        %v6283 = vunpack.c.l.b16 %v6219
        %v6284 = vunpack.c.l.b16 %v6220
        %v6285 = vunpack.c.l.b16 %v6221
        %v6286 = vunpack.c.l.b16 %v6222
        %v6287 = vunpack.c.l.b16 %v6223
        %v6288 = vunpack.c.l.b16 %v6224
        %v6289 = vunpack.c.l.b16 %v6225
        %v6290 = vunpack.c.l.b16 %v6226
        %v6291 = vunpack.c.l.b16 %v6227
        %v6292 = vunpack.c.l.b16 %v6228
        %v6293 = vunpack.c.l.b16 %v6229
        %v6294 = vunpack.c.l.b16 %v6230
        %v6295 = vpack.c.b16 %v6264, %v6263
        %v6296 = vpack.c.b16 %v6266, %v6265
        %v6297 = vpack.c.b16 %v6268, %v6267
        %v6298 = vpack.c.b16 %v6270, %v6269
        %v6299 = vpack.c.b16 %v6272, %v6271
        %v6300 = vpack.c.b16 %v6274, %v6273
        %v6301 = vpack.c.b16 %v6276, %v6275
        %v6302 = vpack.c.b16 %v6278, %v6277
        %v6303 = vpack.c.b16 %v6280, %v6279
        %v6304 = vpack.c.b16 %v6282, %v6281
        %v6305 = vpack.c.b16 %v6284, %v6283
        %v6306 = vpack.c.b16 %v6286, %v6285
        %v6307 = vpack.c.b16 %v6288, %v6287
        %v6308 = vpack.c.b16 %v6290, %v6289
        %v6309 = vpack.c.b16 %v6292, %v6291
        %v6310 = vpack.c.b16 %v6294, %v6293
        %6327 = vmatprep.subr.bf16.mxu0 0
        %6328 = vmatpush1.bf16.msra.mxu0 %v6302
        %6329 = vmatprep.subr.bf16.mxu0 0
        %6330 = vmatpush1.bf16.msra.mxu0 %v6301
        %6331 = vmatprep.subr.bf16.mxu0 0
        %6332 = vmatpush1.bf16.msra.mxu0 %v6300
        %6333 = vmatprep.subr.bf16.mxu0 0
        %6334 = vmatpush1.bf16.msra.mxu0 %v6299
        %6335 = vmatprep.subr.bf16.mxu0 0
        %6336 = vmatpush1.bf16.msra.mxu0 %v6298
        %6337 = vmatprep.subr.bf16.mxu0 0
        %6338 = vmatpush1.bf16.msra.mxu0 %v6297
        %6339 = vmatprep.subr.bf16.mxu0 0
        %6340 = vmatpush1.bf16.msra.mxu0 %v6296
        %6341 = vmatprep.subr.bf16.mxu0 0
        %6342 = vmatpush1.bf16.msra.mxu0 %v6295
        %6343 = vmatprep.subr.bf16.mxu0 0
        %6344 = vmatpush2.bf16.msra.mxu0 %v6310
        %6345 = vmatprep.subr.bf16.mxu0 0
        %6346 = vmatpush2.bf16.msra.mxu0 %v6309
        %6347 = vmatprep.subr.bf16.mxu0 0
        %6348 = vmatpush2.bf16.msra.mxu0 %v6308
        %6349 = vmatprep.subr.bf16.mxu0 0
        %6350 = vmatpush2.bf16.msra.mxu0 %v6307
        %6351 = vmatprep.subr.bf16.mxu0 0
        %6352 = vmatpush2.bf16.msra.mxu0 %v6306
        %6353 = vmatprep.subr.bf16.mxu0 0
        %6354 = vmatpush2.bf16.msra.mxu0 %v6305
        %6355 = vmatprep.subr.bf16.mxu0 0
        %6356 = vmatpush2.bf16.msra.mxu0 %v6304
        %6357 = vmatprep.subr.bf16.mxu0 0
        %6358 = vmatpush2.bf16.msra.mxu0 %v6303
        %6359 = vmatprep.mubr.bf16.mxu0 %v5506
        %6360 = vmatmul.mubr.bf16.gmra.mxu0 %v5505
        %v6361 = vpop.f32.mrf.mxu0
        %v6362 = vadd.f32 0.0, %v6361
        %v6363 = vpop.f32.mrf.mxu0
        %v6364 = vpop.f32.mrf.mxu0
        %v6365 = vpop.f32.mrf.mxu0
        %6366 = vdwg.mxu0
        %v6367 = vadd.f32 %v6197, %v6362
        %s6368 = scalar_lea.vmem %s5, 640
        %v6369 = vld [vmem:[%s6368] sm:$0xf]
        %v6370 = vld [vmem:[%s6368 + $0x4] sm:$0xf]
        %v6371 = vld [vmem:[%s6368 + $0x8] sm:$0xf]
        %v6372 = vld [vmem:[%s6368 + $0xc] sm:$0xf]
        %v6373 = vld [vmem:[%s6368 + $0x10] sm:$0xf]
        %v6374 = vld [vmem:[%s6368 + $0x14] sm:$0xf]
        %v6375 = vld [vmem:[%s6368 + $0x18] sm:$0xf]
        %v6376 = vld [vmem:[%s6368 + $0x1c] sm:$0xf]
        %v6377 = vld [vmem:[%s6368 + $0x20] sm:$0xf]
        %v6378 = vld [vmem:[%s6368 + $0x24] sm:$0xf]
        %v6379 = vld [vmem:[%s6368 + $0x28] sm:$0xf]
        %v6380 = vld [vmem:[%s6368 + $0x2c] sm:$0xf]
        %v6381 = vld [vmem:[%s6368 + $0x30] sm:$0xf]
        %v6382 = vld [vmem:[%s6368 + $0x34] sm:$0xf]
        %v6383 = vld [vmem:[%s6368 + $0x38] sm:$0xf]
        %v6384 = vld [vmem:[%s6368 + $0x3c] sm:$0xf]
        %v6385 = vld [vmem:[%s6368 + $0x40] sm:$0xf]
        %v6386 = vld [vmem:[%s6368 + $0x44] sm:$0xf]
        %v6387 = vld [vmem:[%s6368 + $0x48] sm:$0xf]
        %v6388 = vld [vmem:[%s6368 + $0x4c] sm:$0xf]
        %v6389 = vld [vmem:[%s6368 + $0x50] sm:$0xf]
        %v6390 = vld [vmem:[%s6368 + $0x54] sm:$0xf]
        %v6391 = vld [vmem:[%s6368 + $0x58] sm:$0xf]
        %v6392 = vld [vmem:[%s6368 + $0x5c] sm:$0xf]
        %v6393 = vld [vmem:[%s6368 + $0x60] sm:$0xf]
        %v6394 = vld [vmem:[%s6368 + $0x64] sm:$0xf]
        %v6395 = vld [vmem:[%s6368 + $0x68] sm:$0xf]
        %v6396 = vld [vmem:[%s6368 + $0x6c] sm:$0xf]
        %v6397 = vld [vmem:[%s6368 + $0x70] sm:$0xf]
        %v6398 = vld [vmem:[%s6368 + $0x74] sm:$0xf]
        %v6399 = vld [vmem:[%s6368 + $0x78] sm:$0xf]
        %v6400 = vld [vmem:[%s6368 + $0x7c] sm:$0xf]
        %v6403 = vrot.slane %v5505, 4
        %v6404 = vrot.slane %v5506, 4
        %v6439 = vunpack.c.l.b16 %v6369
        %v6440 = vunpack.c.l.b16 %v6370
        %v6441 = vunpack.c.l.b16 %v6371
        %v6442 = vunpack.c.l.b16 %v6372
        %v6443 = vunpack.c.l.b16 %v6373
        %v6444 = vunpack.c.l.b16 %v6374
        %v6445 = vunpack.c.l.b16 %v6375
        %v6446 = vunpack.c.l.b16 %v6376
        %v6447 = vunpack.c.l.b16 %v6377
        %v6448 = vunpack.c.l.b16 %v6378
        %v6449 = vunpack.c.l.b16 %v6379
        %v6450 = vunpack.c.l.b16 %v6380
        %v6451 = vunpack.c.l.b16 %v6381
        %v6452 = vunpack.c.l.b16 %v6382
        %v6453 = vunpack.c.l.b16 %v6383
        %v6454 = vunpack.c.l.b16 %v6384
        %v6455 = vunpack.c.l.b16 %v6385
        %v6456 = vunpack.c.l.b16 %v6386
        %v6457 = vunpack.c.l.b16 %v6387
        %v6458 = vunpack.c.l.b16 %v6388
        %v6459 = vunpack.c.l.b16 %v6389
        %v6460 = vunpack.c.l.b16 %v6390
        %v6461 = vunpack.c.l.b16 %v6391
        %v6462 = vunpack.c.l.b16 %v6392
        %v6463 = vunpack.c.l.b16 %v6393
        %v6464 = vunpack.c.l.b16 %v6394
        %v6465 = vunpack.c.l.b16 %v6395
        %v6466 = vunpack.c.l.b16 %v6396
        %v6467 = vunpack.c.l.b16 %v6397
        %v6468 = vunpack.c.l.b16 %v6398
        %v6469 = vunpack.c.l.b16 %v6399
        %v6470 = vunpack.c.l.b16 %v6400
        %v6471 = vpack.c.b16 %v6440, %v6439
        %v6472 = vpack.c.b16 %v6442, %v6441
        %v6473 = vpack.c.b16 %v6444, %v6443
        %v6474 = vpack.c.b16 %v6446, %v6445
        %v6475 = vpack.c.b16 %v6448, %v6447
        %v6476 = vpack.c.b16 %v6450, %v6449
        %v6477 = vpack.c.b16 %v6452, %v6451
        %v6478 = vpack.c.b16 %v6454, %v6453
        %v6479 = vpack.c.b16 %v6456, %v6455
        %v6480 = vpack.c.b16 %v6458, %v6457
        %v6481 = vpack.c.b16 %v6460, %v6459
        %v6482 = vpack.c.b16 %v6462, %v6461
        %v6483 = vpack.c.b16 %v6464, %v6463
        %v6484 = vpack.c.b16 %v6466, %v6465
        %v6485 = vpack.c.b16 %v6468, %v6467
        %v6486 = vpack.c.b16 %v6470, %v6469
        %6503 = vmatprep.subr.bf16.mxu0 0
        %6504 = vmatpush1.bf16.msra.mxu0 %v6478
        %6505 = vmatprep.subr.bf16.mxu0 0
        %6506 = vmatpush1.bf16.msra.mxu0 %v6477
        %6507 = vmatprep.subr.bf16.mxu0 0
        %6508 = vmatpush1.bf16.msra.mxu0 %v6476
        %6509 = vmatprep.subr.bf16.mxu0 0
        %6510 = vmatpush1.bf16.msra.mxu0 %v6475
        %6511 = vmatprep.subr.bf16.mxu0 0
        %6512 = vmatpush1.bf16.msra.mxu0 %v6474
        %6513 = vmatprep.subr.bf16.mxu0 0
        %6514 = vmatpush1.bf16.msra.mxu0 %v6473
        %6515 = vmatprep.subr.bf16.mxu0 0
        %6516 = vmatpush1.bf16.msra.mxu0 %v6472
        %6517 = vmatprep.subr.bf16.mxu0 0
        %6518 = vmatpush1.bf16.msra.mxu0 %v6471
        %6519 = vmatprep.subr.bf16.mxu0 0
        %6520 = vmatpush2.bf16.msra.mxu0 %v6486
        %6521 = vmatprep.subr.bf16.mxu0 0
        %6522 = vmatpush2.bf16.msra.mxu0 %v6485
        %6523 = vmatprep.subr.bf16.mxu0 0
        %6524 = vmatpush2.bf16.msra.mxu0 %v6484
        %6525 = vmatprep.subr.bf16.mxu0 0
        %6526 = vmatpush2.bf16.msra.mxu0 %v6483
        %6527 = vmatprep.subr.bf16.mxu0 0
        %6528 = vmatpush2.bf16.msra.mxu0 %v6482
        %6529 = vmatprep.subr.bf16.mxu0 0
        %6530 = vmatpush2.bf16.msra.mxu0 %v6481
        %6531 = vmatprep.subr.bf16.mxu0 0
        %6532 = vmatpush2.bf16.msra.mxu0 %v6480
        %6533 = vmatprep.subr.bf16.mxu0 0
        %6534 = vmatpush2.bf16.msra.mxu0 %v6479
        %6535 = vmatprep.mubr.bf16.mxu0 %v6404
        %6536 = vmatmul.mubr.bf16.gmra.mxu0 %v6403
        %v6537 = vpop.f32.mrf.mxu0
        %v6538 = vadd.f32 0.0, %v6537
        %v6539 = vpop.f32.mrf.mxu0
        %v6540 = vpop.f32.mrf.mxu0
        %v6541 = vpop.f32.mrf.mxu0
        %6542 = vdwg.mxu0
        %v6543 = vadd.f32 %v6367, %v6538
        %s6544 = scalar_lea.vmem %s5, 768
        %v6545 = vld [vmem:[%s6544] sm:$0xf]
        %v6546 = vld [vmem:[%s6544 + $0x4] sm:$0xf]
        %v6547 = vld [vmem:[%s6544 + $0x8] sm:$0xf]
        %v6548 = vld [vmem:[%s6544 + $0xc] sm:$0xf]
        %v6549 = vld [vmem:[%s6544 + $0x10] sm:$0xf]
        %v6550 = vld [vmem:[%s6544 + $0x14] sm:$0xf]
        %v6551 = vld [vmem:[%s6544 + $0x18] sm:$0xf]
        %v6552 = vld [vmem:[%s6544 + $0x1c] sm:$0xf]
        %v6553 = vld [vmem:[%s6544 + $0x20] sm:$0xf]
        %v6554 = vld [vmem:[%s6544 + $0x24] sm:$0xf]
        %v6555 = vld [vmem:[%s6544 + $0x28] sm:$0xf]
        %v6556 = vld [vmem:[%s6544 + $0x2c] sm:$0xf]
        %v6557 = vld [vmem:[%s6544 + $0x30] sm:$0xf]
        %v6558 = vld [vmem:[%s6544 + $0x34] sm:$0xf]
        %v6559 = vld [vmem:[%s6544 + $0x38] sm:$0xf]
        %v6560 = vld [vmem:[%s6544 + $0x3c] sm:$0xf]
        %v6561 = vld [vmem:[%s6544 + $0x40] sm:$0xf]
        %v6562 = vld [vmem:[%s6544 + $0x44] sm:$0xf]
        %v6563 = vld [vmem:[%s6544 + $0x48] sm:$0xf]
        %v6564 = vld [vmem:[%s6544 + $0x4c] sm:$0xf]
        %v6565 = vld [vmem:[%s6544 + $0x50] sm:$0xf]
        %v6566 = vld [vmem:[%s6544 + $0x54] sm:$0xf]
        %v6567 = vld [vmem:[%s6544 + $0x58] sm:$0xf]
        %v6568 = vld [vmem:[%s6544 + $0x5c] sm:$0xf]
        %v6569 = vld [vmem:[%s6544 + $0x60] sm:$0xf]
        %v6570 = vld [vmem:[%s6544 + $0x64] sm:$0xf]
        %v6571 = vld [vmem:[%s6544 + $0x68] sm:$0xf]
        %v6572 = vld [vmem:[%s6544 + $0x6c] sm:$0xf]
        %v6573 = vld [vmem:[%s6544 + $0x70] sm:$0xf]
        %v6574 = vld [vmem:[%s6544 + $0x74] sm:$0xf]
        %v6575 = vld [vmem:[%s6544 + $0x78] sm:$0xf]
        %v6576 = vld [vmem:[%s6544 + $0x7c] sm:$0xf]
        %v6609 = vunpack.c.l.b16 %v6545
        %v6610 = vunpack.c.l.b16 %v6546
        %v6611 = vunpack.c.l.b16 %v6547
        %v6612 = vunpack.c.l.b16 %v6548
        %v6613 = vunpack.c.l.b16 %v6549
        %v6614 = vunpack.c.l.b16 %v6550
        %v6615 = vunpack.c.l.b16 %v6551
        %v6616 = vunpack.c.l.b16 %v6552
        %v6617 = vunpack.c.l.b16 %v6553
        %v6618 = vunpack.c.l.b16 %v6554
        %v6619 = vunpack.c.l.b16 %v6555
        %v6620 = vunpack.c.l.b16 %v6556
        %v6621 = vunpack.c.l.b16 %v6557
        %v6622 = vunpack.c.l.b16 %v6558
        %v6623 = vunpack.c.l.b16 %v6559
        %v6624 = vunpack.c.l.b16 %v6560
        %v6625 = vunpack.c.l.b16 %v6561
        %v6626 = vunpack.c.l.b16 %v6562
        %v6627 = vunpack.c.l.b16 %v6563
        %v6628 = vunpack.c.l.b16 %v6564
        %v6629 = vunpack.c.l.b16 %v6565
        %v6630 = vunpack.c.l.b16 %v6566
        %v6631 = vunpack.c.l.b16 %v6567
        %v6632 = vunpack.c.l.b16 %v6568
        %v6633 = vunpack.c.l.b16 %v6569
        %v6634 = vunpack.c.l.b16 %v6570
        %v6635 = vunpack.c.l.b16 %v6571
        %v6636 = vunpack.c.l.b16 %v6572
        %v6637 = vunpack.c.l.b16 %v6573
        %v6638 = vunpack.c.l.b16 %v6574
        %v6639 = vunpack.c.l.b16 %v6575
        %v6640 = vunpack.c.l.b16 %v6576
        %v6641 = vpack.c.b16 %v6610, %v6609
        %v6642 = vpack.c.b16 %v6612, %v6611
        %v6643 = vpack.c.b16 %v6614, %v6613
        %v6644 = vpack.c.b16 %v6616, %v6615
        %v6645 = vpack.c.b16 %v6618, %v6617
        %v6646 = vpack.c.b16 %v6620, %v6619
        %v6647 = vpack.c.b16 %v6622, %v6621
        %v6648 = vpack.c.b16 %v6624, %v6623
        %v6649 = vpack.c.b16 %v6626, %v6625
        %v6650 = vpack.c.b16 %v6628, %v6627
        %v6651 = vpack.c.b16 %v6630, %v6629
        %v6652 = vpack.c.b16 %v6632, %v6631
        %v6653 = vpack.c.b16 %v6634, %v6633
        %v6654 = vpack.c.b16 %v6636, %v6635
        %v6655 = vpack.c.b16 %v6638, %v6637
        %v6656 = vpack.c.b16 %v6640, %v6639
        %6673 = vmatprep.subr.bf16.mxu0 0
        %6674 = vmatpush1.bf16.msra.mxu0 %v6648
        %6675 = vmatprep.subr.bf16.mxu0 0
        %6676 = vmatpush1.bf16.msra.mxu0 %v6647
        %6677 = vmatprep.subr.bf16.mxu0 0
        %6678 = vmatpush1.bf16.msra.mxu0 %v6646
        %6679 = vmatprep.subr.bf16.mxu0 0
        %6680 = vmatpush1.bf16.msra.mxu0 %v6645
        %6681 = vmatprep.subr.bf16.mxu0 0
        %6682 = vmatpush1.bf16.msra.mxu0 %v6644
        %6683 = vmatprep.subr.bf16.mxu0 0
        %6684 = vmatpush1.bf16.msra.mxu0 %v6643
        %6685 = vmatprep.subr.bf16.mxu0 0
        %6686 = vmatpush1.bf16.msra.mxu0 %v6642
        %6687 = vmatprep.subr.bf16.mxu0 0
        %6688 = vmatpush1.bf16.msra.mxu0 %v6641
        %6689 = vmatprep.subr.bf16.mxu0 0
        %6690 = vmatpush2.bf16.msra.mxu0 %v6656
        %6691 = vmatprep.subr.bf16.mxu0 0
        %6692 = vmatpush2.bf16.msra.mxu0 %v6655
        %6693 = vmatprep.subr.bf16.mxu0 0
        %6694 = vmatpush2.bf16.msra.mxu0 %v6654
        %6695 = vmatprep.subr.bf16.mxu0 0
        %6696 = vmatpush2.bf16.msra.mxu0 %v6653
        %6697 = vmatprep.subr.bf16.mxu0 0
        %6698 = vmatpush2.bf16.msra.mxu0 %v6652
        %6699 = vmatprep.subr.bf16.mxu0 0
        %6700 = vmatpush2.bf16.msra.mxu0 %v6651
        %6701 = vmatprep.subr.bf16.mxu0 0
        %6702 = vmatpush2.bf16.msra.mxu0 %v6650
        %6703 = vmatprep.subr.bf16.mxu0 0
        %6704 = vmatpush2.bf16.msra.mxu0 %v6649
        %6705 = vmatprep.mubr.bf16.mxu0 %v5508
        %6706 = vmatmul.mubr.bf16.gmra.mxu0 %v5507
        %v6707 = vpop.f32.mrf.mxu0
        %v6708 = vadd.f32 0.0, %v6707
        %v6709 = vpop.f32.mrf.mxu0
        %v6710 = vpop.f32.mrf.mxu0
        %v6711 = vpop.f32.mrf.mxu0
        %6712 = vdwg.mxu0
        %v6713 = vadd.f32 %v6543, %v6708
        %v6714 = vld [vmem:[%s6] sm:$0x1]
        %v6716 = vlaneseq
        %v6717 = vshrl.u32 %v6716, 7
        %v6718 = vsub.s32 0, %v6717
        %v6719 = vrot.slane %v6714, %v6718
        %v6721 = vadd.f32 %v6713, %v6719
        %6722 = vst [vmem:[%s271] sm:$0xff] %v6721
        %s6723 = sand.u32 %s181, 1
        %s6724 = scalar_lea.sflag [#allocation6], %s6723
        %s6725 = sand.u32 %s181, 1
        %s6726 = smul.addr %s6725, 8
        %s6727 = scalar_lea.vmem [#allocation5], %s6726
        // Predicated region
        $region49: #{detector_forward.1} parent=47 // pred_check
          %p6728 = pneg %p191
        $region50: #{detector_forward.1} parent=47 // pred_check_branch
          %6730 = sbr.rel (%p6728) target = $region52
        $region51: #{detector_forward.1} parent=47 // pred_region
          %s6732 = ssub.s32 128, 128
          %6733 = vsyncadd %s6724, %s6732
          %s6734 = smul.addr %s21, 128
          %s6735 = scalar_lea.hbm %s7, %s6734
          %s6737 = sshll.u32 %s6727, 4
          %s6738 = int_to_ptr.vmem [resolvable:$true] %s6737
          %6740 = dma.vmem_to_hbm [thread:$0]  %s6738, 128, %s6735, %s6724
        $region52: #{detector_forward.1} parent=47 // pred_fallthru
          _
      $region48: #{detector_forward.1} parent=5 // pred_fallthru
        _
      %p6741 = scmp.le.s32.totalorder 2, %s16
      // Predicated region
      $region53: #{detector_forward.1} parent=5 // pred_check
        %p6742 = pneg %p6741
      $region54: #{detector_forward.1} parent=5 // pred_check_branch
        %6744 = sbr.rel (%p6742) target = $region56
      $region55: #{detector_forward.1} parent=5 // pred_region
        %s6745 = ssub.s32 %s16, 2
        // Predicated region
        $region57: #{detector_forward.1} parent=55 // pred_check
          %p6746 = pneg %p197
        $region58: #{detector_forward.1} parent=55 // pred_check_branch
          %6748 = sbr.rel (%p6746) target = $region60
        $region59: #{detector_forward.1} parent=55 // pred_region
          %s6749 = sand.u32 %s182, 1
          %s6750 = scalar_lea.sflag [#allocation6], %s6749
          %s6751 = sand.u32 %s182, 1
          %s6752 = smul.addr %s6751, 8
          %s6753 = scalar_lea.vmem [#allocation5], %s6752
          %6754 = dma.done %s6750, 128
        $region60: #{detector_forward.1} parent=55 // pred_fallthru
          _
      $region56: #{detector_forward.1} parent=5 // pred_fallthru
        _
    $region6: #{detector_forward.1} parent=1 // loop_footer
      %s20 = sadd.s32 1, %s16
    $region7: #{detector_forward.1} parent=1 // loop_footer_branch
      %15 = sbr.rel target = $region3
    $region8: #{detector_forward.1} parent=1 // loop_exit
      _
    %6755 = vsyncpa [#allocation6], 1
    %s6756 = scalar_lea.sflag [#allocation6], 1
    %6757 = vsyncpa %s6756, 1

</llo_original>
